<compile_context>
chip_gen: v5e
topology: v5e:2x2
jax: 0.10.0
libtpu: 0.0.40
codegen_flags: <defaults>
</compile_context>

<pallas_src>
import functools
import math

import jax
import jax.numpy as jnp
from jax import lax
from jax.experimental import pallas as pl
from jax.experimental.pallas import tpu as pltpu


# ----------------------------------------------------------------------------
# Fused kernel: all LSTM layers (chunk-wide input GEMMs) + LayerNorm
# ----------------------------------------------------------------------------
def _fused_core_kernel(num_layers, hidden_dim, chunk,
                       x_ref, wih0_ref, wih_ref, whh_ref, b0_ref, b_ref,
                       h0_ref, c0_ref, gamma_ref, beta_ref,
                       y_ref, hn_ref, cn_ref,
                       h_scr, c_scr, g_scr, a_scr):
    """Grid = (batch blocks ['parallel'], time chunks ['arbitrary']).

    x_ref:    (Bb, Tc, D)          input chunk (matmul dtype)
    wih0_ref: (D, 4H)              layer-0 input->gates weights (matmul dtype)
    wih_ref:  (max(L-1,1), H, 4H)  input->gates weights, layers 1..L-1
    whh_ref:  (L, H, 4H)           hidden->gates weights (all layers)
    b0_ref:   (1, 4H)              combined bias, layer 0 (f32)
    b_ref:    (max(L-1,1), 1, 4H)  combined biases, layers 1..L-1 (f32)
    h0/c0:    (L, Bb, H)           initial state (f32)
    gamma/beta: (1, H)             LayerNorm parameters
    y_ref:    (Bb, Tc, H)          normalized output chunk
    hn/cn:    (L, Bb, H)           final (raw) LSTM state
    h_scr/c_scr: (L, Bb, H) f32    state carried across time chunks
    g_scr:    (Bb, Tc, 4H) f32     chunk-wide gate pre-activations (input part)
    a_scr:    (Bb, Tc, H)  f32     current layer's output for the whole chunk
    Gate order follows PyTorch: [i, f, g, o].
    """
    H = hidden_dim
    L = num_layers
    Bb = x_ref.shape[0]
    D = x_ref.shape[2]
    mdt = whh_ref.dtype
    t_step = pl.program_id(1)

    @pl.when(t_step == 0)
    def _():
        h_scr[...] = h0_ref[...]
        c_scr[...] = c0_ref[...]
        # Robust init of the resident output blocks (finalized at last step).
        hn_ref[...] = h0_ref[...]
        cn_ref[...] = c0_ref[...]

    gamma = gamma_ref[...]                      # (1, H)
    beta = beta_ref[...]                        # (1, H)

    # Layer-0 chunk-wide input projection: one (Bb*Tc, D) @ (D, 4H) MXU GEMM.
    x_flat = x_ref[...].astype(mdt).reshape(Bb * chunk, D)
    g0 = jnp.dot(x_flat, wih0_ref[...], preferred_element_type=jnp.float32)
    g_scr[...] = (g0 + b0_ref[...]).reshape(Bb, chunk, 4 * H)

    for l in range(L):
        if l > 0:
            # Chunk-wide input projection for layer l from the previous
            # layer's chunk output: one (Bb*Tc, H) @ (H, 4H) MXU GEMM.
            a_flat = a_scr[...].reshape(Bb * chunk, H).astype(mdt)
            g = jnp.dot(a_flat, wih_ref[l - 1],
                        preferred_element_type=jnp.float32)
            g_scr[...] = (g + b_ref[l - 1]).reshape(Bb, chunk, 4 * H)

        whh_l = whh_ref[l]                      # (H, 4H)
        h = h_scr[l]                            # (Bb, H) f32
        c = c_scr[l]
        # Serial recurrence: only h @ W_hh is left inside the time loop.
        # TODO(synk): lax.fori_loop(..., unroll=4) once Tc grows beyond ~16.
        for tt in range(chunk):
            gates = g_scr[:, tt, :] + jnp.dot(
                h.astype(mdt), whh_l, preferred_element_type=jnp.float32)
            i_g = jax.nn.sigmoid(gates[:, 0 * H:1 * H])
            f_g = jax.nn.sigmoid(gates[:, 1 * H:2 * H])
            g_g = jnp.tanh(gates[:, 2 * H:3 * H])
            o_g = jax.nn.sigmoid(gates[:, 3 * H:4 * H])
            c = f_g * c + i_g * g_g
            h = o_g * jnp.tanh(c)
            a_scr[:, tt, :] = h
        h_scr[l] = h
        c_scr[l] = c

    # Chunk-batched LayerNorm (eps=1e-5) + single lane-dense output store.
    a = a_scr[...]                              # (Bb, Tc, H) f32
    mean = jnp.mean(a, axis=-1, keepdims=True)
    var = jnp.mean(a * a, axis=-1, keepdims=True) - mean * mean
    y_ref[...] = ((a - mean) * lax.rsqrt(var + 1e-5) * gamma
                  + beta).astype(y_ref.dtype)

    @pl.when(t_step == pl.num_programs(1) - 1)
    def _():
        hn_ref[...] = h_scr[...]
        cn_ref[...] = c_scr[...]


# ----------------------------------------------------------------------------
# Wrapper
# ----------------------------------------------------------------------------
def _pick_time_chunk(T, target=16):
    """Largest Tc <= target with T % Tc == 0 and (Tc % 8 == 0 or Tc == T)."""
    for tc in range(min(T, target), 0, -1):
        if T % tc == 0 and (tc % 8 == 0 or tc == T):
            return tc
    return T


def _pick_batch_block(B):
    """Split batch into 2 blocks (engages v7x's 2nd TC) only if sublane-aligned."""
    if B % 2 == 0 and (B // 2) % 8 == 0:
        return B // 2
    return B


def _nbytes(shape, dtype):
    return math.prod(shape) * jnp.dtype(dtype).itemsize


def alphastar_core_forward(x, params, hidden=None, *,
                           matmul_dtype=jnp.float32, time_chunk_target=16):
    """Pallas implementation of AlphaStarCore.forward (eval semantics).

    x: (B, T, input_dim) batch_first.  hidden: optional (h_0, c_0) each
    (num_layers, B, H); zeros if None.  Returns (normalized_out (B,T,H),
    (h_n, c_n) each (num_layers, B, H)).
    """
    if x.ndim != 3:
        raise ValueError(f"Expected 3D input tensor, got shape {x.shape}")
    B, T, D = x.shape
    L = params["num_layers"]
    H = params["w_hh"].shape[1]
    Lr = max(L - 1, 1)
    f32 = jnp.float32
    mdt = jnp.dtype(matmul_dtype)

    if hidden is None:
        h0 = jnp.zeros((L, B, H), f32)
        c0 = jnp.zeros((L, B, H), f32)
    else:
        h0, c0 = hidden
        h0 = h0.astype(f32)
        c0 = c0.astype(f32)

    # MXU operands (weights + x) in the matmul dtype; biases/state stay f32.
    xq = x.astype(mdt)
    wih0 = params["w_ih0_t"].astype(mdt)
    wih_rest = params["w_ih_rest"].astype(mdt)
    whh = params["w_hh"].astype(mdt)
    b0 = params["b0"].astype(f32)
    b_rest = params["b_rest"].astype(f32)
    gamma = params["ln_gamma"].reshape(1, H).astype(f32)
    beta = params["ln_beta"].reshape(1, H).astype(f32)

    Tc = _pick_time_chunk(T, time_chunk_target)
    Bb = _pick_batch_block(B)
    grid = (B // Bb, T // Tc)

    kernel = functools.partial(_fused_core_kernel, L, H, Tc)
    out_shapes = (
        jax.ShapeDtypeStruct((B, T, H), f32),   # normalized output
        jax.ShapeDtypeStruct((L, B, H), f32),   # h_n
        jax.ShapeDtypeStruct((L, B, H), f32),   # c_n
    )

    # Explicit scoped-VMEM budget from actual block footprint (conservative:
    # everything x2 for double-buffering) + scratch, clamped for v7x (64 MiB).
    block_bytes = (
        2 * _nbytes((Bb, Tc, D), mdt)
        + 2 * _nbytes((Bb, Tc, H), f32)
        + 2 * 4 * _nbytes((L, Bb, H), f32)
        + 2 * (_nbytes((D, 4 * H), mdt) + _nbytes((Lr, H, 4 * H), mdt)
               + _nbytes((L, H, 4 * H), mdt))
        + 2 * (_nbytes((1, 4 * H), f32) + _nbytes((Lr, 1, 4 * H), f32)
               + 2 * _nbytes((1, H), f32))
    )
    scratch_bytes = (2 * _nbytes((L, Bb, H), f32)
                     + _nbytes((Bb, Tc, 4 * H), f32)
                     + _nbytes((Bb, Tc, H), f32))
    vmem_limit = int(min(64 << 20,
                         max(32 << 20, block_bytes + scratch_bytes + (4 << 20))))

    def run(single_buffer_constants):
        def const_spec(shape, imap):
            if single_buffer_constants:
                return pl.BlockSpec(shape, imap, pipeline_mode=pl.Buffered(1))
            return pl.BlockSpec(shape, imap)

        grid_spec = pltpu.PrefetchScalarGridSpec(
            num_scalar_prefetch=0,
            grid=grid,
            in_specs=[
                pl.BlockSpec((Bb, Tc, D), lambda bi, ti: (bi, ti, 0)),      # x
                const_spec((D, 4 * H), lambda bi, ti: (0, 0)),              # W_ih l0
                const_spec((Lr, H, 4 * H), lambda bi, ti: (0, 0, 0)),       # W_ih l>=1
                const_spec((L, H, 4 * H), lambda bi, ti: (0, 0, 0)),        # W_hh
                const_spec((1, 4 * H), lambda bi, ti: (0, 0)),              # bias l0
                const_spec((Lr, 1, 4 * H), lambda bi, ti: (0, 0, 0)),       # bias l>=1
                pl.BlockSpec((L, Bb, H), lambda bi, ti: (0, bi, 0)),        # h0
                pl.BlockSpec((L, Bb, H), lambda bi, ti: (0, bi, 0)),        # c0
                const_spec((1, H), lambda bi, ti: (0, 0)),                  # ln gamma
                const_spec((1, H), lambda bi, ti: (0, 0)),                  # ln beta
            ],
            out_specs=[
                pl.BlockSpec((Bb, Tc, H), lambda bi, ti: (bi, ti, 0)),      # y
                pl.BlockSpec((L, Bb, H), lambda bi, ti: (0, bi, 0)),        # h_n
                pl.BlockSpec((L, Bb, H), lambda bi, ti: (0, bi, 0)),        # c_n
            ],
            scratch_shapes=[
                pltpu.VMEM((L, Bb, H), f32),        # h carry (all layers)
                pltpu.VMEM((L, Bb, H), f32),        # c carry (all layers)
                pltpu.VMEM((Bb, Tc, 4 * H), f32),   # chunk gate pre-activations
                pltpu.VMEM((Bb, Tc, H), f32),       # chunk layer activations
            ],
        )
        return pl.pallas_call(
            kernel,
            out_shape=out_shapes,
            grid_spec=grid_spec,
            compiler_params=pltpu.CompilerParams(
                dimension_semantics=("parallel", "arbitrary"),
                vmem_limit_bytes=vmem_limit),
        )(xq, wih0, wih_rest, whh, b0, b_rest, h0, c0, gamma, beta)

    try:
        y, h_n, c_n = run(True)
    except Exception:
        # pipeline_mode / pl.Buffered(1) unsupported on this JAX version:
        # fall back to default double-buffering (correctness unaffected).
        y, h_n, c_n = run(False)

    return y, (h_n, c_n)


# ----------------------------------------------------------------------------
# Pure-JAX reference (for correctness check; supports bf16-MXU emulation)
# ----------------------------------------------------------------------------
def _lstm_layer_ref(x_tm, w_ih_t, w_hh_t, bias, h0, c0, mdt):
    H = h0.shape[-1]
    w_ih_t = w_ih_t.astype(mdt)
    w_hh_t = w_hh_t.astype(mdt)

    def step(carry, x_t):
        h, c = carry
        gates = (jnp.dot(x_t.astype(mdt), w_ih_t,
                         preferred_element_type=jnp.float32)
                 + jnp.dot(h.astype(mdt), w_hh_t,
                           preferred_element_type=jnp.float32)
                 + bias)
        i = jax.nn.sigmoid(gates[:, 0 * H:1 * H])
        f = jax.nn.sigmoid(gates[:, 1 * H:2 * H])
        g = jnp.tanh(gates[:, 2 * H:3 * H])
        o = jax.nn.sigmoid(gates[:, 3 * H:4 * H])
        c_new = f * c + i * g
        h_new = o * jnp.tanh(c_new)
        return (h_new, c_new), h_new

    (h_n, c_n), ys = lax.scan(step, (h0, c0), x_tm)
    return ys, h_n, c_n


def alphastar_core_ref(x, params, hidden=None, matmul_dtype=jnp.float32):
    B, T, _ = x.shape
    L = params["num_layers"]
    H = params["w_hh"].shape[1]
    if hidden is None:
        h0 = jnp.zeros((L, B, H), jnp.float32)
        c0 = jnp.zeros((L, B, H), jnp.float32)
    else:
        h0, c0 = hidden
        h0 = h0.astype(jnp.float32)
        c0 = c0.astype(jnp.float32)

    layer_in = jnp.transpose(x, (1, 0, 2)).astype(jnp.float32)
    h_fs, c_fs = [], []
    for l in range(L):
        w_ih_t = params["w_ih0_t"] if l == 0 else params["w_ih_rest"][l - 1]
        bias = (params["b0"] if l == 0 else params["b_rest"][l - 1]).reshape(-1)
        w_hh_t = params["w_hh"][l]
        layer_in, h_n, c_n = _lstm_layer_ref(
            layer_in, w_ih_t, w_hh_t, bias, h0[l], c0[l], matmul_dtype)
        h_fs.append(h_n)
        c_fs.append(c_n)

    y = jnp.transpose(layer_in, (1, 0, 2))
    mean = jnp.mean(y, axis=-1, keepdims=True)
    var = jnp.mean((y - mean) ** 2, axis=-1, keepdims=True)
    normed = (y - mean) * lax.rsqrt(var + 1e-5) * params["ln_gamma"] + params["ln_beta"]
    return normed, (jnp.stack(h_fs), jnp.stack(c_fs))


# ----------------------------------------------------------------------------
# Deterministic parameter init (mirrors nn.LSTM / nn.LayerNorm shapes)
# ----------------------------------------------------------------------------
def init_params(key, input_dim, hidden_dim, num_layers):
    k = 1.0 / jnp.sqrt(jnp.float32(hidden_dim))
    H = hidden_dim
    w_ih0_t, b0 = None, None
    w_ih_rest, b_rest, w_hh = [], [], []
    for l in range(num_layers):
        d_in = input_dim if l == 0 else H
        key, k1, k2, k3, k4 = jax.random.split(key, 5)
        w_ih = jax.random.uniform(k1, (4 * H, d_in), jnp.float32, -k, k)
        w_hh_l = jax.random.uniform(k2, (4 * H, H), jnp.float32, -k, k)
        b_ih = jax.random.uniform(k3, (4 * H,), jnp.float32, -k, k)
        b_hh = jax.random.uniform(k4, (4 * H,), jnp.float32, -k, k)
        bias = (b_ih + b_hh).reshape(1, 4 * H)
        if l == 0:
            w_ih0_t = w_ih.T                # (D, 4H)
            b0 = bias                       # (1, 4H)
        else:
            w_ih_rest.append(w_ih.T)        # (H, 4H)
            b_rest.append(bias)             # (1, 4H)
        w_hh.append(w_hh_l.T)               # (H, 4H)

    if num_layers > 1:
        w_ih_rest = jnp.stack(w_ih_rest)                      # (L-1, H, 4H)
        b_rest = jnp.stack(b_rest)                            # (L-1, 1, 4H)
    else:  # dummies (never read when num_layers == 1)
        w_ih_rest = jnp.zeros((1, H, 4 * H), jnp.float32)
        b_rest = jnp.zeros((1, 1, 4 * H), jnp.float32)

    return {
        "num_layers": num_layers,
        "w_ih0_t": w_ih0_t,
        "b0": b0,
        "w_ih_rest": w_ih_rest,
        "b_rest": b_rest,
        "w_hh": jnp.stack(w_hh),                              # (L, H, 4H)
        "ln_gamma": jnp.ones((H,), jnp.float32),
        "ln_beta": jnp.zeros((H,), jnp.float32),
    }


if __name__ == "__main__":
    B, T, D_IN, H, L = 2, 8, 32, 32, 3

    key = jax.random.PRNGKey(0)
    key, kx, kh, kc = jax.random.split(key, 4)
    x = jax.random.normal(kx, (B, T, D_IN), jnp.float32)
    h0 = 0.1 * jax.random.normal(kh, (L, B, H), jnp.float32)
    c0 = 0.1 * jax.random.normal(kc, (L, B, H), jnp.float32)
    params = init_params(key, D_IN, H, L)

    # ---- f32 MXU path: tight correctness check -----------------------------
    out0, (hn0, cn0) = alphastar_core_forward(x, params)
    out1, (hn1, cn1) = alphastar_core_forward(x, params, (h0, c0))
    jax.block_until_ready((out0, hn0, cn0, out1, hn1, cn1))

    ref0, (rh0, rc0) = alphastar_core_ref(x, params)
    ref1, (rh1, rc1) = alphastar_core_ref(x, params, (h0, c0))

    assert out0.shape == (B, T, H)
    assert hn0.shape == (L, B, H) and cn0.shape == (L, B, H)
    tol = dict(atol=1e-4, rtol=1e-4)
    assert jnp.allclose(out0, ref0, **tol)
    assert jnp.allclose(hn0, rh0, **tol)
    assert jnp.allclose(cn0, rc0, **tol)
    assert jnp.allclose(out1, ref1, **tol)
    assert jnp.allclose(hn1, rh1, **tol)
    assert jnp.allclose(cn1, rc1, **tol)

    # ---- bf16 MXU path (production config), longer sequence ----------------
    T2 = 32
    key, kx2 = jax.random.split(key)
    x2 = jax.random.normal(kx2, (B, T2, D_IN), jnp.float32)
    outb, (hnb, cnb) = alphastar_core_forward(
        x2, params, (h0, c0), matmul_dtype=jnp.bfloat16)
    jax.block_until_ready((outb, hnb, cnb))
    refb, (rhb, rcb) = alphastar_core_ref(
        x2, params, (h0, c0), matmul_dtype=jnp.bfloat16)
    tolb = dict(atol=5e-3, rtol=5e-3)
    assert outb.shape == (B, T2, H)
    assert jnp.allclose(outb, refb, **tolb)
    assert jnp.allclose(hnb, rhb, **tolb)
    assert jnp.allclose(cnb, rcb, **tolb)

    print("KERNEL_OK")
</pallas_src>

<mosaic_0001>
module attributes {stable_mosaic.version = 11 : i64} {
  func.func @_fused_core_kernel(%arg0: i32, %arg1: i32, %arg2: memref<2x8x32xf32, #tpu.memory_space<vmem>>, %arg3: memref<32x128xf32, #tpu.memory_space<vmem>>, %arg4: memref<2x32x128xf32, #tpu.memory_space<vmem>>, %arg5: memref<3x32x128xf32, #tpu.memory_space<vmem>>, %arg6: memref<1x128xf32, #tpu.memory_space<vmem>>, %arg7: memref<2x1x128xf32, #tpu.memory_space<vmem>>, %arg8: memref<3x2x32xf32, #tpu.memory_space<vmem>>, %arg9: memref<3x2x32xf32, #tpu.memory_space<vmem>>, %arg10: memref<1x32xf32, #tpu.memory_space<vmem>>, %arg11: memref<1x32xf32, #tpu.memory_space<vmem>>, %arg12: memref<2x8x32xf32, #tpu.memory_space<vmem>>, %arg13: memref<3x2x32xf32, #tpu.memory_space<vmem>>, %arg14: memref<3x2x32xf32, #tpu.memory_space<vmem>>, %arg15: memref<3x2x32xf32, #tpu.memory_space<vmem>>, %arg16: memref<3x2x32xf32, #tpu.memory_space<vmem>>, %arg17: memref<2x8x128xf32, #tpu.memory_space<vmem>>, %arg18: memref<2x8x32xf32, #tpu.memory_space<vmem>>) attributes {dimension_semantics = [#tpu.dimension_semantics<parallel>, #tpu.dimension_semantics<arbitrary>], iteration_bounds = array<i64: 1, 1>, scalar_prefetch = 0 : i64, scratch_operands = 4 : i64, tpu.core_type = #tpu.core_type<tc>, window_params = [{transform_indices = @transform_0, window_bounds = array<i64: 2, 8, 32>}, {pipeline_mode = #tpu.pipeline_mode<synchronous>, transform_indices = @transform_1, window_bounds = array<i64: 32, 128>}, {pipeline_mode = #tpu.pipeline_mode<synchronous>, transform_indices = @transform_2, window_bounds = array<i64: 2, 32, 128>}, {pipeline_mode = #tpu.pipeline_mode<synchronous>, transform_indices = @transform_3, window_bounds = array<i64: 3, 32, 128>}, {pipeline_mode = #tpu.pipeline_mode<synchronous>, transform_indices = @transform_4, window_bounds = array<i64: 1, 128>}, {pipeline_mode = #tpu.pipeline_mode<synchronous>, transform_indices = @transform_5, window_bounds = array<i64: 2, 1, 128>}, {transform_indices = @transform_6, window_bounds = array<i64: 3, 2, 32>}, {transform_indices = @transform_7, window_bounds = array<i64: 3, 2, 32>}, {pipeline_mode = #tpu.pipeline_mode<synchronous>, transform_indices = @transform_8, window_bounds = array<i64: 1, 32>}, {pipeline_mode = #tpu.pipeline_mode<synchronous>, transform_indices = @transform_9, window_bounds = array<i64: 1, 32>}, {transform_indices = @transform_10, window_bounds = array<i64: 2, 8, 32>}, {transform_indices = @transform_11, window_bounds = array<i64: 3, 2, 32>}, {transform_indices = @transform_12, window_bounds = array<i64: 3, 2, 32>}]} {
    %c0_i32 = arith.constant 0 : i32
    %0 = arith.cmpi eq, %arg1, %c0_i32 : i32
    %1 = arith.extui %0 : i1 to i32
    %c0_i32_0 = arith.constant 0 : i32
    %2 = arith.cmpi ne, %1, %c0_i32_0 : i32
    scf.if %2 {
      %c0_331 = arith.constant 0 : index
      %c0_332 = arith.constant 0 : index
      %c0_333 = arith.constant 0 : index
      %869 = vector.load %arg8[%c0_331, %c0_332, %c0_333] : memref<3x2x32xf32, #tpu.memory_space<vmem>>, vector<3x2x32xf32>
      %c0_334 = arith.constant 0 : index
      %c0_335 = arith.constant 0 : index
      %c0_336 = arith.constant 0 : index
      %870 = vector.load %arg15[%c0_334, %c0_335, %c0_336] : memref<3x2x32xf32, #tpu.memory_space<vmem>>, vector<3x2x32xf32>
      tpu.vector_store %arg15[%c0_334, %c0_335, %c0_336], %869 {strides = array<i32>} : memref<3x2x32xf32, #tpu.memory_space<vmem>>, vector<3x2x32xf32>,
      %c0_337 = arith.constant 0 : index
      %c0_338 = arith.constant 0 : index
      %c0_339 = arith.constant 0 : index
      %871 = vector.load %arg9[%c0_337, %c0_338, %c0_339] : memref<3x2x32xf32, #tpu.memory_space<vmem>>, vector<3x2x32xf32>
      %c0_340 = arith.constant 0 : index
      %c0_341 = arith.constant 0 : index
      %c0_342 = arith.constant 0 : index
      %872 = vector.load %arg16[%c0_340, %c0_341, %c0_342] : memref<3x2x32xf32, #tpu.memory_space<vmem>>, vector<3x2x32xf32>
      tpu.vector_store %arg16[%c0_340, %c0_341, %c0_342], %871 {strides = array<i32>} : memref<3x2x32xf32, #tpu.memory_space<vmem>>, vector<3x2x32xf32>,
      %c0_343 = arith.constant 0 : index
      %c0_344 = arith.constant 0 : index
      %c0_345 = arith.constant 0 : index
      %873 = vector.load %arg8[%c0_343, %c0_344, %c0_345] : memref<3x2x32xf32, #tpu.memory_space<vmem>>, vector<3x2x32xf32>
      %c0_346 = arith.constant 0 : index
      %c0_347 = arith.constant 0 : index
      %c0_348 = arith.constant 0 : index
      %874 = vector.load %arg13[%c0_346, %c0_347, %c0_348] : memref<3x2x32xf32, #tpu.memory_space<vmem>>, vector<3x2x32xf32>
      tpu.vector_store %arg13[%c0_346, %c0_347, %c0_348], %873 {strides = array<i32>} : memref<3x2x32xf32, #tpu.memory_space<vmem>>, vector<3x2x32xf32>,
      %c0_349 = arith.constant 0 : index
      %c0_350 = arith.constant 0 : index
      %c0_351 = arith.constant 0 : index
      %875 = vector.load %arg9[%c0_349, %c0_350, %c0_351] : memref<3x2x32xf32, #tpu.memory_space<vmem>>, vector<3x2x32xf32>
      %c0_352 = arith.constant 0 : index
      %c0_353 = arith.constant 0 : index
      %c0_354 = arith.constant 0 : index
      %876 = vector.load %arg14[%c0_352, %c0_353, %c0_354] : memref<3x2x32xf32, #tpu.memory_space<vmem>>, vector<3x2x32xf32>
      tpu.vector_store %arg14[%c0_352, %c0_353, %c0_354], %875 {strides = array<i32>} : memref<3x2x32xf32, #tpu.memory_space<vmem>>, vector<3x2x32xf32>,
    } else {
    }
    %c0 = arith.constant 0 : index
    %c0_1 = arith.constant 0 : index
    %3 = vector.load %arg10[%c0, %c0_1] : memref<1x32xf32, #tpu.memory_space<vmem>>, vector<1x32xf32>
    %c0_2 = arith.constant 0 : index
    %c0_3 = arith.constant 0 : index
    %4 = vector.load %arg11[%c0_2, %c0_3] : memref<1x32xf32, #tpu.memory_space<vmem>>, vector<1x32xf32>
    %c0_4 = arith.constant 0 : index
    %c0_5 = arith.constant 0 : index
    %c0_6 = arith.constant 0 : index
    %5 = vector.load %arg2[%c0_4, %c0_5, %c0_6] : memref<2x8x32xf32, #tpu.memory_space<vmem>>, vector<2x8x32xf32>
    %6 = vector.shape_cast %5 : vector<2x8x32xf32> to vector<16x32xf32>
    %c0_7 = arith.constant 0 : index
    %c0_8 = arith.constant 0 : index
    %7 = vector.load %arg3[%c0_7, %c0_8] : memref<32x128xf32, #tpu.memory_space<vmem>>, vector<32x128xf32>
    %cst = arith.constant dense<0.000000e+00> : vector<16x128xf32>
    %8 = tpu.matmul %6, %7, %cst {dimension_numbers = #tpu.dot_dimension_numbers<[1], [0], [0], [1], [0, 0, 1, 1], [], []>} : vector<16x32xf32>, vector<32x128xf32>, vector<16x128xf32> -> vector<16x128xf32>
    %c0_9 = arith.constant 0 : index
    %c0_10 = arith.constant 0 : index
    %9 = vector.load %arg6[%c0_9, %c0_10] : memref<1x128xf32, #tpu.memory_space<vmem>>, vector<1x128xf32>
    %10 = vector.broadcast %9 : vector<1x128xf32> to vector<16x128xf32>
    %11 = arith.addf %8, %10 : vector<16x128xf32>
    %12 = vector.shape_cast %11 : vector<16x128xf32> to vector<2x8x128xf32>
    %c0_11 = arith.constant 0 : index
    %c0_12 = arith.constant 0 : index
    %c0_13 = arith.constant 0 : index
    %13 = vector.load %arg17[%c0_11, %c0_12, %c0_13] : memref<2x8x128xf32, #tpu.memory_space<vmem>>, vector<2x8x128xf32>
    tpu.vector_store %arg17[%c0_11, %c0_12, %c0_13], %12 {strides = array<i32>} : memref<2x8x128xf32, #tpu.memory_space<vmem>>, vector<2x8x128xf32>,
    %c0_14 = arith.constant 0 : index
    %c0_15 = arith.constant 0 : index
    %c0_16 = arith.constant 0 : index
    %14 = vector.load %arg5[%c0_14, %c0_15, %c0_16] : memref<3x32x128xf32, #tpu.memory_space<vmem>>, vector<1x32x128xf32>
    %15 = vector.shape_cast %14 : vector<1x32x128xf32> to vector<32x128xf32>
    %c0_17 = arith.constant 0 : index
    %c0_18 = arith.constant 0 : index
    %c0_19 = arith.constant 0 : index
    %16 = vector.load %arg15[%c0_17, %c0_18, %c0_19] : memref<3x2x32xf32, #tpu.memory_space<vmem>>, vector<1x2x32xf32>
    %17 = vector.shape_cast %16 : vector<1x2x32xf32> to vector<2x32xf32>
    %c0_20 = arith.constant 0 : index
    %c0_21 = arith.constant 0 : index
    %c0_22 = arith.constant 0 : index
    %18 = vector.load %arg16[%c0_20, %c0_21, %c0_22] : memref<3x2x32xf32, #tpu.memory_space<vmem>>, vector<1x2x32xf32>
    %19 = vector.shape_cast %18 : vector<1x2x32xf32> to vector<2x32xf32>
    %c0_23 = arith.constant 0 : index
    %c0_24 = arith.constant 0 : index
    %c0_25 = arith.constant 0 : index
    %20 = vector.load %arg17[%c0_23, %c0_24, %c0_25] : memref<2x8x128xf32, #tpu.memory_space<vmem>>, vector<2x1x128xf32>
    %21 = vector.shape_cast %20 : vector<2x1x128xf32> to vector<2x128xf32>
    %cst_26 = arith.constant dense<0.000000e+00> : vector<2x128xf32>
    %22 = tpu.matmul %17, %15, %cst_26 {dimension_numbers = #tpu.dot_dimension_numbers<[1], [0], [0], [1], [0, 0, 1, 1], [], []>} : vector<2x32xf32>, vector<32x128xf32>, vector<2x128xf32> -> vector<2x128xf32>
    %23 = arith.addf %21, %22 : vector<2x128xf32>
    %24 = vector.extract_strided_slice %23 {offsets = [0, 0], sizes = [2, 32], strides = [1, 1]} : vector<2x128xf32> to vector<2x32xf32>
    %25 = arith.negf %24 : vector<2x32xf32>
    %26 = math.exp %25 : vector<2x32xf32>
    %cst_27 = arith.constant 1.000000e+00 : f32
    %27 = vector.broadcast %cst_27 : f32 to vector<2x32xf32>
    %28 = arith.addf %27, %26 : vector<2x32xf32>
    %29 = arith.divf %27, %28 : vector<2x32xf32>
    %30 = vector.extract_strided_slice %23 {offsets = [0, 32], sizes = [2, 32], strides = [1, 1]} : vector<2x128xf32> to vector<2x32xf32>
    %31 = arith.negf %30 : vector<2x32xf32>
    %32 = math.exp %31 : vector<2x32xf32>
    %cst_28 = arith.constant 1.000000e+00 : f32
    %33 = vector.broadcast %cst_28 : f32 to vector<2x32xf32>
    %34 = arith.addf %33, %32 : vector<2x32xf32>
    %35 = arith.divf %33, %34 : vector<2x32xf32>
    %36 = vector.extract_strided_slice %23 {offsets = [0, 64], sizes = [2, 32], strides = [1, 1]} : vector<2x128xf32> to vector<2x32xf32>
    %37 = math.tanh %36 : vector<2x32xf32>
    %38 = vector.extract_strided_slice %23 {offsets = [0, 96], sizes = [2, 32], strides = [1, 1]} : vector<2x128xf32> to vector<2x32xf32>
    %39 = arith.negf %38 : vector<2x32xf32>
    %40 = math.exp %39 : vector<2x32xf32>
    %cst_29 = arith.constant 1.000000e+00 : f32
    %41 = vector.broadcast %cst_29 : f32 to vector<2x32xf32>
    %42 = arith.addf %41, %40 : vector<2x32xf32>
    %43 = arith.divf %41, %42 : vector<2x32xf32>
    %44 = arith.mulf %35, %19 : vector<2x32xf32>
    %45 = arith.mulf %29, %37 : vector<2x32xf32>
    %46 = arith.addf %44, %45 : vector<2x32xf32>
    %47 = math.tanh %46 : vector<2x32xf32>
    %48 = arith.mulf %43, %47 : vector<2x32xf32>
    %c0_30 = arith.constant 0 : index
    %c0_31 = arith.constant 0 : index
    %c0_32 = arith.constant 0 : index
    %49 = vector.load %arg18[%c0_30, %c0_31, %c0_32] : memref<2x8x32xf32, #tpu.memory_space<vmem>>, vector<2x1x32xf32>
    %50 = vector.shape_cast %49 : vector<2x1x32xf32> to vector<2x32xf32>
    %51 = vector.shape_cast %48 : vector<2x32xf32> to vector<2x1x32xf32>
    tpu.vector_store %arg18[%c0_30, %c0_31, %c0_32], %51 {strides = array<i32>} : memref<2x8x32xf32, #tpu.memory_space<vmem>>, vector<2x1x32xf32>,
    %c0_33 = arith.constant 0 : index
    %c1 = arith.constant 1 : index
    %c0_34 = arith.constant 0 : index
    %52 = vector.load %arg17[%c0_33, %c1, %c0_34] : memref<2x8x128xf32, #tpu.memory_space<vmem>>, vector<2x1x128xf32>
    %53 = vector.shape_cast %52 : vector<2x1x128xf32> to vector<2x128xf32>
    %cst_35 = arith.constant dense<0.000000e+00> : vector<2x128xf32>
    %54 = tpu.matmul %48, %15, %cst_35 {dimension_numbers = #tpu.dot_dimension_numbers<[1], [0], [0], [1], [0, 0, 1, 1], [], []>} : vector<2x32xf32>, vector<32x128xf32>, vector<2x128xf32> -> vector<2x128xf32>
    %55 = arith.addf %53, %54 : vector<2x128xf32>
    %56 = vector.extract_strided_slice %55 {offsets = [0, 0], sizes = [2, 32], strides = [1, 1]} : vector<2x128xf32> to vector<2x32xf32>
    %57 = arith.negf %56 : vector<2x32xf32>
    %58 = math.exp %57 : vector<2x32xf32>
    %cst_36 = arith.constant 1.000000e+00 : f32
    %59 = vector.broadcast %cst_36 : f32 to vector<2x32xf32>
    %60 = arith.addf %59, %58 : vector<2x32xf32>
    %61 = arith.divf %59, %60 : vector<2x32xf32>
    %62 = vector.extract_strided_slice %55 {offsets = [0, 32], sizes = [2, 32], strides = [1, 1]} : vector<2x128xf32> to vector<2x32xf32>
    %63 = arith.negf %62 : vector<2x32xf32>
    %64 = math.exp %63 : vector<2x32xf32>
    %cst_37 = arith.constant 1.000000e+00 : f32
    %65 = vector.broadcast %cst_37 : f32 to vector<2x32xf32>
    %66 = arith.addf %65, %64 : vector<2x32xf32>
    %67 = arith.divf %65, %66 : vector<2x32xf32>
    %68 = vector.extract_strided_slice %55 {offsets = [0, 64], sizes = [2, 32], strides = [1, 1]} : vector<2x128xf32> to vector<2x32xf32>
    %69 = math.tanh %68 : vector<2x32xf32>
    %70 = vector.extract_strided_slice %55 {offsets = [0, 96], sizes = [2, 32], strides = [1, 1]} : vector<2x128xf32> to vector<2x32xf32>
    %71 = arith.negf %70 : vector<2x32xf32>
    %72 = math.exp %71 : vector<2x32xf32>
    %cst_38 = arith.constant 1.000000e+00 : f32
    %73 = vector.broadcast %cst_38 : f32 to vector<2x32xf32>
    %74 = arith.addf %73, %72 : vector<2x32xf32>
    %75 = arith.divf %73, %74 : vector<2x32xf32>
    %76 = arith.mulf %67, %46 : vector<2x32xf32>
    %77 = arith.mulf %61, %69 : vector<2x32xf32>
    %78 = arith.addf %76, %77 : vector<2x32xf32>
    %79 = math.tanh %78 : vector<2x32xf32>
    %80 = arith.mulf %75, %79 : vector<2x32xf32>
    %c0_39 = arith.constant 0 : index
    %c1_40 = arith.constant 1 : index
    %c0_41 = arith.constant 0 : index
    %81 = vector.load %arg18[%c0_39, %c1_40, %c0_41] : memref<2x8x32xf32, #tpu.memory_space<vmem>>, vector<2x1x32xf32>
    %82 = vector.shape_cast %81 : vector<2x1x32xf32> to vector<2x32xf32>
    %83 = vector.shape_cast %80 : vector<2x32xf32> to vector<2x1x32xf32>
    tpu.vector_store %arg18[%c0_39, %c1_40, %c0_41], %83 {strides = array<i32>} : memref<2x8x32xf32, #tpu.memory_space<vmem>>, vector<2x1x32xf32>,
    %c0_42 = arith.constant 0 : index
    %c2 = arith.constant 2 : index
    %c0_43 = arith.constant 0 : index
    %84 = vector.load %arg17[%c0_42, %c2, %c0_43] : memref<2x8x128xf32, #tpu.memory_space<vmem>>, vector<2x1x128xf32>
    %85 = vector.shape_cast %84 : vector<2x1x128xf32> to vector<2x128xf32>
    %cst_44 = arith.constant dense<0.000000e+00> : vector<2x128xf32>
    %86 = tpu.matmul %80, %15, %cst_44 {dimension_numbers = #tpu.dot_dimension_numbers<[1], [0], [0], [1], [0, 0, 1, 1], [], []>} : vector<2x32xf32>, vector<32x128xf32>, vector<2x128xf32> -> vector<2x128xf32>
    %87 = arith.addf %85, %86 : vector<2x128xf32>
    %88 = vector.extract_strided_slice %87 {offsets = [0, 0], sizes = [2, 32], strides = [1, 1]} : vector<2x128xf32> to vector<2x32xf32>
    %89 = arith.negf %88 : vector<2x32xf32>
    %90 = math.exp %89 : vector<2x32xf32>
    %cst_45 = arith.constant 1.000000e+00 : f32
    %91 = vector.broadcast %cst_45 : f32 to vector<2x32xf32>
    %92 = arith.addf %91, %90 : vector<2x32xf32>
    %93 = arith.divf %91, %92 : vector<2x32xf32>
    %94 = vector.extract_strided_slice %87 {offsets = [0, 32], sizes = [2, 32], strides = [1, 1]} : vector<2x128xf32> to vector<2x32xf32>
    %95 = arith.negf %94 : vector<2x32xf32>
    %96 = math.exp %95 : vector<2x32xf32>
    %cst_46 = arith.constant 1.000000e+00 : f32
    %97 = vector.broadcast %cst_46 : f32 to vector<2x32xf32>
    %98 = arith.addf %97, %96 : vector<2x32xf32>
    %99 = arith.divf %97, %98 : vector<2x32xf32>
    %100 = vector.extract_strided_slice %87 {offsets = [0, 64], sizes = [2, 32], strides = [1, 1]} : vector<2x128xf32> to vector<2x32xf32>
    %101 = math.tanh %100 : vector<2x32xf32>
    %102 = vector.extract_strided_slice %87 {offsets = [0, 96], sizes = [2, 32], strides = [1, 1]} : vector<2x128xf32> to vector<2x32xf32>
    %103 = arith.negf %102 : vector<2x32xf32>
    %104 = math.exp %103 : vector<2x32xf32>
    %cst_47 = arith.constant 1.000000e+00 : f32
    %105 = vector.broadcast %cst_47 : f32 to vector<2x32xf32>
    %106 = arith.addf %105, %104 : vector<2x32xf32>
    %107 = arith.divf %105, %106 : vector<2x32xf32>
    %108 = arith.mulf %99, %78 : vector<2x32xf32>
    %109 = arith.mulf %93, %101 : vector<2x32xf32>
    %110 = arith.addf %108, %109 : vector<2x32xf32>
    %111 = math.tanh %110 : vector<2x32xf32>
    %112 = arith.mulf %107, %111 : vector<2x32xf32>
    %c0_48 = arith.constant 0 : index
    %c2_49 = arith.constant 2 : index
    %c0_50 = arith.constant 0 : index
    %113 = vector.load %arg18[%c0_48, %c2_49, %c0_50] : memref<2x8x32xf32, #tpu.memory_space<vmem>>, vector<2x1x32xf32>
    %114 = vector.shape_cast %113 : vector<2x1x32xf32> to vector<2x32xf32>
    %115 = vector.shape_cast %112 : vector<2x32xf32> to vector<2x1x32xf32>
    tpu.vector_store %arg18[%c0_48, %c2_49, %c0_50], %115 {strides = array<i32>} : memref<2x8x32xf32, #tpu.memory_space<vmem>>, vector<2x1x32xf32>,
    %c0_51 = arith.constant 0 : index
    %c3 = arith.constant 3 : index
    %c0_52 = arith.constant 0 : index
    %116 = vector.load %arg17[%c0_51, %c3, %c0_52] : memref<2x8x128xf32, #tpu.memory_space<vmem>>, vector<2x1x128xf32>
    %117 = vector.shape_cast %116 : vector<2x1x128xf32> to vector<2x128xf32>
    %cst_53 = arith.constant dense<0.000000e+00> : vector<2x128xf32>
    %118 = tpu.matmul %112, %15, %cst_53 {dimension_numbers = #tpu.dot_dimension_numbers<[1], [0], [0], [1], [0, 0, 1, 1], [], []>} : vector<2x32xf32>, vector<32x128xf32>, vector<2x128xf32> -> vector<2x128xf32>
    %119 = arith.addf %117, %118 : vector<2x128xf32>
    %120 = vector.extract_strided_slice %119 {offsets = [0, 0], sizes = [2, 32], strides = [1, 1]} : vector<2x128xf32> to vector<2x32xf32>
    %121 = arith.negf %120 : vector<2x32xf32>
    %122 = math.exp %121 : vector<2x32xf32>
    %cst_54 = arith.constant 1.000000e+00 : f32
    %123 = vector.broadcast %cst_54 : f32 to vector<2x32xf32>
    %124 = arith.addf %123, %122 : vector<2x32xf32>
    %125 = arith.divf %123, %124 : vector<2x32xf32>
    %126 = vector.extract_strided_slice %119 {offsets = [0, 32], sizes = [2, 32], strides = [1, 1]} : vector<2x128xf32> to vector<2x32xf32>
    %127 = arith.negf %126 : vector<2x32xf32>
    %128 = math.exp %127 : vector<2x32xf32>
    %cst_55 = arith.constant 1.000000e+00 : f32
    %129 = vector.broadcast %cst_55 : f32 to vector<2x32xf32>
    %130 = arith.addf %129, %128 : vector<2x32xf32>
    %131 = arith.divf %129, %130 : vector<2x32xf32>
    %132 = vector.extract_strided_slice %119 {offsets = [0, 64], sizes = [2, 32], strides = [1, 1]} : vector<2x128xf32> to vector<2x32xf32>
    %133 = math.tanh %132 : vector<2x32xf32>
    %134 = vector.extract_strided_slice %119 {offsets = [0, 96], sizes = [2, 32], strides = [1, 1]} : vector<2x128xf32> to vector<2x32xf32>
    %135 = arith.negf %134 : vector<2x32xf32>
    %136 = math.exp %135 : vector<2x32xf32>
    %cst_56 = arith.constant 1.000000e+00 : f32
    %137 = vector.broadcast %cst_56 : f32 to vector<2x32xf32>
    %138 = arith.addf %137, %136 : vector<2x32xf32>
    %139 = arith.divf %137, %138 : vector<2x32xf32>
    %140 = arith.mulf %131, %110 : vector<2x32xf32>
    %141 = arith.mulf %125, %133 : vector<2x32xf32>
    %142 = arith.addf %140, %141 : vector<2x32xf32>
    %143 = math.tanh %142 : vector<2x32xf32>
    %144 = arith.mulf %139, %143 : vector<2x32xf32>
    %c0_57 = arith.constant 0 : index
    %c3_58 = arith.constant 3 : index
    %c0_59 = arith.constant 0 : index
    %145 = vector.load %arg18[%c0_57, %c3_58, %c0_59] : memref<2x8x32xf32, #tpu.memory_space<vmem>>, vector<2x1x32xf32>
    %146 = vector.shape_cast %145 : vector<2x1x32xf32> to vector<2x32xf32>
    %147 = vector.shape_cast %144 : vector<2x32xf32> to vector<2x1x32xf32>
    tpu.vector_store %arg18[%c0_57, %c3_58, %c0_59], %147 {strides = array<i32>} : memref<2x8x32xf32, #tpu.memory_space<vmem>>, vector<2x1x32xf32>,
    %c0_60 = arith.constant 0 : index
    %c4 = arith.constant 4 : index
    %c0_61 = arith.constant 0 : index
    %148 = vector.load %arg17[%c0_60, %c4, %c0_61] : memref<2x8x128xf32, #tpu.memory_space<vmem>>, vector<2x1x128xf32>
    %149 = vector.shape_cast %148 : vector<2x1x128xf32> to vector<2x128xf32>
    %cst_62 = arith.constant dense<0.000000e+00> : vector<2x128xf32>
    %150 = tpu.matmul %144, %15, %cst_62 {dimension_numbers = #tpu.dot_dimension_numbers<[1], [0], [0], [1], [0, 0, 1, 1], [], []>} : vector<2x32xf32>, vector<32x128xf32>, vector<2x128xf32> -> vector<2x128xf32>
    %151 = arith.addf %149, %150 : vector<2x128xf32>
    %152 = vector.extract_strided_slice %151 {offsets = [0, 0], sizes = [2, 32], strides = [1, 1]} : vector<2x128xf32> to vector<2x32xf32>
    %153 = arith.negf %152 : vector<2x32xf32>
    %154 = math.exp %153 : vector<2x32xf32>
    %cst_63 = arith.constant 1.000000e+00 : f32
    %155 = vector.broadcast %cst_63 : f32 to vector<2x32xf32>
    %156 = arith.addf %155, %154 : vector<2x32xf32>
    %157 = arith.divf %155, %156 : vector<2x32xf32>
    %158 = vector.extract_strided_slice %151 {offsets = [0, 32], sizes = [2, 32], strides = [1, 1]} : vector<2x128xf32> to vector<2x32xf32>
    %159 = arith.negf %158 : vector<2x32xf32>
    %160 = math.exp %159 : vector<2x32xf32>
    %cst_64 = arith.constant 1.000000e+00 : f32
    %161 = vector.broadcast %cst_64 : f32 to vector<2x32xf32>
    %162 = arith.addf %161, %160 : vector<2x32xf32>
    %163 = arith.divf %161, %162 : vector<2x32xf32>
    %164 = vector.extract_strided_slice %151 {offsets = [0, 64], sizes = [2, 32], strides = [1, 1]} : vector<2x128xf32> to vector<2x32xf32>
    %165 = math.tanh %164 : vector<2x32xf32>
    %166 = vector.extract_strided_slice %151 {offsets = [0, 96], sizes = [2, 32], strides = [1, 1]} : vector<2x128xf32> to vector<2x32xf32>
    %167 = arith.negf %166 : vector<2x32xf32>
    %168 = math.exp %167 : vector<2x32xf32>
    %cst_65 = arith.constant 1.000000e+00 : f32
    %169 = vector.broadcast %cst_65 : f32 to vector<2x32xf32>
    %170 = arith.addf %169, %168 : vector<2x32xf32>
    %171 = arith.divf %169, %170 : vector<2x32xf32>
    %172 = arith.mulf %163, %142 : vector<2x32xf32>
    %173 = arith.mulf %157, %165 : vector<2x32xf32>
    %174 = arith.addf %172, %173 : vector<2x32xf32>
    %175 = math.tanh %174 : vector<2x32xf32>
    %176 = arith.mulf %171, %175 : vector<2x32xf32>
    %c0_66 = arith.constant 0 : index
    %c4_67 = arith.constant 4 : index
    %c0_68 = arith.constant 0 : index
    %177 = vector.load %arg18[%c0_66, %c4_67, %c0_68] : memref<2x8x32xf32, #tpu.memory_space<vmem>>, vector<2x1x32xf32>
    %178 = vector.shape_cast %177 : vector<2x1x32xf32> to vector<2x32xf32>
    %179 = vector.shape_cast %176 : vector<2x32xf32> to vector<2x1x32xf32>
    tpu.vector_store %arg18[%c0_66, %c4_67, %c0_68], %179 {strides = array<i32>} : memref<2x8x32xf32, #tpu.memory_space<vmem>>, vector<2x1x32xf32>,
    %c0_69 = arith.constant 0 : index
    %c5 = arith.constant 5 : index
    %c0_70 = arith.constant 0 : index
    %180 = vector.load %arg17[%c0_69, %c5, %c0_70] : memref<2x8x128xf32, #tpu.memory_space<vmem>>, vector<2x1x128xf32>
    %181 = vector.shape_cast %180 : vector<2x1x128xf32> to vector<2x128xf32>
    %cst_71 = arith.constant dense<0.000000e+00> : vector<2x128xf32>
    %182 = tpu.matmul %176, %15, %cst_71 {dimension_numbers = #tpu.dot_dimension_numbers<[1], [0], [0], [1], [0, 0, 1, 1], [], []>} : vector<2x32xf32>, vector<32x128xf32>, vector<2x128xf32> -> vector<2x128xf32>
    %183 = arith.addf %181, %182 : vector<2x128xf32>
    %184 = vector.extract_strided_slice %183 {offsets = [0, 0], sizes = [2, 32], strides = [1, 1]} : vector<2x128xf32> to vector<2x32xf32>
    %185 = arith.negf %184 : vector<2x32xf32>
    %186 = math.exp %185 : vector<2x32xf32>
    %cst_72 = arith.constant 1.000000e+00 : f32
    %187 = vector.broadcast %cst_72 : f32 to vector<2x32xf32>
    %188 = arith.addf %187, %186 : vector<2x32xf32>
    %189 = arith.divf %187, %188 : vector<2x32xf32>
    %190 = vector.extract_strided_slice %183 {offsets = [0, 32], sizes = [2, 32], strides = [1, 1]} : vector<2x128xf32> to vector<2x32xf32>
    %191 = arith.negf %190 : vector<2x32xf32>
    %192 = math.exp %191 : vector<2x32xf32>
    %cst_73 = arith.constant 1.000000e+00 : f32
    %193 = vector.broadcast %cst_73 : f32 to vector<2x32xf32>
    %194 = arith.addf %193, %192 : vector<2x32xf32>
    %195 = arith.divf %193, %194 : vector<2x32xf32>
    %196 = vector.extract_strided_slice %183 {offsets = [0, 64], sizes = [2, 32], strides = [1, 1]} : vector<2x128xf32> to vector<2x32xf32>
    %197 = math.tanh %196 : vector<2x32xf32>
    %198 = vector.extract_strided_slice %183 {offsets = [0, 96], sizes = [2, 32], strides = [1, 1]} : vector<2x128xf32> to vector<2x32xf32>
    %199 = arith.negf %198 : vector<2x32xf32>
    %200 = math.exp %199 : vector<2x32xf32>
    %cst_74 = arith.constant 1.000000e+00 : f32
    %201 = vector.broadcast %cst_74 : f32 to vector<2x32xf32>
    %202 = arith.addf %201, %200 : vector<2x32xf32>
    %203 = arith.divf %201, %202 : vector<2x32xf32>
    %204 = arith.mulf %195, %174 : vector<2x32xf32>
    %205 = arith.mulf %189, %197 : vector<2x32xf32>
    %206 = arith.addf %204, %205 : vector<2x32xf32>
    %207 = math.tanh %206 : vector<2x32xf32>
    %208 = arith.mulf %203, %207 : vector<2x32xf32>
    %c0_75 = arith.constant 0 : index
    %c5_76 = arith.constant 5 : index
    %c0_77 = arith.constant 0 : index
    %209 = vector.load %arg18[%c0_75, %c5_76, %c0_77] : memref<2x8x32xf32, #tpu.memory_space<vmem>>, vector<2x1x32xf32>
    %210 = vector.shape_cast %209 : vector<2x1x32xf32> to vector<2x32xf32>
    %211 = vector.shape_cast %208 : vector<2x32xf32> to vector<2x1x32xf32>
    tpu.vector_store %arg18[%c0_75, %c5_76, %c0_77], %211 {strides = array<i32>} : memref<2x8x32xf32, #tpu.memory_space<vmem>>, vector<2x1x32xf32>,
    %c0_78 = arith.constant 0 : index
    %c6 = arith.constant 6 : index
    %c0_79 = arith.constant 0 : index
    %212 = vector.load %arg17[%c0_78, %c6, %c0_79] : memref<2x8x128xf32, #tpu.memory_space<vmem>>, vector<2x1x128xf32>
    %213 = vector.shape_cast %212 : vector<2x1x128xf32> to vector<2x128xf32>
    %cst_80 = arith.constant dense<0.000000e+00> : vector<2x128xf32>
    %214 = tpu.matmul %208, %15, %cst_80 {dimension_numbers = #tpu.dot_dimension_numbers<[1], [0], [0], [1], [0, 0, 1, 1], [], []>} : vector<2x32xf32>, vector<32x128xf32>, vector<2x128xf32> -> vector<2x128xf32>
    %215 = arith.addf %213, %214 : vector<2x128xf32>
    %216 = vector.extract_strided_slice %215 {offsets = [0, 0], sizes = [2, 32], strides = [1, 1]} : vector<2x128xf32> to vector<2x32xf32>
    %217 = arith.negf %216 : vector<2x32xf32>
    %218 = math.exp %217 : vector<2x32xf32>
    %cst_81 = arith.constant 1.000000e+00 : f32
    %219 = vector.broadcast %cst_81 : f32 to vector<2x32xf32>
    %220 = arith.addf %219, %218 : vector<2x32xf32>
    %221 = arith.divf %219, %220 : vector<2x32xf32>
    %222 = vector.extract_strided_slice %215 {offsets = [0, 32], sizes = [2, 32], strides = [1, 1]} : vector<2x128xf32> to vector<2x32xf32>
    %223 = arith.negf %222 : vector<2x32xf32>
    %224 = math.exp %223 : vector<2x32xf32>
    %cst_82 = arith.constant 1.000000e+00 : f32
    %225 = vector.broadcast %cst_82 : f32 to vector<2x32xf32>
    %226 = arith.addf %225, %224 : vector<2x32xf32>
    %227 = arith.divf %225, %226 : vector<2x32xf32>
    %228 = vector.extract_strided_slice %215 {offsets = [0, 64], sizes = [2, 32], strides = [1, 1]} : vector<2x128xf32> to vector<2x32xf32>
    %229 = math.tanh %228 : vector<2x32xf32>
    %230 = vector.extract_strided_slice %215 {offsets = [0, 96], sizes = [2, 32], strides = [1, 1]} : vector<2x128xf32> to vector<2x32xf32>
    %231 = arith.negf %230 : vector<2x32xf32>
    %232 = math.exp %231 : vector<2x32xf32>
    %cst_83 = arith.constant 1.000000e+00 : f32
    %233 = vector.broadcast %cst_83 : f32 to vector<2x32xf32>
    %234 = arith.addf %233, %232 : vector<2x32xf32>
    %235 = arith.divf %233, %234 : vector<2x32xf32>
    %236 = arith.mulf %227, %206 : vector<2x32xf32>
    %237 = arith.mulf %221, %229 : vector<2x32xf32>
    %238 = arith.addf %236, %237 : vector<2x32xf32>
    %239 = math.tanh %238 : vector<2x32xf32>
    %240 = arith.mulf %235, %239 : vector<2x32xf32>
    %c0_84 = arith.constant 0 : index
    %c6_85 = arith.constant 6 : index
    %c0_86 = arith.constant 0 : index
    %241 = vector.load %arg18[%c0_84, %c6_85, %c0_86] : memref<2x8x32xf32, #tpu.memory_space<vmem>>, vector<2x1x32xf32>
    %242 = vector.shape_cast %241 : vector<2x1x32xf32> to vector<2x32xf32>
    %243 = vector.shape_cast %240 : vector<2x32xf32> to vector<2x1x32xf32>
    tpu.vector_store %arg18[%c0_84, %c6_85, %c0_86], %243 {strides = array<i32>} : memref<2x8x32xf32, #tpu.memory_space<vmem>>, vector<2x1x32xf32>,
    %c0_87 = arith.constant 0 : index
    %c7 = arith.constant 7 : index
    %c0_88 = arith.constant 0 : index
    %244 = vector.load %arg17[%c0_87, %c7, %c0_88] : memref<2x8x128xf32, #tpu.memory_space<vmem>>, vector<2x1x128xf32>
    %245 = vector.shape_cast %244 : vector<2x1x128xf32> to vector<2x128xf32>
    %cst_89 = arith.constant dense<0.000000e+00> : vector<2x128xf32>
    %246 = tpu.matmul %240, %15, %cst_89 {dimension_numbers = #tpu.dot_dimension_numbers<[1], [0], [0], [1], [0, 0, 1, 1], [], []>} : vector<2x32xf32>, vector<32x128xf32>, vector<2x128xf32> -> vector<2x128xf32>
    %247 = arith.addf %245, %246 : vector<2x128xf32>
    %248 = vector.extract_strided_slice %247 {offsets = [0, 0], sizes = [2, 32], strides = [1, 1]} : vector<2x128xf32> to vector<2x32xf32>
    %249 = arith.negf %248 : vector<2x32xf32>
    %250 = math.exp %249 : vector<2x32xf32>
    %cst_90 = arith.constant 1.000000e+00 : f32
    %251 = vector.broadcast %cst_90 : f32 to vector<2x32xf32>
    %252 = arith.addf %251, %250 : vector<2x32xf32>
    %253 = arith.divf %251, %252 : vector<2x32xf32>
    %254 = vector.extract_strided_slice %247 {offsets = [0, 32], sizes = [2, 32], strides = [1, 1]} : vector<2x128xf32> to vector<2x32xf32>
    %255 = arith.negf %254 : vector<2x32xf32>
    %256 = math.exp %255 : vector<2x32xf32>
    %cst_91 = arith.constant 1.000000e+00 : f32
    %257 = vector.broadcast %cst_91 : f32 to vector<2x32xf32>
    %258 = arith.addf %257, %256 : vector<2x32xf32>
    %259 = arith.divf %257, %258 : vector<2x32xf32>
    %260 = vector.extract_strided_slice %247 {offsets = [0, 64], sizes = [2, 32], strides = [1, 1]} : vector<2x128xf32> to vector<2x32xf32>
    %261 = math.tanh %260 : vector<2x32xf32>
    %262 = vector.extract_strided_slice %247 {offsets = [0, 96], sizes = [2, 32], strides = [1, 1]} : vector<2x128xf32> to vector<2x32xf32>
    %263 = arith.negf %262 : vector<2x32xf32>
    %264 = math.exp %263 : vector<2x32xf32>
    %cst_92 = arith.constant 1.000000e+00 : f32
    %265 = vector.broadcast %cst_92 : f32 to vector<2x32xf32>
    %266 = arith.addf %265, %264 : vector<2x32xf32>
    %267 = arith.divf %265, %266 : vector<2x32xf32>
    %268 = arith.mulf %259, %238 : vector<2x32xf32>
    %269 = arith.mulf %253, %261 : vector<2x32xf32>
    %270 = arith.addf %268, %269 : vector<2x32xf32>
    %271 = math.tanh %270 : vector<2x32xf32>
    %272 = arith.mulf %267, %271 : vector<2x32xf32>
    %c0_93 = arith.constant 0 : index
    %c7_94 = arith.constant 7 : index
    %c0_95 = arith.constant 0 : index
    %273 = vector.load %arg18[%c0_93, %c7_94, %c0_95] : memref<2x8x32xf32, #tpu.memory_space<vmem>>, vector<2x1x32xf32>
    %274 = vector.shape_cast %273 : vector<2x1x32xf32> to vector<2x32xf32>
    %275 = vector.shape_cast %272 : vector<2x32xf32> to vector<2x1x32xf32>
    tpu.vector_store %arg18[%c0_93, %c7_94, %c0_95], %275 {strides = array<i32>} : memref<2x8x32xf32, #tpu.memory_space<vmem>>, vector<2x1x32xf32>,
    %c0_96 = arith.constant 0 : index
    %c0_97 = arith.constant 0 : index
    %c0_98 = arith.constant 0 : index
    %276 = vector.load %arg15[%c0_96, %c0_97, %c0_98] : memref<3x2x32xf32, #tpu.memory_space<vmem>>, vector<1x2x32xf32>
    %277 = vector.shape_cast %276 : vector<1x2x32xf32> to vector<2x32xf32>
    %278 = vector.shape_cast %272 : vector<2x32xf32> to vector<1x2x32xf32>
    tpu.vector_store %arg15[%c0_96, %c0_97, %c0_98], %278 {strides = array<i32>} : memref<3x2x32xf32, #tpu.memory_space<vmem>>, vector<1x2x32xf32>,
    %c0_99 = arith.constant 0 : index
    %c0_100 = arith.constant 0 : index
    %c0_101 = arith.constant 0 : index
    %279 = vector.load %arg16[%c0_99, %c0_100, %c0_101] : memref<3x2x32xf32, #tpu.memory_space<vmem>>, vector<1x2x32xf32>
    %280 = vector.shape_cast %279 : vector<1x2x32xf32> to vector<2x32xf32>
    %281 = vector.shape_cast %270 : vector<2x32xf32> to vector<1x2x32xf32>
    tpu.vector_store %arg16[%c0_99, %c0_100, %c0_101], %281 {strides = array<i32>} : memref<3x2x32xf32, #tpu.memory_space<vmem>>, vector<1x2x32xf32>,
    %c0_102 = arith.constant 0 : index
    %c0_103 = arith.constant 0 : index
    %c0_104 = arith.constant 0 : index
    %282 = vector.load %arg18[%c0_102, %c0_103, %c0_104] : memref<2x8x32xf32, #tpu.memory_space<vmem>>, vector<2x8x32xf32>
    %283 = vector.shape_cast %282 : vector<2x8x32xf32> to vector<16x32xf32>
    %c0_105 = arith.constant 0 : index
    %c0_106 = arith.constant 0 : index
    %c0_107 = arith.constant 0 : index
    %284 = vector.load %arg4[%c0_105, %c0_106, %c0_107] : memref<2x32x128xf32, #tpu.memory_space<vmem>>, vector<1x32x128xf32>
    %285 = vector.shape_cast %284 : vector<1x32x128xf32> to vector<32x128xf32>
    %cst_108 = arith.constant dense<0.000000e+00> : vector<16x128xf32>
    %286 = tpu.matmul %283, %285, %cst_108 {dimension_numbers = #tpu.dot_dimension_numbers<[1], [0], [0], [1], [0, 0, 1, 1], [], []>} : vector<16x32xf32>, vector<32x128xf32>, vector<16x128xf32> -> vector<16x128xf32>
    %c0_109 = arith.constant 0 : index
    %c0_110 = arith.constant 0 : index
    %c0_111 = arith.constant 0 : index
    %287 = vector.load %arg7[%c0_109, %c0_110, %c0_111] : memref<2x1x128xf32, #tpu.memory_space<vmem>>, vector<1x1x128xf32>
    %288 = vector.shape_cast %287 : vector<1x1x128xf32> to vector<1x128xf32>
    %289 = vector.broadcast %288 : vector<1x128xf32> to vector<16x128xf32>
    %290 = arith.addf %286, %289 : vector<16x128xf32>
    %291 = vector.shape_cast %290 : vector<16x128xf32> to vector<2x8x128xf32>
    %c0_112 = arith.constant 0 : index
    %c0_113 = arith.constant 0 : index
    %c0_114 = arith.constant 0 : index
    %292 = vector.load %arg17[%c0_112, %c0_113, %c0_114] : memref<2x8x128xf32, #tpu.memory_space<vmem>>, vector<2x8x128xf32>
    tpu.vector_store %arg17[%c0_112, %c0_113, %c0_114], %291 {strides = array<i32>} : memref<2x8x128xf32, #tpu.memory_space<vmem>>, vector<2x8x128xf32>,
    %c1_115 = arith.constant 1 : index
    %c0_116 = arith.constant 0 : index
    %c0_117 = arith.constant 0 : index
    %293 = vector.load %arg5[%c1_115, %c0_116, %c0_117] : memref<3x32x128xf32, #tpu.memory_space<vmem>>, vector<1x32x128xf32>
    %294 = vector.shape_cast %293 : vector<1x32x128xf32> to vector<32x128xf32>
    %c1_118 = arith.constant 1 : index
    %c0_119 = arith.constant 0 : index
    %c0_120 = arith.constant 0 : index
    %295 = vector.load %arg15[%c1_118, %c0_119, %c0_120] : memref<3x2x32xf32, #tpu.memory_space<vmem>>, vector<1x2x32xf32>
    %296 = vector.shape_cast %295 : vector<1x2x32xf32> to vector<2x32xf32>
    %c1_121 = arith.constant 1 : index
    %c0_122 = arith.constant 0 : index
    %c0_123 = arith.constant 0 : index
    %297 = vector.load %arg16[%c1_121, %c0_122, %c0_123] : memref<3x2x32xf32, #tpu.memory_space<vmem>>, vector<1x2x32xf32>
    %298 = vector.shape_cast %297 : vector<1x2x32xf32> to vector<2x32xf32>
    %c0_124 = arith.constant 0 : index
    %c0_125 = arith.constant 0 : index
    %c0_126 = arith.constant 0 : index
    %299 = vector.load %arg17[%c0_124, %c0_125, %c0_126] : memref<2x8x128xf32, #tpu.memory_space<vmem>>, vector<2x1x128xf32>
    %300 = vector.shape_cast %299 : vector<2x1x128xf32> to vector<2x128xf32>
    %cst_127 = arith.constant dense<0.000000e+00> : vector<2x128xf32>
    %301 = tpu.matmul %296, %294, %cst_127 {dimension_numbers = #tpu.dot_dimension_numbers<[1], [0], [0], [1], [0, 0, 1, 1], [], []>} : vector<2x32xf32>, vector<32x128xf32>, vector<2x128xf32> -> vector<2x128xf32>
    %302 = arith.addf %300, %301 : vector<2x128xf32>
    %303 = vector.extract_strided_slice %302 {offsets = [0, 0], sizes = [2, 32], strides = [1, 1]} : vector<2x128xf32> to vector<2x32xf32>
    %304 = arith.negf %303 : vector<2x32xf32>
    %305 = math.exp %304 : vector<2x32xf32>
    %cst_128 = arith.constant 1.000000e+00 : f32
    %306 = vector.broadcast %cst_128 : f32 to vector<2x32xf32>
    %307 = arith.addf %306, %305 : vector<2x32xf32>
    %308 = arith.divf %306, %307 : vector<2x32xf32>
    %309 = vector.extract_strided_slice %302 {offsets = [0, 32], sizes = [2, 32], strides = [1, 1]} : vector<2x128xf32> to vector<2x32xf32>
    %310 = arith.negf %309 : vector<2x32xf32>
    %311 = math.exp %310 : vector<2x32xf32>
    %cst_129 = arith.constant 1.000000e+00 : f32
    %312 = vector.broadcast %cst_129 : f32 to vector<2x32xf32>
    %313 = arith.addf %312, %311 : vector<2x32xf32>
    %314 = arith.divf %312, %313 : vector<2x32xf32>
    %315 = vector.extract_strided_slice %302 {offsets = [0, 64], sizes = [2, 32], strides = [1, 1]} : vector<2x128xf32> to vector<2x32xf32>
    %316 = math.tanh %315 : vector<2x32xf32>
    %317 = vector.extract_strided_slice %302 {offsets = [0, 96], sizes = [2, 32], strides = [1, 1]} : vector<2x128xf32> to vector<2x32xf32>
    %318 = arith.negf %317 : vector<2x32xf32>
    %319 = math.exp %318 : vector<2x32xf32>
    %cst_130 = arith.constant 1.000000e+00 : f32
    %320 = vector.broadcast %cst_130 : f32 to vector<2x32xf32>
    %321 = arith.addf %320, %319 : vector<2x32xf32>
    %322 = arith.divf %320, %321 : vector<2x32xf32>
    %323 = arith.mulf %314, %298 : vector<2x32xf32>
    %324 = arith.mulf %308, %316 : vector<2x32xf32>
    %325 = arith.addf %323, %324 : vector<2x32xf32>
    %326 = math.tanh %325 : vector<2x32xf32>
    %327 = arith.mulf %322, %326 : vector<2x32xf32>
    %c0_131 = arith.constant 0 : index
    %c0_132 = arith.constant 0 : index
    %c0_133 = arith.constant 0 : index
    %328 = vector.load %arg18[%c0_131, %c0_132, %c0_133] : memref<2x8x32xf32, #tpu.memory_space<vmem>>, vector<2x1x32xf32>
    %329 = vector.shape_cast %328 : vector<2x1x32xf32> to vector<2x32xf32>
    %330 = vector.shape_cast %327 : vector<2x32xf32> to vector<2x1x32xf32>
    tpu.vector_store %arg18[%c0_131, %c0_132, %c0_133], %330 {strides = array<i32>} : memref<2x8x32xf32, #tpu.memory_space<vmem>>, vector<2x1x32xf32>,
    %c0_134 = arith.constant 0 : index
    %c1_135 = arith.constant 1 : index
    %c0_136 = arith.constant 0 : index
    %331 = vector.load %arg17[%c0_134, %c1_135, %c0_136] : memref<2x8x128xf32, #tpu.memory_space<vmem>>, vector<2x1x128xf32>
    %332 = vector.shape_cast %331 : vector<2x1x128xf32> to vector<2x128xf32>
    %cst_137 = arith.constant dense<0.000000e+00> : vector<2x128xf32>
    %333 = tpu.matmul %327, %294, %cst_137 {dimension_numbers = #tpu.dot_dimension_numbers<[1], [0], [0], [1], [0, 0, 1, 1], [], []>} : vector<2x32xf32>, vector<32x128xf32>, vector<2x128xf32> -> vector<2x128xf32>
    %334 = arith.addf %332, %333 : vector<2x128xf32>
    %335 = vector.extract_strided_slice %334 {offsets = [0, 0], sizes = [2, 32], strides = [1, 1]} : vector<2x128xf32> to vector<2x32xf32>
    %336 = arith.negf %335 : vector<2x32xf32>
    %337 = math.exp %336 : vector<2x32xf32>
    %cst_138 = arith.constant 1.000000e+00 : f32
    %338 = vector.broadcast %cst_138 : f32 to vector<2x32xf32>
    %339 = arith.addf %338, %337 : vector<2x32xf32>
    %340 = arith.divf %338, %339 : vector<2x32xf32>
    %341 = vector.extract_strided_slice %334 {offsets = [0, 32], sizes = [2, 32], strides = [1, 1]} : vector<2x128xf32> to vector<2x32xf32>
    %342 = arith.negf %341 : vector<2x32xf32>
    %343 = math.exp %342 : vector<2x32xf32>
    %cst_139 = arith.constant 1.000000e+00 : f32
    %344 = vector.broadcast %cst_139 : f32 to vector<2x32xf32>
    %345 = arith.addf %344, %343 : vector<2x32xf32>
    %346 = arith.divf %344, %345 : vector<2x32xf32>
    %347 = vector.extract_strided_slice %334 {offsets = [0, 64], sizes = [2, 32], strides = [1, 1]} : vector<2x128xf32> to vector<2x32xf32>
    %348 = math.tanh %347 : vector<2x32xf32>
    %349 = vector.extract_strided_slice %334 {offsets = [0, 96], sizes = [2, 32], strides = [1, 1]} : vector<2x128xf32> to vector<2x32xf32>
    %350 = arith.negf %349 : vector<2x32xf32>
    %351 = math.exp %350 : vector<2x32xf32>
    %cst_140 = arith.constant 1.000000e+00 : f32
    %352 = vector.broadcast %cst_140 : f32 to vector<2x32xf32>
    %353 = arith.addf %352, %351 : vector<2x32xf32>
    %354 = arith.divf %352, %353 : vector<2x32xf32>
    %355 = arith.mulf %346, %325 : vector<2x32xf32>
    %356 = arith.mulf %340, %348 : vector<2x32xf32>
    %357 = arith.addf %355, %356 : vector<2x32xf32>
    %358 = math.tanh %357 : vector<2x32xf32>
    %359 = arith.mulf %354, %358 : vector<2x32xf32>
    %c0_141 = arith.constant 0 : index
    %c1_142 = arith.constant 1 : index
    %c0_143 = arith.constant 0 : index
    %360 = vector.load %arg18[%c0_141, %c1_142, %c0_143] : memref<2x8x32xf32, #tpu.memory_space<vmem>>, vector<2x1x32xf32>
    %361 = vector.shape_cast %360 : vector<2x1x32xf32> to vector<2x32xf32>
    %362 = vector.shape_cast %359 : vector<2x32xf32> to vector<2x1x32xf32>
    tpu.vector_store %arg18[%c0_141, %c1_142, %c0_143], %362 {strides = array<i32>} : memref<2x8x32xf32, #tpu.memory_space<vmem>>, vector<2x1x32xf32>,
    %c0_144 = arith.constant 0 : index
    %c2_145 = arith.constant 2 : index
    %c0_146 = arith.constant 0 : index
    %363 = vector.load %arg17[%c0_144, %c2_145, %c0_146] : memref<2x8x128xf32, #tpu.memory_space<vmem>>, vector<2x1x128xf32>
    %364 = vector.shape_cast %363 : vector<2x1x128xf32> to vector<2x128xf32>
    %cst_147 = arith.constant dense<0.000000e+00> : vector<2x128xf32>
    %365 = tpu.matmul %359, %294, %cst_147 {dimension_numbers = #tpu.dot_dimension_numbers<[1], [0], [0], [1], [0, 0, 1, 1], [], []>} : vector<2x32xf32>, vector<32x128xf32>, vector<2x128xf32> -> vector<2x128xf32>
    %366 = arith.addf %364, %365 : vector<2x128xf32>
    %367 = vector.extract_strided_slice %366 {offsets = [0, 0], sizes = [2, 32], strides = [1, 1]} : vector<2x128xf32> to vector<2x32xf32>
    %368 = arith.negf %367 : vector<2x32xf32>
    %369 = math.exp %368 : vector<2x32xf32>
    %cst_148 = arith.constant 1.000000e+00 : f32
    %370 = vector.broadcast %cst_148 : f32 to vector<2x32xf32>
    %371 = arith.addf %370, %369 : vector<2x32xf32>
    %372 = arith.divf %370, %371 : vector<2x32xf32>
    %373 = vector.extract_strided_slice %366 {offsets = [0, 32], sizes = [2, 32], strides = [1, 1]} : vector<2x128xf32> to vector<2x32xf32>
    %374 = arith.negf %373 : vector<2x32xf32>
    %375 = math.exp %374 : vector<2x32xf32>
    %cst_149 = arith.constant 1.000000e+00 : f32
    %376 = vector.broadcast %cst_149 : f32 to vector<2x32xf32>
    %377 = arith.addf %376, %375 : vector<2x32xf32>
    %378 = arith.divf %376, %377 : vector<2x32xf32>
    %379 = vector.extract_strided_slice %366 {offsets = [0, 64], sizes = [2, 32], strides = [1, 1]} : vector<2x128xf32> to vector<2x32xf32>
    %380 = math.tanh %379 : vector<2x32xf32>
    %381 = vector.extract_strided_slice %366 {offsets = [0, 96], sizes = [2, 32], strides = [1, 1]} : vector<2x128xf32> to vector<2x32xf32>
    %382 = arith.negf %381 : vector<2x32xf32>
    %383 = math.exp %382 : vector<2x32xf32>
    %cst_150 = arith.constant 1.000000e+00 : f32
    %384 = vector.broadcast %cst_150 : f32 to vector<2x32xf32>
    %385 = arith.addf %384, %383 : vector<2x32xf32>
    %386 = arith.divf %384, %385 : vector<2x32xf32>
    %387 = arith.mulf %378, %357 : vector<2x32xf32>
    %388 = arith.mulf %372, %380 : vector<2x32xf32>
    %389 = arith.addf %387, %388 : vector<2x32xf32>
    %390 = math.tanh %389 : vector<2x32xf32>
    %391 = arith.mulf %386, %390 : vector<2x32xf32>
    %c0_151 = arith.constant 0 : index
    %c2_152 = arith.constant 2 : index
    %c0_153 = arith.constant 0 : index
    %392 = vector.load %arg18[%c0_151, %c2_152, %c0_153] : memref<2x8x32xf32, #tpu.memory_space<vmem>>, vector<2x1x32xf32>
    %393 = vector.shape_cast %392 : vector<2x1x32xf32> to vector<2x32xf32>
    %394 = vector.shape_cast %391 : vector<2x32xf32> to vector<2x1x32xf32>
    tpu.vector_store %arg18[%c0_151, %c2_152, %c0_153], %394 {strides = array<i32>} : memref<2x8x32xf32, #tpu.memory_space<vmem>>, vector<2x1x32xf32>,
    %c0_154 = arith.constant 0 : index
    %c3_155 = arith.constant 3 : index
    %c0_156 = arith.constant 0 : index
    %395 = vector.load %arg17[%c0_154, %c3_155, %c0_156] : memref<2x8x128xf32, #tpu.memory_space<vmem>>, vector<2x1x128xf32>
    %396 = vector.shape_cast %395 : vector<2x1x128xf32> to vector<2x128xf32>
    %cst_157 = arith.constant dense<0.000000e+00> : vector<2x128xf32>
    %397 = tpu.matmul %391, %294, %cst_157 {dimension_numbers = #tpu.dot_dimension_numbers<[1], [0], [0], [1], [0, 0, 1, 1], [], []>} : vector<2x32xf32>, vector<32x128xf32>, vector<2x128xf32> -> vector<2x128xf32>
    %398 = arith.addf %396, %397 : vector<2x128xf32>
    %399 = vector.extract_strided_slice %398 {offsets = [0, 0], sizes = [2, 32], strides = [1, 1]} : vector<2x128xf32> to vector<2x32xf32>
    %400 = arith.negf %399 : vector<2x32xf32>
    %401 = math.exp %400 : vector<2x32xf32>
    %cst_158 = arith.constant 1.000000e+00 : f32
    %402 = vector.broadcast %cst_158 : f32 to vector<2x32xf32>
    %403 = arith.addf %402, %401 : vector<2x32xf32>
    %404 = arith.divf %402, %403 : vector<2x32xf32>
    %405 = vector.extract_strided_slice %398 {offsets = [0, 32], sizes = [2, 32], strides = [1, 1]} : vector<2x128xf32> to vector<2x32xf32>
    %406 = arith.negf %405 : vector<2x32xf32>
    %407 = math.exp %406 : vector<2x32xf32>
    %cst_159 = arith.constant 1.000000e+00 : f32
    %408 = vector.broadcast %cst_159 : f32 to vector<2x32xf32>
    %409 = arith.addf %408, %407 : vector<2x32xf32>
    %410 = arith.divf %408, %409 : vector<2x32xf32>
    %411 = vector.extract_strided_slice %398 {offsets = [0, 64], sizes = [2, 32], strides = [1, 1]} : vector<2x128xf32> to vector<2x32xf32>
    %412 = math.tanh %411 : vector<2x32xf32>
    %413 = vector.extract_strided_slice %398 {offsets = [0, 96], sizes = [2, 32], strides = [1, 1]} : vector<2x128xf32> to vector<2x32xf32>
    %414 = arith.negf %413 : vector<2x32xf32>
    %415 = math.exp %414 : vector<2x32xf32>
    %cst_160 = arith.constant 1.000000e+00 : f32
    %416 = vector.broadcast %cst_160 : f32 to vector<2x32xf32>
    %417 = arith.addf %416, %415 : vector<2x32xf32>
    %418 = arith.divf %416, %417 : vector<2x32xf32>
    %419 = arith.mulf %410, %389 : vector<2x32xf32>
    %420 = arith.mulf %404, %412 : vector<2x32xf32>
    %421 = arith.addf %419, %420 : vector<2x32xf32>
    %422 = math.tanh %421 : vector<2x32xf32>
    %423 = arith.mulf %418, %422 : vector<2x32xf32>
    %c0_161 = arith.constant 0 : index
    %c3_162 = arith.constant 3 : index
    %c0_163 = arith.constant 0 : index
    %424 = vector.load %arg18[%c0_161, %c3_162, %c0_163] : memref<2x8x32xf32, #tpu.memory_space<vmem>>, vector<2x1x32xf32>
    %425 = vector.shape_cast %424 : vector<2x1x32xf32> to vector<2x32xf32>
    %426 = vector.shape_cast %423 : vector<2x32xf32> to vector<2x1x32xf32>
    tpu.vector_store %arg18[%c0_161, %c3_162, %c0_163], %426 {strides = array<i32>} : memref<2x8x32xf32, #tpu.memory_space<vmem>>, vector<2x1x32xf32>,
    %c0_164 = arith.constant 0 : index
    %c4_165 = arith.constant 4 : index
    %c0_166 = arith.constant 0 : index
    %427 = vector.load %arg17[%c0_164, %c4_165, %c0_166] : memref<2x8x128xf32, #tpu.memory_space<vmem>>, vector<2x1x128xf32>
    %428 = vector.shape_cast %427 : vector<2x1x128xf32> to vector<2x128xf32>
    %cst_167 = arith.constant dense<0.000000e+00> : vector<2x128xf32>
    %429 = tpu.matmul %423, %294, %cst_167 {dimension_numbers = #tpu.dot_dimension_numbers<[1], [0], [0], [1], [0, 0, 1, 1], [], []>} : vector<2x32xf32>, vector<32x128xf32>, vector<2x128xf32> -> vector<2x128xf32>
    %430 = arith.addf %428, %429 : vector<2x128xf32>
    %431 = vector.extract_strided_slice %430 {offsets = [0, 0], sizes = [2, 32], strides = [1, 1]} : vector<2x128xf32> to vector<2x32xf32>
    %432 = arith.negf %431 : vector<2x32xf32>
    %433 = math.exp %432 : vector<2x32xf32>
    %cst_168 = arith.constant 1.000000e+00 : f32
    %434 = vector.broadcast %cst_168 : f32 to vector<2x32xf32>
    %435 = arith.addf %434, %433 : vector<2x32xf32>
    %436 = arith.divf %434, %435 : vector<2x32xf32>
    %437 = vector.extract_strided_slice %430 {offsets = [0, 32], sizes = [2, 32], strides = [1, 1]} : vector<2x128xf32> to vector<2x32xf32>
    %438 = arith.negf %437 : vector<2x32xf32>
    %439 = math.exp %438 : vector<2x32xf32>
    %cst_169 = arith.constant 1.000000e+00 : f32
    %440 = vector.broadcast %cst_169 : f32 to vector<2x32xf32>
    %441 = arith.addf %440, %439 : vector<2x32xf32>
    %442 = arith.divf %440, %441 : vector<2x32xf32>
    %443 = vector.extract_strided_slice %430 {offsets = [0, 64], sizes = [2, 32], strides = [1, 1]} : vector<2x128xf32> to vector<2x32xf32>
    %444 = math.tanh %443 : vector<2x32xf32>
    %445 = vector.extract_strided_slice %430 {offsets = [0, 96], sizes = [2, 32], strides = [1, 1]} : vector<2x128xf32> to vector<2x32xf32>
    %446 = arith.negf %445 : vector<2x32xf32>
    %447 = math.exp %446 : vector<2x32xf32>
    %cst_170 = arith.constant 1.000000e+00 : f32
    %448 = vector.broadcast %cst_170 : f32 to vector<2x32xf32>
    %449 = arith.addf %448, %447 : vector<2x32xf32>
    %450 = arith.divf %448, %449 : vector<2x32xf32>
    %451 = arith.mulf %442, %421 : vector<2x32xf32>
    %452 = arith.mulf %436, %444 : vector<2x32xf32>
    %453 = arith.addf %451, %452 : vector<2x32xf32>
    %454 = math.tanh %453 : vector<2x32xf32>
    %455 = arith.mulf %450, %454 : vector<2x32xf32>
    %c0_171 = arith.constant 0 : index
    %c4_172 = arith.constant 4 : index
    %c0_173 = arith.constant 0 : index
    %456 = vector.load %arg18[%c0_171, %c4_172, %c0_173] : memref<2x8x32xf32, #tpu.memory_space<vmem>>, vector<2x1x32xf32>
    %457 = vector.shape_cast %456 : vector<2x1x32xf32> to vector<2x32xf32>
    %458 = vector.shape_cast %455 : vector<2x32xf32> to vector<2x1x32xf32>
    tpu.vector_store %arg18[%c0_171, %c4_172, %c0_173], %458 {strides = array<i32>} : memref<2x8x32xf32, #tpu.memory_space<vmem>>, vector<2x1x32xf32>,
    %c0_174 = arith.constant 0 : index
    %c5_175 = arith.constant 5 : index
    %c0_176 = arith.constant 0 : index
    %459 = vector.load %arg17[%c0_174, %c5_175, %c0_176] : memref<2x8x128xf32, #tpu.memory_space<vmem>>, vector<2x1x128xf32>
    %460 = vector.shape_cast %459 : vector<2x1x128xf32> to vector<2x128xf32>
    %cst_177 = arith.constant dense<0.000000e+00> : vector<2x128xf32>
    %461 = tpu.matmul %455, %294, %cst_177 {dimension_numbers = #tpu.dot_dimension_numbers<[1], [0], [0], [1], [0, 0, 1, 1], [], []>} : vector<2x32xf32>, vector<32x128xf32>, vector<2x128xf32> -> vector<2x128xf32>
    %462 = arith.addf %460, %461 : vector<2x128xf32>
    %463 = vector.extract_strided_slice %462 {offsets = [0, 0], sizes = [2, 32], strides = [1, 1]} : vector<2x128xf32> to vector<2x32xf32>
    %464 = arith.negf %463 : vector<2x32xf32>
    %465 = math.exp %464 : vector<2x32xf32>
    %cst_178 = arith.constant 1.000000e+00 : f32
    %466 = vector.broadcast %cst_178 : f32 to vector<2x32xf32>
    %467 = arith.addf %466, %465 : vector<2x32xf32>
    %468 = arith.divf %466, %467 : vector<2x32xf32>
    %469 = vector.extract_strided_slice %462 {offsets = [0, 32], sizes = [2, 32], strides = [1, 1]} : vector<2x128xf32> to vector<2x32xf32>
    %470 = arith.negf %469 : vector<2x32xf32>
    %471 = math.exp %470 : vector<2x32xf32>
    %cst_179 = arith.constant 1.000000e+00 : f32
    %472 = vector.broadcast %cst_179 : f32 to vector<2x32xf32>
    %473 = arith.addf %472, %471 : vector<2x32xf32>
    %474 = arith.divf %472, %473 : vector<2x32xf32>
    %475 = vector.extract_strided_slice %462 {offsets = [0, 64], sizes = [2, 32], strides = [1, 1]} : vector<2x128xf32> to vector<2x32xf32>
    %476 = math.tanh %475 : vector<2x32xf32>
    %477 = vector.extract_strided_slice %462 {offsets = [0, 96], sizes = [2, 32], strides = [1, 1]} : vector<2x128xf32> to vector<2x32xf32>
    %478 = arith.negf %477 : vector<2x32xf32>
    %479 = math.exp %478 : vector<2x32xf32>
    %cst_180 = arith.constant 1.000000e+00 : f32
    %480 = vector.broadcast %cst_180 : f32 to vector<2x32xf32>
    %481 = arith.addf %480, %479 : vector<2x32xf32>
    %482 = arith.divf %480, %481 : vector<2x32xf32>
    %483 = arith.mulf %474, %453 : vector<2x32xf32>
    %484 = arith.mulf %468, %476 : vector<2x32xf32>
    %485 = arith.addf %483, %484 : vector<2x32xf32>
    %486 = math.tanh %485 : vector<2x32xf32>
    %487 = arith.mulf %482, %486 : vector<2x32xf32>
    %c0_181 = arith.constant 0 : index
    %c5_182 = arith.constant 5 : index
    %c0_183 = arith.constant 0 : index
    %488 = vector.load %arg18[%c0_181, %c5_182, %c0_183] : memref<2x8x32xf32, #tpu.memory_space<vmem>>, vector<2x1x32xf32>
    %489 = vector.shape_cast %488 : vector<2x1x32xf32> to vector<2x32xf32>
    %490 = vector.shape_cast %487 : vector<2x32xf32> to vector<2x1x32xf32>
    tpu.vector_store %arg18[%c0_181, %c5_182, %c0_183], %490 {strides = array<i32>} : memref<2x8x32xf32, #tpu.memory_space<vmem>>, vector<2x1x32xf32>,
    %c0_184 = arith.constant 0 : index
    %c6_185 = arith.constant 6 : index
    %c0_186 = arith.constant 0 : index
    %491 = vector.load %arg17[%c0_184, %c6_185, %c0_186] : memref<2x8x128xf32, #tpu.memory_space<vmem>>, vector<2x1x128xf32>
    %492 = vector.shape_cast %491 : vector<2x1x128xf32> to vector<2x128xf32>
    %cst_187 = arith.constant dense<0.000000e+00> : vector<2x128xf32>
    %493 = tpu.matmul %487, %294, %cst_187 {dimension_numbers = #tpu.dot_dimension_numbers<[1], [0], [0], [1], [0, 0, 1, 1], [], []>} : vector<2x32xf32>, vector<32x128xf32>, vector<2x128xf32> -> vector<2x128xf32>
    %494 = arith.addf %492, %493 : vector<2x128xf32>
    %495 = vector.extract_strided_slice %494 {offsets = [0, 0], sizes = [2, 32], strides = [1, 1]} : vector<2x128xf32> to vector<2x32xf32>
    %496 = arith.negf %495 : vector<2x32xf32>
    %497 = math.exp %496 : vector<2x32xf32>
    %cst_188 = arith.constant 1.000000e+00 : f32
    %498 = vector.broadcast %cst_188 : f32 to vector<2x32xf32>
    %499 = arith.addf %498, %497 : vector<2x32xf32>
    %500 = arith.divf %498, %499 : vector<2x32xf32>
    %501 = vector.extract_strided_slice %494 {offsets = [0, 32], sizes = [2, 32], strides = [1, 1]} : vector<2x128xf32> to vector<2x32xf32>
    %502 = arith.negf %501 : vector<2x32xf32>
    %503 = math.exp %502 : vector<2x32xf32>
    %cst_189 = arith.constant 1.000000e+00 : f32
    %504 = vector.broadcast %cst_189 : f32 to vector<2x32xf32>
    %505 = arith.addf %504, %503 : vector<2x32xf32>
    %506 = arith.divf %504, %505 : vector<2x32xf32>
    %507 = vector.extract_strided_slice %494 {offsets = [0, 64], sizes = [2, 32], strides = [1, 1]} : vector<2x128xf32> to vector<2x32xf32>
    %508 = math.tanh %507 : vector<2x32xf32>
    %509 = vector.extract_strided_slice %494 {offsets = [0, 96], sizes = [2, 32], strides = [1, 1]} : vector<2x128xf32> to vector<2x32xf32>
    %510 = arith.negf %509 : vector<2x32xf32>
    %511 = math.exp %510 : vector<2x32xf32>
    %cst_190 = arith.constant 1.000000e+00 : f32
    %512 = vector.broadcast %cst_190 : f32 to vector<2x32xf32>
    %513 = arith.addf %512, %511 : vector<2x32xf32>
    %514 = arith.divf %512, %513 : vector<2x32xf32>
    %515 = arith.mulf %506, %485 : vector<2x32xf32>
    %516 = arith.mulf %500, %508 : vector<2x32xf32>
    %517 = arith.addf %515, %516 : vector<2x32xf32>
    %518 = math.tanh %517 : vector<2x32xf32>
    %519 = arith.mulf %514, %518 : vector<2x32xf32>
    %c0_191 = arith.constant 0 : index
    %c6_192 = arith.constant 6 : index
    %c0_193 = arith.constant 0 : index
    %520 = vector.load %arg18[%c0_191, %c6_192, %c0_193] : memref<2x8x32xf32, #tpu.memory_space<vmem>>, vector<2x1x32xf32>
    %521 = vector.shape_cast %520 : vector<2x1x32xf32> to vector<2x32xf32>
    %522 = vector.shape_cast %519 : vector<2x32xf32> to vector<2x1x32xf32>
    tpu.vector_store %arg18[%c0_191, %c6_192, %c0_193], %522 {strides = array<i32>} : memref<2x8x32xf32, #tpu.memory_space<vmem>>, vector<2x1x32xf32>,
    %c0_194 = arith.constant 0 : index
    %c7_195 = arith.constant 7 : index
    %c0_196 = arith.constant 0 : index
    %523 = vector.load %arg17[%c0_194, %c7_195, %c0_196] : memref<2x8x128xf32, #tpu.memory_space<vmem>>, vector<2x1x128xf32>
    %524 = vector.shape_cast %523 : vector<2x1x128xf32> to vector<2x128xf32>
    %cst_197 = arith.constant dense<0.000000e+00> : vector<2x128xf32>
    %525 = tpu.matmul %519, %294, %cst_197 {dimension_numbers = #tpu.dot_dimension_numbers<[1], [0], [0], [1], [0, 0, 1, 1], [], []>} : vector<2x32xf32>, vector<32x128xf32>, vector<2x128xf32> -> vector<2x128xf32>
    %526 = arith.addf %524, %525 : vector<2x128xf32>
    %527 = vector.extract_strided_slice %526 {offsets = [0, 0], sizes = [2, 32], strides = [1, 1]} : vector<2x128xf32> to vector<2x32xf32>
    %528 = arith.negf %527 : vector<2x32xf32>
    %529 = math.exp %528 : vector<2x32xf32>
    %cst_198 = arith.constant 1.000000e+00 : f32
    %530 = vector.broadcast %cst_198 : f32 to vector<2x32xf32>
    %531 = arith.addf %530, %529 : vector<2x32xf32>
    %532 = arith.divf %530, %531 : vector<2x32xf32>
    %533 = vector.extract_strided_slice %526 {offsets = [0, 32], sizes = [2, 32], strides = [1, 1]} : vector<2x128xf32> to vector<2x32xf32>
    %534 = arith.negf %533 : vector<2x32xf32>
    %535 = math.exp %534 : vector<2x32xf32>
    %cst_199 = arith.constant 1.000000e+00 : f32
    %536 = vector.broadcast %cst_199 : f32 to vector<2x32xf32>
    %537 = arith.addf %536, %535 : vector<2x32xf32>
    %538 = arith.divf %536, %537 : vector<2x32xf32>
    %539 = vector.extract_strided_slice %526 {offsets = [0, 64], sizes = [2, 32], strides = [1, 1]} : vector<2x128xf32> to vector<2x32xf32>
    %540 = math.tanh %539 : vector<2x32xf32>
    %541 = vector.extract_strided_slice %526 {offsets = [0, 96], sizes = [2, 32], strides = [1, 1]} : vector<2x128xf32> to vector<2x32xf32>
    %542 = arith.negf %541 : vector<2x32xf32>
    %543 = math.exp %542 : vector<2x32xf32>
    %cst_200 = arith.constant 1.000000e+00 : f32
    %544 = vector.broadcast %cst_200 : f32 to vector<2x32xf32>
    %545 = arith.addf %544, %543 : vector<2x32xf32>
    %546 = arith.divf %544, %545 : vector<2x32xf32>
    %547 = arith.mulf %538, %517 : vector<2x32xf32>
    %548 = arith.mulf %532, %540 : vector<2x32xf32>
    %549 = arith.addf %547, %548 : vector<2x32xf32>
    %550 = math.tanh %549 : vector<2x32xf32>
    %551 = arith.mulf %546, %550 : vector<2x32xf32>
    %c0_201 = arith.constant 0 : index
    %c7_202 = arith.constant 7 : index
    %c0_203 = arith.constant 0 : index
    %552 = vector.load %arg18[%c0_201, %c7_202, %c0_203] : memref<2x8x32xf32, #tpu.memory_space<vmem>>, vector<2x1x32xf32>
    %553 = vector.shape_cast %552 : vector<2x1x32xf32> to vector<2x32xf32>
    %554 = vector.shape_cast %551 : vector<2x32xf32> to vector<2x1x32xf32>
    tpu.vector_store %arg18[%c0_201, %c7_202, %c0_203], %554 {strides = array<i32>} : memref<2x8x32xf32, #tpu.memory_space<vmem>>, vector<2x1x32xf32>,
    %c1_204 = arith.constant 1 : index
    %c0_205 = arith.constant 0 : index
    %c0_206 = arith.constant 0 : index
    %555 = vector.load %arg15[%c1_204, %c0_205, %c0_206] : memref<3x2x32xf32, #tpu.memory_space<vmem>>, vector<1x2x32xf32>
    %556 = vector.shape_cast %555 : vector<1x2x32xf32> to vector<2x32xf32>
    %557 = vector.shape_cast %551 : vector<2x32xf32> to vector<1x2x32xf32>
    tpu.vector_store %arg15[%c1_204, %c0_205, %c0_206], %557 {strides = array<i32>} : memref<3x2x32xf32, #tpu.memory_space<vmem>>, vector<1x2x32xf32>,
    %c1_207 = arith.constant 1 : index
    %c0_208 = arith.constant 0 : index
    %c0_209 = arith.constant 0 : index
    %558 = vector.load %arg16[%c1_207, %c0_208, %c0_209] : memref<3x2x32xf32, #tpu.memory_space<vmem>>, vector<1x2x32xf32>
    %559 = vector.shape_cast %558 : vector<1x2x32xf32> to vector<2x32xf32>
    %560 = vector.shape_cast %549 : vector<2x32xf32> to vector<1x2x32xf32>
    tpu.vector_store %arg16[%c1_207, %c0_208, %c0_209], %560 {strides = array<i32>} : memref<3x2x32xf32, #tpu.memory_space<vmem>>, vector<1x2x32xf32>,
    %c0_210 = arith.constant 0 : index
    %c0_211 = arith.constant 0 : index
    %c0_212 = arith.constant 0 : index
    %561 = vector.load %arg18[%c0_210, %c0_211, %c0_212] : memref<2x8x32xf32, #tpu.memory_space<vmem>>, vector<2x8x32xf32>
    %562 = vector.shape_cast %561 : vector<2x8x32xf32> to vector<16x32xf32>
    %c1_213 = arith.constant 1 : index
    %c0_214 = arith.constant 0 : index
    %c0_215 = arith.constant 0 : index
    %563 = vector.load %arg4[%c1_213, %c0_214, %c0_215] : memref<2x32x128xf32, #tpu.memory_space<vmem>>, vector<1x32x128xf32>
    %564 = vector.shape_cast %563 : vector<1x32x128xf32> to vector<32x128xf32>
    %cst_216 = arith.constant dense<0.000000e+00> : vector<16x128xf32>
    %565 = tpu.matmul %562, %564, %cst_216 {dimension_numbers = #tpu.dot_dimension_numbers<[1], [0], [0], [1], [0, 0, 1, 1], [], []>} : vector<16x32xf32>, vector<32x128xf32>, vector<16x128xf32> -> vector<16x128xf32>
    %c1_217 = arith.constant 1 : index
    %c0_218 = arith.constant 0 : index
    %c0_219 = arith.constant 0 : index
    %566 = vector.load %arg7[%c1_217, %c0_218, %c0_219] : memref<2x1x128xf32, #tpu.memory_space<vmem>>, vector<1x1x128xf32>
    %567 = vector.shape_cast %566 : vector<1x1x128xf32> to vector<1x128xf32>
    %568 = vector.broadcast %567 : vector<1x128xf32> to vector<16x128xf32>
    %569 = arith.addf %565, %568 : vector<16x128xf32>
    %570 = vector.shape_cast %569 : vector<16x128xf32> to vector<2x8x128xf32>
    %c0_220 = arith.constant 0 : index
    %c0_221 = arith.constant 0 : index
    %c0_222 = arith.constant 0 : index
    %571 = vector.load %arg17[%c0_220, %c0_221, %c0_222] : memref<2x8x128xf32, #tpu.memory_space<vmem>>, vector<2x8x128xf32>
    tpu.vector_store %arg17[%c0_220, %c0_221, %c0_222], %570 {strides = array<i32>} : memref<2x8x128xf32, #tpu.memory_space<vmem>>, vector<2x8x128xf32>,
    %c2_223 = arith.constant 2 : index
    %c0_224 = arith.constant 0 : index
    %c0_225 = arith.constant 0 : index
    %572 = vector.load %arg5[%c2_223, %c0_224, %c0_225] : memref<3x32x128xf32, #tpu.memory_space<vmem>>, vector<1x32x128xf32>
    %573 = vector.shape_cast %572 : vector<1x32x128xf32> to vector<32x128xf32>
    %c2_226 = arith.constant 2 : index
    %c0_227 = arith.constant 0 : index
    %c0_228 = arith.constant 0 : index
    %574 = vector.load %arg15[%c2_226, %c0_227, %c0_228] : memref<3x2x32xf32, #tpu.memory_space<vmem>>, vector<1x2x32xf32>
    %575 = vector.shape_cast %574 : vector<1x2x32xf32> to vector<2x32xf32>
    %c2_229 = arith.constant 2 : index
    %c0_230 = arith.constant 0 : index
    %c0_231 = arith.constant 0 : index
    %576 = vector.load %arg16[%c2_229, %c0_230, %c0_231] : memref<3x2x32xf32, #tpu.memory_space<vmem>>, vector<1x2x32xf32>
    %577 = vector.shape_cast %576 : vector<1x2x32xf32> to vector<2x32xf32>
    %c0_232 = arith.constant 0 : index
    %c0_233 = arith.constant 0 : index
    %c0_234 = arith.constant 0 : index
    %578 = vector.load %arg17[%c0_232, %c0_233, %c0_234] : memref<2x8x128xf32, #tpu.memory_space<vmem>>, vector<2x1x128xf32>
    %579 = vector.shape_cast %578 : vector<2x1x128xf32> to vector<2x128xf32>
    %cst_235 = arith.constant dense<0.000000e+00> : vector<2x128xf32>
    %580 = tpu.matmul %575, %573, %cst_235 {dimension_numbers = #tpu.dot_dimension_numbers<[1], [0], [0], [1], [0, 0, 1, 1], [], []>} : vector<2x32xf32>, vector<32x128xf32>, vector<2x128xf32> -> vector<2x128xf32>
    %581 = arith.addf %579, %580 : vector<2x128xf32>
    %582 = vector.extract_strided_slice %581 {offsets = [0, 0], sizes = [2, 32], strides = [1, 1]} : vector<2x128xf32> to vector<2x32xf32>
    %583 = arith.negf %582 : vector<2x32xf32>
    %584 = math.exp %583 : vector<2x32xf32>
    %cst_236 = arith.constant 1.000000e+00 : f32
    %585 = vector.broadcast %cst_236 : f32 to vector<2x32xf32>
    %586 = arith.addf %585, %584 : vector<2x32xf32>
    %587 = arith.divf %585, %586 : vector<2x32xf32>
    %588 = vector.extract_strided_slice %581 {offsets = [0, 32], sizes = [2, 32], strides = [1, 1]} : vector<2x128xf32> to vector<2x32xf32>
    %589 = arith.negf %588 : vector<2x32xf32>
    %590 = math.exp %589 : vector<2x32xf32>
    %cst_237 = arith.constant 1.000000e+00 : f32
    %591 = vector.broadcast %cst_237 : f32 to vector<2x32xf32>
    %592 = arith.addf %591, %590 : vector<2x32xf32>
    %593 = arith.divf %591, %592 : vector<2x32xf32>
    %594 = vector.extract_strided_slice %581 {offsets = [0, 64], sizes = [2, 32], strides = [1, 1]} : vector<2x128xf32> to vector<2x32xf32>
    %595 = math.tanh %594 : vector<2x32xf32>
    %596 = vector.extract_strided_slice %581 {offsets = [0, 96], sizes = [2, 32], strides = [1, 1]} : vector<2x128xf32> to vector<2x32xf32>
    %597 = arith.negf %596 : vector<2x32xf32>
    %598 = math.exp %597 : vector<2x32xf32>
    %cst_238 = arith.constant 1.000000e+00 : f32
    %599 = vector.broadcast %cst_238 : f32 to vector<2x32xf32>
    %600 = arith.addf %599, %598 : vector<2x32xf32>
    %601 = arith.divf %599, %600 : vector<2x32xf32>
    %602 = arith.mulf %593, %577 : vector<2x32xf32>
    %603 = arith.mulf %587, %595 : vector<2x32xf32>
    %604 = arith.addf %602, %603 : vector<2x32xf32>
    %605 = math.tanh %604 : vector<2x32xf32>
    %606 = arith.mulf %601, %605 : vector<2x32xf32>
    %c0_239 = arith.constant 0 : index
    %c0_240 = arith.constant 0 : index
    %c0_241 = arith.constant 0 : index
    %607 = vector.load %arg18[%c0_239, %c0_240, %c0_241] : memref<2x8x32xf32, #tpu.memory_space<vmem>>, vector<2x1x32xf32>
    %608 = vector.shape_cast %607 : vector<2x1x32xf32> to vector<2x32xf32>
    %609 = vector.shape_cast %606 : vector<2x32xf32> to vector<2x1x32xf32>
    tpu.vector_store %arg18[%c0_239, %c0_240, %c0_241], %609 {strides = array<i32>} : memref<2x8x32xf32, #tpu.memory_space<vmem>>, vector<2x1x32xf32>,
    %c0_242 = arith.constant 0 : index
    %c1_243 = arith.constant 1 : index
    %c0_244 = arith.constant 0 : index
    %610 = vector.load %arg17[%c0_242, %c1_243, %c0_244] : memref<2x8x128xf32, #tpu.memory_space<vmem>>, vector<2x1x128xf32>
    %611 = vector.shape_cast %610 : vector<2x1x128xf32> to vector<2x128xf32>
    %cst_245 = arith.constant dense<0.000000e+00> : vector<2x128xf32>
    %612 = tpu.matmul %606, %573, %cst_245 {dimension_numbers = #tpu.dot_dimension_numbers<[1], [0], [0], [1], [0, 0, 1, 1], [], []>} : vector<2x32xf32>, vector<32x128xf32>, vector<2x128xf32> -> vector<2x128xf32>
    %613 = arith.addf %611, %612 : vector<2x128xf32>
    %614 = vector.extract_strided_slice %613 {offsets = [0, 0], sizes = [2, 32], strides = [1, 1]} : vector<2x128xf32> to vector<2x32xf32>
    %615 = arith.negf %614 : vector<2x32xf32>
    %616 = math.exp %615 : vector<2x32xf32>
    %cst_246 = arith.constant 1.000000e+00 : f32
    %617 = vector.broadcast %cst_246 : f32 to vector<2x32xf32>
    %618 = arith.addf %617, %616 : vector<2x32xf32>
    %619 = arith.divf %617, %618 : vector<2x32xf32>
    %620 = vector.extract_strided_slice %613 {offsets = [0, 32], sizes = [2, 32], strides = [1, 1]} : vector<2x128xf32> to vector<2x32xf32>
    %621 = arith.negf %620 : vector<2x32xf32>
    %622 = math.exp %621 : vector<2x32xf32>
    %cst_247 = arith.constant 1.000000e+00 : f32
    %623 = vector.broadcast %cst_247 : f32 to vector<2x32xf32>
    %624 = arith.addf %623, %622 : vector<2x32xf32>
    %625 = arith.divf %623, %624 : vector<2x32xf32>
    %626 = vector.extract_strided_slice %613 {offsets = [0, 64], sizes = [2, 32], strides = [1, 1]} : vector<2x128xf32> to vector<2x32xf32>
    %627 = math.tanh %626 : vector<2x32xf32>
    %628 = vector.extract_strided_slice %613 {offsets = [0, 96], sizes = [2, 32], strides = [1, 1]} : vector<2x128xf32> to vector<2x32xf32>
    %629 = arith.negf %628 : vector<2x32xf32>
    %630 = math.exp %629 : vector<2x32xf32>
    %cst_248 = arith.constant 1.000000e+00 : f32
    %631 = vector.broadcast %cst_248 : f32 to vector<2x32xf32>
    %632 = arith.addf %631, %630 : vector<2x32xf32>
    %633 = arith.divf %631, %632 : vector<2x32xf32>
    %634 = arith.mulf %625, %604 : vector<2x32xf32>
    %635 = arith.mulf %619, %627 : vector<2x32xf32>
    %636 = arith.addf %634, %635 : vector<2x32xf32>
    %637 = math.tanh %636 : vector<2x32xf32>
    %638 = arith.mulf %633, %637 : vector<2x32xf32>
    %c0_249 = arith.constant 0 : index
    %c1_250 = arith.constant 1 : index
    %c0_251 = arith.constant 0 : index
    %639 = vector.load %arg18[%c0_249, %c1_250, %c0_251] : memref<2x8x32xf32, #tpu.memory_space<vmem>>, vector<2x1x32xf32>
    %640 = vector.shape_cast %639 : vector<2x1x32xf32> to vector<2x32xf32>
    %641 = vector.shape_cast %638 : vector<2x32xf32> to vector<2x1x32xf32>
    tpu.vector_store %arg18[%c0_249, %c1_250, %c0_251], %641 {strides = array<i32>} : memref<2x8x32xf32, #tpu.memory_space<vmem>>, vector<2x1x32xf32>,
    %c0_252 = arith.constant 0 : index
    %c2_253 = arith.constant 2 : index
    %c0_254 = arith.constant 0 : index
    %642 = vector.load %arg17[%c0_252, %c2_253, %c0_254] : memref<2x8x128xf32, #tpu.memory_space<vmem>>, vector<2x1x128xf32>
    %643 = vector.shape_cast %642 : vector<2x1x128xf32> to vector<2x128xf32>
    %cst_255 = arith.constant dense<0.000000e+00> : vector<2x128xf32>
    %644 = tpu.matmul %638, %573, %cst_255 {dimension_numbers = #tpu.dot_dimension_numbers<[1], [0], [0], [1], [0, 0, 1, 1], [], []>} : vector<2x32xf32>, vector<32x128xf32>, vector<2x128xf32> -> vector<2x128xf32>
    %645 = arith.addf %643, %644 : vector<2x128xf32>
    %646 = vector.extract_strided_slice %645 {offsets = [0, 0], sizes = [2, 32], strides = [1, 1]} : vector<2x128xf32> to vector<2x32xf32>
    %647 = arith.negf %646 : vector<2x32xf32>
    %648 = math.exp %647 : vector<2x32xf32>
    %cst_256 = arith.constant 1.000000e+00 : f32
    %649 = vector.broadcast %cst_256 : f32 to vector<2x32xf32>
    %650 = arith.addf %649, %648 : vector<2x32xf32>
    %651 = arith.divf %649, %650 : vector<2x32xf32>
    %652 = vector.extract_strided_slice %645 {offsets = [0, 32], sizes = [2, 32], strides = [1, 1]} : vector<2x128xf32> to vector<2x32xf32>
    %653 = arith.negf %652 : vector<2x32xf32>
    %654 = math.exp %653 : vector<2x32xf32>
    %cst_257 = arith.constant 1.000000e+00 : f32
    %655 = vector.broadcast %cst_257 : f32 to vector<2x32xf32>
    %656 = arith.addf %655, %654 : vector<2x32xf32>
    %657 = arith.divf %655, %656 : vector<2x32xf32>
    %658 = vector.extract_strided_slice %645 {offsets = [0, 64], sizes = [2, 32], strides = [1, 1]} : vector<2x128xf32> to vector<2x32xf32>
    %659 = math.tanh %658 : vector<2x32xf32>
    %660 = vector.extract_strided_slice %645 {offsets = [0, 96], sizes = [2, 32], strides = [1, 1]} : vector<2x128xf32> to vector<2x32xf32>
    %661 = arith.negf %660 : vector<2x32xf32>
    %662 = math.exp %661 : vector<2x32xf32>
    %cst_258 = arith.constant 1.000000e+00 : f32
    %663 = vector.broadcast %cst_258 : f32 to vector<2x32xf32>
    %664 = arith.addf %663, %662 : vector<2x32xf32>
    %665 = arith.divf %663, %664 : vector<2x32xf32>
    %666 = arith.mulf %657, %636 : vector<2x32xf32>
    %667 = arith.mulf %651, %659 : vector<2x32xf32>
    %668 = arith.addf %666, %667 : vector<2x32xf32>
    %669 = math.tanh %668 : vector<2x32xf32>
    %670 = arith.mulf %665, %669 : vector<2x32xf32>
    %c0_259 = arith.constant 0 : index
    %c2_260 = arith.constant 2 : index
    %c0_261 = arith.constant 0 : index
    %671 = vector.load %arg18[%c0_259, %c2_260, %c0_261] : memref<2x8x32xf32, #tpu.memory_space<vmem>>, vector<2x1x32xf32>
    %672 = vector.shape_cast %671 : vector<2x1x32xf32> to vector<2x32xf32>
    %673 = vector.shape_cast %670 : vector<2x32xf32> to vector<2x1x32xf32>
    tpu.vector_store %arg18[%c0_259, %c2_260, %c0_261], %673 {strides = array<i32>} : memref<2x8x32xf32, #tpu.memory_space<vmem>>, vector<2x1x32xf32>,
    %c0_262 = arith.constant 0 : index
    %c3_263 = arith.constant 3 : index
    %c0_264 = arith.constant 0 : index
    %674 = vector.load %arg17[%c0_262, %c3_263, %c0_264] : memref<2x8x128xf32, #tpu.memory_space<vmem>>, vector<2x1x128xf32>
    %675 = vector.shape_cast %674 : vector<2x1x128xf32> to vector<2x128xf32>
    %cst_265 = arith.constant dense<0.000000e+00> : vector<2x128xf32>
    %676 = tpu.matmul %670, %573, %cst_265 {dimension_numbers = #tpu.dot_dimension_numbers<[1], [0], [0], [1], [0, 0, 1, 1], [], []>} : vector<2x32xf32>, vector<32x128xf32>, vector<2x128xf32> -> vector<2x128xf32>
    %677 = arith.addf %675, %676 : vector<2x128xf32>
    %678 = vector.extract_strided_slice %677 {offsets = [0, 0], sizes = [2, 32], strides = [1, 1]} : vector<2x128xf32> to vector<2x32xf32>
    %679 = arith.negf %678 : vector<2x32xf32>
    %680 = math.exp %679 : vector<2x32xf32>
    %cst_266 = arith.constant 1.000000e+00 : f32
    %681 = vector.broadcast %cst_266 : f32 to vector<2x32xf32>
    %682 = arith.addf %681, %680 : vector<2x32xf32>
    %683 = arith.divf %681, %682 : vector<2x32xf32>
    %684 = vector.extract_strided_slice %677 {offsets = [0, 32], sizes = [2, 32], strides = [1, 1]} : vector<2x128xf32> to vector<2x32xf32>
    %685 = arith.negf %684 : vector<2x32xf32>
    %686 = math.exp %685 : vector<2x32xf32>
    %cst_267 = arith.constant 1.000000e+00 : f32
    %687 = vector.broadcast %cst_267 : f32 to vector<2x32xf32>
    %688 = arith.addf %687, %686 : vector<2x32xf32>
    %689 = arith.divf %687, %688 : vector<2x32xf32>
    %690 = vector.extract_strided_slice %677 {offsets = [0, 64], sizes = [2, 32], strides = [1, 1]} : vector<2x128xf32> to vector<2x32xf32>
    %691 = math.tanh %690 : vector<2x32xf32>
    %692 = vector.extract_strided_slice %677 {offsets = [0, 96], sizes = [2, 32], strides = [1, 1]} : vector<2x128xf32> to vector<2x32xf32>
    %693 = arith.negf %692 : vector<2x32xf32>
    %694 = math.exp %693 : vector<2x32xf32>
    %cst_268 = arith.constant 1.000000e+00 : f32
    %695 = vector.broadcast %cst_268 : f32 to vector<2x32xf32>
    %696 = arith.addf %695, %694 : vector<2x32xf32>
    %697 = arith.divf %695, %696 : vector<2x32xf32>
    %698 = arith.mulf %689, %668 : vector<2x32xf32>
    %699 = arith.mulf %683, %691 : vector<2x32xf32>
    %700 = arith.addf %698, %699 : vector<2x32xf32>
    %701 = math.tanh %700 : vector<2x32xf32>
    %702 = arith.mulf %697, %701 : vector<2x32xf32>
    %c0_269 = arith.constant 0 : index
    %c3_270 = arith.constant 3 : index
    %c0_271 = arith.constant 0 : index
    %703 = vector.load %arg18[%c0_269, %c3_270, %c0_271] : memref<2x8x32xf32, #tpu.memory_space<vmem>>, vector<2x1x32xf32>
    %704 = vector.shape_cast %703 : vector<2x1x32xf32> to vector<2x32xf32>
    %705 = vector.shape_cast %702 : vector<2x32xf32> to vector<2x1x32xf32>
    tpu.vector_store %arg18[%c0_269, %c3_270, %c0_271], %705 {strides = array<i32>} : memref<2x8x32xf32, #tpu.memory_space<vmem>>, vector<2x1x32xf32>,
    %c0_272 = arith.constant 0 : index
    %c4_273 = arith.constant 4 : index
    %c0_274 = arith.constant 0 : index
    %706 = vector.load %arg17[%c0_272, %c4_273, %c0_274] : memref<2x8x128xf32, #tpu.memory_space<vmem>>, vector<2x1x128xf32>
    %707 = vector.shape_cast %706 : vector<2x1x128xf32> to vector<2x128xf32>
    %cst_275 = arith.constant dense<0.000000e+00> : vector<2x128xf32>
    %708 = tpu.matmul %702, %573, %cst_275 {dimension_numbers = #tpu.dot_dimension_numbers<[1], [0], [0], [1], [0, 0, 1, 1], [], []>} : vector<2x32xf32>, vector<32x128xf32>, vector<2x128xf32> -> vector<2x128xf32>
    %709 = arith.addf %707, %708 : vector<2x128xf32>
    %710 = vector.extract_strided_slice %709 {offsets = [0, 0], sizes = [2, 32], strides = [1, 1]} : vector<2x128xf32> to vector<2x32xf32>
    %711 = arith.negf %710 : vector<2x32xf32>
    %712 = math.exp %711 : vector<2x32xf32>
    %cst_276 = arith.constant 1.000000e+00 : f32
    %713 = vector.broadcast %cst_276 : f32 to vector<2x32xf32>
    %714 = arith.addf %713, %712 : vector<2x32xf32>
    %715 = arith.divf %713, %714 : vector<2x32xf32>
    %716 = vector.extract_strided_slice %709 {offsets = [0, 32], sizes = [2, 32], strides = [1, 1]} : vector<2x128xf32> to vector<2x32xf32>
    %717 = arith.negf %716 : vector<2x32xf32>
    %718 = math.exp %717 : vector<2x32xf32>
    %cst_277 = arith.constant 1.000000e+00 : f32
    %719 = vector.broadcast %cst_277 : f32 to vector<2x32xf32>
    %720 = arith.addf %719, %718 : vector<2x32xf32>
    %721 = arith.divf %719, %720 : vector<2x32xf32>
    %722 = vector.extract_strided_slice %709 {offsets = [0, 64], sizes = [2, 32], strides = [1, 1]} : vector<2x128xf32> to vector<2x32xf32>
    %723 = math.tanh %722 : vector<2x32xf32>
    %724 = vector.extract_strided_slice %709 {offsets = [0, 96], sizes = [2, 32], strides = [1, 1]} : vector<2x128xf32> to vector<2x32xf32>
    %725 = arith.negf %724 : vector<2x32xf32>
    %726 = math.exp %725 : vector<2x32xf32>
    %cst_278 = arith.constant 1.000000e+00 : f32
    %727 = vector.broadcast %cst_278 : f32 to vector<2x32xf32>
    %728 = arith.addf %727, %726 : vector<2x32xf32>
    %729 = arith.divf %727, %728 : vector<2x32xf32>
    %730 = arith.mulf %721, %700 : vector<2x32xf32>
    %731 = arith.mulf %715, %723 : vector<2x32xf32>
    %732 = arith.addf %730, %731 : vector<2x32xf32>
    %733 = math.tanh %732 : vector<2x32xf32>
    %734 = arith.mulf %729, %733 : vector<2x32xf32>
    %c0_279 = arith.constant 0 : index
    %c4_280 = arith.constant 4 : index
    %c0_281 = arith.constant 0 : index
    %735 = vector.load %arg18[%c0_279, %c4_280, %c0_281] : memref<2x8x32xf32, #tpu.memory_space<vmem>>, vector<2x1x32xf32>
    %736 = vector.shape_cast %735 : vector<2x1x32xf32> to vector<2x32xf32>
    %737 = vector.shape_cast %734 : vector<2x32xf32> to vector<2x1x32xf32>
    tpu.vector_store %arg18[%c0_279, %c4_280, %c0_281], %737 {strides = array<i32>} : memref<2x8x32xf32, #tpu.memory_space<vmem>>, vector<2x1x32xf32>,
    %c0_282 = arith.constant 0 : index
    %c5_283 = arith.constant 5 : index
    %c0_284 = arith.constant 0 : index
    %738 = vector.load %arg17[%c0_282, %c5_283, %c0_284] : memref<2x8x128xf32, #tpu.memory_space<vmem>>, vector<2x1x128xf32>
    %739 = vector.shape_cast %738 : vector<2x1x128xf32> to vector<2x128xf32>
    %cst_285 = arith.constant dense<0.000000e+00> : vector<2x128xf32>
    %740 = tpu.matmul %734, %573, %cst_285 {dimension_numbers = #tpu.dot_dimension_numbers<[1], [0], [0], [1], [0, 0, 1, 1], [], []>} : vector<2x32xf32>, vector<32x128xf32>, vector<2x128xf32> -> vector<2x128xf32>
    %741 = arith.addf %739, %740 : vector<2x128xf32>
    %742 = vector.extract_strided_slice %741 {offsets = [0, 0], sizes = [2, 32], strides = [1, 1]} : vector<2x128xf32> to vector<2x32xf32>
    %743 = arith.negf %742 : vector<2x32xf32>
    %744 = math.exp %743 : vector<2x32xf32>
    %cst_286 = arith.constant 1.000000e+00 : f32
    %745 = vector.broadcast %cst_286 : f32 to vector<2x32xf32>
    %746 = arith.addf %745, %744 : vector<2x32xf32>
    %747 = arith.divf %745, %746 : vector<2x32xf32>
    %748 = vector.extract_strided_slice %741 {offsets = [0, 32], sizes = [2, 32], strides = [1, 1]} : vector<2x128xf32> to vector<2x32xf32>
    %749 = arith.negf %748 : vector<2x32xf32>
    %750 = math.exp %749 : vector<2x32xf32>
    %cst_287 = arith.constant 1.000000e+00 : f32
    %751 = vector.broadcast %cst_287 : f32 to vector<2x32xf32>
    %752 = arith.addf %751, %750 : vector<2x32xf32>
    %753 = arith.divf %751, %752 : vector<2x32xf32>
    %754 = vector.extract_strided_slice %741 {offsets = [0, 64], sizes = [2, 32], strides = [1, 1]} : vector<2x128xf32> to vector<2x32xf32>
    %755 = math.tanh %754 : vector<2x32xf32>
    %756 = vector.extract_strided_slice %741 {offsets = [0, 96], sizes = [2, 32], strides = [1, 1]} : vector<2x128xf32> to vector<2x32xf32>
    %757 = arith.negf %756 : vector<2x32xf32>
    %758 = math.exp %757 : vector<2x32xf32>
    %cst_288 = arith.constant 1.000000e+00 : f32
    %759 = vector.broadcast %cst_288 : f32 to vector<2x32xf32>
    %760 = arith.addf %759, %758 : vector<2x32xf32>
    %761 = arith.divf %759, %760 : vector<2x32xf32>
    %762 = arith.mulf %753, %732 : vector<2x32xf32>
    %763 = arith.mulf %747, %755 : vector<2x32xf32>
    %764 = arith.addf %762, %763 : vector<2x32xf32>
    %765 = math.tanh %764 : vector<2x32xf32>
    %766 = arith.mulf %761, %765 : vector<2x32xf32>
    %c0_289 = arith.constant 0 : index
    %c5_290 = arith.constant 5 : index
    %c0_291 = arith.constant 0 : index
    %767 = vector.load %arg18[%c0_289, %c5_290, %c0_291] : memref<2x8x32xf32, #tpu.memory_space<vmem>>, vector<2x1x32xf32>
    %768 = vector.shape_cast %767 : vector<2x1x32xf32> to vector<2x32xf32>
    %769 = vector.shape_cast %766 : vector<2x32xf32> to vector<2x1x32xf32>
    tpu.vector_store %arg18[%c0_289, %c5_290, %c0_291], %769 {strides = array<i32>} : memref<2x8x32xf32, #tpu.memory_space<vmem>>, vector<2x1x32xf32>,
    %c0_292 = arith.constant 0 : index
    %c6_293 = arith.constant 6 : index
    %c0_294 = arith.constant 0 : index
    %770 = vector.load %arg17[%c0_292, %c6_293, %c0_294] : memref<2x8x128xf32, #tpu.memory_space<vmem>>, vector<2x1x128xf32>
    %771 = vector.shape_cast %770 : vector<2x1x128xf32> to vector<2x128xf32>
    %cst_295 = arith.constant dense<0.000000e+00> : vector<2x128xf32>
    %772 = tpu.matmul %766, %573, %cst_295 {dimension_numbers = #tpu.dot_dimension_numbers<[1], [0], [0], [1], [0, 0, 1, 1], [], []>} : vector<2x32xf32>, vector<32x128xf32>, vector<2x128xf32> -> vector<2x128xf32>
    %773 = arith.addf %771, %772 : vector<2x128xf32>
    %774 = vector.extract_strided_slice %773 {offsets = [0, 0], sizes = [2, 32], strides = [1, 1]} : vector<2x128xf32> to vector<2x32xf32>
    %775 = arith.negf %774 : vector<2x32xf32>
    %776 = math.exp %775 : vector<2x32xf32>
    %cst_296 = arith.constant 1.000000e+00 : f32
    %777 = vector.broadcast %cst_296 : f32 to vector<2x32xf32>
    %778 = arith.addf %777, %776 : vector<2x32xf32>
    %779 = arith.divf %777, %778 : vector<2x32xf32>
    %780 = vector.extract_strided_slice %773 {offsets = [0, 32], sizes = [2, 32], strides = [1, 1]} : vector<2x128xf32> to vector<2x32xf32>
    %781 = arith.negf %780 : vector<2x32xf32>
    %782 = math.exp %781 : vector<2x32xf32>
    %cst_297 = arith.constant 1.000000e+00 : f32
    %783 = vector.broadcast %cst_297 : f32 to vector<2x32xf32>
    %784 = arith.addf %783, %782 : vector<2x32xf32>
    %785 = arith.divf %783, %784 : vector<2x32xf32>
    %786 = vector.extract_strided_slice %773 {offsets = [0, 64], sizes = [2, 32], strides = [1, 1]} : vector<2x128xf32> to vector<2x32xf32>
    %787 = math.tanh %786 : vector<2x32xf32>
    %788 = vector.extract_strided_slice %773 {offsets = [0, 96], sizes = [2, 32], strides = [1, 1]} : vector<2x128xf32> to vector<2x32xf32>
    %789 = arith.negf %788 : vector<2x32xf32>
    %790 = math.exp %789 : vector<2x32xf32>
    %cst_298 = arith.constant 1.000000e+00 : f32
    %791 = vector.broadcast %cst_298 : f32 to vector<2x32xf32>
    %792 = arith.addf %791, %790 : vector<2x32xf32>
    %793 = arith.divf %791, %792 : vector<2x32xf32>
    %794 = arith.mulf %785, %764 : vector<2x32xf32>
    %795 = arith.mulf %779, %787 : vector<2x32xf32>
    %796 = arith.addf %794, %795 : vector<2x32xf32>
    %797 = math.tanh %796 : vector<2x32xf32>
    %798 = arith.mulf %793, %797 : vector<2x32xf32>
    %c0_299 = arith.constant 0 : index
    %c6_300 = arith.constant 6 : index
    %c0_301 = arith.constant 0 : index
    %799 = vector.load %arg18[%c0_299, %c6_300, %c0_301] : memref<2x8x32xf32, #tpu.memory_space<vmem>>, vector<2x1x32xf32>
    %800 = vector.shape_cast %799 : vector<2x1x32xf32> to vector<2x32xf32>
    %801 = vector.shape_cast %798 : vector<2x32xf32> to vector<2x1x32xf32>
    tpu.vector_store %arg18[%c0_299, %c6_300, %c0_301], %801 {strides = array<i32>} : memref<2x8x32xf32, #tpu.memory_space<vmem>>, vector<2x1x32xf32>,
    %c0_302 = arith.constant 0 : index
    %c7_303 = arith.constant 7 : index
    %c0_304 = arith.constant 0 : index
    %802 = vector.load %arg17[%c0_302, %c7_303, %c0_304] : memref<2x8x128xf32, #tpu.memory_space<vmem>>, vector<2x1x128xf32>
    %803 = vector.shape_cast %802 : vector<2x1x128xf32> to vector<2x128xf32>
    %cst_305 = arith.constant dense<0.000000e+00> : vector<2x128xf32>
    %804 = tpu.matmul %798, %573, %cst_305 {dimension_numbers = #tpu.dot_dimension_numbers<[1], [0], [0], [1], [0, 0, 1, 1], [], []>} : vector<2x32xf32>, vector<32x128xf32>, vector<2x128xf32> -> vector<2x128xf32>
    %805 = arith.addf %803, %804 : vector<2x128xf32>
    %806 = vector.extract_strided_slice %805 {offsets = [0, 0], sizes = [2, 32], strides = [1, 1]} : vector<2x128xf32> to vector<2x32xf32>
    %807 = arith.negf %806 : vector<2x32xf32>
    %808 = math.exp %807 : vector<2x32xf32>
    %cst_306 = arith.constant 1.000000e+00 : f32
    %809 = vector.broadcast %cst_306 : f32 to vector<2x32xf32>
    %810 = arith.addf %809, %808 : vector<2x32xf32>
    %811 = arith.divf %809, %810 : vector<2x32xf32>
    %812 = vector.extract_strided_slice %805 {offsets = [0, 32], sizes = [2, 32], strides = [1, 1]} : vector<2x128xf32> to vector<2x32xf32>
    %813 = arith.negf %812 : vector<2x32xf32>
    %814 = math.exp %813 : vector<2x32xf32>
    %cst_307 = arith.constant 1.000000e+00 : f32
    %815 = vector.broadcast %cst_307 : f32 to vector<2x32xf32>
    %816 = arith.addf %815, %814 : vector<2x32xf32>
    %817 = arith.divf %815, %816 : vector<2x32xf32>
    %818 = vector.extract_strided_slice %805 {offsets = [0, 64], sizes = [2, 32], strides = [1, 1]} : vector<2x128xf32> to vector<2x32xf32>
    %819 = math.tanh %818 : vector<2x32xf32>
    %820 = vector.extract_strided_slice %805 {offsets = [0, 96], sizes = [2, 32], strides = [1, 1]} : vector<2x128xf32> to vector<2x32xf32>
    %821 = arith.negf %820 : vector<2x32xf32>
    %822 = math.exp %821 : vector<2x32xf32>
    %cst_308 = arith.constant 1.000000e+00 : f32
    %823 = vector.broadcast %cst_308 : f32 to vector<2x32xf32>
    %824 = arith.addf %823, %822 : vector<2x32xf32>
    %825 = arith.divf %823, %824 : vector<2x32xf32>
    %826 = arith.mulf %817, %796 : vector<2x32xf32>
    %827 = arith.mulf %811, %819 : vector<2x32xf32>
    %828 = arith.addf %826, %827 : vector<2x32xf32>
    %829 = math.tanh %828 : vector<2x32xf32>
    %830 = arith.mulf %825, %829 : vector<2x32xf32>
    %c0_309 = arith.constant 0 : index
    %c7_310 = arith.constant 7 : index
    %c0_311 = arith.constant 0 : index
    %831 = vector.load %arg18[%c0_309, %c7_310, %c0_311] : memref<2x8x32xf32, #tpu.memory_space<vmem>>, vector<2x1x32xf32>
    %832 = vector.shape_cast %831 : vector<2x1x32xf32> to vector<2x32xf32>
    %833 = vector.shape_cast %830 : vector<2x32xf32> to vector<2x1x32xf32>
    tpu.vector_store %arg18[%c0_309, %c7_310, %c0_311], %833 {strides = array<i32>} : memref<2x8x32xf32, #tpu.memory_space<vmem>>, vector<2x1x32xf32>,
    %c2_312 = arith.constant 2 : index
    %c0_313 = arith.constant 0 : index
    %c0_314 = arith.constant 0 : index
    %834 = vector.load %arg15[%c2_312, %c0_313, %c0_314] : memref<3x2x32xf32, #tpu.memory_space<vmem>>, vector<1x2x32xf32>
    %835 = vector.shape_cast %834 : vector<1x2x32xf32> to vector<2x32xf32>
    %836 = vector.shape_cast %830 : vector<2x32xf32> to vector<1x2x32xf32>
    tpu.vector_store %arg15[%c2_312, %c0_313, %c0_314], %836 {strides = array<i32>} : memref<3x2x32xf32, #tpu.memory_space<vmem>>, vector<1x2x32xf32>,
    %c2_315 = arith.constant 2 : index
    %c0_316 = arith.constant 0 : index
    %c0_317 = arith.constant 0 : index
    %837 = vector.load %arg16[%c2_315, %c0_316, %c0_317] : memref<3x2x32xf32, #tpu.memory_space<vmem>>, vector<1x2x32xf32>
    %838 = vector.shape_cast %837 : vector<1x2x32xf32> to vector<2x32xf32>
    %839 = vector.shape_cast %828 : vector<2x32xf32> to vector<1x2x32xf32>
    tpu.vector_store %arg16[%c2_315, %c0_316, %c0_317], %839 {strides = array<i32>} : memref<3x2x32xf32, #tpu.memory_space<vmem>>, vector<1x2x32xf32>,
    %c0_318 = arith.constant 0 : index
    %c0_319 = arith.constant 0 : index
    %c0_320 = arith.constant 0 : index
    %840 = vector.load %arg18[%c0_318, %c0_319, %c0_320] : memref<2x8x32xf32, #tpu.memory_space<vmem>>, vector<2x8x32xf32>
    %cst_321 = arith.constant dense<0.000000e+00> : vector<2x8xf32>
    %841 = vector.multi_reduction <add>, %840, %cst_321 [2] : vector<2x8x32xf32> to vector<2x8xf32>
    %842 = vector.shape_cast %841 : vector<2x8xf32> to vector<2x8x1xf32>
    %cst_322 = arith.constant 3.200000e+01 : f32
    %843 = vector.broadcast %cst_322 : f32 to vector<2x8x1xf32>
    %844 = arith.divf %842, %843 : vector<2x8x1xf32>
    %845 = arith.mulf %840, %840 : vector<2x8x32xf32>
    %cst_323 = arith.constant dense<0.000000e+00> : vector<2x8xf32>
    %846 = vector.multi_reduction <add>, %845, %cst_323 [2] : vector<2x8x32xf32> to vector<2x8xf32>
    %847 = vector.shape_cast %846 : vector<2x8xf32> to vector<2x8x1xf32>
    %cst_324 = arith.constant 3.200000e+01 : f32
    %848 = vector.broadcast %cst_324 : f32 to vector<2x8x1xf32>
    %849 = arith.divf %847, %848 : vector<2x8x1xf32>
    %850 = arith.mulf %844, %844 : vector<2x8x1xf32>
    %851 = arith.subf %849, %850 : vector<2x8x1xf32>
    %852 = vector.broadcast %844 : vector<2x8x1xf32> to vector<2x8x32xf32>
    %853 = arith.subf %840, %852 : vector<2x8x32xf32>
    %cst_325 = arith.constant 9.99999974E-6 : f32
    %854 = vector.broadcast %cst_325 : f32 to vector<2x8x1xf32>
    %855 = arith.addf %851, %854 : vector<2x8x1xf32>
    %856 = math.rsqrt %855 : vector<2x8x1xf32>
    %857 = vector.broadcast %856 : vector<2x8x1xf32> to vector<2x8x32xf32>
    %858 = arith.mulf %853, %857 : vector<2x8x32xf32>
    %859 = vector.shape_cast %3 : vector<1x32xf32> to vector<1x1x32xf32>
    %860 = vector.broadcast %859 : vector<1x1x32xf32> to vector<2x8x32xf32>
    %861 = arith.mulf %858, %860 : vector<2x8x32xf32>
    %862 = vector.shape_cast %4 : vector<1x32xf32> to vector<1x1x32xf32>
    %863 = vector.broadcast %862 : vector<1x1x32xf32> to vector<2x8x32xf32>
    %864 = arith.addf %861, %863 : vector<2x8x32xf32>
    %c0_326 = arith.constant 0 : index
    %c0_327 = arith.constant 0 : index
    %c0_328 = arith.constant 0 : index
    %865 = vector.load %arg12[%c0_326, %c0_327, %c0_328] : memref<2x8x32xf32, #tpu.memory_space<vmem>>, vector<2x8x32xf32>
    tpu.vector_store %arg12[%c0_326, %c0_327, %c0_328], %864 {strides = array<i32>} : memref<2x8x32xf32, #tpu.memory_space<vmem>>, vector<2x8x32xf32>,
    %c0_i32_329 = arith.constant 0 : i32
    %866 = arith.cmpi eq, %arg1, %c0_i32_329 : i32
    %867 = arith.extui %866 : i1 to i32
    %c0_i32_330 = arith.constant 0 : i32
    %868 = arith.cmpi ne, %867, %c0_i32_330 : i32
    scf.if %868 {
      %c0_331 = arith.constant 0 : index
      %c0_332 = arith.constant 0 : index
      %c0_333 = arith.constant 0 : index
      %869 = vector.load %arg15[%c0_331, %c0_332, %c0_333] : memref<3x2x32xf32, #tpu.memory_space<vmem>>, vector<3x2x32xf32>
      %c0_334 = arith.constant 0 : index
      %c0_335 = arith.constant 0 : index
      %c0_336 = arith.constant 0 : index
      %870 = vector.load %arg13[%c0_334, %c0_335, %c0_336] : memref<3x2x32xf32, #tpu.memory_space<vmem>>, vector<3x2x32xf32>
      tpu.vector_store %arg13[%c0_334, %c0_335, %c0_336], %869 {strides = array<i32>} : memref<3x2x32xf32, #tpu.memory_space<vmem>>, vector<3x2x32xf32>,
      %c0_337 = arith.constant 0 : index
      %c0_338 = arith.constant 0 : index
      %c0_339 = arith.constant 0 : index
      %871 = vector.load %arg16[%c0_337, %c0_338, %c0_339] : memref<3x2x32xf32, #tpu.memory_space<vmem>>, vector<3x2x32xf32>
      %c0_340 = arith.constant 0 : index
      %c0_341 = arith.constant 0 : index
      %c0_342 = arith.constant 0 : index
      %872 = vector.load %arg14[%c0_340, %c0_341, %c0_342] : memref<3x2x32xf32, #tpu.memory_space<vmem>>, vector<3x2x32xf32>
      tpu.vector_store %arg14[%c0_340, %c0_341, %c0_342], %871 {strides = array<i32>} : memref<3x2x32xf32, #tpu.memory_space<vmem>>, vector<3x2x32xf32>,
    } else {
    }
    return
  }
  func.func @transform_0(%arg0: i32, %arg1: i32) -> (i32, i32, i32) {
    %c0_i32 = arith.constant 0 : i32
    %c0_i32_0 = arith.constant 0 : i32
    return %arg0, %arg1, %c0_i32 : i32, i32, i32
  }
  func.func @transform_1(%arg0: i32, %arg1: i32) -> (i32, i32) {
    %c0_i32 = arith.constant 0 : i32
    %c0_i32_0 = arith.constant 0 : i32
    %c0_i32_1 = arith.constant 0 : i32
    return %c0_i32, %c0_i32_0 : i32, i32
  }
  func.func @transform_2(%arg0: i32, %arg1: i32) -> (i32, i32, i32) {
    %c0_i32 = arith.constant 0 : i32
    %c0_i32_0 = arith.constant 0 : i32
    %c0_i32_1 = arith.constant 0 : i32
    %c0_i32_2 = arith.constant 0 : i32
    return %c0_i32, %c0_i32_0, %c0_i32_1 : i32, i32, i32
  }
  func.func @transform_3(%arg0: i32, %arg1: i32) -> (i32, i32, i32) {
    %c0_i32 = arith.constant 0 : i32
    %c0_i32_0 = arith.constant 0 : i32
    %c0_i32_1 = arith.constant 0 : i32
    %c0_i32_2 = arith.constant 0 : i32
    return %c0_i32, %c0_i32_0, %c0_i32_1 : i32, i32, i32
  }
  func.func @transform_4(%arg0: i32, %arg1: i32) -> (i32, i32) {
    %c0_i32 = arith.constant 0 : i32
    %c0_i32_0 = arith.constant 0 : i32
    %c0_i32_1 = arith.constant 0 : i32
    return %c0_i32, %c0_i32_0 : i32, i32
  }
  func.func @transform_5(%arg0: i32, %arg1: i32) -> (i32, i32, i32) {
    %c0_i32 = arith.constant 0 : i32
    %c0_i32_0 = arith.constant 0 : i32
    %c0_i32_1 = arith.constant 0 : i32
    %c0_i32_2 = arith.constant 0 : i32
    return %c0_i32, %c0_i32_0, %c0_i32_1 : i32, i32, i32
  }
  func.func @transform_6(%arg0: i32, %arg1: i32) -> (i32, i32, i32) {
    %c0_i32 = arith.constant 0 : i32
    %c0_i32_0 = arith.constant 0 : i32
    %c0_i32_1 = arith.constant 0 : i32
    return %c0_i32, %arg0, %c0_i32_0 : i32, i32, i32
  }
  func.func @transform_7(%arg0: i32, %arg1: i32) -> (i32, i32, i32) {
    %c0_i32 = arith.constant 0 : i32
    %c0_i32_0 = arith.constant 0 : i32
    %c0_i32_1 = arith.constant 0 : i32
    return %c0_i32, %arg0, %c0_i32_0 : i32, i32, i32
  }
  func.func @transform_8(%arg0: i32, %arg1: i32) -> (i32, i32) {
    %c0_i32 = arith.constant 0 : i32
    %c0_i32_0 = arith.constant 0 : i32
    %c0_i32_1 = arith.constant 0 : i32
    return %c0_i32, %c0_i32_0 : i32, i32
  }
  func.func @transform_9(%arg0: i32, %arg1: i32) -> (i32, i32) {
    %c0_i32 = arith.constant 0 : i32
    %c0_i32_0 = arith.constant 0 : i32
    %c0_i32_1 = arith.constant 0 : i32
    return %c0_i32, %c0_i32_0 : i32, i32
  }
  func.func @transform_10(%arg0: i32, %arg1: i32) -> (i32, i32, i32) {
    %c0_i32 = arith.constant 0 : i32
    %c0_i32_0 = arith.constant 0 : i32
    return %arg0, %arg1, %c0_i32 : i32, i32, i32
  }
  func.func @transform_11(%arg0: i32, %arg1: i32) -> (i32, i32, i32) {
    %c0_i32 = arith.constant 0 : i32
    %c0_i32_0 = arith.constant 0 : i32
    %c0_i32_1 = arith.constant 0 : i32
    return %c0_i32, %arg0, %c0_i32_0 : i32, i32, i32
  }
  func.func @transform_12(%arg0: i32, %arg1: i32) -> (i32, i32, i32) {
    %c0_i32 = arith.constant 0 : i32
    %c0_i32_0 = arith.constant 0 : i32
    %c0_i32_1 = arith.constant 0 : i32
    return %c0_i32, %arg0, %c0_i32_0 : i32, i32, i32
  }
}

module attributes {stable_mosaic.version = 11 : i64} {
  func.func @_fused_core_kernel(%arg0: i32, %arg1: i32, %arg2: memref<2x8x32xf32, #tpu.memory_space<vmem>>, %arg3: memref<32x128xf32, #tpu.memory_space<vmem>>, %arg4: memref<2x32x128xf32, #tpu.memory_space<vmem>>, %arg5: memref<3x32x128xf32, #tpu.memory_space<vmem>>, %arg6: memref<1x128xf32, #tpu.memory_space<vmem>>, %arg7: memref<2x1x128xf32, #tpu.memory_space<vmem>>, %arg8: memref<3x2x32xf32, #tpu.memory_space<vmem>>, %arg9: memref<3x2x32xf32, #tpu.memory_space<vmem>>, %arg10: memref<1x32xf32, #tpu.memory_space<vmem>>, %arg11: memref<1x32xf32, #tpu.memory_space<vmem>>, %arg12: memref<2x8x32xf32, #tpu.memory_space<vmem>>, %arg13: memref<3x2x32xf32, #tpu.memory_space<vmem>>, %arg14: memref<3x2x32xf32, #tpu.memory_space<vmem>>, %arg15: memref<3x2x32xf32, #tpu.memory_space<vmem>>, %arg16: memref<3x2x32xf32, #tpu.memory_space<vmem>>, %arg17: memref<2x8x128xf32, #tpu.memory_space<vmem>>, %arg18: memref<2x8x32xf32, #tpu.memory_space<vmem>>) attributes {dimension_semantics = [#tpu.dimension_semantics<parallel>, #tpu.dimension_semantics<arbitrary>], iteration_bounds = array<i64: 1, 1>, scalar_prefetch = 0 : i64, scratch_operands = 4 : i64, tpu.core_type = #tpu.core_type<tc>, window_params = [{transform_indices = @transform_0, window_bounds = array<i64: 2, 8, 32>}, {pipeline_mode = #tpu.pipeline_mode<synchronous>, transform_indices = @transform_1, window_bounds = array<i64: 32, 128>}, {pipeline_mode = #tpu.pipeline_mode<synchronous>, transform_indices = @transform_2, window_bounds = array<i64: 2, 32, 128>}, {pipeline_mode = #tpu.pipeline_mode<synchronous>, transform_indices = @transform_3, window_bounds = array<i64: 3, 32, 128>}, {pipeline_mode = #tpu.pipeline_mode<synchronous>, transform_indices = @transform_4, window_bounds = array<i64: 1, 128>}, {pipeline_mode = #tpu.pipeline_mode<synchronous>, transform_indices = @transform_5, window_bounds = array<i64: 2, 1, 128>}, {transform_indices = @transform_6, window_bounds = array<i64: 3, 2, 32>}, {transform_indices = @transform_7, window_bounds = array<i64: 3, 2, 32>}, {pipeline_mode = #tpu.pipeline_mode<synchronous>, transform_indices = @transform_8, window_bounds = array<i64: 1, 32>}, {pipeline_mode = #tpu.pipeline_mode<synchronous>, transform_indices = @transform_9, window_bounds = array<i64: 1, 32>}, {transform_indices = @transform_10, window_bounds = array<i64: 2, 8, 32>}, {transform_indices = @transform_11, window_bounds = array<i64: 3, 2, 32>}, {transform_indices = @transform_12, window_bounds = array<i64: 3, 2, 32>}]} {
    %c0_i32 = arith.constant 0 : i32
    %0 = arith.cmpi eq, %arg1, %c0_i32 : i32
    %1 = arith.extui %0 : i1 to i32
    %c0_i32_0 = arith.constant 0 : i32
    %2 = arith.cmpi ne, %1, %c0_i32_0 : i32
    scf.if %2 {
      %c0_331 = arith.constant 0 : index
      %c0_332 = arith.constant 0 : index
      %c0_333 = arith.constant 0 : index
      %869 = vector.load %arg8[%c0_331, %c0_332, %c0_333] : memref<3x2x32xf32, #tpu.memory_space<vmem>>, vector<3x2x32xf32>
      %c0_334 = arith.constant 0 : index
      %c0_335 = arith.constant 0 : index
      %c0_336 = arith.constant 0 : index
      %870 = vector.load %arg15[%c0_334, %c0_335, %c0_336] : memref<3x2x32xf32, #tpu.memory_space<vmem>>, vector<3x2x32xf32>
      tpu.vector_store %arg15[%c0_334, %c0_335, %c0_336], %869 {strides = array<i32>} : memref<3x2x32xf32, #tpu.memory_space<vmem>>, vector<3x2x32xf32>,
      %c0_337 = arith.constant 0 : index
      %c0_338 = arith.constant 0 : index
      %c0_339 = arith.constant 0 : index
      %871 = vector.load %arg9[%c0_337, %c0_338, %c0_339] : memref<3x2x32xf32, #tpu.memory_space<vmem>>, vector<3x2x32xf32>
      %c0_340 = arith.constant 0 : index
      %c0_341 = arith.constant 0 : index
      %c0_342 = arith.constant 0 : index
      %872 = vector.load %arg16[%c0_340, %c0_341, %c0_342] : memref<3x2x32xf32, #tpu.memory_space<vmem>>, vector<3x2x32xf32>
      tpu.vector_store %arg16[%c0_340, %c0_341, %c0_342], %871 {strides = array<i32>} : memref<3x2x32xf32, #tpu.memory_space<vmem>>, vector<3x2x32xf32>,
      %c0_343 = arith.constant 0 : index
      %c0_344 = arith.constant 0 : index
      %c0_345 = arith.constant 0 : index
      %873 = vector.load %arg8[%c0_343, %c0_344, %c0_345] : memref<3x2x32xf32, #tpu.memory_space<vmem>>, vector<3x2x32xf32>
      %c0_346 = arith.constant 0 : index
      %c0_347 = arith.constant 0 : index
      %c0_348 = arith.constant 0 : index
      %874 = vector.load %arg13[%c0_346, %c0_347, %c0_348] : memref<3x2x32xf32, #tpu.memory_space<vmem>>, vector<3x2x32xf32>
      tpu.vector_store %arg13[%c0_346, %c0_347, %c0_348], %873 {strides = array<i32>} : memref<3x2x32xf32, #tpu.memory_space<vmem>>, vector<3x2x32xf32>,
      %c0_349 = arith.constant 0 : index
      %c0_350 = arith.constant 0 : index
      %c0_351 = arith.constant 0 : index
      %875 = vector.load %arg9[%c0_349, %c0_350, %c0_351] : memref<3x2x32xf32, #tpu.memory_space<vmem>>, vector<3x2x32xf32>
      %c0_352 = arith.constant 0 : index
      %c0_353 = arith.constant 0 : index
      %c0_354 = arith.constant 0 : index
      %876 = vector.load %arg14[%c0_352, %c0_353, %c0_354] : memref<3x2x32xf32, #tpu.memory_space<vmem>>, vector<3x2x32xf32>
      tpu.vector_store %arg14[%c0_352, %c0_353, %c0_354], %875 {strides = array<i32>} : memref<3x2x32xf32, #tpu.memory_space<vmem>>, vector<3x2x32xf32>,
    } else {
    }
    %c0 = arith.constant 0 : index
    %c0_1 = arith.constant 0 : index
    %3 = vector.load %arg10[%c0, %c0_1] : memref<1x32xf32, #tpu.memory_space<vmem>>, vector<1x32xf32>
    %c0_2 = arith.constant 0 : index
    %c0_3 = arith.constant 0 : index
    %4 = vector.load %arg11[%c0_2, %c0_3] : memref<1x32xf32, #tpu.memory_space<vmem>>, vector<1x32xf32>
    %c0_4 = arith.constant 0 : index
    %c0_5 = arith.constant 0 : index
    %c0_6 = arith.constant 0 : index
    %5 = vector.load %arg2[%c0_4, %c0_5, %c0_6] : memref<2x8x32xf32, #tpu.memory_space<vmem>>, vector<2x8x32xf32>
    %6 = vector.shape_cast %5 : vector<2x8x32xf32> to vector<16x32xf32>
    %c0_7 = arith.constant 0 : index
    %c0_8 = arith.constant 0 : index
    %7 = vector.load %arg3[%c0_7, %c0_8] : memref<32x128xf32, #tpu.memory_space<vmem>>, vector<32x128xf32>
    %cst = arith.constant dense<0.000000e+00> : vector<16x128xf32>
    %8 = tpu.matmul %6, %7, %cst {dimension_numbers = #tpu.dot_dimension_numbers<[1], [0], [0], [1], [0, 0, 1, 1], [], []>} : vector<16x32xf32>, vector<32x128xf32>, vector<16x128xf32> -> vector<16x128xf32>
    %c0_9 = arith.constant 0 : index
    %c0_10 = arith.constant 0 : index
    %9 = vector.load %arg6[%c0_9, %c0_10] : memref<1x128xf32, #tpu.memory_space<vmem>>, vector<1x128xf32>
    %10 = vector.broadcast %9 : vector<1x128xf32> to vector<16x128xf32>
    %11 = arith.addf %8, %10 : vector<16x128xf32>
    %12 = vector.shape_cast %11 : vector<16x128xf32> to vector<2x8x128xf32>
    %c0_11 = arith.constant 0 : index
    %c0_12 = arith.constant 0 : index
    %c0_13 = arith.constant 0 : index
    %13 = vector.load %arg17[%c0_11, %c0_12, %c0_13] : memref<2x8x128xf32, #tpu.memory_space<vmem>>, vector<2x8x128xf32>
    tpu.vector_store %arg17[%c0_11, %c0_12, %c0_13], %12 {strides = array<i32>} : memref<2x8x128xf32, #tpu.memory_space<vmem>>, vector<2x8x128xf32>,
    %c0_14 = arith.constant 0 : index
    %c0_15 = arith.constant 0 : index
    %c0_16 = arith.constant 0 : index
    %14 = vector.load %arg5[%c0_14, %c0_15, %c0_16] : memref<3x32x128xf32, #tpu.memory_space<vmem>>, vector<1x32x128xf32>
    %15 = vector.shape_cast %14 : vector<1x32x128xf32> to vector<32x128xf32>
    %c0_17 = arith.constant 0 : index
    %c0_18 = arith.constant 0 : index
    %c0_19 = arith.constant 0 : index
    %16 = vector.load %arg15[%c0_17, %c0_18, %c0_19] : memref<3x2x32xf32, #tpu.memory_space<vmem>>, vector<1x2x32xf32>
    %17 = vector.shape_cast %16 : vector<1x2x32xf32> to vector<2x32xf32>
    %c0_20 = arith.constant 0 : index
    %c0_21 = arith.constant 0 : index
    %c0_22 = arith.constant 0 : index
    %18 = vector.load %arg16[%c0_20, %c0_21, %c0_22] : memref<3x2x32xf32, #tpu.memory_space<vmem>>, vector<1x2x32xf32>
    %19 = vector.shape_cast %18 : vector<1x2x32xf32> to vector<2x32xf32>
    %c0_23 = arith.constant 0 : index
    %c0_24 = arith.constant 0 : index
    %c0_25 = arith.constant 0 : index
    %20 = vector.load %arg17[%c0_23, %c0_24, %c0_25] : memref<2x8x128xf32, #tpu.memory_space<vmem>>, vector<2x1x128xf32>
    %21 = vector.shape_cast %20 : vector<2x1x128xf32> to vector<2x128xf32>
    %cst_26 = arith.constant dense<0.000000e+00> : vector<2x128xf32>
    %22 = tpu.matmul %17, %15, %cst_26 {dimension_numbers = #tpu.dot_dimension_numbers<[1], [0], [0], [1], [0, 0, 1, 1], [], []>} : vector<2x32xf32>, vector<32x128xf32>, vector<2x128xf32> -> vector<2x128xf32>
    %23 = arith.addf %21, %22 : vector<2x128xf32>
    %24 = vector.extract_strided_slice %23 {offsets = [0, 0], sizes = [2, 32], strides = [1, 1]} : vector<2x128xf32> to vector<2x32xf32>
    %25 = arith.negf %24 : vector<2x32xf32>
    %26 = math.exp %25 : vector<2x32xf32>
    %cst_27 = arith.constant 1.000000e+00 : f32
    %27 = vector.broadcast %cst_27 : f32 to vector<2x32xf32>
    %28 = arith.addf %27, %26 : vector<2x32xf32>
    %29 = arith.divf %27, %28 : vector<2x32xf32>
    %30 = vector.extract_strided_slice %23 {offsets = [0, 32], sizes = [2, 32], strides = [1, 1]} : vector<2x128xf32> to vector<2x32xf32>
    %31 = arith.negf %30 : vector<2x32xf32>
    %32 = math.exp %31 : vector<2x32xf32>
    %cst_28 = arith.constant 1.000000e+00 : f32
    %33 = vector.broadcast %cst_28 : f32 to vector<2x32xf32>
    %34 = arith.addf %33, %32 : vector<2x32xf32>
    %35 = arith.divf %33, %34 : vector<2x32xf32>
    %36 = vector.extract_strided_slice %23 {offsets = [0, 64], sizes = [2, 32], strides = [1, 1]} : vector<2x128xf32> to vector<2x32xf32>
    %37 = math.tanh %36 : vector<2x32xf32>
    %38 = vector.extract_strided_slice %23 {offsets = [0, 96], sizes = [2, 32], strides = [1, 1]} : vector<2x128xf32> to vector<2x32xf32>
    %39 = arith.negf %38 : vector<2x32xf32>
    %40 = math.exp %39 : vector<2x32xf32>
    %cst_29 = arith.constant 1.000000e+00 : f32
    %41 = vector.broadcast %cst_29 : f32 to vector<2x32xf32>
    %42 = arith.addf %41, %40 : vector<2x32xf32>
    %43 = arith.divf %41, %42 : vector<2x32xf32>
    %44 = arith.mulf %35, %19 : vector<2x32xf32>
    %45 = arith.mulf %29, %37 : vector<2x32xf32>
    %46 = arith.addf %44, %45 : vector<2x32xf32>
    %47 = math.tanh %46 : vector<2x32xf32>
    %48 = arith.mulf %43, %47 : vector<2x32xf32>
    %c0_30 = arith.constant 0 : index
    %c0_31 = arith.constant 0 : index
    %c0_32 = arith.constant 0 : index
    %49 = vector.load %arg18[%c0_30, %c0_31, %c0_32] : memref<2x8x32xf32, #tpu.memory_space<vmem>>, vector<2x1x32xf32>
    %50 = vector.shape_cast %49 : vector<2x1x32xf32> to vector<2x32xf32>
    %51 = vector.shape_cast %48 : vector<2x32xf32> to vector<2x1x32xf32>
    tpu.vector_store %arg18[%c0_30, %c0_31, %c0_32], %51 {strides = array<i32>} : memref<2x8x32xf32, #tpu.memory_space<vmem>>, vector<2x1x32xf32>,
    %c0_33 = arith.constant 0 : index
    %c1 = arith.constant 1 : index
    %c0_34 = arith.constant 0 : index
    %52 = vector.load %arg17[%c0_33, %c1, %c0_34] : memref<2x8x128xf32, #tpu.memory_space<vmem>>, vector<2x1x128xf32>
    %53 = vector.shape_cast %52 : vector<2x1x128xf32> to vector<2x128xf32>
    %cst_35 = arith.constant dense<0.000000e+00> : vector<2x128xf32>
    %54 = tpu.matmul %48, %15, %cst_35 {dimension_numbers = #tpu.dot_dimension_numbers<[1], [0], [0], [1], [0, 0, 1, 1], [], []>} : vector<2x32xf32>, vector<32x128xf32>, vector<2x128xf32> -> vector<2x128xf32>
    %55 = arith.addf %53, %54 : vector<2x128xf32>
    %56 = vector.extract_strided_slice %55 {offsets = [0, 0], sizes = [2, 32], strides = [1, 1]} : vector<2x128xf32> to vector<2x32xf32>
    %57 = arith.negf %56 : vector<2x32xf32>
    %58 = math.exp %57 : vector<2x32xf32>
    %cst_36 = arith.constant 1.000000e+00 : f32
    %59 = vector.broadcast %cst_36 : f32 to vector<2x32xf32>
    %60 = arith.addf %59, %58 : vector<2x32xf32>
    %61 = arith.divf %59, %60 : vector<2x32xf32>
    %62 = vector.extract_strided_slice %55 {offsets = [0, 32], sizes = [2, 32], strides = [1, 1]} : vector<2x128xf32> to vector<2x32xf32>
    %63 = arith.negf %62 : vector<2x32xf32>
    %64 = math.exp %63 : vector<2x32xf32>
    %cst_37 = arith.constant 1.000000e+00 : f32
    %65 = vector.broadcast %cst_37 : f32 to vector<2x32xf32>
    %66 = arith.addf %65, %64 : vector<2x32xf32>
    %67 = arith.divf %65, %66 : vector<2x32xf32>
    %68 = vector.extract_strided_slice %55 {offsets = [0, 64], sizes = [2, 32], strides = [1, 1]} : vector<2x128xf32> to vector<2x32xf32>
    %69 = math.tanh %68 : vector<2x32xf32>
    %70 = vector.extract_strided_slice %55 {offsets = [0, 96], sizes = [2, 32], strides = [1, 1]} : vector<2x128xf32> to vector<2x32xf32>
    %71 = arith.negf %70 : vector<2x32xf32>
    %72 = math.exp %71 : vector<2x32xf32>
    %cst_38 = arith.constant 1.000000e+00 : f32
    %73 = vector.broadcast %cst_38 : f32 to vector<2x32xf32>
    %74 = arith.addf %73, %72 : vector<2x32xf32>
    %75 = arith.divf %73, %74 : vector<2x32xf32>
    %76 = arith.mulf %67, %46 : vector<2x32xf32>
    %77 = arith.mulf %61, %69 : vector<2x32xf32>
    %78 = arith.addf %76, %77 : vector<2x32xf32>
    %79 = math.tanh %78 : vector<2x32xf32>
    %80 = arith.mulf %75, %79 : vector<2x32xf32>
    %c0_39 = arith.constant 0 : index
    %c1_40 = arith.constant 1 : index
    %c0_41 = arith.constant 0 : index
    %81 = vector.load %arg18[%c0_39, %c1_40, %c0_41] : memref<2x8x32xf32, #tpu.memory_space<vmem>>, vector<2x1x32xf32>
    %82 = vector.shape_cast %81 : vector<2x1x32xf32> to vector<2x32xf32>
    %83 = vector.shape_cast %80 : vector<2x32xf32> to vector<2x1x32xf32>
    tpu.vector_store %arg18[%c0_39, %c1_40, %c0_41], %83 {strides = array<i32>} : memref<2x8x32xf32, #tpu.memory_space<vmem>>, vector<2x1x32xf32>,
    %c0_42 = arith.constant 0 : index
    %c2 = arith.constant 2 : index
    %c0_43 = arith.constant 0 : index
    %84 = vector.load %arg17[%c0_42, %c2, %c0_43] : memref<2x8x128xf32, #tpu.memory_space<vmem>>, vector<2x1x128xf32>
    %85 = vector.shape_cast %84 : vector<2x1x128xf32> to vector<2x128xf32>
    %cst_44 = arith.constant dense<0.000000e+00> : vector<2x128xf32>
    %86 = tpu.matmul %80, %15, %cst_44 {dimension_numbers = #tpu.dot_dimension_numbers<[1], [0], [0], [1], [0, 0, 1, 1], [], []>} : vector<2x32xf32>, vector<32x128xf32>, vector<2x128xf32> -> vector<2x128xf32>
    %87 = arith.addf %85, %86 : vector<2x128xf32>
    %88 = vector.extract_strided_slice %87 {offsets = [0, 0], sizes = [2, 32], strides = [1, 1]} : vector<2x128xf32> to vector<2x32xf32>
    %89 = arith.negf %88 : vector<2x32xf32>
    %90 = math.exp %89 : vector<2x32xf32>
    %cst_45 = arith.constant 1.000000e+00 : f32
    %91 = vector.broadcast %cst_45 : f32 to vector<2x32xf32>
    %92 = arith.addf %91, %90 : vector<2x32xf32>
    %93 = arith.divf %91, %92 : vector<2x32xf32>
    %94 = vector.extract_strided_slice %87 {offsets = [0, 32], sizes = [2, 32], strides = [1, 1]} : vector<2x128xf32> to vector<2x32xf32>
    %95 = arith.negf %94 : vector<2x32xf32>
    %96 = math.exp %95 : vector<2x32xf32>
    %cst_46 = arith.constant 1.000000e+00 : f32
    %97 = vector.broadcast %cst_46 : f32 to vector<2x32xf32>
    %98 = arith.addf %97, %96 : vector<2x32xf32>
    %99 = arith.divf %97, %98 : vector<2x32xf32>
    %100 = vector.extract_strided_slice %87 {offsets = [0, 64], sizes = [2, 32], strides = [1, 1]} : vector<2x128xf32> to vector<2x32xf32>
    %101 = math.tanh %100 : vector<2x32xf32>
    %102 = vector.extract_strided_slice %87 {offsets = [0, 96], sizes = [2, 32], strides = [1, 1]} : vector<2x128xf32> to vector<2x32xf32>
    %103 = arith.negf %102 : vector<2x32xf32>
    %104 = math.exp %103 : vector<2x32xf32>
    %cst_47 = arith.constant 1.000000e+00 : f32
    %105 = vector.broadcast %cst_47 : f32 to vector<2x32xf32>
    %106 = arith.addf %105, %104 : vector<2x32xf32>
    %107 = arith.divf %105, %106 : vector<2x32xf32>
    %108 = arith.mulf %99, %78 : vector<2x32xf32>
    %109 = arith.mulf %93, %101 : vector<2x32xf32>
    %110 = arith.addf %108, %109 : vector<2x32xf32>
    %111 = math.tanh %110 : vector<2x32xf32>
    %112 = arith.mulf %107, %111 : vector<2x32xf32>
    %c0_48 = arith.constant 0 : index
    %c2_49 = arith.constant 2 : index
    %c0_50 = arith.constant 0 : index
    %113 = vector.load %arg18[%c0_48, %c2_49, %c0_50] : memref<2x8x32xf32, #tpu.memory_space<vmem>>, vector<2x1x32xf32>
    %114 = vector.shape_cast %113 : vector<2x1x32xf32> to vector<2x32xf32>
    %115 = vector.shape_cast %112 : vector<2x32xf32> to vector<2x1x32xf32>
    tpu.vector_store %arg18[%c0_48, %c2_49, %c0_50], %115 {strides = array<i32>} : memref<2x8x32xf32, #tpu.memory_space<vmem>>, vector<2x1x32xf32>,
    %c0_51 = arith.constant 0 : index
    %c3 = arith.constant 3 : index
    %c0_52 = arith.constant 0 : index
    %116 = vector.load %arg17[%c0_51, %c3, %c0_52] : memref<2x8x128xf32, #tpu.memory_space<vmem>>, vector<2x1x128xf32>
    %117 = vector.shape_cast %116 : vector<2x1x128xf32> to vector<2x128xf32>
    %cst_53 = arith.constant dense<0.000000e+00> : vector<2x128xf32>
    %118 = tpu.matmul %112, %15, %cst_53 {dimension_numbers = #tpu.dot_dimension_numbers<[1], [0], [0], [1], [0, 0, 1, 1], [], []>} : vector<2x32xf32>, vector<32x128xf32>, vector<2x128xf32> -> vector<2x128xf32>
    %119 = arith.addf %117, %118 : vector<2x128xf32>
    %120 = vector.extract_strided_slice %119 {offsets = [0, 0], sizes = [2, 32], strides = [1, 1]} : vector<2x128xf32> to vector<2x32xf32>
    %121 = arith.negf %120 : vector<2x32xf32>
    %122 = math.exp %121 : vector<2x32xf32>
    %cst_54 = arith.constant 1.000000e+00 : f32
    %123 = vector.broadcast %cst_54 : f32 to vector<2x32xf32>
    %124 = arith.addf %123, %122 : vector<2x32xf32>
    %125 = arith.divf %123, %124 : vector<2x32xf32>
    %126 = vector.extract_strided_slice %119 {offsets = [0, 32], sizes = [2, 32], strides = [1, 1]} : vector<2x128xf32> to vector<2x32xf32>
    %127 = arith.negf %126 : vector<2x32xf32>
    %128 = math.exp %127 : vector<2x32xf32>
    %cst_55 = arith.constant 1.000000e+00 : f32
    %129 = vector.broadcast %cst_55 : f32 to vector<2x32xf32>
    %130 = arith.addf %129, %128 : vector<2x32xf32>
    %131 = arith.divf %129, %130 : vector<2x32xf32>
    %132 = vector.extract_strided_slice %119 {offsets = [0, 64], sizes = [2, 32], strides = [1, 1]} : vector<2x128xf32> to vector<2x32xf32>
    %133 = math.tanh %132 : vector<2x32xf32>
    %134 = vector.extract_strided_slice %119 {offsets = [0, 96], sizes = [2, 32], strides = [1, 1]} : vector<2x128xf32> to vector<2x32xf32>
    %135 = arith.negf %134 : vector<2x32xf32>
    %136 = math.exp %135 : vector<2x32xf32>
    %cst_56 = arith.constant 1.000000e+00 : f32
    %137 = vector.broadcast %cst_56 : f32 to vector<2x32xf32>
    %138 = arith.addf %137, %136 : vector<2x32xf32>
    %139 = arith.divf %137, %138 : vector<2x32xf32>
    %140 = arith.mulf %131, %110 : vector<2x32xf32>
    %141 = arith.mulf %125, %133 : vector<2x32xf32>
    %142 = arith.addf %140, %141 : vector<2x32xf32>
    %143 = math.tanh %142 : vector<2x32xf32>
    %144 = arith.mulf %139, %143 : vector<2x32xf32>
    %c0_57 = arith.constant 0 : index
    %c3_58 = arith.constant 3 : index
    %c0_59 = arith.constant 0 : index
    %145 = vector.load %arg18[%c0_57, %c3_58, %c0_59] : memref<2x8x32xf32, #tpu.memory_space<vmem>>, vector<2x1x32xf32>
    %146 = vector.shape_cast %145 : vector<2x1x32xf32> to vector<2x32xf32>
    %147 = vector.shape_cast %144 : vector<2x32xf32> to vector<2x1x32xf32>
    tpu.vector_store %arg18[%c0_57, %c3_58, %c0_59], %147 {strides = array<i32>} : memref<2x8x32xf32, #tpu.memory_space<vmem>>, vector<2x1x32xf32>,
    %c0_60 = arith.constant 0 : index
    %c4 = arith.constant 4 : index
    %c0_61 = arith.constant 0 : index
    %148 = vector.load %arg17[%c0_60, %c4, %c0_61] : memref<2x8x128xf32, #tpu.memory_space<vmem>>, vector<2x1x128xf32>
    %149 = vector.shape_cast %148 : vector<2x1x128xf32> to vector<2x128xf32>
    %cst_62 = arith.constant dense<0.000000e+00> : vector<2x128xf32>
    %150 = tpu.matmul %144, %15, %cst_62 {dimension_numbers = #tpu.dot_dimension_numbers<[1], [0], [0], [1], [0, 0, 1, 1], [], []>} : vector<2x32xf32>, vector<32x128xf32>, vector<2x128xf32> -> vector<2x128xf32>
    %151 = arith.addf %149, %150 : vector<2x128xf32>
    %152 = vector.extract_strided_slice %151 {offsets = [0, 0], sizes = [2, 32], strides = [1, 1]} : vector<2x128xf32> to vector<2x32xf32>
    %153 = arith.negf %152 : vector<2x32xf32>
    %154 = math.exp %153 : vector<2x32xf32>
    %cst_63 = arith.constant 1.000000e+00 : f32
    %155 = vector.broadcast %cst_63 : f32 to vector<2x32xf32>
    %156 = arith.addf %155, %154 : vector<2x32xf32>
    %157 = arith.divf %155, %156 : vector<2x32xf32>
    %158 = vector.extract_strided_slice %151 {offsets = [0, 32], sizes = [2, 32], strides = [1, 1]} : vector<2x128xf32> to vector<2x32xf32>
    %159 = arith.negf %158 : vector<2x32xf32>
    %160 = math.exp %159 : vector<2x32xf32>
    %cst_64 = arith.constant 1.000000e+00 : f32
    %161 = vector.broadcast %cst_64 : f32 to vector<2x32xf32>
    %162 = arith.addf %161, %160 : vector<2x32xf32>
    %163 = arith.divf %161, %162 : vector<2x32xf32>
    %164 = vector.extract_strided_slice %151 {offsets = [0, 64], sizes = [2, 32], strides = [1, 1]} : vector<2x128xf32> to vector<2x32xf32>
    %165 = math.tanh %164 : vector<2x32xf32>
    %166 = vector.extract_strided_slice %151 {offsets = [0, 96], sizes = [2, 32], strides = [1, 1]} : vector<2x128xf32> to vector<2x32xf32>
    %167 = arith.negf %166 : vector<2x32xf32>
    %168 = math.exp %167 : vector<2x32xf32>
    %cst_65 = arith.constant 1.000000e+00 : f32
    %169 = vector.broadcast %cst_65 : f32 to vector<2x32xf32>
    %170 = arith.addf %169, %168 : vector<2x32xf32>
    %171 = arith.divf %169, %170 : vector<2x32xf32>
    %172 = arith.mulf %163, %142 : vector<2x32xf32>
    %173 = arith.mulf %157, %165 : vector<2x32xf32>
    %174 = arith.addf %172, %173 : vector<2x32xf32>
    %175 = math.tanh %174 : vector<2x32xf32>
    %176 = arith.mulf %171, %175 : vector<2x32xf32>
    %c0_66 = arith.constant 0 : index
    %c4_67 = arith.constant 4 : index
    %c0_68 = arith.constant 0 : index
    %177 = vector.load %arg18[%c0_66, %c4_67, %c0_68] : memref<2x8x32xf32, #tpu.memory_space<vmem>>, vector<2x1x32xf32>
    %178 = vector.shape_cast %177 : vector<2x1x32xf32> to vector<2x32xf32>
    %179 = vector.shape_cast %176 : vector<2x32xf32> to vector<2x1x32xf32>
    tpu.vector_store %arg18[%c0_66, %c4_67, %c0_68], %179 {strides = array<i32>} : memref<2x8x32xf32, #tpu.memory_space<vmem>>, vector<2x1x32xf32>,
    %c0_69 = arith.constant 0 : index
    %c5 = arith.constant 5 : index
    %c0_70 = arith.constant 0 : index
    %180 = vector.load %arg17[%c0_69, %c5, %c0_70] : memref<2x8x128xf32, #tpu.memory_space<vmem>>, vector<2x1x128xf32>
    %181 = vector.shape_cast %180 : vector<2x1x128xf32> to vector<2x128xf32>
    %cst_71 = arith.constant dense<0.000000e+00> : vector<2x128xf32>
    %182 = tpu.matmul %176, %15, %cst_71 {dimension_numbers = #tpu.dot_dimension_numbers<[1], [0], [0], [1], [0, 0, 1, 1], [], []>} : vector<2x32xf32>, vector<32x128xf32>, vector<2x128xf32> -> vector<2x128xf32>
    %183 = arith.addf %181, %182 : vector<2x128xf32>
    %184 = vector.extract_strided_slice %183 {offsets = [0, 0], sizes = [2, 32], strides = [1, 1]} : vector<2x128xf32> to vector<2x32xf32>
    %185 = arith.negf %184 : vector<2x32xf32>
    %186 = math.exp %185 : vector<2x32xf32>
    %cst_72 = arith.constant 1.000000e+00 : f32
    %187 = vector.broadcast %cst_72 : f32 to vector<2x32xf32>
    %188 = arith.addf %187, %186 : vector<2x32xf32>
    %189 = arith.divf %187, %188 : vector<2x32xf32>
    %190 = vector.extract_strided_slice %183 {offsets = [0, 32], sizes = [2, 32], strides = [1, 1]} : vector<2x128xf32> to vector<2x32xf32>
    %191 = arith.negf %190 : vector<2x32xf32>
    %192 = math.exp %191 : vector<2x32xf32>
    %cst_73 = arith.constant 1.000000e+00 : f32
    %193 = vector.broadcast %cst_73 : f32 to vector<2x32xf32>
    %194 = arith.addf %193, %192 : vector<2x32xf32>
    %195 = arith.divf %193, %194 : vector<2x32xf32>
    %196 = vector.extract_strided_slice %183 {offsets = [0, 64], sizes = [2, 32], strides = [1, 1]} : vector<2x128xf32> to vector<2x32xf32>
    %197 = math.tanh %196 : vector<2x32xf32>
    %198 = vector.extract_strided_slice %183 {offsets = [0, 96], sizes = [2, 32], strides = [1, 1]} : vector<2x128xf32> to vector<2x32xf32>
    %199 = arith.negf %198 : vector<2x32xf32>
    %200 = math.exp %199 : vector<2x32xf32>
    %cst_74 = arith.constant 1.000000e+00 : f32
    %201 = vector.broadcast %cst_74 : f32 to vector<2x32xf32>
    %202 = arith.addf %201, %200 : vector<2x32xf32>
    %203 = arith.divf %201, %202 : vector<2x32xf32>
    %204 = arith.mulf %195, %174 : vector<2x32xf32>
    %205 = arith.mulf %189, %197 : vector<2x32xf32>
    %206 = arith.addf %204, %205 : vector<2x32xf32>
    %207 = math.tanh %206 : vector<2x32xf32>
    %208 = arith.mulf %203, %207 : vector<2x32xf32>
    %c0_75 = arith.constant 0 : index
    %c5_76 = arith.constant 5 : index
    %c0_77 = arith.constant 0 : index
    %209 = vector.load %arg18[%c0_75, %c5_76, %c0_77] : memref<2x8x32xf32, #tpu.memory_space<vmem>>, vector<2x1x32xf32>
    %210 = vector.shape_cast %209 : vector<2x1x32xf32> to vector<2x32xf32>
    %211 = vector.shape_cast %208 : vector<2x32xf32> to vector<2x1x32xf32>
    tpu.vector_store %arg18[%c0_75, %c5_76, %c0_77], %211 {strides = array<i32>} : memref<2x8x32xf32, #tpu.memory_space<vmem>>, vector<2x1x32xf32>,
    %c0_78 = arith.constant 0 : index
    %c6 = arith.constant 6 : index
    %c0_79 = arith.constant 0 : index
    %212 = vector.load %arg17[%c0_78, %c6, %c0_79] : memref<2x8x128xf32, #tpu.memory_space<vmem>>, vector<2x1x128xf32>
    %213 = vector.shape_cast %212 : vector<2x1x128xf32> to vector<2x128xf32>
    %cst_80 = arith.constant dense<0.000000e+00> : vector<2x128xf32>
    %214 = tpu.matmul %208, %15, %cst_80 {dimension_numbers = #tpu.dot_dimension_numbers<[1], [0], [0], [1], [0, 0, 1, 1], [], []>} : vector<2x32xf32>, vector<32x128xf32>, vector<2x128xf32> -> vector<2x128xf32>
    %215 = arith.addf %213, %214 : vector<2x128xf32>
    %216 = vector.extract_strided_slice %215 {offsets = [0, 0], sizes = [2, 32], strides = [1, 1]} : vector<2x128xf32> to vector<2x32xf32>
    %217 = arith.negf %216 : vector<2x32xf32>
    %218 = math.exp %217 : vector<2x32xf32>
    %cst_81 = arith.constant 1.000000e+00 : f32
    %219 = vector.broadcast %cst_81 : f32 to vector<2x32xf32>
    %220 = arith.addf %219, %218 : vector<2x32xf32>
    %221 = arith.divf %219, %220 : vector<2x32xf32>
    %222 = vector.extract_strided_slice %215 {offsets = [0, 32], sizes = [2, 32], strides = [1, 1]} : vector<2x128xf32> to vector<2x32xf32>
    %223 = arith.negf %222 : vector<2x32xf32>
    %224 = math.exp %223 : vector<2x32xf32>
    %cst_82 = arith.constant 1.000000e+00 : f32
    %225 = vector.broadcast %cst_82 : f32 to vector<2x32xf32>
    %226 = arith.addf %225, %224 : vector<2x32xf32>
    %227 = arith.divf %225, %226 : vector<2x32xf32>
    %228 = vector.extract_strided_slice %215 {offsets = [0, 64], sizes = [2, 32], strides = [1, 1]} : vector<2x128xf32> to vector<2x32xf32>
    %229 = math.tanh %228 : vector<2x32xf32>
    %230 = vector.extract_strided_slice %215 {offsets = [0, 96], sizes = [2, 32], strides = [1, 1]} : vector<2x128xf32> to vector<2x32xf32>
    %231 = arith.negf %230 : vector<2x32xf32>
    %232 = math.exp %231 : vector<2x32xf32>
    %cst_83 = arith.constant 1.000000e+00 : f32
    %233 = vector.broadcast %cst_83 : f32 to vector<2x32xf32>
    %234 = arith.addf %233, %232 : vector<2x32xf32>
    %235 = arith.divf %233, %234 : vector<2x32xf32>
    %236 = arith.mulf %227, %206 : vector<2x32xf32>
    %237 = arith.mulf %221, %229 : vector<2x32xf32>
    %238 = arith.addf %236, %237 : vector<2x32xf32>
    %239 = math.tanh %238 : vector<2x32xf32>
    %240 = arith.mulf %235, %239 : vector<2x32xf32>
    %c0_84 = arith.constant 0 : index
    %c6_85 = arith.constant 6 : index
    %c0_86 = arith.constant 0 : index
    %241 = vector.load %arg18[%c0_84, %c6_85, %c0_86] : memref<2x8x32xf32, #tpu.memory_space<vmem>>, vector<2x1x32xf32>
    %242 = vector.shape_cast %241 : vector<2x1x32xf32> to vector<2x32xf32>
    %243 = vector.shape_cast %240 : vector<2x32xf32> to vector<2x1x32xf32>
    tpu.vector_store %arg18[%c0_84, %c6_85, %c0_86], %243 {strides = array<i32>} : memref<2x8x32xf32, #tpu.memory_space<vmem>>, vector<2x1x32xf32>,
    %c0_87 = arith.constant 0 : index
    %c7 = arith.constant 7 : index
    %c0_88 = arith.constant 0 : index
    %244 = vector.load %arg17[%c0_87, %c7, %c0_88] : memref<2x8x128xf32, #tpu.memory_space<vmem>>, vector<2x1x128xf32>
    %245 = vector.shape_cast %244 : vector<2x1x128xf32> to vector<2x128xf32>
    %cst_89 = arith.constant dense<0.000000e+00> : vector<2x128xf32>
    %246 = tpu.matmul %240, %15, %cst_89 {dimension_numbers = #tpu.dot_dimension_numbers<[1], [0], [0], [1], [0, 0, 1, 1], [], []>} : vector<2x32xf32>, vector<32x128xf32>, vector<2x128xf32> -> vector<2x128xf32>
    %247 = arith.addf %245, %246 : vector<2x128xf32>
    %248 = vector.extract_strided_slice %247 {offsets = [0, 0], sizes = [2, 32], strides = [1, 1]} : vector<2x128xf32> to vector<2x32xf32>
    %249 = arith.negf %248 : vector<2x32xf32>
    %250 = math.exp %249 : vector<2x32xf32>
    %cst_90 = arith.constant 1.000000e+00 : f32
    %251 = vector.broadcast %cst_90 : f32 to vector<2x32xf32>
    %252 = arith.addf %251, %250 : vector<2x32xf32>
    %253 = arith.divf %251, %252 : vector<2x32xf32>
    %254 = vector.extract_strided_slice %247 {offsets = [0, 32], sizes = [2, 32], strides = [1, 1]} : vector<2x128xf32> to vector<2x32xf32>
    %255 = arith.negf %254 : vector<2x32xf32>
    %256 = math.exp %255 : vector<2x32xf32>
    %cst_91 = arith.constant 1.000000e+00 : f32
    %257 = vector.broadcast %cst_91 : f32 to vector<2x32xf32>
    %258 = arith.addf %257, %256 : vector<2x32xf32>
    %259 = arith.divf %257, %258 : vector<2x32xf32>
    %260 = vector.extract_strided_slice %247 {offsets = [0, 64], sizes = [2, 32], strides = [1, 1]} : vector<2x128xf32> to vector<2x32xf32>
    %261 = math.tanh %260 : vector<2x32xf32>
    %262 = vector.extract_strided_slice %247 {offsets = [0, 96], sizes = [2, 32], strides = [1, 1]} : vector<2x128xf32> to vector<2x32xf32>
    %263 = arith.negf %262 : vector<2x32xf32>
    %264 = math.exp %263 : vector<2x32xf32>
    %cst_92 = arith.constant 1.000000e+00 : f32
    %265 = vector.broadcast %cst_92 : f32 to vector<2x32xf32>
    %266 = arith.addf %265, %264 : vector<2x32xf32>
    %267 = arith.divf %265, %266 : vector<2x32xf32>
    %268 = arith.mulf %259, %238 : vector<2x32xf32>
    %269 = arith.mulf %253, %261 : vector<2x32xf32>
    %270 = arith.addf %268, %269 : vector<2x32xf32>
    %271 = math.tanh %270 : vector<2x32xf32>
    %272 = arith.mulf %267, %271 : vector<2x32xf32>
    %c0_93 = arith.constant 0 : index
    %c7_94 = arith.constant 7 : index
    %c0_95 = arith.constant 0 : index
    %273 = vector.load %arg18[%c0_93, %c7_94, %c0_95] : memref<2x8x32xf32, #tpu.memory_space<vmem>>, vector<2x1x32xf32>
    %274 = vector.shape_cast %273 : vector<2x1x32xf32> to vector<2x32xf32>
    %275 = vector.shape_cast %272 : vector<2x32xf32> to vector<2x1x32xf32>
    tpu.vector_store %arg18[%c0_93, %c7_94, %c0_95], %275 {strides = array<i32>} : memref<2x8x32xf32, #tpu.memory_space<vmem>>, vector<2x1x32xf32>,
    %c0_96 = arith.constant 0 : index
    %c0_97 = arith.constant 0 : index
    %c0_98 = arith.constant 0 : index
    %276 = vector.load %arg15[%c0_96, %c0_97, %c0_98] : memref<3x2x32xf32, #tpu.memory_space<vmem>>, vector<1x2x32xf32>
    %277 = vector.shape_cast %276 : vector<1x2x32xf32> to vector<2x32xf32>
    %278 = vector.shape_cast %272 : vector<2x32xf32> to vector<1x2x32xf32>
    tpu.vector_store %arg15[%c0_96, %c0_97, %c0_98], %278 {strides = array<i32>} : memref<3x2x32xf32, #tpu.memory_space<vmem>>, vector<1x2x32xf32>,
    %c0_99 = arith.constant 0 : index
    %c0_100 = arith.constant 0 : index
    %c0_101 = arith.constant 0 : index
    %279 = vector.load %arg16[%c0_99, %c0_100, %c0_101] : memref<3x2x32xf32, #tpu.memory_space<vmem>>, vector<1x2x32xf32>
    %280 = vector.shape_cast %279 : vector<1x2x32xf32> to vector<2x32xf32>
    %281 = vector.shape_cast %270 : vector<2x32xf32> to vector<1x2x32xf32>
    tpu.vector_store %arg16[%c0_99, %c0_100, %c0_101], %281 {strides = array<i32>} : memref<3x2x32xf32, #tpu.memory_space<vmem>>, vector<1x2x32xf32>,
    %c0_102 = arith.constant 0 : index
    %c0_103 = arith.constant 0 : index
    %c0_104 = arith.constant 0 : index
    %282 = vector.load %arg18[%c0_102, %c0_103, %c0_104] : memref<2x8x32xf32, #tpu.memory_space<vmem>>, vector<2x8x32xf32>
    %283 = vector.shape_cast %282 : vector<2x8x32xf32> to vector<16x32xf32>
    %c0_105 = arith.constant 0 : index
    %c0_106 = arith.constant 0 : index
    %c0_107 = arith.constant 0 : index
    %284 = vector.load %arg4[%c0_105, %c0_106, %c0_107] : memref<2x32x128xf32, #tpu.memory_space<vmem>>, vector<1x32x128xf32>
    %285 = vector.shape_cast %284 : vector<1x32x128xf32> to vector<32x128xf32>
    %cst_108 = arith.constant dense<0.000000e+00> : vector<16x128xf32>
    %286 = tpu.matmul %283, %285, %cst_108 {dimension_numbers = #tpu.dot_dimension_numbers<[1], [0], [0], [1], [0, 0, 1, 1], [], []>} : vector<16x32xf32>, vector<32x128xf32>, vector<16x128xf32> -> vector<16x128xf32>
    %c0_109 = arith.constant 0 : index
    %c0_110 = arith.constant 0 : index
    %c0_111 = arith.constant 0 : index
    %287 = vector.load %arg7[%c0_109, %c0_110, %c0_111] : memref<2x1x128xf32, #tpu.memory_space<vmem>>, vector<1x1x128xf32>
    %288 = vector.shape_cast %287 : vector<1x1x128xf32> to vector<1x128xf32>
    %289 = vector.broadcast %288 : vector<1x128xf32> to vector<16x128xf32>
    %290 = arith.addf %286, %289 : vector<16x128xf32>
    %291 = vector.shape_cast %290 : vector<16x128xf32> to vector<2x8x128xf32>
    %c0_112 = arith.constant 0 : index
    %c0_113 = arith.constant 0 : index
    %c0_114 = arith.constant 0 : index
    %292 = vector.load %arg17[%c0_112, %c0_113, %c0_114] : memref<2x8x128xf32, #tpu.memory_space<vmem>>, vector<2x8x128xf32>
    tpu.vector_store %arg17[%c0_112, %c0_113, %c0_114], %291 {strides = array<i32>} : memref<2x8x128xf32, #tpu.memory_space<vmem>>, vector<2x8x128xf32>,
    %c1_115 = arith.constant 1 : index
    %c0_116 = arith.constant 0 : index
    %c0_117 = arith.constant 0 : index
    %293 = vector.load %arg5[%c1_115, %c0_116, %c0_117] : memref<3x32x128xf32, #tpu.memory_space<vmem>>, vector<1x32x128xf32>
    %294 = vector.shape_cast %293 : vector<1x32x128xf32> to vector<32x128xf32>
    %c1_118 = arith.constant 1 : index
    %c0_119 = arith.constant 0 : index
    %c0_120 = arith.constant 0 : index
    %295 = vector.load %arg15[%c1_118, %c0_119, %c0_120] : memref<3x2x32xf32, #tpu.memory_space<vmem>>, vector<1x2x32xf32>
    %296 = vector.shape_cast %295 : vector<1x2x32xf32> to vector<2x32xf32>
    %c1_121 = arith.constant 1 : index
    %c0_122 = arith.constant 0 : index
    %c0_123 = arith.constant 0 : index
    %297 = vector.load %arg16[%c1_121, %c0_122, %c0_123] : memref<3x2x32xf32, #tpu.memory_space<vmem>>, vector<1x2x32xf32>
    %298 = vector.shape_cast %297 : vector<1x2x32xf32> to vector<2x32xf32>
    %c0_124 = arith.constant 0 : index
    %c0_125 = arith.constant 0 : index
    %c0_126 = arith.constant 0 : index
    %299 = vector.load %arg17[%c0_124, %c0_125, %c0_126] : memref<2x8x128xf32, #tpu.memory_space<vmem>>, vector<2x1x128xf32>
    %300 = vector.shape_cast %299 : vector<2x1x128xf32> to vector<2x128xf32>
    %cst_127 = arith.constant dense<0.000000e+00> : vector<2x128xf32>
    %301 = tpu.matmul %296, %294, %cst_127 {dimension_numbers = #tpu.dot_dimension_numbers<[1], [0], [0], [1], [0, 0, 1, 1], [], []>} : vector<2x32xf32>, vector<32x128xf32>, vector<2x128xf32> -> vector<2x128xf32>
    %302 = arith.addf %300, %301 : vector<2x128xf32>
    %303 = vector.extract_strided_slice %302 {offsets = [0, 0], sizes = [2, 32], strides = [1, 1]} : vector<2x128xf32> to vector<2x32xf32>
    %304 = arith.negf %303 : vector<2x32xf32>
    %305 = math.exp %304 : vector<2x32xf32>
    %cst_128 = arith.constant 1.000000e+00 : f32
    %306 = vector.broadcast %cst_128 : f32 to vector<2x32xf32>
    %307 = arith.addf %306, %305 : vector<2x32xf32>
    %308 = arith.divf %306, %307 : vector<2x32xf32>
    %309 = vector.extract_strided_slice %302 {offsets = [0, 32], sizes = [2, 32], strides = [1, 1]} : vector<2x128xf32> to vector<2x32xf32>
    %310 = arith.negf %309 : vector<2x32xf32>
    %311 = math.exp %310 : vector<2x32xf32>
    %cst_129 = arith.constant 1.000000e+00 : f32
    %312 = vector.broadcast %cst_129 : f32 to vector<2x32xf32>
    %313 = arith.addf %312, %311 : vector<2x32xf32>
    %314 = arith.divf %312, %313 : vector<2x32xf32>
    %315 = vector.extract_strided_slice %302 {offsets = [0, 64], sizes = [2, 32], strides = [1, 1]} : vector<2x128xf32> to vector<2x32xf32>
    %316 = math.tanh %315 : vector<2x32xf32>
    %317 = vector.extract_strided_slice %302 {offsets = [0, 96], sizes = [2, 32], strides = [1, 1]} : vector<2x128xf32> to vector<2x32xf32>
    %318 = arith.negf %317 : vector<2x32xf32>
    %319 = math.exp %318 : vector<2x32xf32>
    %cst_130 = arith.constant 1.000000e+00 : f32
    %320 = vector.broadcast %cst_130 : f32 to vector<2x32xf32>
    %321 = arith.addf %320, %319 : vector<2x32xf32>
    %322 = arith.divf %320, %321 : vector<2x32xf32>
    %323 = arith.mulf %314, %298 : vector<2x32xf32>
    %324 = arith.mulf %308, %316 : vector<2x32xf32>
    %325 = arith.addf %323, %324 : vector<2x32xf32>
    %326 = math.tanh %325 : vector<2x32xf32>
    %327 = arith.mulf %322, %326 : vector<2x32xf32>
    %c0_131 = arith.constant 0 : index
    %c0_132 = arith.constant 0 : index
    %c0_133 = arith.constant 0 : index
    %328 = vector.load %arg18[%c0_131, %c0_132, %c0_133] : memref<2x8x32xf32, #tpu.memory_space<vmem>>, vector<2x1x32xf32>
    %329 = vector.shape_cast %328 : vector<2x1x32xf32> to vector<2x32xf32>
    %330 = vector.shape_cast %327 : vector<2x32xf32> to vector<2x1x32xf32>
    tpu.vector_store %arg18[%c0_131, %c0_132, %c0_133], %330 {strides = array<i32>} : memref<2x8x32xf32, #tpu.memory_space<vmem>>, vector<2x1x32xf32>,
    %c0_134 = arith.constant 0 : index
    %c1_135 = arith.constant 1 : index
    %c0_136 = arith.constant 0 : index
    %331 = vector.load %arg17[%c0_134, %c1_135, %c0_136] : memref<2x8x128xf32, #tpu.memory_space<vmem>>, vector<2x1x128xf32>
    %332 = vector.shape_cast %331 : vector<2x1x128xf32> to vector<2x128xf32>
    %cst_137 = arith.constant dense<0.000000e+00> : vector<2x128xf32>
    %333 = tpu.matmul %327, %294, %cst_137 {dimension_numbers = #tpu.dot_dimension_numbers<[1], [0], [0], [1], [0, 0, 1, 1], [], []>} : vector<2x32xf32>, vector<32x128xf32>, vector<2x128xf32> -> vector<2x128xf32>
    %334 = arith.addf %332, %333 : vector<2x128xf32>
    %335 = vector.extract_strided_slice %334 {offsets = [0, 0], sizes = [2, 32], strides = [1, 1]} : vector<2x128xf32> to vector<2x32xf32>
    %336 = arith.negf %335 : vector<2x32xf32>
    %337 = math.exp %336 : vector<2x32xf32>
    %cst_138 = arith.constant 1.000000e+00 : f32
    %338 = vector.broadcast %cst_138 : f32 to vector<2x32xf32>
    %339 = arith.addf %338, %337 : vector<2x32xf32>
    %340 = arith.divf %338, %339 : vector<2x32xf32>
    %341 = vector.extract_strided_slice %334 {offsets = [0, 32], sizes = [2, 32], strides = [1, 1]} : vector<2x128xf32> to vector<2x32xf32>
    %342 = arith.negf %341 : vector<2x32xf32>
    %343 = math.exp %342 : vector<2x32xf32>
    %cst_139 = arith.constant 1.000000e+00 : f32
    %344 = vector.broadcast %cst_139 : f32 to vector<2x32xf32>
    %345 = arith.addf %344, %343 : vector<2x32xf32>
    %346 = arith.divf %344, %345 : vector<2x32xf32>
    %347 = vector.extract_strided_slice %334 {offsets = [0, 64], sizes = [2, 32], strides = [1, 1]} : vector<2x128xf32> to vector<2x32xf32>
    %348 = math.tanh %347 : vector<2x32xf32>
    %349 = vector.extract_strided_slice %334 {offsets = [0, 96], sizes = [2, 32], strides = [1, 1]} : vector<2x128xf32> to vector<2x32xf32>
    %350 = arith.negf %349 : vector<2x32xf32>
    %351 = math.exp %350 : vector<2x32xf32>
    %cst_140 = arith.constant 1.000000e+00 : f32
    %352 = vector.broadcast %cst_140 : f32 to vector<2x32xf32>
    %353 = arith.addf %352, %351 : vector<2x32xf32>
    %354 = arith.divf %352, %353 : vector<2x32xf32>
    %355 = arith.mulf %346, %325 : vector<2x32xf32>
    %356 = arith.mulf %340, %348 : vector<2x32xf32>
    %357 = arith.addf %355, %356 : vector<2x32xf32>
    %358 = math.tanh %357 : vector<2x32xf32>
    %359 = arith.mulf %354, %358 : vector<2x32xf32>
    %c0_141 = arith.constant 0 : index
    %c1_142 = arith.constant 1 : index
    %c0_143 = arith.constant 0 : index
    %360 = vector.load %arg18[%c0_141, %c1_142, %c0_143] : memref<2x8x32xf32, #tpu.memory_space<vmem>>, vector<2x1x32xf32>
    %361 = vector.shape_cast %360 : vector<2x1x32xf32> to vector<2x32xf32>
    %362 = vector.shape_cast %359 : vector<2x32xf32> to vector<2x1x32xf32>
    tpu.vector_store %arg18[%c0_141, %c1_142, %c0_143], %362 {strides = array<i32>} : memref<2x8x32xf32, #tpu.memory_space<vmem>>, vector<2x1x32xf32>,
    %c0_144 = arith.constant 0 : index
    %c2_145 = arith.constant 2 : index
    %c0_146 = arith.constant 0 : index
    %363 = vector.load %arg17[%c0_144, %c2_145, %c0_146] : memref<2x8x128xf32, #tpu.memory_space<vmem>>, vector<2x1x128xf32>
    %364 = vector.shape_cast %363 : vector<2x1x128xf32> to vector<2x128xf32>
    %cst_147 = arith.constant dense<0.000000e+00> : vector<2x128xf32>
    %365 = tpu.matmul %359, %294, %cst_147 {dimension_numbers = #tpu.dot_dimension_numbers<[1], [0], [0], [1], [0, 0, 1, 1], [], []>} : vector<2x32xf32>, vector<32x128xf32>, vector<2x128xf32> -> vector<2x128xf32>
    %366 = arith.addf %364, %365 : vector<2x128xf32>
    %367 = vector.extract_strided_slice %366 {offsets = [0, 0], sizes = [2, 32], strides = [1, 1]} : vector<2x128xf32> to vector<2x32xf32>
    %368 = arith.negf %367 : vector<2x32xf32>
    %369 = math.exp %368 : vector<2x32xf32>
    %cst_148 = arith.constant 1.000000e+00 : f32
    %370 = vector.broadcast %cst_148 : f32 to vector<2x32xf32>
    %371 = arith.addf %370, %369 : vector<2x32xf32>
    %372 = arith.divf %370, %371 : vector<2x32xf32>
    %373 = vector.extract_strided_slice %366 {offsets = [0, 32], sizes = [2, 32], strides = [1, 1]} : vector<2x128xf32> to vector<2x32xf32>
    %374 = arith.negf %373 : vector<2x32xf32>
    %375 = math.exp %374 : vector<2x32xf32>
    %cst_149 = arith.constant 1.000000e+00 : f32
    %376 = vector.broadcast %cst_149 : f32 to vector<2x32xf32>
    %377 = arith.addf %376, %375 : vector<2x32xf32>
    %378 = arith.divf %376, %377 : vector<2x32xf32>
    %379 = vector.extract_strided_slice %366 {offsets = [0, 64], sizes = [2, 32], strides = [1, 1]} : vector<2x128xf32> to vector<2x32xf32>
    %380 = math.tanh %379 : vector<2x32xf32>
    %381 = vector.extract_strided_slice %366 {offsets = [0, 96], sizes = [2, 32], strides = [1, 1]} : vector<2x128xf32> to vector<2x32xf32>
    %382 = arith.negf %381 : vector<2x32xf32>
    %383 = math.exp %382 : vector<2x32xf32>
    %cst_150 = arith.constant 1.000000e+00 : f32
    %384 = vector.broadcast %cst_150 : f32 to vector<2x32xf32>
    %385 = arith.addf %384, %383 : vector<2x32xf32>
    %386 = arith.divf %384, %385 : vector<2x32xf32>
    %387 = arith.mulf %378, %357 : vector<2x32xf32>
    %388 = arith.mulf %372, %380 : vector<2x32xf32>
    %389 = arith.addf %387, %388 : vector<2x32xf32>
    %390 = math.tanh %389 : vector<2x32xf32>
    %391 = arith.mulf %386, %390 : vector<2x32xf32>
    %c0_151 = arith.constant 0 : index
    %c2_152 = arith.constant 2 : index
    %c0_153 = arith.constant 0 : index
    %392 = vector.load %arg18[%c0_151, %c2_152, %c0_153] : memref<2x8x32xf32, #tpu.memory_space<vmem>>, vector<2x1x32xf32>
    %393 = vector.shape_cast %392 : vector<2x1x32xf32> to vector<2x32xf32>
    %394 = vector.shape_cast %391 : vector<2x32xf32> to vector<2x1x32xf32>
    tpu.vector_store %arg18[%c0_151, %c2_152, %c0_153], %394 {strides = array<i32>} : memref<2x8x32xf32, #tpu.memory_space<vmem>>, vector<2x1x32xf32>,
    %c0_154 = arith.constant 0 : index
    %c3_155 = arith.constant 3 : index
    %c0_156 = arith.constant 0 : index
    %395 = vector.load %arg17[%c0_154, %c3_155, %c0_156] : memref<2x8x128xf32, #tpu.memory_space<vmem>>, vector<2x1x128xf32>
    %396 = vector.shape_cast %395 : vector<2x1x128xf32> to vector<2x128xf32>
    %cst_157 = arith.constant dense<0.000000e+00> : vector<2x128xf32>
    %397 = tpu.matmul %391, %294, %cst_157 {dimension_numbers = #tpu.dot_dimension_numbers<[1], [0], [0], [1], [0, 0, 1, 1], [], []>} : vector<2x32xf32>, vector<32x128xf32>, vector<2x128xf32> -> vector<2x128xf32>
    %398 = arith.addf %396, %397 : vector<2x128xf32>
    %399 = vector.extract_strided_slice %398 {offsets = [0, 0], sizes = [2, 32], strides = [1, 1]} : vector<2x128xf32> to vector<2x32xf32>
    %400 = arith.negf %399 : vector<2x32xf32>
    %401 = math.exp %400 : vector<2x32xf32>
    %cst_158 = arith.constant 1.000000e+00 : f32
    %402 = vector.broadcast %cst_158 : f32 to vector<2x32xf32>
    %403 = arith.addf %402, %401 : vector<2x32xf32>
    %404 = arith.divf %402, %403 : vector<2x32xf32>
    %405 = vector.extract_strided_slice %398 {offsets = [0, 32], sizes = [2, 32], strides = [1, 1]} : vector<2x128xf32> to vector<2x32xf32>
    %406 = arith.negf %405 : vector<2x32xf32>
    %407 = math.exp %406 : vector<2x32xf32>
    %cst_159 = arith.constant 1.000000e+00 : f32
    %408 = vector.broadcast %cst_159 : f32 to vector<2x32xf32>
    %409 = arith.addf %408, %407 : vector<2x32xf32>
    %410 = arith.divf %408, %409 : vector<2x32xf32>
    %411 = vector.extract_strided_slice %398 {offsets = [0, 64], sizes = [2, 32], strides = [1, 1]} : vector<2x128xf32> to vector<2x32xf32>
    %412 = math.tanh %411 : vector<2x32xf32>
    %413 = vector.extract_strided_slice %398 {offsets = [0, 96], sizes = [2, 32], strides = [1, 1]} : vector<2x128xf32> to vector<2x32xf32>
    %414 = arith.negf %413 : vector<2x32xf32>
    %415 = math.exp %414 : vector<2x32xf32>
    %cst_160 = arith.constant 1.000000e+00 : f32
    %416 = vector.broadcast %cst_160 : f32 to vector<2x32xf32>
    %417 = arith.addf %416, %415 : vector<2x32xf32>
    %418 = arith.divf %416, %417 : vector<2x32xf32>
    %419 = arith.mulf %410, %389 : vector<2x32xf32>
    %420 = arith.mulf %404, %412 : vector<2x32xf32>
    %421 = arith.addf %419, %420 : vector<2x32xf32>
    %422 = math.tanh %421 : vector<2x32xf32>
    %423 = arith.mulf %418, %422 : vector<2x32xf32>
    %c0_161 = arith.constant 0 : index
    %c3_162 = arith.constant 3 : index
    %c0_163 = arith.constant 0 : index
    %424 = vector.load %arg18[%c0_161, %c3_162, %c0_163] : memref<2x8x32xf32, #tpu.memory_space<vmem>>, vector<2x1x32xf32>
    %425 = vector.shape_cast %424 : vector<2x1x32xf32> to vector<2x32xf32>
    %426 = vector.shape_cast %423 : vector<2x32xf32> to vector<2x1x32xf32>
    tpu.vector_store %arg18[%c0_161, %c3_162, %c0_163], %426 {strides = array<i32>} : memref<2x8x32xf32, #tpu.memory_space<vmem>>, vector<2x1x32xf32>,
    %c0_164 = arith.constant 0 : index
    %c4_165 = arith.constant 4 : index
    %c0_166 = arith.constant 0 : index
    %427 = vector.load %arg17[%c0_164, %c4_165, %c0_166] : memref<2x8x128xf32, #tpu.memory_space<vmem>>, vector<2x1x128xf32>
    %428 = vector.shape_cast %427 : vector<2x1x128xf32> to vector<2x128xf32>
    %cst_167 = arith.constant dense<0.000000e+00> : vector<2x128xf32>
    %429 = tpu.matmul %423, %294, %cst_167 {dimension_numbers = #tpu.dot_dimension_numbers<[1], [0], [0], [1], [0, 0, 1, 1], [], []>} : vector<2x32xf32>, vector<32x128xf32>, vector<2x128xf32> -> vector<2x128xf32>
    %430 = arith.addf %428, %429 : vector<2x128xf32>
    %431 = vector.extract_strided_slice %430 {offsets = [0, 0], sizes = [2, 32], strides = [1, 1]} : vector<2x128xf32> to vector<2x32xf32>
    %432 = arith.negf %431 : vector<2x32xf32>
    %433 = math.exp %432 : vector<2x32xf32>
    %cst_168 = arith.constant 1.000000e+00 : f32
    %434 = vector.broadcast %cst_168 : f32 to vector<2x32xf32>
    %435 = arith.addf %434, %433 : vector<2x32xf32>
    %436 = arith.divf %434, %435 : vector<2x32xf32>
    %437 = vector.extract_strided_slice %430 {offsets = [0, 32], sizes = [2, 32], strides = [1, 1]} : vector<2x128xf32> to vector<2x32xf32>
    %438 = arith.negf %437 : vector<2x32xf32>
    %439 = math.exp %438 : vector<2x32xf32>
    %cst_169 = arith.constant 1.000000e+00 : f32
    %440 = vector.broadcast %cst_169 : f32 to vector<2x32xf32>
    %441 = arith.addf %440, %439 : vector<2x32xf32>
    %442 = arith.divf %440, %441 : vector<2x32xf32>
    %443 = vector.extract_strided_slice %430 {offsets = [0, 64], sizes = [2, 32], strides = [1, 1]} : vector<2x128xf32> to vector<2x32xf32>
    %444 = math.tanh %443 : vector<2x32xf32>
    %445 = vector.extract_strided_slice %430 {offsets = [0, 96], sizes = [2, 32], strides = [1, 1]} : vector<2x128xf32> to vector<2x32xf32>
    %446 = arith.negf %445 : vector<2x32xf32>
    %447 = math.exp %446 : vector<2x32xf32>
    %cst_170 = arith.constant 1.000000e+00 : f32
    %448 = vector.broadcast %cst_170 : f32 to vector<2x32xf32>
    %449 = arith.addf %448, %447 : vector<2x32xf32>
    %450 = arith.divf %448, %449 : vector<2x32xf32>
    %451 = arith.mulf %442, %421 : vector<2x32xf32>
    %452 = arith.mulf %436, %444 : vector<2x32xf32>
    %453 = arith.addf %451, %452 : vector<2x32xf32>
    %454 = math.tanh %453 : vector<2x32xf32>
    %455 = arith.mulf %450, %454 : vector<2x32xf32>
    %c0_171 = arith.constant 0 : index
    %c4_172 = arith.constant 4 : index
    %c0_173 = arith.constant 0 : index
    %456 = vector.load %arg18[%c0_171, %c4_172, %c0_173] : memref<2x8x32xf32, #tpu.memory_space<vmem>>, vector<2x1x32xf32>
    %457 = vector.shape_cast %456 : vector<2x1x32xf32> to vector<2x32xf32>
    %458 = vector.shape_cast %455 : vector<2x32xf32> to vector<2x1x32xf32>
    tpu.vector_store %arg18[%c0_171, %c4_172, %c0_173], %458 {strides = array<i32>} : memref<2x8x32xf32, #tpu.memory_space<vmem>>, vector<2x1x32xf32>,
    %c0_174 = arith.constant 0 : index
    %c5_175 = arith.constant 5 : index
    %c0_176 = arith.constant 0 : index
    %459 = vector.load %arg17[%c0_174, %c5_175, %c0_176] : memref<2x8x128xf32, #tpu.memory_space<vmem>>, vector<2x1x128xf32>
    %460 = vector.shape_cast %459 : vector<2x1x128xf32> to vector<2x128xf32>
    %cst_177 = arith.constant dense<0.000000e+00> : vector<2x128xf32>
    %461 = tpu.matmul %455, %294, %cst_177 {dimension_numbers = #tpu.dot_dimension_numbers<[1], [0], [0], [1], [0, 0, 1, 1], [], []>} : vector<2x32xf32>, vector<32x128xf32>, vector<2x128xf32> -> vector<2x128xf32>
    %462 = arith.addf %460, %461 : vector<2x128xf32>
    %463 = vector.extract_strided_slice %462 {offsets = [0, 0], sizes = [2, 32], strides = [1, 1]} : vector<2x128xf32> to vector<2x32xf32>
    %464 = arith.negf %463 : vector<2x32xf32>
    %465 = math.exp %464 : vector<2x32xf32>
    %cst_178 = arith.constant 1.000000e+00 : f32
    %466 = vector.broadcast %cst_178 : f32 to vector<2x32xf32>
    %467 = arith.addf %466, %465 : vector<2x32xf32>
    %468 = arith.divf %466, %467 : vector<2x32xf32>
    %469 = vector.extract_strided_slice %462 {offsets = [0, 32], sizes = [2, 32], strides = [1, 1]} : vector<2x128xf32> to vector<2x32xf32>
    %470 = arith.negf %469 : vector<2x32xf32>
    %471 = math.exp %470 : vector<2x32xf32>
    %cst_179 = arith.constant 1.000000e+00 : f32
    %472 = vector.broadcast %cst_179 : f32 to vector<2x32xf32>
    %473 = arith.addf %472, %471 : vector<2x32xf32>
    %474 = arith.divf %472, %473 : vector<2x32xf32>
    %475 = vector.extract_strided_slice %462 {offsets = [0, 64], sizes = [2, 32], strides = [1, 1]} : vector<2x128xf32> to vector<2x32xf32>
    %476 = math.tanh %475 : vector<2x32xf32>
    %477 = vector.extract_strided_slice %462 {offsets = [0, 96], sizes = [2, 32], strides = [1, 1]} : vector<2x128xf32> to vector<2x32xf32>
    %478 = arith.negf %477 : vector<2x32xf32>
    %479 = math.exp %478 : vector<2x32xf32>
    %cst_180 = arith.constant 1.000000e+00 : f32
    %480 = vector.broadcast %cst_180 : f32 to vector<2x32xf32>
    %481 = arith.addf %480, %479 : vector<2x32xf32>
    %482 = arith.divf %480, %481 : vector<2x32xf32>
    %483 = arith.mulf %474, %453 : vector<2x32xf32>
    %484 = arith.mulf %468, %476 : vector<2x32xf32>
    %485 = arith.addf %483, %484 : vector<2x32xf32>
    %486 = math.tanh %485 : vector<2x32xf32>
    %487 = arith.mulf %482, %486 : vector<2x32xf32>
    %c0_181 = arith.constant 0 : index
    %c5_182 = arith.constant 5 : index
    %c0_183 = arith.constant 0 : index
    %488 = vector.load %arg18[%c0_181, %c5_182, %c0_183] : memref<2x8x32xf32, #tpu.memory_space<vmem>>, vector<2x1x32xf32>
    %489 = vector.shape_cast %488 : vector<2x1x32xf32> to vector<2x32xf32>
    %490 = vector.shape_cast %487 : vector<2x32xf32> to vector<2x1x32xf32>
    tpu.vector_store %arg18[%c0_181, %c5_182, %c0_183], %490 {strides = array<i32>} : memref<2x8x32xf32, #tpu.memory_space<vmem>>, vector<2x1x32xf32>,
    %c0_184 = arith.constant 0 : index
    %c6_185 = arith.constant 6 : index
    %c0_186 = arith.constant 0 : index
    %491 = vector.load %arg17[%c0_184, %c6_185, %c0_186] : memref<2x8x128xf32, #tpu.memory_space<vmem>>, vector<2x1x128xf32>
    %492 = vector.shape_cast %491 : vector<2x1x128xf32> to vector<2x128xf32>
    %cst_187 = arith.constant dense<0.000000e+00> : vector<2x128xf32>
    %493 = tpu.matmul %487, %294, %cst_187 {dimension_numbers = #tpu.dot_dimension_numbers<[1], [0], [0], [1], [0, 0, 1, 1], [], []>} : vector<2x32xf32>, vector<32x128xf32>, vector<2x128xf32> -> vector<2x128xf32>
    %494 = arith.addf %492, %493 : vector<2x128xf32>
    %495 = vector.extract_strided_slice %494 {offsets = [0, 0], sizes = [2, 32], strides = [1, 1]} : vector<2x128xf32> to vector<2x32xf32>
    %496 = arith.negf %495 : vector<2x32xf32>
    %497 = math.exp %496 : vector<2x32xf32>
    %cst_188 = arith.constant 1.000000e+00 : f32
    %498 = vector.broadcast %cst_188 : f32 to vector<2x32xf32>
    %499 = arith.addf %498, %497 : vector<2x32xf32>
    %500 = arith.divf %498, %499 : vector<2x32xf32>
    %501 = vector.extract_strided_slice %494 {offsets = [0, 32], sizes = [2, 32], strides = [1, 1]} : vector<2x128xf32> to vector<2x32xf32>
    %502 = arith.negf %501 : vector<2x32xf32>
    %503 = math.exp %502 : vector<2x32xf32>
    %cst_189 = arith.constant 1.000000e+00 : f32
    %504 = vector.broadcast %cst_189 : f32 to vector<2x32xf32>
    %505 = arith.addf %504, %503 : vector<2x32xf32>
    %506 = arith.divf %504, %505 : vector<2x32xf32>
    %507 = vector.extract_strided_slice %494 {offsets = [0, 64], sizes = [2, 32], strides = [1, 1]} : vector<2x128xf32> to vector<2x32xf32>
    %508 = math.tanh %507 : vector<2x32xf32>
    %509 = vector.extract_strided_slice %494 {offsets = [0, 96], sizes = [2, 32], strides = [1, 1]} : vector<2x128xf32> to vector<2x32xf32>
    %510 = arith.negf %509 : vector<2x32xf32>
    %511 = math.exp %510 : vector<2x32xf32>
    %cst_190 = arith.constant 1.000000e+00 : f32
    %512 = vector.broadcast %cst_190 : f32 to vector<2x32xf32>
    %513 = arith.addf %512, %511 : vector<2x32xf32>
    %514 = arith.divf %512, %513 : vector<2x32xf32>
    %515 = arith.mulf %506, %485 : vector<2x32xf32>
    %516 = arith.mulf %500, %508 : vector<2x32xf32>
    %517 = arith.addf %515, %516 : vector<2x32xf32>
    %518 = math.tanh %517 : vector<2x32xf32>
    %519 = arith.mulf %514, %518 : vector<2x32xf32>
    %c0_191 = arith.constant 0 : index
    %c6_192 = arith.constant 6 : index
    %c0_193 = arith.constant 0 : index
    %520 = vector.load %arg18[%c0_191, %c6_192, %c0_193] : memref<2x8x32xf32, #tpu.memory_space<vmem>>, vector<2x1x32xf32>
    %521 = vector.shape_cast %520 : vector<2x1x32xf32> to vector<2x32xf32>
    %522 = vector.shape_cast %519 : vector<2x32xf32> to vector<2x1x32xf32>
    tpu.vector_store %arg18[%c0_191, %c6_192, %c0_193], %522 {strides = array<i32>} : memref<2x8x32xf32, #tpu.memory_space<vmem>>, vector<2x1x32xf32>,
    %c0_194 = arith.constant 0 : index
    %c7_195 = arith.constant 7 : index
    %c0_196 = arith.constant 0 : index
    %523 = vector.load %arg17[%c0_194, %c7_195, %c0_196] : memref<2x8x128xf32, #tpu.memory_space<vmem>>, vector<2x1x128xf32>
    %524 = vector.shape_cast %523 : vector<2x1x128xf32> to vector<2x128xf32>
    %cst_197 = arith.constant dense<0.000000e+00> : vector<2x128xf32>
    %525 = tpu.matmul %519, %294, %cst_197 {dimension_numbers = #tpu.dot_dimension_numbers<[1], [0], [0], [1], [0, 0, 1, 1], [], []>} : vector<2x32xf32>, vector<32x128xf32>, vector<2x128xf32> -> vector<2x128xf32>
    %526 = arith.addf %524, %525 : vector<2x128xf32>
    %527 = vector.extract_strided_slice %526 {offsets = [0, 0], sizes = [2, 32], strides = [1, 1]} : vector<2x128xf32> to vector<2x32xf32>
    %528 = arith.negf %527 : vector<2x32xf32>
    %529 = math.exp %528 : vector<2x32xf32>
    %cst_198 = arith.constant 1.000000e+00 : f32
    %530 = vector.broadcast %cst_198 : f32 to vector<2x32xf32>
    %531 = arith.addf %530, %529 : vector<2x32xf32>
    %532 = arith.divf %530, %531 : vector<2x32xf32>
    %533 = vector.extract_strided_slice %526 {offsets = [0, 32], sizes = [2, 32], strides = [1, 1]} : vector<2x128xf32> to vector<2x32xf32>
    %534 = arith.negf %533 : vector<2x32xf32>
    %535 = math.exp %534 : vector<2x32xf32>
    %cst_199 = arith.constant 1.000000e+00 : f32
    %536 = vector.broadcast %cst_199 : f32 to vector<2x32xf32>
    %537 = arith.addf %536, %535 : vector<2x32xf32>
    %538 = arith.divf %536, %537 : vector<2x32xf32>
    %539 = vector.extract_strided_slice %526 {offsets = [0, 64], sizes = [2, 32], strides = [1, 1]} : vector<2x128xf32> to vector<2x32xf32>
    %540 = math.tanh %539 : vector<2x32xf32>
    %541 = vector.extract_strided_slice %526 {offsets = [0, 96], sizes = [2, 32], strides = [1, 1]} : vector<2x128xf32> to vector<2x32xf32>
    %542 = arith.negf %541 : vector<2x32xf32>
    %543 = math.exp %542 : vector<2x32xf32>
    %cst_200 = arith.constant 1.000000e+00 : f32
    %544 = vector.broadcast %cst_200 : f32 to vector<2x32xf32>
    %545 = arith.addf %544, %543 : vector<2x32xf32>
    %546 = arith.divf %544, %545 : vector<2x32xf32>
    %547 = arith.mulf %538, %517 : vector<2x32xf32>
    %548 = arith.mulf %532, %540 : vector<2x32xf32>
    %549 = arith.addf %547, %548 : vector<2x32xf32>
    %550 = math.tanh %549 : vector<2x32xf32>
    %551 = arith.mulf %546, %550 : vector<2x32xf32>
    %c0_201 = arith.constant 0 : index
    %c7_202 = arith.constant 7 : index
    %c0_203 = arith.constant 0 : index
    %552 = vector.load %arg18[%c0_201, %c7_202, %c0_203] : memref<2x8x32xf32, #tpu.memory_space<vmem>>, vector<2x1x32xf32>
    %553 = vector.shape_cast %552 : vector<2x1x32xf32> to vector<2x32xf32>
    %554 = vector.shape_cast %551 : vector<2x32xf32> to vector<2x1x32xf32>
    tpu.vector_store %arg18[%c0_201, %c7_202, %c0_203], %554 {strides = array<i32>} : memref<2x8x32xf32, #tpu.memory_space<vmem>>, vector<2x1x32xf32>,
    %c1_204 = arith.constant 1 : index
    %c0_205 = arith.constant 0 : index
    %c0_206 = arith.constant 0 : index
    %555 = vector.load %arg15[%c1_204, %c0_205, %c0_206] : memref<3x2x32xf32, #tpu.memory_space<vmem>>, vector<1x2x32xf32>
    %556 = vector.shape_cast %555 : vector<1x2x32xf32> to vector<2x32xf32>
    %557 = vector.shape_cast %551 : vector<2x32xf32> to vector<1x2x32xf32>
    tpu.vector_store %arg15[%c1_204, %c0_205, %c0_206], %557 {strides = array<i32>} : memref<3x2x32xf32, #tpu.memory_space<vmem>>, vector<1x2x32xf32>,
    %c1_207 = arith.constant 1 : index
    %c0_208 = arith.constant 0 : index
    %c0_209 = arith.constant 0 : index
    %558 = vector.load %arg16[%c1_207, %c0_208, %c0_209] : memref<3x2x32xf32, #tpu.memory_space<vmem>>, vector<1x2x32xf32>
    %559 = vector.shape_cast %558 : vector<1x2x32xf32> to vector<2x32xf32>
    %560 = vector.shape_cast %549 : vector<2x32xf32> to vector<1x2x32xf32>
    tpu.vector_store %arg16[%c1_207, %c0_208, %c0_209], %560 {strides = array<i32>} : memref<3x2x32xf32, #tpu.memory_space<vmem>>, vector<1x2x32xf32>,
    %c0_210 = arith.constant 0 : index
    %c0_211 = arith.constant 0 : index
    %c0_212 = arith.constant 0 : index
    %561 = vector.load %arg18[%c0_210, %c0_211, %c0_212] : memref<2x8x32xf32, #tpu.memory_space<vmem>>, vector<2x8x32xf32>
    %562 = vector.shape_cast %561 : vector<2x8x32xf32> to vector<16x32xf32>
    %c1_213 = arith.constant 1 : index
    %c0_214 = arith.constant 0 : index
    %c0_215 = arith.constant 0 : index
    %563 = vector.load %arg4[%c1_213, %c0_214, %c0_215] : memref<2x32x128xf32, #tpu.memory_space<vmem>>, vector<1x32x128xf32>
    %564 = vector.shape_cast %563 : vector<1x32x128xf32> to vector<32x128xf32>
    %cst_216 = arith.constant dense<0.000000e+00> : vector<16x128xf32>
    %565 = tpu.matmul %562, %564, %cst_216 {dimension_numbers = #tpu.dot_dimension_numbers<[1], [0], [0], [1], [0, 0, 1, 1], [], []>} : vector<16x32xf32>, vector<32x128xf32>, vector<16x128xf32> -> vector<16x128xf32>
    %c1_217 = arith.constant 1 : index
    %c0_218 = arith.constant 0 : index
    %c0_219 = arith.constant 0 : index
    %566 = vector.load %arg7[%c1_217, %c0_218, %c0_219] : memref<2x1x128xf32, #tpu.memory_space<vmem>>, vector<1x1x128xf32>
    %567 = vector.shape_cast %566 : vector<1x1x128xf32> to vector<1x128xf32>
    %568 = vector.broadcast %567 : vector<1x128xf32> to vector<16x128xf32>
    %569 = arith.addf %565, %568 : vector<16x128xf32>
    %570 = vector.shape_cast %569 : vector<16x128xf32> to vector<2x8x128xf32>
    %c0_220 = arith.constant 0 : index
    %c0_221 = arith.constant 0 : index
    %c0_222 = arith.constant 0 : index
    %571 = vector.load %arg17[%c0_220, %c0_221, %c0_222] : memref<2x8x128xf32, #tpu.memory_space<vmem>>, vector<2x8x128xf32>
    tpu.vector_store %arg17[%c0_220, %c0_221, %c0_222], %570 {strides = array<i32>} : memref<2x8x128xf32, #tpu.memory_space<vmem>>, vector<2x8x128xf32>,
    %c2_223 = arith.constant 2 : index
    %c0_224 = arith.constant 0 : index
    %c0_225 = arith.constant 0 : index
    %572 = vector.load %arg5[%c2_223, %c0_224, %c0_225] : memref<3x32x128xf32, #tpu.memory_space<vmem>>, vector<1x32x128xf32>
    %573 = vector.shape_cast %572 : vector<1x32x128xf32> to vector<32x128xf32>
    %c2_226 = arith.constant 2 : index
    %c0_227 = arith.constant 0 : index
    %c0_228 = arith.constant 0 : index
    %574 = vector.load %arg15[%c2_226, %c0_227, %c0_228] : memref<3x2x32xf32, #tpu.memory_space<vmem>>, vector<1x2x32xf32>
    %575 = vector.shape_cast %574 : vector<1x2x32xf32> to vector<2x32xf32>
    %c2_229 = arith.constant 2 : index
    %c0_230 = arith.constant 0 : index
    %c0_231 = arith.constant 0 : index
    %576 = vector.load %arg16[%c2_229, %c0_230, %c0_231] : memref<3x2x32xf32, #tpu.memory_space<vmem>>, vector<1x2x32xf32>
    %577 = vector.shape_cast %576 : vector<1x2x32xf32> to vector<2x32xf32>
    %c0_232 = arith.constant 0 : index
    %c0_233 = arith.constant 0 : index
    %c0_234 = arith.constant 0 : index
    %578 = vector.load %arg17[%c0_232, %c0_233, %c0_234] : memref<2x8x128xf32, #tpu.memory_space<vmem>>, vector<2x1x128xf32>
    %579 = vector.shape_cast %578 : vector<2x1x128xf32> to vector<2x128xf32>
    %cst_235 = arith.constant dense<0.000000e+00> : vector<2x128xf32>
    %580 = tpu.matmul %575, %573, %cst_235 {dimension_numbers = #tpu.dot_dimension_numbers<[1], [0], [0], [1], [0, 0, 1, 1], [], []>} : vector<2x32xf32>, vector<32x128xf32>, vector<2x128xf32> -> vector<2x128xf32>
    %581 = arith.addf %579, %580 : vector<2x128xf32>
    %582 = vector.extract_strided_slice %581 {offsets = [0, 0], sizes = [2, 32], strides = [1, 1]} : vector<2x128xf32> to vector<2x32xf32>
    %583 = arith.negf %582 : vector<2x32xf32>
    %584 = math.exp %583 : vector<2x32xf32>
    %cst_236 = arith.constant 1.000000e+00 : f32
    %585 = vector.broadcast %cst_236 : f32 to vector<2x32xf32>
    %586 = arith.addf %585, %584 : vector<2x32xf32>
    %587 = arith.divf %585, %586 : vector<2x32xf32>
    %588 = vector.extract_strided_slice %581 {offsets = [0, 32], sizes = [2, 32], strides = [1, 1]} : vector<2x128xf32> to vector<2x32xf32>
    %589 = arith.negf %588 : vector<2x32xf32>
    %590 = math.exp %589 : vector<2x32xf32>
    %cst_237 = arith.constant 1.000000e+00 : f32
    %591 = vector.broadcast %cst_237 : f32 to vector<2x32xf32>
    %592 = arith.addf %591, %590 : vector<2x32xf32>
    %593 = arith.divf %591, %592 : vector<2x32xf32>
    %594 = vector.extract_strided_slice %581 {offsets = [0, 64], sizes = [2, 32], strides = [1, 1]} : vector<2x128xf32> to vector<2x32xf32>
    %595 = math.tanh %594 : vector<2x32xf32>
    %596 = vector.extract_strided_slice %581 {offsets = [0, 96], sizes = [2, 32], strides = [1, 1]} : vector<2x128xf32> to vector<2x32xf32>
    %597 = arith.negf %596 : vector<2x32xf32>
    %598 = math.exp %597 : vector<2x32xf32>
    %cst_238 = arith.constant 1.000000e+00 : f32
    %599 = vector.broadcast %cst_238 : f32 to vector<2x32xf32>
    %600 = arith.addf %599, %598 : vector<2x32xf32>
    %601 = arith.divf %599, %600 : vector<2x32xf32>
    %602 = arith.mulf %593, %577 : vector<2x32xf32>
    %603 = arith.mulf %587, %595 : vector<2x32xf32>
    %604 = arith.addf %602, %603 : vector<2x32xf32>
    %605 = math.tanh %604 : vector<2x32xf32>
    %606 = arith.mulf %601, %605 : vector<2x32xf32>
    %c0_239 = arith.constant 0 : index
    %c0_240 = arith.constant 0 : index
    %c0_241 = arith.constant 0 : index
    %607 = vector.load %arg18[%c0_239, %c0_240, %c0_241] : memref<2x8x32xf32, #tpu.memory_space<vmem>>, vector<2x1x32xf32>
    %608 = vector.shape_cast %607 : vector<2x1x32xf32> to vector<2x32xf32>
    %609 = vector.shape_cast %606 : vector<2x32xf32> to vector<2x1x32xf32>
    tpu.vector_store %arg18[%c0_239, %c0_240, %c0_241], %609 {strides = array<i32>} : memref<2x8x32xf32, #tpu.memory_space<vmem>>, vector<2x1x32xf32>,
    %c0_242 = arith.constant 0 : index
    %c1_243 = arith.constant 1 : index
    %c0_244 = arith.constant 0 : index
    %610 = vector.load %arg17[%c0_242, %c1_243, %c0_244] : memref<2x8x128xf32, #tpu.memory_space<vmem>>, vector<2x1x128xf32>
    %611 = vector.shape_cast %610 : vector<2x1x128xf32> to vector<2x128xf32>
    %cst_245 = arith.constant dense<0.000000e+00> : vector<2x128xf32>
    %612 = tpu.matmul %606, %573, %cst_245 {dimension_numbers = #tpu.dot_dimension_numbers<[1], [0], [0], [1], [0, 0, 1, 1], [], []>} : vector<2x32xf32>, vector<32x128xf32>, vector<2x128xf32> -> vector<2x128xf32>
    %613 = arith.addf %611, %612 : vector<2x128xf32>
    %614 = vector.extract_strided_slice %613 {offsets = [0, 0], sizes = [2, 32], strides = [1, 1]} : vector<2x128xf32> to vector<2x32xf32>
    %615 = arith.negf %614 : vector<2x32xf32>
    %616 = math.exp %615 : vector<2x32xf32>
    %cst_246 = arith.constant 1.000000e+00 : f32
    %617 = vector.broadcast %cst_246 : f32 to vector<2x32xf32>
    %618 = arith.addf %617, %616 : vector<2x32xf32>
    %619 = arith.divf %617, %618 : vector<2x32xf32>
    %620 = vector.extract_strided_slice %613 {offsets = [0, 32], sizes = [2, 32], strides = [1, 1]} : vector<2x128xf32> to vector<2x32xf32>
    %621 = arith.negf %620 : vector<2x32xf32>
    %622 = math.exp %621 : vector<2x32xf32>
    %cst_247 = arith.constant 1.000000e+00 : f32
    %623 = vector.broadcast %cst_247 : f32 to vector<2x32xf32>
    %624 = arith.addf %623, %622 : vector<2x32xf32>
    %625 = arith.divf %623, %624 : vector<2x32xf32>
    %626 = vector.extract_strided_slice %613 {offsets = [0, 64], sizes = [2, 32], strides = [1, 1]} : vector<2x128xf32> to vector<2x32xf32>
    %627 = math.tanh %626 : vector<2x32xf32>
    %628 = vector.extract_strided_slice %613 {offsets = [0, 96], sizes = [2, 32], strides = [1, 1]} : vector<2x128xf32> to vector<2x32xf32>
    %629 = arith.negf %628 : vector<2x32xf32>
    %630 = math.exp %629 : vector<2x32xf32>
    %cst_248 = arith.constant 1.000000e+00 : f32
    %631 = vector.broadcast %cst_248 : f32 to vector<2x32xf32>
    %632 = arith.addf %631, %630 : vector<2x32xf32>
    %633 = arith.divf %631, %632 : vector<2x32xf32>
    %634 = arith.mulf %625, %604 : vector<2x32xf32>
    %635 = arith.mulf %619, %627 : vector<2x32xf32>
    %636 = arith.addf %634, %635 : vector<2x32xf32>
    %637 = math.tanh %636 : vector<2x32xf32>
    %638 = arith.mulf %633, %637 : vector<2x32xf32>
    %c0_249 = arith.constant 0 : index
    %c1_250 = arith.constant 1 : index
    %c0_251 = arith.constant 0 : index
    %639 = vector.load %arg18[%c0_249, %c1_250, %c0_251] : memref<2x8x32xf32, #tpu.memory_space<vmem>>, vector<2x1x32xf32>
    %640 = vector.shape_cast %639 : vector<2x1x32xf32> to vector<2x32xf32>
    %641 = vector.shape_cast %638 : vector<2x32xf32> to vector<2x1x32xf32>
    tpu.vector_store %arg18[%c0_249, %c1_250, %c0_251], %641 {strides = array<i32>} : memref<2x8x32xf32, #tpu.memory_space<vmem>>, vector<2x1x32xf32>,
    %c0_252 = arith.constant 0 : index
    %c2_253 = arith.constant 2 : index
    %c0_254 = arith.constant 0 : index
    %642 = vector.load %arg17[%c0_252, %c2_253, %c0_254] : memref<2x8x128xf32, #tpu.memory_space<vmem>>, vector<2x1x128xf32>
    %643 = vector.shape_cast %642 : vector<2x1x128xf32> to vector<2x128xf32>
    %cst_255 = arith.constant dense<0.000000e+00> : vector<2x128xf32>
    %644 = tpu.matmul %638, %573, %cst_255 {dimension_numbers = #tpu.dot_dimension_numbers<[1], [0], [0], [1], [0, 0, 1, 1], [], []>} : vector<2x32xf32>, vector<32x128xf32>, vector<2x128xf32> -> vector<2x128xf32>
    %645 = arith.addf %643, %644 : vector<2x128xf32>
    %646 = vector.extract_strided_slice %645 {offsets = [0, 0], sizes = [2, 32], strides = [1, 1]} : vector<2x128xf32> to vector<2x32xf32>
    %647 = arith.negf %646 : vector<2x32xf32>
    %648 = math.exp %647 : vector<2x32xf32>
    %cst_256 = arith.constant 1.000000e+00 : f32
    %649 = vector.broadcast %cst_256 : f32 to vector<2x32xf32>
    %650 = arith.addf %649, %648 : vector<2x32xf32>
    %651 = arith.divf %649, %650 : vector<2x32xf32>
    %652 = vector.extract_strided_slice %645 {offsets = [0, 32], sizes = [2, 32], strides = [1, 1]} : vector<2x128xf32> to vector<2x32xf32>
    %653 = arith.negf %652 : vector<2x32xf32>
    %654 = math.exp %653 : vector<2x32xf32>
    %cst_257 = arith.constant 1.000000e+00 : f32
    %655 = vector.broadcast %cst_257 : f32 to vector<2x32xf32>
    %656 = arith.addf %655, %654 : vector<2x32xf32>
    %657 = arith.divf %655, %656 : vector<2x32xf32>
    %658 = vector.extract_strided_slice %645 {offsets = [0, 64], sizes = [2, 32], strides = [1, 1]} : vector<2x128xf32> to vector<2x32xf32>
    %659 = math.tanh %658 : vector<2x32xf32>
    %660 = vector.extract_strided_slice %645 {offsets = [0, 96], sizes = [2, 32], strides = [1, 1]} : vector<2x128xf32> to vector<2x32xf32>
    %661 = arith.negf %660 : vector<2x32xf32>
    %662 = math.exp %661 : vector<2x32xf32>
    %cst_258 = arith.constant 1.000000e+00 : f32
    %663 = vector.broadcast %cst_258 : f32 to vector<2x32xf32>
    %664 = arith.addf %663, %662 : vector<2x32xf32>
    %665 = arith.divf %663, %664 : vector<2x32xf32>
    %666 = arith.mulf %657, %636 : vector<2x32xf32>
    %667 = arith.mulf %651, %659 : vector<2x32xf32>
    %668 = arith.addf %666, %667 : vector<2x32xf32>
    %669 = math.tanh %668 : vector<2x32xf32>
    %670 = arith.mulf %665, %669 : vector<2x32xf32>
    %c0_259 = arith.constant 0 : index
    %c2_260 = arith.constant 2 : index
    %c0_261 = arith.constant 0 : index
    %671 = vector.load %arg18[%c0_259, %c2_260, %c0_261] : memref<2x8x32xf32, #tpu.memory_space<vmem>>, vector<2x1x32xf32>
    %672 = vector.shape_cast %671 : vector<2x1x32xf32> to vector<2x32xf32>
    %673 = vector.shape_cast %670 : vector<2x32xf32> to vector<2x1x32xf32>
    tpu.vector_store %arg18[%c0_259, %c2_260, %c0_261], %673 {strides = array<i32>} : memref<2x8x32xf32, #tpu.memory_space<vmem>>, vector<2x1x32xf32>,
    %c0_262 = arith.constant 0 : index
    %c3_263 = arith.constant 3 : index
    %c0_264 = arith.constant 0 : index
    %674 = vector.load %arg17[%c0_262, %c3_263, %c0_264] : memref<2x8x128xf32, #tpu.memory_space<vmem>>, vector<2x1x128xf32>
    %675 = vector.shape_cast %674 : vector<2x1x128xf32> to vector<2x128xf32>
    %cst_265 = arith.constant dense<0.000000e+00> : vector<2x128xf32>
    %676 = tpu.matmul %670, %573, %cst_265 {dimension_numbers = #tpu.dot_dimension_numbers<[1], [0], [0], [1], [0, 0, 1, 1], [], []>} : vector<2x32xf32>, vector<32x128xf32>, vector<2x128xf32> -> vector<2x128xf32>
    %677 = arith.addf %675, %676 : vector<2x128xf32>
    %678 = vector.extract_strided_slice %677 {offsets = [0, 0], sizes = [2, 32], strides = [1, 1]} : vector<2x128xf32> to vector<2x32xf32>
    %679 = arith.negf %678 : vector<2x32xf32>
    %680 = math.exp %679 : vector<2x32xf32>
    %cst_266 = arith.constant 1.000000e+00 : f32
    %681 = vector.broadcast %cst_266 : f32 to vector<2x32xf32>
    %682 = arith.addf %681, %680 : vector<2x32xf32>
    %683 = arith.divf %681, %682 : vector<2x32xf32>
    %684 = vector.extract_strided_slice %677 {offsets = [0, 32], sizes = [2, 32], strides = [1, 1]} : vector<2x128xf32> to vector<2x32xf32>
    %685 = arith.negf %684 : vector<2x32xf32>
    %686 = math.exp %685 : vector<2x32xf32>
    %cst_267 = arith.constant 1.000000e+00 : f32
    %687 = vector.broadcast %cst_267 : f32 to vector<2x32xf32>
    %688 = arith.addf %687, %686 : vector<2x32xf32>
    %689 = arith.divf %687, %688 : vector<2x32xf32>
    %690 = vector.extract_strided_slice %677 {offsets = [0, 64], sizes = [2, 32], strides = [1, 1]} : vector<2x128xf32> to vector<2x32xf32>
    %691 = math.tanh %690 : vector<2x32xf32>
    %692 = vector.extract_strided_slice %677 {offsets = [0, 96], sizes = [2, 32], strides = [1, 1]} : vector<2x128xf32> to vector<2x32xf32>
    %693 = arith.negf %692 : vector<2x32xf32>
    %694 = math.exp %693 : vector<2x32xf32>
    %cst_268 = arith.constant 1.000000e+00 : f32
    %695 = vector.broadcast %cst_268 : f32 to vector<2x32xf32>
    %696 = arith.addf %695, %694 : vector<2x32xf32>
    %697 = arith.divf %695, %696 : vector<2x32xf32>
    %698 = arith.mulf %689, %668 : vector<2x32xf32>
    %699 = arith.mulf %683, %691 : vector<2x32xf32>
    %700 = arith.addf %698, %699 : vector<2x32xf32>
    %701 = math.tanh %700 : vector<2x32xf32>
    %702 = arith.mulf %697, %701 : vector<2x32xf32>
    %c0_269 = arith.constant 0 : index
    %c3_270 = arith.constant 3 : index
    %c0_271 = arith.constant 0 : index
    %703 = vector.load %arg18[%c0_269, %c3_270, %c0_271] : memref<2x8x32xf32, #tpu.memory_space<vmem>>, vector<2x1x32xf32>
    %704 = vector.shape_cast %703 : vector<2x1x32xf32> to vector<2x32xf32>
    %705 = vector.shape_cast %702 : vector<2x32xf32> to vector<2x1x32xf32>
    tpu.vector_store %arg18[%c0_269, %c3_270, %c0_271], %705 {strides = array<i32>} : memref<2x8x32xf32, #tpu.memory_space<vmem>>, vector<2x1x32xf32>,
    %c0_272 = arith.constant 0 : index
    %c4_273 = arith.constant 4 : index
    %c0_274 = arith.constant 0 : index
    %706 = vector.load %arg17[%c0_272, %c4_273, %c0_274] : memref<2x8x128xf32, #tpu.memory_space<vmem>>, vector<2x1x128xf32>
    %707 = vector.shape_cast %706 : vector<2x1x128xf32> to vector<2x128xf32>
    %cst_275 = arith.constant dense<0.000000e+00> : vector<2x128xf32>
    %708 = tpu.matmul %702, %573, %cst_275 {dimension_numbers = #tpu.dot_dimension_numbers<[1], [0], [0], [1], [0, 0, 1, 1], [], []>} : vector<2x32xf32>, vector<32x128xf32>, vector<2x128xf32> -> vector<2x128xf32>
    %709 = arith.addf %707, %708 : vector<2x128xf32>
    %710 = vector.extract_strided_slice %709 {offsets = [0, 0], sizes = [2, 32], strides = [1, 1]} : vector<2x128xf32> to vector<2x32xf32>
    %711 = arith.negf %710 : vector<2x32xf32>
    %712 = math.exp %711 : vector<2x32xf32>
    %cst_276 = arith.constant 1.000000e+00 : f32
    %713 = vector.broadcast %cst_276 : f32 to vector<2x32xf32>
    %714 = arith.addf %713, %712 : vector<2x32xf32>
    %715 = arith.divf %713, %714 : vector<2x32xf32>
    %716 = vector.extract_strided_slice %709 {offsets = [0, 32], sizes = [2, 32], strides = [1, 1]} : vector<2x128xf32> to vector<2x32xf32>
    %717 = arith.negf %716 : vector<2x32xf32>
    %718 = math.exp %717 : vector<2x32xf32>
    %cst_277 = arith.constant 1.000000e+00 : f32
    %719 = vector.broadcast %cst_277 : f32 to vector<2x32xf32>
    %720 = arith.addf %719, %718 : vector<2x32xf32>
    %721 = arith.divf %719, %720 : vector<2x32xf32>
    %722 = vector.extract_strided_slice %709 {offsets = [0, 64], sizes = [2, 32], strides = [1, 1]} : vector<2x128xf32> to vector<2x32xf32>
    %723 = math.tanh %722 : vector<2x32xf32>
    %724 = vector.extract_strided_slice %709 {offsets = [0, 96], sizes = [2, 32], strides = [1, 1]} : vector<2x128xf32> to vector<2x32xf32>
    %725 = arith.negf %724 : vector<2x32xf32>
    %726 = math.exp %725 : vector<2x32xf32>
    %cst_278 = arith.constant 1.000000e+00 : f32
    %727 = vector.broadcast %cst_278 : f32 to vector<2x32xf32>
    %728 = arith.addf %727, %726 : vector<2x32xf32>
    %729 = arith.divf %727, %728 : vector<2x32xf32>
    %730 = arith.mulf %721, %700 : vector<2x32xf32>
    %731 = arith.mulf %715, %723 : vector<2x32xf32>
    %732 = arith.addf %730, %731 : vector<2x32xf32>
    %733 = math.tanh %732 : vector<2x32xf32>
    %734 = arith.mulf %729, %733 : vector<2x32xf32>
    %c0_279 = arith.constant 0 : index
    %c4_280 = arith.constant 4 : index
    %c0_281 = arith.constant 0 : index
    %735 = vector.load %arg18[%c0_279, %c4_280, %c0_281] : memref<2x8x32xf32, #tpu.memory_space<vmem>>, vector<2x1x32xf32>
    %736 = vector.shape_cast %735 : vector<2x1x32xf32> to vector<2x32xf32>
    %737 = vector.shape_cast %734 : vector<2x32xf32> to vector<2x1x32xf32>
    tpu.vector_store %arg18[%c0_279, %c4_280, %c0_281], %737 {strides = array<i32>} : memref<2x8x32xf32, #tpu.memory_space<vmem>>, vector<2x1x32xf32>,
    %c0_282 = arith.constant 0 : index
    %c5_283 = arith.constant 5 : index
    %c0_284 = arith.constant 0 : index
    %738 = vector.load %arg17[%c0_282, %c5_283, %c0_284] : memref<2x8x128xf32, #tpu.memory_space<vmem>>, vector<2x1x128xf32>
    %739 = vector.shape_cast %738 : vector<2x1x128xf32> to vector<2x128xf32>
    %cst_285 = arith.constant dense<0.000000e+00> : vector<2x128xf32>
    %740 = tpu.matmul %734, %573, %cst_285 {dimension_numbers = #tpu.dot_dimension_numbers<[1], [0], [0], [1], [0, 0, 1, 1], [], []>} : vector<2x32xf32>, vector<32x128xf32>, vector<2x128xf32> -> vector<2x128xf32>
    %741 = arith.addf %739, %740 : vector<2x128xf32>
    %742 = vector.extract_strided_slice %741 {offsets = [0, 0], sizes = [2, 32], strides = [1, 1]} : vector<2x128xf32> to vector<2x32xf32>
    %743 = arith.negf %742 : vector<2x32xf32>
    %744 = math.exp %743 : vector<2x32xf32>
    %cst_286 = arith.constant 1.000000e+00 : f32
    %745 = vector.broadcast %cst_286 : f32 to vector<2x32xf32>
    %746 = arith.addf %745, %744 : vector<2x32xf32>
    %747 = arith.divf %745, %746 : vector<2x32xf32>
    %748 = vector.extract_strided_slice %741 {offsets = [0, 32], sizes = [2, 32], strides = [1, 1]} : vector<2x128xf32> to vector<2x32xf32>
    %749 = arith.negf %748 : vector<2x32xf32>
    %750 = math.exp %749 : vector<2x32xf32>
    %cst_287 = arith.constant 1.000000e+00 : f32
    %751 = vector.broadcast %cst_287 : f32 to vector<2x32xf32>
    %752 = arith.addf %751, %750 : vector<2x32xf32>
    %753 = arith.divf %751, %752 : vector<2x32xf32>
    %754 = vector.extract_strided_slice %741 {offsets = [0, 64], sizes = [2, 32], strides = [1, 1]} : vector<2x128xf32> to vector<2x32xf32>
    %755 = math.tanh %754 : vector<2x32xf32>
    %756 = vector.extract_strided_slice %741 {offsets = [0, 96], sizes = [2, 32], strides = [1, 1]} : vector<2x128xf32> to vector<2x32xf32>
    %757 = arith.negf %756 : vector<2x32xf32>
    %758 = math.exp %757 : vector<2x32xf32>
    %cst_288 = arith.constant 1.000000e+00 : f32
    %759 = vector.broadcast %cst_288 : f32 to vector<2x32xf32>
    %760 = arith.addf %759, %758 : vector<2x32xf32>
    %761 = arith.divf %759, %760 : vector<2x32xf32>
    %762 = arith.mulf %753, %732 : vector<2x32xf32>
    %763 = arith.mulf %747, %755 : vector<2x32xf32>
    %764 = arith.addf %762, %763 : vector<2x32xf32>
    %765 = math.tanh %764 : vector<2x32xf32>
    %766 = arith.mulf %761, %765 : vector<2x32xf32>
    %c0_289 = arith.constant 0 : index
    %c5_290 = arith.constant 5 : index
    %c0_291 = arith.constant 0 : index
    %767 = vector.load %arg18[%c0_289, %c5_290, %c0_291] : memref<2x8x32xf32, #tpu.memory_space<vmem>>, vector<2x1x32xf32>
    %768 = vector.shape_cast %767 : vector<2x1x32xf32> to vector<2x32xf32>
    %769 = vector.shape_cast %766 : vector<2x32xf32> to vector<2x1x32xf32>
    tpu.vector_store %arg18[%c0_289, %c5_290, %c0_291], %769 {strides = array<i32>} : memref<2x8x32xf32, #tpu.memory_space<vmem>>, vector<2x1x32xf32>,
    %c0_292 = arith.constant 0 : index
    %c6_293 = arith.constant 6 : index
    %c0_294 = arith.constant 0 : index
    %770 = vector.load %arg17[%c0_292, %c6_293, %c0_294] : memref<2x8x128xf32, #tpu.memory_space<vmem>>, vector<2x1x128xf32>
    %771 = vector.shape_cast %770 : vector<2x1x128xf32> to vector<2x128xf32>
    %cst_295 = arith.constant dense<0.000000e+00> : vector<2x128xf32>
    %772 = tpu.matmul %766, %573, %cst_295 {dimension_numbers = #tpu.dot_dimension_numbers<[1], [0], [0], [1], [0, 0, 1, 1], [], []>} : vector<2x32xf32>, vector<32x128xf32>, vector<2x128xf32> -> vector<2x128xf32>
    %773 = arith.addf %771, %772 : vector<2x128xf32>
    %774 = vector.extract_strided_slice %773 {offsets = [0, 0], sizes = [2, 32], strides = [1, 1]} : vector<2x128xf32> to vector<2x32xf32>
    %775 = arith.negf %774 : vector<2x32xf32>
    %776 = math.exp %775 : vector<2x32xf32>
    %cst_296 = arith.constant 1.000000e+00 : f32
    %777 = vector.broadcast %cst_296 : f32 to vector<2x32xf32>
    %778 = arith.addf %777, %776 : vector<2x32xf32>
    %779 = arith.divf %777, %778 : vector<2x32xf32>
    %780 = vector.extract_strided_slice %773 {offsets = [0, 32], sizes = [2, 32], strides = [1, 1]} : vector<2x128xf32> to vector<2x32xf32>
    %781 = arith.negf %780 : vector<2x32xf32>
    %782 = math.exp %781 : vector<2x32xf32>
    %cst_297 = arith.constant 1.000000e+00 : f32
    %783 = vector.broadcast %cst_297 : f32 to vector<2x32xf32>
    %784 = arith.addf %783, %782 : vector<2x32xf32>
    %785 = arith.divf %783, %784 : vector<2x32xf32>
    %786 = vector.extract_strided_slice %773 {offsets = [0, 64], sizes = [2, 32], strides = [1, 1]} : vector<2x128xf32> to vector<2x32xf32>
    %787 = math.tanh %786 : vector<2x32xf32>
    %788 = vector.extract_strided_slice %773 {offsets = [0, 96], sizes = [2, 32], strides = [1, 1]} : vector<2x128xf32> to vector<2x32xf32>
    %789 = arith.negf %788 : vector<2x32xf32>
    %790 = math.exp %789 : vector<2x32xf32>
    %cst_298 = arith.constant 1.000000e+00 : f32
    %791 = vector.broadcast %cst_298 : f32 to vector<2x32xf32>
    %792 = arith.addf %791, %790 : vector<2x32xf32>
    %793 = arith.divf %791, %792 : vector<2x32xf32>
    %794 = arith.mulf %785, %764 : vector<2x32xf32>
    %795 = arith.mulf %779, %787 : vector<2x32xf32>
    %796 = arith.addf %794, %795 : vector<2x32xf32>
    %797 = math.tanh %796 : vector<2x32xf32>
    %798 = arith.mulf %793, %797 : vector<2x32xf32>
    %c0_299 = arith.constant 0 : index
    %c6_300 = arith.constant 6 : index
    %c0_301 = arith.constant 0 : index
    %799 = vector.load %arg18[%c0_299, %c6_300, %c0_301] : memref<2x8x32xf32, #tpu.memory_space<vmem>>, vector<2x1x32xf32>
    %800 = vector.shape_cast %799 : vector<2x1x32xf32> to vector<2x32xf32>
    %801 = vector.shape_cast %798 : vector<2x32xf32> to vector<2x1x32xf32>
    tpu.vector_store %arg18[%c0_299, %c6_300, %c0_301], %801 {strides = array<i32>} : memref<2x8x32xf32, #tpu.memory_space<vmem>>, vector<2x1x32xf32>,
    %c0_302 = arith.constant 0 : index
    %c7_303 = arith.constant 7 : index
    %c0_304 = arith.constant 0 : index
    %802 = vector.load %arg17[%c0_302, %c7_303, %c0_304] : memref<2x8x128xf32, #tpu.memory_space<vmem>>, vector<2x1x128xf32>
    %803 = vector.shape_cast %802 : vector<2x1x128xf32> to vector<2x128xf32>
    %cst_305 = arith.constant dense<0.000000e+00> : vector<2x128xf32>
    %804 = tpu.matmul %798, %573, %cst_305 {dimension_numbers = #tpu.dot_dimension_numbers<[1], [0], [0], [1], [0, 0, 1, 1], [], []>} : vector<2x32xf32>, vector<32x128xf32>, vector<2x128xf32> -> vector<2x128xf32>
    %805 = arith.addf %803, %804 : vector<2x128xf32>
    %806 = vector.extract_strided_slice %805 {offsets = [0, 0], sizes = [2, 32], strides = [1, 1]} : vector<2x128xf32> to vector<2x32xf32>
    %807 = arith.negf %806 : vector<2x32xf32>
    %808 = math.exp %807 : vector<2x32xf32>
    %cst_306 = arith.constant 1.000000e+00 : f32
    %809 = vector.broadcast %cst_306 : f32 to vector<2x32xf32>
    %810 = arith.addf %809, %808 : vector<2x32xf32>
    %811 = arith.divf %809, %810 : vector<2x32xf32>
    %812 = vector.extract_strided_slice %805 {offsets = [0, 32], sizes = [2, 32], strides = [1, 1]} : vector<2x128xf32> to vector<2x32xf32>
    %813 = arith.negf %812 : vector<2x32xf32>
    %814 = math.exp %813 : vector<2x32xf32>
    %cst_307 = arith.constant 1.000000e+00 : f32
    %815 = vector.broadcast %cst_307 : f32 to vector<2x32xf32>
    %816 = arith.addf %815, %814 : vector<2x32xf32>
    %817 = arith.divf %815, %816 : vector<2x32xf32>
    %818 = vector.extract_strided_slice %805 {offsets = [0, 64], sizes = [2, 32], strides = [1, 1]} : vector<2x128xf32> to vector<2x32xf32>
    %819 = math.tanh %818 : vector<2x32xf32>
    %820 = vector.extract_strided_slice %805 {offsets = [0, 96], sizes = [2, 32], strides = [1, 1]} : vector<2x128xf32> to vector<2x32xf32>
    %821 = arith.negf %820 : vector<2x32xf32>
    %822 = math.exp %821 : vector<2x32xf32>
    %cst_308 = arith.constant 1.000000e+00 : f32
    %823 = vector.broadcast %cst_308 : f32 to vector<2x32xf32>
    %824 = arith.addf %823, %822 : vector<2x32xf32>
    %825 = arith.divf %823, %824 : vector<2x32xf32>
    %826 = arith.mulf %817, %796 : vector<2x32xf32>
    %827 = arith.mulf %811, %819 : vector<2x32xf32>
    %828 = arith.addf %826, %827 : vector<2x32xf32>
    %829 = math.tanh %828 : vector<2x32xf32>
    %830 = arith.mulf %825, %829 : vector<2x32xf32>
    %c0_309 = arith.constant 0 : index
    %c7_310 = arith.constant 7 : index
    %c0_311 = arith.constant 0 : index
    %831 = vector.load %arg18[%c0_309, %c7_310, %c0_311] : memref<2x8x32xf32, #tpu.memory_space<vmem>>, vector<2x1x32xf32>
    %832 = vector.shape_cast %831 : vector<2x1x32xf32> to vector<2x32xf32>
    %833 = vector.shape_cast %830 : vector<2x32xf32> to vector<2x1x32xf32>
    tpu.vector_store %arg18[%c0_309, %c7_310, %c0_311], %833 {strides = array<i32>} : memref<2x8x32xf32, #tpu.memory_space<vmem>>, vector<2x1x32xf32>,
    %c2_312 = arith.constant 2 : index
    %c0_313 = arith.constant 0 : index
    %c0_314 = arith.constant 0 : index
    %834 = vector.load %arg15[%c2_312, %c0_313, %c0_314] : memref<3x2x32xf32, #tpu.memory_space<vmem>>, vector<1x2x32xf32>
    %835 = vector.shape_cast %834 : vector<1x2x32xf32> to vector<2x32xf32>
    %836 = vector.shape_cast %830 : vector<2x32xf32> to vector<1x2x32xf32>
    tpu.vector_store %arg15[%c2_312, %c0_313, %c0_314], %836 {strides = array<i32>} : memref<3x2x32xf32, #tpu.memory_space<vmem>>, vector<1x2x32xf32>,
    %c2_315 = arith.constant 2 : index
    %c0_316 = arith.constant 0 : index
    %c0_317 = arith.constant 0 : index
    %837 = vector.load %arg16[%c2_315, %c0_316, %c0_317] : memref<3x2x32xf32, #tpu.memory_space<vmem>>, vector<1x2x32xf32>
    %838 = vector.shape_cast %837 : vector<1x2x32xf32> to vector<2x32xf32>
    %839 = vector.shape_cast %828 : vector<2x32xf32> to vector<1x2x32xf32>
    tpu.vector_store %arg16[%c2_315, %c0_316, %c0_317], %839 {strides = array<i32>} : memref<3x2x32xf32, #tpu.memory_space<vmem>>, vector<1x2x32xf32>,
    %c0_318 = arith.constant 0 : index
    %c0_319 = arith.constant 0 : index
    %c0_320 = arith.constant 0 : index
    %840 = vector.load %arg18[%c0_318, %c0_319, %c0_320] : memref<2x8x32xf32, #tpu.memory_space<vmem>>, vector<2x8x32xf32>
    %cst_321 = arith.constant dense<0.000000e+00> : vector<2x8xf32>
    %841 = vector.multi_reduction <add>, %840, %cst_321 [2] : vector<2x8x32xf32> to vector<2x8xf32>
    %842 = vector.shape_cast %841 : vector<2x8xf32> to vector<2x8x1xf32>
    %cst_322 = arith.constant 3.200000e+01 : f32
    %843 = vector.broadcast %cst_322 : f32 to vector<2x8x1xf32>
    %844 = arith.divf %842, %843 : vector<2x8x1xf32>
    %845 = arith.mulf %840, %840 : vector<2x8x32xf32>
    %cst_323 = arith.constant dense<0.000000e+00> : vector<2x8xf32>
    %846 = vector.multi_reduction <add>, %845, %cst_323 [2] : vector<2x8x32xf32> to vector<2x8xf32>
    %847 = vector.shape_cast %846 : vector<2x8xf32> to vector<2x8x1xf32>
    %cst_324 = arith.constant 3.200000e+01 : f32
    %848 = vector.broadcast %cst_324 : f32 to vector<2x8x1xf32>
    %849 = arith.divf %847, %848 : vector<2x8x1xf32>
    %850 = arith.mulf %844, %844 : vector<2x8x1xf32>
    %851 = arith.subf %849, %850 : vector<2x8x1xf32>
    %852 = vector.broadcast %844 : vector<2x8x1xf32> to vector<2x8x32xf32>
    %853 = arith.subf %840, %852 : vector<2x8x32xf32>
    %cst_325 = arith.constant 9.99999974E-6 : f32
    %854 = vector.broadcast %cst_325 : f32 to vector<2x8x1xf32>
    %855 = arith.addf %851, %854 : vector<2x8x1xf32>
    %856 = math.rsqrt %855 : vector<2x8x1xf32>
    %857 = vector.broadcast %856 : vector<2x8x1xf32> to vector<2x8x32xf32>
    %858 = arith.mulf %853, %857 : vector<2x8x32xf32>
    %859 = vector.shape_cast %3 : vector<1x32xf32> to vector<1x1x32xf32>
    %860 = vector.broadcast %859 : vector<1x1x32xf32> to vector<2x8x32xf32>
    %861 = arith.mulf %858, %860 : vector<2x8x32xf32>
    %862 = vector.shape_cast %4 : vector<1x32xf32> to vector<1x1x32xf32>
    %863 = vector.broadcast %862 : vector<1x1x32xf32> to vector<2x8x32xf32>
    %864 = arith.addf %861, %863 : vector<2x8x32xf32>
    %c0_326 = arith.constant 0 : index
    %c0_327 = arith.constant 0 : index
    %c0_328 = arith.constant 0 : index
    %865 = vector.load %arg12[%c0_326, %c0_327, %c0_328] : memref<2x8x32xf32, #tpu.memory_space<vmem>>, vector<2x8x32xf32>
    tpu.vector_store %arg12[%c0_326, %c0_327, %c0_328], %864 {strides = array<i32>} : memref<2x8x32xf32, #tpu.memory_space<vmem>>, vector<2x8x32xf32>,
    %c0_i32_329 = arith.constant 0 : i32
    %866 = arith.cmpi eq, %arg1, %c0_i32_329 : i32
    %867 = arith.extui %866 : i1 to i32
    %c0_i32_330 = arith.constant 0 : i32
    %868 = arith.cmpi ne, %867, %c0_i32_330 : i32
    scf.if %868 {
      %c0_331 = arith.constant 0 : index
      %c0_332 = arith.constant 0 : index
      %c0_333 = arith.constant 0 : index
      %869 = vector.load %arg15[%c0_331, %c0_332, %c0_333] : memref<3x2x32xf32, #tpu.memory_space<vmem>>, vector<3x2x32xf32>
      %c0_334 = arith.constant 0 : index
      %c0_335 = arith.constant 0 : index
      %c0_336 = arith.constant 0 : index
      %870 = vector.load %arg13[%c0_334, %c0_335, %c0_336] : memref<3x2x32xf32, #tpu.memory_space<vmem>>, vector<3x2x32xf32>
      tpu.vector_store %arg13[%c0_334, %c0_335, %c0_336], %869 {strides = array<i32>} : memref<3x2x32xf32, #tpu.memory_space<vmem>>, vector<3x2x32xf32>,
      %c0_337 = arith.constant 0 : index
      %c0_338 = arith.constant 0 : index
      %c0_339 = arith.constant 0 : index
      %871 = vector.load %arg16[%c0_337, %c0_338, %c0_339] : memref<3x2x32xf32, #tpu.memory_space<vmem>>, vector<3x2x32xf32>
      %c0_340 = arith.constant 0 : index
      %c0_341 = arith.constant 0 : index
      %c0_342 = arith.constant 0 : index
      %872 = vector.load %arg14[%c0_340, %c0_341, %c0_342] : memref<3x2x32xf32, #tpu.memory_space<vmem>>, vector<3x2x32xf32>
      tpu.vector_store %arg14[%c0_340, %c0_341, %c0_342], %871 {strides = array<i32>} : memref<3x2x32xf32, #tpu.memory_space<vmem>>, vector<3x2x32xf32>,
    } else {
    }
    return
  }
  func.func @transform_0(%arg0: i32, %arg1: i32) -> (i32, i32, i32) {
    %c0_i32 = arith.constant 0 : i32
    %c0_i32_0 = arith.constant 0 : i32
    return %arg0, %arg1, %c0_i32 : i32, i32, i32
  }
  func.func @transform_1(%arg0: i32, %arg1: i32) -> (i32, i32) {
    %c0_i32 = arith.constant 0 : i32
    %c0_i32_0 = arith.constant 0 : i32
    %c0_i32_1 = arith.constant 0 : i32
    return %c0_i32, %c0_i32_0 : i32, i32
  }
  func.func @transform_2(%arg0: i32, %arg1: i32) -> (i32, i32, i32) {
    %c0_i32 = arith.constant 0 : i32
    %c0_i32_0 = arith.constant 0 : i32
    %c0_i32_1 = arith.constant 0 : i32
    %c0_i32_2 = arith.constant 0 : i32
    return %c0_i32, %c0_i32_0, %c0_i32_1 : i32, i32, i32
  }
  func.func @transform_3(%arg0: i32, %arg1: i32) -> (i32, i32, i32) {
    %c0_i32 = arith.constant 0 : i32
    %c0_i32_0 = arith.constant 0 : i32
    %c0_i32_1 = arith.constant 0 : i32
    %c0_i32_2 = arith.constant 0 : i32
    return %c0_i32, %c0_i32_0, %c0_i32_1 : i32, i32, i32
  }
  func.func @transform_4(%arg0: i32, %arg1: i32) -> (i32, i32) {
    %c0_i32 = arith.constant 0 : i32
    %c0_i32_0 = arith.constant 0 : i32
    %c0_i32_1 = arith.constant 0 : i32
    return %c0_i32, %c0_i32_0 : i32, i32
  }
  func.func @transform_5(%arg0: i32, %arg1: i32) -> (i32, i32, i32) {
    %c0_i32 = arith.constant 0 : i32
    %c0_i32_0 = arith.constant 0 : i32
    %c0_i32_1 = arith.constant 0 : i32
    %c0_i32_2 = arith.constant 0 : i32
    return %c0_i32, %c0_i32_0, %c0_i32_1 : i32, i32, i32
  }
  func.func @transform_6(%arg0: i32, %arg1: i32) -> (i32, i32, i32) {
    %c0_i32 = arith.constant 0 : i32
    %c0_i32_0 = arith.constant 0 : i32
    %c0_i32_1 = arith.constant 0 : i32
    return %c0_i32, %arg0, %c0_i32_0 : i32, i32, i32
  }
  func.func @transform_7(%arg0: i32, %arg1: i32) -> (i32, i32, i32) {
    %c0_i32 = arith.constant 0 : i32
    %c0_i32_0 = arith.constant 0 : i32
    %c0_i32_1 = arith.constant 0 : i32
    return %c0_i32, %arg0, %c0_i32_0 : i32, i32, i32
  }
  func.func @transform_8(%arg0: i32, %arg1: i32) -> (i32, i32) {
    %c0_i32 = arith.constant 0 : i32
    %c0_i32_0 = arith.constant 0 : i32
    %c0_i32_1 = arith.constant 0 : i32
    return %c0_i32, %c0_i32_0 : i32, i32
  }
  func.func @transform_9(%arg0: i32, %arg1: i32) -> (i32, i32) {
    %c0_i32 = arith.constant 0 : i32
    %c0_i32_0 = arith.constant 0 : i32
    %c0_i32_1 = arith.constant 0 : i32
    return %c0_i32, %c0_i32_0 : i32, i32
  }
  func.func @transform_10(%arg0: i32, %arg1: i32) -> (i32, i32, i32) {
    %c0_i32 = arith.constant 0 : i32
    %c0_i32_0 = arith.constant 0 : i32
    return %arg0, %arg1, %c0_i32 : i32, i32, i32
  }
  func.func @transform_11(%arg0: i32, %arg1: i32) -> (i32, i32, i32) {
    %c0_i32 = arith.constant 0 : i32
    %c0_i32_0 = arith.constant 0 : i32
    %c0_i32_1 = arith.constant 0 : i32
    return %c0_i32, %arg0, %c0_i32_0 : i32, i32, i32
  }
  func.func @transform_12(%arg0: i32, %arg1: i32) -> (i32, i32, i32) {
    %c0_i32 = arith.constant 0 : i32
    %c0_i32_0 = arith.constant 0 : i32
    %c0_i32_1 = arith.constant 0 : i32
    return %c0_i32, %arg0, %c0_i32_0 : i32, i32, i32
  }
}

</mosaic_0001>

<llo_original>
// kernel: tpu_custom_call.1
$region0: #{tpu_custom_call.1}
  #allocation0 [shape = 'u32[]', space=smem, size = 0x4, offset = 0x4, fixed_abs, tag = 'smem constant byte address 0x4 - core index']
  #allocation1 [shape = 'u32[72,128]{1,0:T(1,128)}', space=vmem, size = 0x9000, scoped, tag = 'internal scratch']
  #allocation2 [shape = 'f32[3,2,32]{2,1,0:T(2,128)}', space=vmem, size = 0xc00, scoped, tag = 'scratch operand']
  #allocation3 [shape = 'f32[3,2,32]{2,1,0:T(2,128)}', space=vmem, size = 0xc00, scoped, tag = 'scratch operand']
  #allocation4 [shape = 'f32[2,8,128]{2,1,0:T(8,128)}', space=vmem, size = 0x2000, scoped, tag = 'scratch operand']
  #allocation5 [shape = 'f32[2,8,32]{2,1,0:T(8,128)}', space=vmem, size = 0x2000, scoped, tag = 'scratch operand']
  %s0 = inlined_call_operand.hbm [shape: f32[2,8,32], index: 0, kind: input, shape index: {}]
  %s1 = inlined_call_operand.hbm [shape: f32[32,128], index: 1, kind: input, shape index: {}]
  %s2 = inlined_call_operand.hbm [shape: f32[2,32,128], index: 2, kind: input, shape index: {}]
  %s3 = inlined_call_operand.hbm [shape: f32[3,32,128], index: 3, kind: input, shape index: {}]
  %s4 = inlined_call_operand.hbm [shape: f32[1,128], index: 4, kind: input, shape index: {}]
  %s5 = inlined_call_operand.hbm [shape: f32[2,1,128], index: 5, kind: input, shape index: {}]
  %s6 = inlined_call_operand.hbm [shape: f32[3,2,32], index: 6, kind: input, shape index: {}]
  %s7 = inlined_call_operand.vmem [shape: f32[3,2,32], index: 7, kind: input, shape index: {}]
  %s8 = inlined_call_operand.vmem [shape: f32[1,32], index: 8, kind: input, shape index: {}]
  %s9 = inlined_call_operand.vmem [shape: f32[1,32], index: 9, kind: input, shape index: {}]
  %s10 = inlined_call_operand.hbm [shape: f32[2,8,32], index: 10, kind: output, shape index: {0}]
  %s11 = inlined_call_operand.hbm [shape: f32[3,2,32], index: 11, kind: output, shape index: {1}]
  %s12 = inlined_call_operand.hbm [shape: f32[3,2,32], index: 12, kind: output, shape index: {2}]
  %13 = xla_tuple %s10, %s11, %s12
  %s14 = sld [smem:[#allocation0]]
  $region102: #{tpu_custom_call.1} parent=0
    _
  %s16 = ssub.s32 1, %s14
  %s17 = scalar_select 0, %s16, %s14
  $region1: #{tpu_custom_call.1} parent=0
    #allocation6 [shape = 'u8[8192]{0}', space=vmem, size = 0x2000, scoped, tag = 'input window, operand 0, single buffered']
    #allocation7 [shape = 's32[1]{0}', space=sflag, size = 0x4, scoped, tag = 'scoped memory for tpu_custom_call.1']
    #allocation8 [shape = 's32[1]{0}', space=sflag, size = 0x4, scoped, tag = 'scoped memory for tpu_custom_call.1']
    #allocation9 [shape = 'u8[16384]{0}', space=vmem, size = 0x4000, scoped, tag = 'input window, operand 1, single buffered']
    #allocation10 [shape = 's32[1]{0}', space=sflag, size = 0x4, scoped, tag = 'scoped memory for tpu_custom_call.1']
    #allocation11 [shape = 'u8[32768]{0}', space=vmem, size = 0x8000, scoped, tag = 'input window, operand 2, single buffered']
    #allocation12 [shape = 'u8[49152]{0}', space=vmem, size = 0xc000, scoped, tag = 'input window, operand 3, single buffered']
    #allocation13 [shape = 's32[1]{0}', space=sflag, size = 0x4, scoped, tag = 'scoped memory for tpu_custom_call.1']
    #allocation14 [shape = 'u8[512]{0}', space=vmem, size = 0x400, scoped, tag = 'input window, operand 4, single buffered']
    #allocation15 [shape = 'u8[1024]{0}', space=vmem, size = 0x400, scoped, tag = 'input window, operand 5, single buffered']
    #allocation16 [shape = 's32[1]{0}', space=sflag, size = 0x4, scoped, tag = 'scoped memory for tpu_custom_call.1']
    #allocation17 [shape = 'u8[3072]{0}', space=vmem, size = 0xc00, scoped, tag = 'input window, operand 6, single buffered']
    #allocation18 [shape = 'u8[8192]{0}', space=vmem, size = 0x2000, scoped, tag = 'output window, operand 0, single buffered']
    #allocation19 [shape = 'u8[3072]{0}', space=vmem, size = 0xc00, scoped, tag = 'output window, operand 1, single buffered']
    #allocation20 [shape = 's32[1]{0}', space=sflag, size = 0x4, scoped, tag = 'scoped memory for tpu_custom_call.1']
    #allocation21 [shape = 'u8[3072]{0}', space=vmem, size = 0xc00, scoped, tag = 'output window, operand 2, single buffered']
    %18 = vsyncpa [#allocation7], 0
    %19 = vsyncpa [#allocation10], 0
    %20 = vsyncpa [#allocation13], 0
    %21 = vsyncpa [#allocation16], 0
    %22 = vsyncpa [#allocation8], 0
    %23 = vsyncpa [#allocation20], 0
    // Predicated region
    $region2: #{tpu_custom_call.1} parent=1 // pred_check
      _
    $region3: #{tpu_custom_call.1} parent=1 // pred_check_branch
      %25 = sbr.rel (0) target = $region5
    $region4: #{tpu_custom_call.1} parent=1 // pred_region
      %27 = vsyncadd [#allocation7], 0
      %s28 = sshll.u32 %s0, 4
      %s29 = int_to_ptr.hbm [resolvable:$true] %s28
      %s30 = sshll.u32 [#allocation6], 4
      %s31 = int_to_ptr.vmem [resolvable:$true] %s30
      %36 = dma.hbm_to_vmem [thread:$0]  %s29, 256, %s31, [#allocation7], 128, 128, 8
    $region5: #{tpu_custom_call.1} parent=1 // pred_fallthru
      _
    // Predicated region
    $region6: #{tpu_custom_call.1} parent=1 // pred_check
      _
    $region7: #{tpu_custom_call.1} parent=1 // pred_check_branch
      %38 = sbr.rel (0) target = $region9
    $region8: #{tpu_custom_call.1} parent=1 // pred_region
      %40 = vsyncadd [#allocation10], 0
      %s41 = sshll.u32 %s1, 4
      %s42 = int_to_ptr.hbm [resolvable:$true] %s41
      %s43 = sshll.u32 [#allocation9], 4
      %s44 = int_to_ptr.vmem [resolvable:$true] %s43
      %49 = dma.hbm_to_vmem [thread:$0]  %s42, 512, %s44, [#allocation10], 128, 128, 8
    $region9: #{tpu_custom_call.1} parent=1 // pred_fallthru
      _
    // Predicated region
    $region10: #{tpu_custom_call.1} parent=1 // pred_check
      _
    $region11: #{tpu_custom_call.1} parent=1 // pred_check_branch
      %51 = sbr.rel (0) target = $region13
    $region12: #{tpu_custom_call.1} parent=1 // pred_region
      %53 = vsyncadd [#allocation10], 0
      %s54 = sshll.u32 %s2, 4
      %s55 = int_to_ptr.hbm [resolvable:$true] %s54
      %s56 = sshll.u32 [#allocation11], 4
      %s57 = int_to_ptr.vmem [resolvable:$true] %s56
      %62 = dma.hbm_to_vmem [thread:$0]  %s55, 1024, %s57, [#allocation10], 128, 128, 8
    $region13: #{tpu_custom_call.1} parent=1 // pred_fallthru
      _
    // Predicated region
    $region14: #{tpu_custom_call.1} parent=1 // pred_check
      _
    $region15: #{tpu_custom_call.1} parent=1 // pred_check_branch
      %64 = sbr.rel (0) target = $region17
    $region16: #{tpu_custom_call.1} parent=1 // pred_region
      %66 = vsyncadd [#allocation13], 0
      %s67 = sshll.u32 %s3, 4
      %s68 = int_to_ptr.hbm [resolvable:$true] %s67
      %s69 = sshll.u32 [#allocation12], 4
      %s70 = int_to_ptr.vmem [resolvable:$true] %s69
      %75 = dma.hbm_to_vmem [thread:$0]  %s68, 1536, %s70, [#allocation13], 128, 128, 8
    $region17: #{tpu_custom_call.1} parent=1 // pred_fallthru
      _
    // Predicated region
    $region18: #{tpu_custom_call.1} parent=1 // pred_check
      _
    $region19: #{tpu_custom_call.1} parent=1 // pred_check_branch
      %77 = sbr.rel (0) target = $region21
    $region20: #{tpu_custom_call.1} parent=1 // pred_region
      %79 = vsyncadd [#allocation13], 0
      %s81 = sshll.u32 %s4, 4
      %s82 = int_to_ptr.hbm [resolvable:$true] %s81
      %s83 = sshll.u32 [#allocation14], 4
      %s84 = int_to_ptr.vmem [resolvable:$true] %s83
      %86 = dma.hbm_to_vmem [thread:$0]  %s82, 16, %s84, [#allocation13]
    $region21: #{tpu_custom_call.1} parent=1 // pred_fallthru
      _
    // Predicated region
    $region22: #{tpu_custom_call.1} parent=1 // pred_check
      _
    $region23: #{tpu_custom_call.1} parent=1 // pred_check_branch
      %88 = sbr.rel (0) target = $region25
    $region24: #{tpu_custom_call.1} parent=1 // pred_region
      %90 = vsyncadd [#allocation16], 0
      %s91 = sshll.u32 %s5, 4
      %s92 = int_to_ptr.hbm [resolvable:$true] %s91
      %s93 = sshll.u32 [#allocation15], 4
      %s94 = int_to_ptr.vmem [resolvable:$true] %s93
      %99 = dma.hbm_to_vmem [thread:$0]  %s92, 32, %s94, [#allocation16], 16, 16, 1
    $region25: #{tpu_custom_call.1} parent=1 // pred_fallthru
      _
    // Predicated region
    $region26: #{tpu_custom_call.1} parent=1 // pred_check
      _
    $region27: #{tpu_custom_call.1} parent=1 // pred_check_branch
      %101 = sbr.rel (0) target = $region29
    $region28: #{tpu_custom_call.1} parent=1 // pred_region
      %103 = vsyncadd [#allocation16], 0
      %s104 = sshll.u32 %s6, 4
      %s105 = int_to_ptr.hbm [resolvable:$true] %s104
      %s106 = sshll.u32 [#allocation17], 4
      %s107 = int_to_ptr.vmem [resolvable:$true] %s106
      %112 = dma.hbm_to_vmem [thread:$0]  %s105, 96, %s107, [#allocation16], 32, 32, 2
    $region29: #{tpu_custom_call.1} parent=1 // pred_fallthru
      _
    // Predicated region
    $region30: #{tpu_custom_call.1} parent=1 // pred_check
      _
    $region31: #{tpu_custom_call.1} parent=1 // pred_check_branch
      %114 = sbr.rel (0) target = $region33
    $region32: #{tpu_custom_call.1} parent=1 // pred_region
      _
    $region33: #{tpu_custom_call.1} parent=1 // pred_fallthru
      _
    // Predicated region
    $region34: #{tpu_custom_call.1} parent=1 // pred_check
      _
    $region35: #{tpu_custom_call.1} parent=1 // pred_check_branch
      %116 = sbr.rel (0) target = $region37
    $region36: #{tpu_custom_call.1} parent=1 // pred_region
      _
    $region37: #{tpu_custom_call.1} parent=1 // pred_fallthru
      _
    // Predicated region
    $region38: #{tpu_custom_call.1} parent=1 // pred_check
      _
    $region39: #{tpu_custom_call.1} parent=1 // pred_check_branch
      %118 = sbr.rel (0) target = $region41
    $region40: #{tpu_custom_call.1} parent=1 // pred_region
      _
    $region41: #{tpu_custom_call.1} parent=1 // pred_fallthru
      _
    // Predicated region
    $region42: #{tpu_custom_call.1} parent=1 // pred_check
      _
    $region43: #{tpu_custom_call.1} parent=1 // pred_check_branch
      %120 = sbr.rel (0) target = $region45
    $region44: #{tpu_custom_call.1} parent=1 // pred_region
      %122 = dma.done [#allocation7], 256
    $region45: #{tpu_custom_call.1} parent=1 // pred_fallthru
      _
    // Predicated region
    $region46: #{tpu_custom_call.1} parent=1 // pred_check
      _
    $region47: #{tpu_custom_call.1} parent=1 // pred_check_branch
      %124 = sbr.rel (0) target = $region49
    $region48: #{tpu_custom_call.1} parent=1 // pred_region
      %126 = dma.done [#allocation10], 512
    $region49: #{tpu_custom_call.1} parent=1 // pred_fallthru
      _
    // Predicated region
    $region50: #{tpu_custom_call.1} parent=1 // pred_check
      _
    $region51: #{tpu_custom_call.1} parent=1 // pred_check_branch
      %128 = sbr.rel (0) target = $region53
    $region52: #{tpu_custom_call.1} parent=1 // pred_region
      %130 = dma.done [#allocation10], 1024
    $region53: #{tpu_custom_call.1} parent=1 // pred_fallthru
      _
    // Predicated region
    $region54: #{tpu_custom_call.1} parent=1 // pred_check
      _
    $region55: #{tpu_custom_call.1} parent=1 // pred_check_branch
      %132 = sbr.rel (0) target = $region57
    $region56: #{tpu_custom_call.1} parent=1 // pred_region
      %134 = dma.done [#allocation13], 1536
    $region57: #{tpu_custom_call.1} parent=1 // pred_fallthru
      _
    // Predicated region
    $region58: #{tpu_custom_call.1} parent=1 // pred_check
      _
    $region59: #{tpu_custom_call.1} parent=1 // pred_check_branch
      %136 = sbr.rel (0) target = $region61
    $region60: #{tpu_custom_call.1} parent=1 // pred_region
      %138 = dma.done [#allocation13], 16
    $region61: #{tpu_custom_call.1} parent=1 // pred_fallthru
      _
    // Predicated region
    $region62: #{tpu_custom_call.1} parent=1 // pred_check
      _
    $region63: #{tpu_custom_call.1} parent=1 // pred_check_branch
      %140 = sbr.rel (0) target = $region65
    $region64: #{tpu_custom_call.1} parent=1 // pred_region
      %142 = dma.done [#allocation16], 32
    $region65: #{tpu_custom_call.1} parent=1 // pred_fallthru
      _
    // Predicated region
    $region66: #{tpu_custom_call.1} parent=1 // pred_check
      _
    $region67: #{tpu_custom_call.1} parent=1 // pred_check_branch
      %144 = sbr.rel (0) target = $region69
    $region68: #{tpu_custom_call.1} parent=1 // pred_region
      %146 = dma.done [#allocation16], 96
    $region69: #{tpu_custom_call.1} parent=1 // pred_fallthru
      _
    %p147 = scmp.eq.s32.totalorder 0, 0
    // Predicated region
    $region70: #{tpu_custom_call.1} parent=1 // pred_check
      %p148 = pneg %p147
    $region71: #{tpu_custom_call.1} parent=1 // pred_check_branch
      %150 = sbr.rel (%p148) target = $region73
    $region72: #{tpu_custom_call.1} parent=1 // pred_region
      %v151 = vld [vmem:[#allocation17] sm:$0x3]
      %v152 = vld [vmem:[#allocation17 + $0x2] sm:$0x3]
      %v153 = vld [vmem:[#allocation17 + $0x4] sm:$0x3]
      %vm154 = vcmask 254976
      %155 = vst.msk [vmem:[#allocation2] sm:$0x3] %vm154, %v151
      %156 = vst.msk [vmem:[#allocation2 + $0x2] sm:$0x3] %vm154, %v152
      %157 = vst.msk [vmem:[#allocation2 + $0x4] sm:$0x3] %vm154, %v153
      %v158 = vld [vmem:[%s7] sm:$0x3]
      %v159 = vld [vmem:[%s7 + $0x2] sm:$0x3]
      %v160 = vld [vmem:[%s7 + $0x4] sm:$0x3]
      %161 = vst.msk [vmem:[#allocation3] sm:$0x3] %vm154, %v158
      %162 = vst.msk [vmem:[#allocation3 + $0x2] sm:$0x3] %vm154, %v159
      %163 = vst.msk [vmem:[#allocation3 + $0x4] sm:$0x3] %vm154, %v160
      %v164 = vld [vmem:[#allocation17] sm:$0x3]
      %v165 = vld [vmem:[#allocation17 + $0x2] sm:$0x3]
      %v166 = vld [vmem:[#allocation17 + $0x4] sm:$0x3]
      %167 = vst.msk [vmem:[#allocation19] sm:$0x3] %vm154, %v164
      %168 = vst.msk [vmem:[#allocation19 + $0x2] sm:$0x3] %vm154, %v165
      %169 = vst.msk [vmem:[#allocation19 + $0x4] sm:$0x3] %vm154, %v166
      %v170 = vld [vmem:[%s7] sm:$0x3]
      %v171 = vld [vmem:[%s7 + $0x2] sm:$0x3]
      %v172 = vld [vmem:[%s7 + $0x4] sm:$0x3]
      %173 = vst.msk [vmem:[#allocation21] sm:$0x3] %vm154, %v170
      %174 = vst.msk [vmem:[#allocation21 + $0x2] sm:$0x3] %vm154, %v171
      %175 = vst.msk [vmem:[#allocation21 + $0x4] sm:$0x3] %vm154, %v172
    $region73: #{tpu_custom_call.1} parent=1 // pred_fallthru
      _
    %v176 = vld [vmem:[%s8] sm:$0x1]
    %v177 = vld [vmem:[%s9] sm:$0x1]
    %v178 = vld [vmem:[#allocation6] sm:$0xff]
    %v179 = vld [vmem:[#allocation6 + $0x8] sm:$0xff]
    %v180 = vld [vmem:[#allocation9] sm:$0xff]
    %v181 = vld [vmem:[#allocation9 + $0x8] sm:$0xff]
    %v182 = vld [vmem:[#allocation9 + $0x10] sm:$0xff]
    %v183 = vld [vmem:[#allocation9 + $0x18] sm:$0xff]
    %v184 = vld [vmem:[#allocation14] sm:$0x1]
    %v186 = vperm.slane %v184, 0
    %vm188 = vcmask 261120
    %v190 = vsel %vm188, %v178, 0
    %v193 = vsel %vm188, %v179, 0
    %195 = vmatpush.msra.mxu0 0.0
    %196 = vmatpush.msra.mxu0 0.0
    %197 = vmatpush.msra.mxu0 0.0
    %198 = vmatpush.msra.mxu0 0.0
    %199 = vmatpush.msra.mxu0 0.0
    %200 = vmatpush.msra.mxu0 0.0
    %201 = vmatpush.msra.mxu0 0.0
    %202 = vmatpush.msra.mxu0 0.0
    %203 = vmatpush.msra.mxu0 0.0
    %204 = vmatpush.msra.mxu0 0.0
    %205 = vmatpush.msra.mxu0 0.0
    %206 = vmatpush.msra.mxu0 0.0
    %207 = vmatpush.msra.mxu0 %v183
    %208 = vmatpush.msra.mxu0 %v182
    %209 = vmatpush.msra.mxu0 %v181
    %210 = vmatpush.msra.mxu0 %v180
    %211 = vmatmul.f32.gmra.mxu0 %v190
    %v212 = vpop.f32.mrf.mxu0
    %v213 = vadd.f32 %v186, %v212
    %214 = vmatmul.f32.gmra.mxu0 %v193
    %v215 = vpop.f32.mrf.mxu0
    %v216 = vadd.f32 %v186, %v215
    %217 = vdwg.mxu0
    %218 = vst [vmem:[#allocation4] sm:$0xff] %v213
    %219 = vst [vmem:[#allocation4 + $0x8] sm:$0xff] %v216
    %v220 = vld [vmem:[#allocation12] sm:$0xff]
    %v221 = vld [vmem:[#allocation12 + $0x8] sm:$0xff]
    %v222 = vld [vmem:[#allocation12 + $0x10] sm:$0xff]
    %v223 = vld [vmem:[#allocation12 + $0x18] sm:$0xff]
    %v224 = vld [vmem:[#allocation2] sm:$0x3]
    %v225 = vld [vmem:[#allocation3] sm:$0x3]
    %v226 = vld [vmem:[#allocation4] sm:$0x1]
    %v227 = vld [vmem:[#allocation4 + $0x8] sm:$0x1]
    %v229 = vsel %vm188, %v224, 0
    %231 = vmatpush.msra.mxu0 0.0
    %232 = vmatpush.msra.mxu0 0.0
    %233 = vmatpush.msra.mxu0 0.0
    %234 = vmatpush.msra.mxu0 0.0
    %235 = vmatpush.msra.mxu0 0.0
    %236 = vmatpush.msra.mxu0 0.0
    %237 = vmatpush.msra.mxu0 0.0
    %238 = vmatpush.msra.mxu0 0.0
    %239 = vmatpush.msra.mxu0 0.0
    %240 = vmatpush.msra.mxu0 0.0
    %241 = vmatpush.msra.mxu0 0.0
    %242 = vmatpush.msra.mxu0 0.0
    %243 = vmatpush.msra.mxu0 %v223
    %244 = vmatpush.msra.mxu0 %v222
    %245 = vmatpush.msra.mxu0 %v221
    %246 = vmatpush.msra.mxu0 %v220
    %247 = vmatmul.f32.gmra.mxu0 %v229
    %v248 = vpop.f32.mrf.mxu0
    %v249 = vadd.f32 0.0, %v248
    %250 = vdwg.mxu0
    %v252 = vrot.slane %v249, 1
    %v255 = vadd.f32 %v226, %v249
    %v256 = vadd.f32 %v227, %v252
    %v257 = vxor.u32 %v255, 2147483648
    %v258 = vxor.u32 %v256, 2147483648
    %v259 = vmul.f32 %v257, 1.442695
    %v260 = vpow.pop %v259
    %v261 = vmul.f32 %v258, 1.442695
    %v262 = vpow.pop %v261
    %v263 = vadd.f32 %v260, 1.0
    %v264 = vadd.f32 %v262, 1.0
    %v265 = vrcp.pop %v263
    %v266 = vmul.f32 %v263, %v265
    %v267 = vsub.f32 1.0, %v266
    %v268 = vmul.f32 %v265, %v267
    %v269 = vadd.f32 %v265, %v268
    %vm270 = vweird.f32 %v263
    %vm271 = vweird.f32 %v265
    %vm272 = vmor %vm270, %vm271
    %v273 = vsel %vm272, %v265, %v269
    %v274 = vand.u32 2147483647, %v263
    %vm275 = vcmp.eq.f32.partialorder %v274, 8.507059e+37
    %v276 = vand.u32 %v263, 2147483648
    %v277 = vor.u32 1.1754944e-38, %v276
    %v278 = vsel %vm275, %v277, %v273
    %v279 = vmul.f32 1.0, %v278
    %v280 = vrcp.pop %v264
    %v281 = vmul.f32 %v264, %v280
    %v282 = vsub.f32 1.0, %v281
    %v283 = vmul.f32 %v280, %v282
    %v284 = vadd.f32 %v280, %v283
    %vm285 = vweird.f32 %v264
    %vm286 = vweird.f32 %v280
    %vm287 = vmor %vm285, %vm286
    %v288 = vsel %vm287, %v280, %v284
    %v289 = vand.u32 2147483647, %v264
    %vm290 = vcmp.eq.f32.partialorder %v289, 8.507059e+37
    %v291 = vand.u32 %v264, 2147483648
    %v292 = vor.u32 1.1754944e-38, %v291
    %v293 = vsel %vm290, %v292, %v288
    %v294 = vmul.f32 1.0, %v293
    %v295 = vtanh.pop %v255
    %v296 = vtanh.pop %v256
    %v298 = vrot.slane %v225, 1
    %299 = vrot.lane.b32.xlu0 %v225, 32
    %v300 = vpop.permute.xlu0 %299
    %301 = vrot.lane.b32.xlu0 %v298, 32
    %v302 = vpop.permute.xlu0 %301
    %v305 = vmul.f32 %v279, %v300
    %v306 = vmul.f32 %v294, %v302
    %309 = vrot.lane.b32.xlu0 %v295, 64
    %v310 = vpop.permute.xlu0 %309
    %311 = vrot.lane.b32.xlu0 %v296, 64
    %v312 = vpop.permute.xlu0 %311
    %v315 = vmul.f32 %v279, %v310
    %v316 = vmul.f32 %v294, %v312
    %319 = vrot.lane.b32.xlu0 %v315, 32
    %v320 = vpop.permute.xlu0 %319
    %321 = vrot.lane.b32.xlu0 %v316, 32
    %v322 = vpop.permute.xlu0 %321
    %v325 = vadd.f32 %v305, %v320
    %v326 = vadd.f32 %v306, %v322
    %v327 = vtanh.pop %v325
    %v328 = vtanh.pop %v326
    %331 = vrot.lane.b32.xlu0 %v327, 64
    %v332 = vpop.permute.xlu0 %331
    %333 = vrot.lane.b32.xlu0 %v328, 64
    %v334 = vpop.permute.xlu0 %333
    %v337 = vmul.f32 %v279, %v332
    %v338 = vmul.f32 %v294, %v334
    %341 = vrot.lane.b32.xlu0 %v337, 32
    %v342 = vpop.permute.xlu0 %341
    %343 = vrot.lane.b32.xlu0 %v338, 32
    %v344 = vpop.permute.xlu0 %343
    %vm347 = vcmask 253952
    %348 = vst.msk [vmem:[#allocation5] sm:$0x1] %vm347, %v342
    %349 = vst.msk [vmem:[#allocation5 + $0x8] sm:$0x1] %vm347, %v344
    %v350 = vld [vmem:[#allocation4 + $0x1] sm:$0x1]
    %v351 = vld [vmem:[#allocation4 + $0x9] sm:$0x1]
    %v352 = vrot.slane %v338, 7
    %vm353 = vcmask 1041409
    %v354 = vsel %vm353, %v352, %v337
    %355 = vrot.lane.b32.xlu0 %v354, 32
    %v356 = vpop.permute.xlu0 %355
    %v357 = vsel %vm188, %v356, 0
    %359 = vmatpush.msra.mxu0 0.0
    %360 = vmatpush.msra.mxu0 0.0
    %361 = vmatpush.msra.mxu0 0.0
    %362 = vmatpush.msra.mxu0 0.0
    %363 = vmatpush.msra.mxu0 0.0
    %364 = vmatpush.msra.mxu0 0.0
    %365 = vmatpush.msra.mxu0 0.0
    %366 = vmatpush.msra.mxu0 0.0
    %367 = vmatpush.msra.mxu0 0.0
    %368 = vmatpush.msra.mxu0 0.0
    %369 = vmatpush.msra.mxu0 0.0
    %370 = vmatpush.msra.mxu0 0.0
    %371 = vmatpush.msra.mxu0 %v223
    %372 = vmatpush.msra.mxu0 %v222
    %373 = vmatpush.msra.mxu0 %v221
    %374 = vmatpush.msra.mxu0 %v220
    %375 = vmatmul.f32.gmra.mxu0 %v357
    %v376 = vpop.f32.mrf.mxu0
    %v377 = vadd.f32 0.0, %v376
    %378 = vdwg.mxu0
    %v380 = vrot.slane %v377, 1
    %v383 = vadd.f32 %v350, %v377
    %v384 = vadd.f32 %v351, %v380
    %v385 = vxor.u32 %v383, 2147483648
    %v386 = vxor.u32 %v384, 2147483648
    %v387 = vmul.f32 %v385, 1.442695
    %v388 = vpow.pop %v387
    %v389 = vmul.f32 %v386, 1.442695
    %v390 = vpow.pop %v389
    %v391 = vadd.f32 %v388, 1.0
    %v392 = vadd.f32 %v390, 1.0
    %v393 = vrcp.pop %v391
    %v394 = vmul.f32 %v391, %v393
    %v395 = vsub.f32 1.0, %v394
    %v396 = vmul.f32 %v393, %v395
    %v397 = vadd.f32 %v393, %v396
    %vm398 = vweird.f32 %v391
    %vm399 = vweird.f32 %v393
    %vm400 = vmor %vm398, %vm399
    %v401 = vsel %vm400, %v393, %v397
    %v402 = vand.u32 2147483647, %v391
    %vm403 = vcmp.eq.f32.partialorder %v402, 8.507059e+37
    %v404 = vand.u32 %v391, 2147483648
    %v405 = vor.u32 1.1754944e-38, %v404
    %v406 = vsel %vm403, %v405, %v401
    %v407 = vmul.f32 1.0, %v406
    %v408 = vrcp.pop %v392
    %v409 = vmul.f32 %v392, %v408
    %v410 = vsub.f32 1.0, %v409
    %v411 = vmul.f32 %v408, %v410
    %v412 = vadd.f32 %v408, %v411
    %vm413 = vweird.f32 %v392
    %vm414 = vweird.f32 %v408
    %vm415 = vmor %vm413, %vm414
    %v416 = vsel %vm415, %v408, %v412
    %v417 = vand.u32 2147483647, %v392
    %vm418 = vcmp.eq.f32.partialorder %v417, 8.507059e+37
    %v419 = vand.u32 %v392, 2147483648
    %v420 = vor.u32 1.1754944e-38, %v419
    %v421 = vsel %vm418, %v420, %v416
    %v422 = vmul.f32 1.0, %v421
    %v423 = vtanh.pop %v383
    %v424 = vtanh.pop %v384
    %v425 = vmul.f32 %v407, %v325
    %v426 = vmul.f32 %v422, %v326
    %429 = vrot.lane.b32.xlu0 %v423, 64
    %v430 = vpop.permute.xlu0 %429
    %431 = vrot.lane.b32.xlu0 %v424, 64
    %v432 = vpop.permute.xlu0 %431
    %v435 = vmul.f32 %v407, %v430
    %v436 = vmul.f32 %v422, %v432
    %439 = vrot.lane.b32.xlu0 %v435, 32
    %v440 = vpop.permute.xlu0 %439
    %441 = vrot.lane.b32.xlu0 %v436, 32
    %v442 = vpop.permute.xlu0 %441
    %v445 = vadd.f32 %v425, %v440
    %v446 = vadd.f32 %v426, %v442
    %v447 = vtanh.pop %v445
    %v448 = vtanh.pop %v446
    %451 = vrot.lane.b32.xlu0 %v447, 64
    %v452 = vpop.permute.xlu0 %451
    %453 = vrot.lane.b32.xlu0 %v448, 64
    %v454 = vpop.permute.xlu0 %453
    %v457 = vmul.f32 %v407, %v452
    %v458 = vmul.f32 %v422, %v454
    %461 = vrot.lane.b32.xlu0 %v457, 32
    %v462 = vpop.permute.xlu0 %461
    %463 = vrot.lane.b32.xlu0 %v458, 32
    %v464 = vpop.permute.xlu0 %463
    %467 = vst.msk [vmem:[#allocation5 + $0x1] sm:$0x1] %vm347, %v462
    %468 = vst.msk [vmem:[#allocation5 + $0x9] sm:$0x1] %vm347, %v464
    %v469 = vld [vmem:[#allocation4 + $0x2] sm:$0x1]
    %v470 = vld [vmem:[#allocation4 + $0xa] sm:$0x1]
    %v471 = vrot.slane %v458, 7
    %v472 = vsel %vm353, %v471, %v457
    %473 = vrot.lane.b32.xlu0 %v472, 32
    %v474 = vpop.permute.xlu0 %473
    %v475 = vsel %vm188, %v474, 0
    %477 = vmatpush.msra.mxu0 0.0
    %478 = vmatpush.msra.mxu0 0.0
    %479 = vmatpush.msra.mxu0 0.0
    %480 = vmatpush.msra.mxu0 0.0
    %481 = vmatpush.msra.mxu0 0.0
    %482 = vmatpush.msra.mxu0 0.0
    %483 = vmatpush.msra.mxu0 0.0
    %484 = vmatpush.msra.mxu0 0.0
    %485 = vmatpush.msra.mxu0 0.0
    %486 = vmatpush.msra.mxu0 0.0
    %487 = vmatpush.msra.mxu0 0.0
    %488 = vmatpush.msra.mxu0 0.0
    %489 = vmatpush.msra.mxu0 %v223
    %490 = vmatpush.msra.mxu0 %v222
    %491 = vmatpush.msra.mxu0 %v221
    %492 = vmatpush.msra.mxu0 %v220
    %493 = vmatmul.f32.gmra.mxu0 %v475
    %v494 = vpop.f32.mrf.mxu0
    %v495 = vadd.f32 0.0, %v494
    %496 = vdwg.mxu0
    %v498 = vrot.slane %v495, 1
    %v501 = vadd.f32 %v469, %v495
    %v502 = vadd.f32 %v470, %v498
    %v503 = vxor.u32 %v501, 2147483648
    %v504 = vxor.u32 %v502, 2147483648
    %v505 = vmul.f32 %v503, 1.442695
    %v506 = vpow.pop %v505
    %v507 = vmul.f32 %v504, 1.442695
    %v508 = vpow.pop %v507
    %v509 = vadd.f32 %v506, 1.0
    %v510 = vadd.f32 %v508, 1.0
    %v511 = vrcp.pop %v509
    %v512 = vmul.f32 %v509, %v511
    %v513 = vsub.f32 1.0, %v512
    %v514 = vmul.f32 %v511, %v513
    %v515 = vadd.f32 %v511, %v514
    %vm516 = vweird.f32 %v509
    %vm517 = vweird.f32 %v511
    %vm518 = vmor %vm516, %vm517
    %v519 = vsel %vm518, %v511, %v515
    %v520 = vand.u32 2147483647, %v509
    %vm521 = vcmp.eq.f32.partialorder %v520, 8.507059e+37
    %v522 = vand.u32 %v509, 2147483648
    %v523 = vor.u32 1.1754944e-38, %v522
    %v524 = vsel %vm521, %v523, %v519
    %v525 = vmul.f32 1.0, %v524
    %v526 = vrcp.pop %v510
    %v527 = vmul.f32 %v510, %v526
    %v528 = vsub.f32 1.0, %v527
    %v529 = vmul.f32 %v526, %v528
    %v530 = vadd.f32 %v526, %v529
    %vm531 = vweird.f32 %v510
    %vm532 = vweird.f32 %v526
    %vm533 = vmor %vm531, %vm532
    %v534 = vsel %vm533, %v526, %v530
    %v535 = vand.u32 2147483647, %v510
    %vm536 = vcmp.eq.f32.partialorder %v535, 8.507059e+37
    %v537 = vand.u32 %v510, 2147483648
    %v538 = vor.u32 1.1754944e-38, %v537
    %v539 = vsel %vm536, %v538, %v534
    %v540 = vmul.f32 1.0, %v539
    %v541 = vtanh.pop %v501
    %v542 = vtanh.pop %v502
    %v543 = vmul.f32 %v525, %v445
    %v544 = vmul.f32 %v540, %v446
    %547 = vrot.lane.b32.xlu0 %v541, 64
    %v548 = vpop.permute.xlu0 %547
    %549 = vrot.lane.b32.xlu0 %v542, 64
    %v550 = vpop.permute.xlu0 %549
    %v553 = vmul.f32 %v525, %v548
    %v554 = vmul.f32 %v540, %v550
    %557 = vrot.lane.b32.xlu0 %v553, 32
    %v558 = vpop.permute.xlu0 %557
    %559 = vrot.lane.b32.xlu0 %v554, 32
    %v560 = vpop.permute.xlu0 %559
    %v563 = vadd.f32 %v543, %v558
    %v564 = vadd.f32 %v544, %v560
    %v565 = vtanh.pop %v563
    %v566 = vtanh.pop %v564
    %569 = vrot.lane.b32.xlu0 %v565, 64
    %v570 = vpop.permute.xlu0 %569
    %571 = vrot.lane.b32.xlu0 %v566, 64
    %v572 = vpop.permute.xlu0 %571
    %v575 = vmul.f32 %v525, %v570
    %v576 = vmul.f32 %v540, %v572
    %579 = vrot.lane.b32.xlu0 %v575, 32
    %v580 = vpop.permute.xlu0 %579
    %581 = vrot.lane.b32.xlu0 %v576, 32
    %v582 = vpop.permute.xlu0 %581
    %585 = vst.msk [vmem:[#allocation5 + $0x2] sm:$0x1] %vm347, %v580
    %586 = vst.msk [vmem:[#allocation5 + $0xa] sm:$0x1] %vm347, %v582
    %v587 = vld [vmem:[#allocation4 + $0x3] sm:$0x1]
    %v588 = vld [vmem:[#allocation4 + $0xb] sm:$0x1]
    %v589 = vrot.slane %v576, 7
    %v590 = vsel %vm353, %v589, %v575
    %591 = vrot.lane.b32.xlu0 %v590, 32
    %v592 = vpop.permute.xlu0 %591
    %v593 = vsel %vm188, %v592, 0
    %595 = vmatpush.msra.mxu0 0.0
    %596 = vmatpush.msra.mxu0 0.0
    %597 = vmatpush.msra.mxu0 0.0
    %598 = vmatpush.msra.mxu0 0.0
    %599 = vmatpush.msra.mxu0 0.0
    %600 = vmatpush.msra.mxu0 0.0
    %601 = vmatpush.msra.mxu0 0.0
    %602 = vmatpush.msra.mxu0 0.0
    %603 = vmatpush.msra.mxu0 0.0
    %604 = vmatpush.msra.mxu0 0.0
    %605 = vmatpush.msra.mxu0 0.0
    %606 = vmatpush.msra.mxu0 0.0
    %607 = vmatpush.msra.mxu0 %v223
    %608 = vmatpush.msra.mxu0 %v222
    %609 = vmatpush.msra.mxu0 %v221
    %610 = vmatpush.msra.mxu0 %v220
    %611 = vmatmul.f32.gmra.mxu0 %v593
    %v612 = vpop.f32.mrf.mxu0
    %v613 = vadd.f32 0.0, %v612
    %614 = vdwg.mxu0
    %v616 = vrot.slane %v613, 1
    %v619 = vadd.f32 %v587, %v613
    %v620 = vadd.f32 %v588, %v616
    %v621 = vxor.u32 %v619, 2147483648
    %v622 = vxor.u32 %v620, 2147483648
    %v623 = vmul.f32 %v621, 1.442695
    %v624 = vpow.pop %v623
    %v625 = vmul.f32 %v622, 1.442695
    %v626 = vpow.pop %v625
    %v627 = vadd.f32 %v624, 1.0
    %v628 = vadd.f32 %v626, 1.0
    %v629 = vrcp.pop %v627
    %v630 = vmul.f32 %v627, %v629
    %v631 = vsub.f32 1.0, %v630
    %v632 = vmul.f32 %v629, %v631
    %v633 = vadd.f32 %v629, %v632
    %vm634 = vweird.f32 %v627
    %vm635 = vweird.f32 %v629
    %vm636 = vmor %vm634, %vm635
    %v637 = vsel %vm636, %v629, %v633
    %v638 = vand.u32 2147483647, %v627
    %vm639 = vcmp.eq.f32.partialorder %v638, 8.507059e+37
    %v640 = vand.u32 %v627, 2147483648
    %v641 = vor.u32 1.1754944e-38, %v640
    %v642 = vsel %vm639, %v641, %v637
    %v643 = vmul.f32 1.0, %v642
    %v644 = vrcp.pop %v628
    %v645 = vmul.f32 %v628, %v644
    %v646 = vsub.f32 1.0, %v645
    %v647 = vmul.f32 %v644, %v646
    %v648 = vadd.f32 %v644, %v647
    %vm649 = vweird.f32 %v628
    %vm650 = vweird.f32 %v644
    %vm651 = vmor %vm649, %vm650
    %v652 = vsel %vm651, %v644, %v648
    %v653 = vand.u32 2147483647, %v628
    %vm654 = vcmp.eq.f32.partialorder %v653, 8.507059e+37
    %v655 = vand.u32 %v628, 2147483648
    %v656 = vor.u32 1.1754944e-38, %v655
    %v657 = vsel %vm654, %v656, %v652
    %v658 = vmul.f32 1.0, %v657
    %v659 = vtanh.pop %v619
    %v660 = vtanh.pop %v620
    %v661 = vmul.f32 %v643, %v563
    %v662 = vmul.f32 %v658, %v564
    %665 = vrot.lane.b32.xlu0 %v659, 64
    %v666 = vpop.permute.xlu0 %665
    %667 = vrot.lane.b32.xlu0 %v660, 64
    %v668 = vpop.permute.xlu0 %667
    %v671 = vmul.f32 %v643, %v666
    %v672 = vmul.f32 %v658, %v668
    %675 = vrot.lane.b32.xlu0 %v671, 32
    %v676 = vpop.permute.xlu0 %675
    %677 = vrot.lane.b32.xlu0 %v672, 32
    %v678 = vpop.permute.xlu0 %677
    %v681 = vadd.f32 %v661, %v676
    %v682 = vadd.f32 %v662, %v678
    %v683 = vtanh.pop %v681
    %v684 = vtanh.pop %v682
    %687 = vrot.lane.b32.xlu0 %v683, 64
    %v688 = vpop.permute.xlu0 %687
    %689 = vrot.lane.b32.xlu0 %v684, 64
    %v690 = vpop.permute.xlu0 %689
    %v693 = vmul.f32 %v643, %v688
    %v694 = vmul.f32 %v658, %v690
    %697 = vrot.lane.b32.xlu0 %v693, 32
    %v698 = vpop.permute.xlu0 %697
    %699 = vrot.lane.b32.xlu0 %v694, 32
    %v700 = vpop.permute.xlu0 %699
    %703 = vst.msk [vmem:[#allocation5 + $0x3] sm:$0x1] %vm347, %v698
    %704 = vst.msk [vmem:[#allocation5 + $0xb] sm:$0x1] %vm347, %v700
    %v705 = vld [vmem:[#allocation4 + $0x4] sm:$0x1]
    %v706 = vld [vmem:[#allocation4 + $0xc] sm:$0x1]
    %v707 = vrot.slane %v694, 7
    %v708 = vsel %vm353, %v707, %v693
    %709 = vrot.lane.b32.xlu0 %v708, 32
    %v710 = vpop.permute.xlu0 %709
    %v711 = vsel %vm188, %v710, 0
    %713 = vmatpush.msra.mxu0 0.0
    %714 = vmatpush.msra.mxu0 0.0
    %715 = vmatpush.msra.mxu0 0.0
    %716 = vmatpush.msra.mxu0 0.0
    %717 = vmatpush.msra.mxu0 0.0
    %718 = vmatpush.msra.mxu0 0.0
    %719 = vmatpush.msra.mxu0 0.0
    %720 = vmatpush.msra.mxu0 0.0
    %721 = vmatpush.msra.mxu0 0.0
    %722 = vmatpush.msra.mxu0 0.0
    %723 = vmatpush.msra.mxu0 0.0
    %724 = vmatpush.msra.mxu0 0.0
    %725 = vmatpush.msra.mxu0 %v223
    %726 = vmatpush.msra.mxu0 %v222
    %727 = vmatpush.msra.mxu0 %v221
    %728 = vmatpush.msra.mxu0 %v220
    %729 = vmatmul.f32.gmra.mxu0 %v711
    %v730 = vpop.f32.mrf.mxu0
    %v731 = vadd.f32 0.0, %v730
    %732 = vdwg.mxu0
    %v734 = vrot.slane %v731, 1
    %v737 = vadd.f32 %v705, %v731
    %v738 = vadd.f32 %v706, %v734
    %v739 = vxor.u32 %v737, 2147483648
    %v740 = vxor.u32 %v738, 2147483648
    %v741 = vmul.f32 %v739, 1.442695
    %v742 = vpow.pop %v741
    %v743 = vmul.f32 %v740, 1.442695
    %v744 = vpow.pop %v743
    %v745 = vadd.f32 %v742, 1.0
    %v746 = vadd.f32 %v744, 1.0
    %v747 = vrcp.pop %v745
    %v748 = vmul.f32 %v745, %v747
    %v749 = vsub.f32 1.0, %v748
    %v750 = vmul.f32 %v747, %v749
    %v751 = vadd.f32 %v747, %v750
    %vm752 = vweird.f32 %v745
    %vm753 = vweird.f32 %v747
    %vm754 = vmor %vm752, %vm753
    %v755 = vsel %vm754, %v747, %v751
    %v756 = vand.u32 2147483647, %v745
    %vm757 = vcmp.eq.f32.partialorder %v756, 8.507059e+37
    %v758 = vand.u32 %v745, 2147483648
    %v759 = vor.u32 1.1754944e-38, %v758
    %v760 = vsel %vm757, %v759, %v755
    %v761 = vmul.f32 1.0, %v760
    %v762 = vrcp.pop %v746
    %v763 = vmul.f32 %v746, %v762
    %v764 = vsub.f32 1.0, %v763
    %v765 = vmul.f32 %v762, %v764
    %v766 = vadd.f32 %v762, %v765
    %vm767 = vweird.f32 %v746
    %vm768 = vweird.f32 %v762
    %vm769 = vmor %vm767, %vm768
    %v770 = vsel %vm769, %v762, %v766
    %v771 = vand.u32 2147483647, %v746
    %vm772 = vcmp.eq.f32.partialorder %v771, 8.507059e+37
    %v773 = vand.u32 %v746, 2147483648
    %v774 = vor.u32 1.1754944e-38, %v773
    %v775 = vsel %vm772, %v774, %v770
    %v776 = vmul.f32 1.0, %v775
    %v777 = vtanh.pop %v737
    %v778 = vtanh.pop %v738
    %v779 = vmul.f32 %v761, %v681
    %v780 = vmul.f32 %v776, %v682
    %783 = vrot.lane.b32.xlu0 %v777, 64
    %v784 = vpop.permute.xlu0 %783
    %785 = vrot.lane.b32.xlu0 %v778, 64
    %v786 = vpop.permute.xlu0 %785
    %v789 = vmul.f32 %v761, %v784
    %v790 = vmul.f32 %v776, %v786
    %793 = vrot.lane.b32.xlu0 %v789, 32
    %v794 = vpop.permute.xlu0 %793
    %795 = vrot.lane.b32.xlu0 %v790, 32
    %v796 = vpop.permute.xlu0 %795
    %v799 = vadd.f32 %v779, %v794
    %v800 = vadd.f32 %v780, %v796
    %v801 = vtanh.pop %v799
    %v802 = vtanh.pop %v800
    %805 = vrot.lane.b32.xlu0 %v801, 64
    %v806 = vpop.permute.xlu0 %805
    %807 = vrot.lane.b32.xlu0 %v802, 64
    %v808 = vpop.permute.xlu0 %807
    %v811 = vmul.f32 %v761, %v806
    %v812 = vmul.f32 %v776, %v808
    %815 = vrot.lane.b32.xlu0 %v811, 32
    %v816 = vpop.permute.xlu0 %815
    %817 = vrot.lane.b32.xlu0 %v812, 32
    %v818 = vpop.permute.xlu0 %817
    %821 = vst.msk [vmem:[#allocation5 + $0x4] sm:$0x1] %vm347, %v816
    %822 = vst.msk [vmem:[#allocation5 + $0xc] sm:$0x1] %vm347, %v818
    %v823 = vld [vmem:[#allocation4 + $0x5] sm:$0x1]
    %v824 = vld [vmem:[#allocation4 + $0xd] sm:$0x1]
    %v825 = vrot.slane %v812, 7
    %v826 = vsel %vm353, %v825, %v811
    %827 = vrot.lane.b32.xlu0 %v826, 32
    %v828 = vpop.permute.xlu0 %827
    %v829 = vsel %vm188, %v828, 0
    %831 = vmatpush.msra.mxu0 0.0
    %832 = vmatpush.msra.mxu0 0.0
    %833 = vmatpush.msra.mxu0 0.0
    %834 = vmatpush.msra.mxu0 0.0
    %835 = vmatpush.msra.mxu0 0.0
    %836 = vmatpush.msra.mxu0 0.0
    %837 = vmatpush.msra.mxu0 0.0
    %838 = vmatpush.msra.mxu0 0.0
    %839 = vmatpush.msra.mxu0 0.0
    %840 = vmatpush.msra.mxu0 0.0
    %841 = vmatpush.msra.mxu0 0.0
    %842 = vmatpush.msra.mxu0 0.0
    %843 = vmatpush.msra.mxu0 %v223
    %844 = vmatpush.msra.mxu0 %v222
    %845 = vmatpush.msra.mxu0 %v221
    %846 = vmatpush.msra.mxu0 %v220
    %847 = vmatmul.f32.gmra.mxu0 %v829
    %v848 = vpop.f32.mrf.mxu0
    %v849 = vadd.f32 0.0, %v848
    %850 = vdwg.mxu0
    %v852 = vrot.slane %v849, 1
    %v855 = vadd.f32 %v823, %v849
    %v856 = vadd.f32 %v824, %v852
    %v857 = vxor.u32 %v855, 2147483648
    %v858 = vxor.u32 %v856, 2147483648
    %v859 = vmul.f32 %v857, 1.442695
    %v860 = vpow.pop %v859
    %v861 = vmul.f32 %v858, 1.442695
    %v862 = vpow.pop %v861
    %v863 = vadd.f32 %v860, 1.0
    %v864 = vadd.f32 %v862, 1.0
    %v865 = vrcp.pop %v863
    %v866 = vmul.f32 %v863, %v865
    %v867 = vsub.f32 1.0, %v866
    %v868 = vmul.f32 %v865, %v867
    %v869 = vadd.f32 %v865, %v868
    %vm870 = vweird.f32 %v863
    %vm871 = vweird.f32 %v865
    %vm872 = vmor %vm870, %vm871
    %v873 = vsel %vm872, %v865, %v869
    %v874 = vand.u32 2147483647, %v863
    %vm875 = vcmp.eq.f32.partialorder %v874, 8.507059e+37
    %v876 = vand.u32 %v863, 2147483648
    %v877 = vor.u32 1.1754944e-38, %v876
    %v878 = vsel %vm875, %v877, %v873
    %v879 = vmul.f32 1.0, %v878
    %v880 = vrcp.pop %v864
    %v881 = vmul.f32 %v864, %v880
    %v882 = vsub.f32 1.0, %v881
    %v883 = vmul.f32 %v880, %v882
    %v884 = vadd.f32 %v880, %v883
    %vm885 = vweird.f32 %v864
    %vm886 = vweird.f32 %v880
    %vm887 = vmor %vm885, %vm886
    %v888 = vsel %vm887, %v880, %v884
    %v889 = vand.u32 2147483647, %v864
    %vm890 = vcmp.eq.f32.partialorder %v889, 8.507059e+37
    %v891 = vand.u32 %v864, 2147483648
    %v892 = vor.u32 1.1754944e-38, %v891
    %v893 = vsel %vm890, %v892, %v888
    %v894 = vmul.f32 1.0, %v893
    %v895 = vtanh.pop %v855
    %v896 = vtanh.pop %v856
    %v897 = vmul.f32 %v879, %v799
    %v898 = vmul.f32 %v894, %v800
    %901 = vrot.lane.b32.xlu0 %v895, 64
    %v902 = vpop.permute.xlu0 %901
    %903 = vrot.lane.b32.xlu0 %v896, 64
    %v904 = vpop.permute.xlu0 %903
    %v907 = vmul.f32 %v879, %v902
    %v908 = vmul.f32 %v894, %v904
    %911 = vrot.lane.b32.xlu0 %v907, 32
    %v912 = vpop.permute.xlu0 %911
    %913 = vrot.lane.b32.xlu0 %v908, 32
    %v914 = vpop.permute.xlu0 %913
    %v917 = vadd.f32 %v897, %v912
    %v918 = vadd.f32 %v898, %v914
    %v919 = vtanh.pop %v917
    %v920 = vtanh.pop %v918
    %923 = vrot.lane.b32.xlu0 %v919, 64
    %v924 = vpop.permute.xlu0 %923
    %925 = vrot.lane.b32.xlu0 %v920, 64
    %v926 = vpop.permute.xlu0 %925
    %v929 = vmul.f32 %v879, %v924
    %v930 = vmul.f32 %v894, %v926
    %933 = vrot.lane.b32.xlu0 %v929, 32
    %v934 = vpop.permute.xlu0 %933
    %935 = vrot.lane.b32.xlu0 %v930, 32
    %v936 = vpop.permute.xlu0 %935
    %939 = vst.msk [vmem:[#allocation5 + $0x5] sm:$0x1] %vm347, %v934
    %940 = vst.msk [vmem:[#allocation5 + $0xd] sm:$0x1] %vm347, %v936
    %v941 = vld [vmem:[#allocation4 + $0x6] sm:$0x1]
    %v942 = vld [vmem:[#allocation4 + $0xe] sm:$0x1]
    %v943 = vrot.slane %v930, 7
    %v944 = vsel %vm353, %v943, %v929
    %945 = vrot.lane.b32.xlu0 %v944, 32
    %v946 = vpop.permute.xlu0 %945
    %v947 = vsel %vm188, %v946, 0
    %949 = vmatpush.msra.mxu0 0.0
    %950 = vmatpush.msra.mxu0 0.0
    %951 = vmatpush.msra.mxu0 0.0
    %952 = vmatpush.msra.mxu0 0.0
    %953 = vmatpush.msra.mxu0 0.0
    %954 = vmatpush.msra.mxu0 0.0
    %955 = vmatpush.msra.mxu0 0.0
    %956 = vmatpush.msra.mxu0 0.0
    %957 = vmatpush.msra.mxu0 0.0
    %958 = vmatpush.msra.mxu0 0.0
    %959 = vmatpush.msra.mxu0 0.0
    %960 = vmatpush.msra.mxu0 0.0
    %961 = vmatpush.msra.mxu0 %v223
    %962 = vmatpush.msra.mxu0 %v222
    %963 = vmatpush.msra.mxu0 %v221
    %964 = vmatpush.msra.mxu0 %v220
    %965 = vmatmul.f32.gmra.mxu0 %v947
    %v966 = vpop.f32.mrf.mxu0
    %v967 = vadd.f32 0.0, %v966
    %968 = vdwg.mxu0
    %v970 = vrot.slane %v967, 1
    %v973 = vadd.f32 %v941, %v967
    %v974 = vadd.f32 %v942, %v970
    %v975 = vxor.u32 %v973, 2147483648
    %v976 = vxor.u32 %v974, 2147483648
    %v977 = vmul.f32 %v975, 1.442695
    %v978 = vpow.pop %v977
    %v979 = vmul.f32 %v976, 1.442695
    %v980 = vpow.pop %v979
    %v981 = vadd.f32 %v978, 1.0
    %v982 = vadd.f32 %v980, 1.0
    %v983 = vrcp.pop %v981
    %v984 = vmul.f32 %v981, %v983
    %v985 = vsub.f32 1.0, %v984
    %v986 = vmul.f32 %v983, %v985
    %v987 = vadd.f32 %v983, %v986
    %vm988 = vweird.f32 %v981
    %vm989 = vweird.f32 %v983
    %vm990 = vmor %vm988, %vm989
    %v991 = vsel %vm990, %v983, %v987
    %v992 = vand.u32 2147483647, %v981
    %vm993 = vcmp.eq.f32.partialorder %v992, 8.507059e+37
    %v994 = vand.u32 %v981, 2147483648
    %v995 = vor.u32 1.1754944e-38, %v994
    %v996 = vsel %vm993, %v995, %v991
    %v997 = vmul.f32 1.0, %v996
    %v998 = vrcp.pop %v982
    %v999 = vmul.f32 %v982, %v998
    %v1000 = vsub.f32 1.0, %v999
    %v1001 = vmul.f32 %v998, %v1000
    %v1002 = vadd.f32 %v998, %v1001
    %vm1003 = vweird.f32 %v982
    %vm1004 = vweird.f32 %v998
    %vm1005 = vmor %vm1003, %vm1004
    %v1006 = vsel %vm1005, %v998, %v1002
    %v1007 = vand.u32 2147483647, %v982
    %vm1008 = vcmp.eq.f32.partialorder %v1007, 8.507059e+37
    %v1009 = vand.u32 %v982, 2147483648
    %v1010 = vor.u32 1.1754944e-38, %v1009
    %v1011 = vsel %vm1008, %v1010, %v1006
    %v1012 = vmul.f32 1.0, %v1011
    %v1013 = vtanh.pop %v973
    %v1014 = vtanh.pop %v974
    %v1015 = vmul.f32 %v997, %v917
    %v1016 = vmul.f32 %v1012, %v918
    %1019 = vrot.lane.b32.xlu0 %v1013, 64
    %v1020 = vpop.permute.xlu0 %1019
    %1021 = vrot.lane.b32.xlu0 %v1014, 64
    %v1022 = vpop.permute.xlu0 %1021
    %v1025 = vmul.f32 %v997, %v1020
    %v1026 = vmul.f32 %v1012, %v1022
    %1029 = vrot.lane.b32.xlu0 %v1025, 32
    %v1030 = vpop.permute.xlu0 %1029
    %1031 = vrot.lane.b32.xlu0 %v1026, 32
    %v1032 = vpop.permute.xlu0 %1031
    %v1035 = vadd.f32 %v1015, %v1030
    %v1036 = vadd.f32 %v1016, %v1032
    %v1037 = vtanh.pop %v1035
    %v1038 = vtanh.pop %v1036
    %1041 = vrot.lane.b32.xlu0 %v1037, 64
    %v1042 = vpop.permute.xlu0 %1041
    %1043 = vrot.lane.b32.xlu0 %v1038, 64
    %v1044 = vpop.permute.xlu0 %1043
    %v1047 = vmul.f32 %v997, %v1042
    %v1048 = vmul.f32 %v1012, %v1044
    %1051 = vrot.lane.b32.xlu0 %v1047, 32
    %v1052 = vpop.permute.xlu0 %1051
    %1053 = vrot.lane.b32.xlu0 %v1048, 32
    %v1054 = vpop.permute.xlu0 %1053
    %1057 = vst.msk [vmem:[#allocation5 + $0x6] sm:$0x1] %vm347, %v1052
    %1058 = vst.msk [vmem:[#allocation5 + $0xe] sm:$0x1] %vm347, %v1054
    %v1059 = vld [vmem:[#allocation4 + $0x7] sm:$0x1]
    %v1060 = vld [vmem:[#allocation4 + $0xf] sm:$0x1]
    %v1061 = vrot.slane %v1048, 7
    %v1062 = vsel %vm353, %v1061, %v1047
    %1063 = vrot.lane.b32.xlu0 %v1062, 32
    %v1064 = vpop.permute.xlu0 %1063
    %v1065 = vsel %vm188, %v1064, 0
    %1067 = vmatpush.msra.mxu0 0.0
    %1068 = vmatpush.msra.mxu0 0.0
    %1069 = vmatpush.msra.mxu0 0.0
    %1070 = vmatpush.msra.mxu0 0.0
    %1071 = vmatpush.msra.mxu0 0.0
    %1072 = vmatpush.msra.mxu0 0.0
    %1073 = vmatpush.msra.mxu0 0.0
    %1074 = vmatpush.msra.mxu0 0.0
    %1075 = vmatpush.msra.mxu0 0.0
    %1076 = vmatpush.msra.mxu0 0.0
    %1077 = vmatpush.msra.mxu0 0.0
    %1078 = vmatpush.msra.mxu0 0.0
    %1079 = vmatpush.msra.mxu0 %v223
    %1080 = vmatpush.msra.mxu0 %v222
    %1081 = vmatpush.msra.mxu0 %v221
    %1082 = vmatpush.msra.mxu0 %v220
    %1083 = vmatmul.f32.gmra.mxu0 %v1065
    %v1084 = vpop.f32.mrf.mxu0
    %v1085 = vadd.f32 0.0, %v1084
    %1086 = vdwg.mxu0
    %v1088 = vrot.slane %v1085, 1
    %v1091 = vadd.f32 %v1059, %v1085
    %v1092 = vadd.f32 %v1060, %v1088
    %v1093 = vxor.u32 %v1091, 2147483648
    %v1094 = vxor.u32 %v1092, 2147483648
    %v1095 = vmul.f32 %v1093, 1.442695
    %v1096 = vpow.pop %v1095
    %v1097 = vmul.f32 %v1094, 1.442695
    %v1098 = vpow.pop %v1097
    %v1099 = vadd.f32 %v1096, 1.0
    %v1100 = vadd.f32 %v1098, 1.0
    %v1101 = vrcp.pop %v1099
    %v1102 = vmul.f32 %v1099, %v1101
    %v1103 = vsub.f32 1.0, %v1102
    %v1104 = vmul.f32 %v1101, %v1103
    %v1105 = vadd.f32 %v1101, %v1104
    %vm1106 = vweird.f32 %v1099
    %vm1107 = vweird.f32 %v1101
    %vm1108 = vmor %vm1106, %vm1107
    %v1109 = vsel %vm1108, %v1101, %v1105
    %v1110 = vand.u32 2147483647, %v1099
    %vm1111 = vcmp.eq.f32.partialorder %v1110, 8.507059e+37
    %v1112 = vand.u32 %v1099, 2147483648
    %v1113 = vor.u32 1.1754944e-38, %v1112
    %v1114 = vsel %vm1111, %v1113, %v1109
    %v1115 = vmul.f32 1.0, %v1114
    %v1116 = vrcp.pop %v1100
    %v1117 = vmul.f32 %v1100, %v1116
    %v1118 = vsub.f32 1.0, %v1117
    %v1119 = vmul.f32 %v1116, %v1118
    %v1120 = vadd.f32 %v1116, %v1119
    %vm1121 = vweird.f32 %v1100
    %vm1122 = vweird.f32 %v1116
    %vm1123 = vmor %vm1121, %vm1122
    %v1124 = vsel %vm1123, %v1116, %v1120
    %v1125 = vand.u32 2147483647, %v1100
    %vm1126 = vcmp.eq.f32.partialorder %v1125, 8.507059e+37
    %v1127 = vand.u32 %v1100, 2147483648
    %v1128 = vor.u32 1.1754944e-38, %v1127
    %v1129 = vsel %vm1126, %v1128, %v1124
    %v1130 = vmul.f32 1.0, %v1129
    %v1131 = vtanh.pop %v1091
    %v1132 = vtanh.pop %v1092
    %v1133 = vmul.f32 %v1115, %v1035
    %v1134 = vmul.f32 %v1130, %v1036
    %1137 = vrot.lane.b32.xlu0 %v1131, 64
    %v1138 = vpop.permute.xlu0 %1137
    %1139 = vrot.lane.b32.xlu0 %v1132, 64
    %v1140 = vpop.permute.xlu0 %1139
    %v1143 = vmul.f32 %v1115, %v1138
    %v1144 = vmul.f32 %v1130, %v1140
    %1147 = vrot.lane.b32.xlu0 %v1143, 32
    %v1148 = vpop.permute.xlu0 %1147
    %1149 = vrot.lane.b32.xlu0 %v1144, 32
    %v1150 = vpop.permute.xlu0 %1149
    %v1153 = vadd.f32 %v1133, %v1148
    %v1154 = vadd.f32 %v1134, %v1150
    %v1155 = vtanh.pop %v1153
    %v1156 = vtanh.pop %v1154
    %1159 = vrot.lane.b32.xlu0 %v1155, 64
    %v1160 = vpop.permute.xlu0 %1159
    %1161 = vrot.lane.b32.xlu0 %v1156, 64
    %v1162 = vpop.permute.xlu0 %1161
    %v1165 = vmul.f32 %v1115, %v1160
    %v1166 = vmul.f32 %v1130, %v1162
    %1169 = vrot.lane.b32.xlu0 %v1165, 32
    %v1170 = vpop.permute.xlu0 %1169
    %1171 = vrot.lane.b32.xlu0 %v1166, 32
    %v1172 = vpop.permute.xlu0 %1171
    %1175 = vst.msk [vmem:[#allocation5 + $0x7] sm:$0x1] %vm347, %v1170
    %1176 = vst.msk [vmem:[#allocation5 + $0xf] sm:$0x1] %vm347, %v1172
    %v1177 = vrot.slane %v1166, 7
    %v1178 = vsel %vm353, %v1177, %v1165
    %1179 = vrot.lane.b32.xlu0 %v1178, 32
    %v1180 = vpop.permute.xlu0 %1179
    %vm1182 = vcmask 254976
    %1183 = vst.msk [vmem:[#allocation2] sm:$0x3] %vm1182, %v1180
    %v1186 = vrot.slane %v1154, 7
    %v1187 = vsel %vm353, %v1186, %v1153
    %1188 = vrot.lane.b32.xlu0 %v1187, 96
    %v1189 = vpop.permute.xlu0 %1188
    %1191 = vst.msk [vmem:[#allocation3] sm:$0x3] %vm1182, %v1189
    %v1192 = vld [vmem:[#allocation5] sm:$0xff]
    %v1193 = vld [vmem:[#allocation5 + $0x8] sm:$0xff]
    %v1194 = vld [vmem:[#allocation11] sm:$0xff]
    %v1195 = vld [vmem:[#allocation11 + $0x8] sm:$0xff]
    %v1196 = vld [vmem:[#allocation11 + $0x10] sm:$0xff]
    %v1197 = vld [vmem:[#allocation11 + $0x18] sm:$0xff]
    %v1198 = vld [vmem:[#allocation15] sm:$0x1]
    %v1200 = vperm.slane %v1198, 0
    %v1203 = vsel %vm188, %v1192, 0
    %v1206 = vsel %vm188, %v1193, 0
    %1208 = vmatpush.msra.mxu0 0.0
    %1209 = vmatpush.msra.mxu0 0.0
    %1210 = vmatpush.msra.mxu0 0.0
    %1211 = vmatpush.msra.mxu0 0.0
    %1212 = vmatpush.msra.mxu0 0.0
    %1213 = vmatpush.msra.mxu0 0.0
    %1214 = vmatpush.msra.mxu0 0.0
    %1215 = vmatpush.msra.mxu0 0.0
    %1216 = vmatpush.msra.mxu0 0.0
    %1217 = vmatpush.msra.mxu0 0.0
    %1218 = vmatpush.msra.mxu0 0.0
    %1219 = vmatpush.msra.mxu0 0.0
    %1220 = vmatpush.msra.mxu0 %v1197
    %1221 = vmatpush.msra.mxu0 %v1196
    %1222 = vmatpush.msra.mxu0 %v1195
    %1223 = vmatpush.msra.mxu0 %v1194
    %1224 = vmatmul.f32.gmra.mxu0 %v1203
    %v1225 = vpop.f32.mrf.mxu0
    %v1226 = vadd.f32 %v1200, %v1225
    %1227 = vmatmul.f32.gmra.mxu0 %v1206
    %v1228 = vpop.f32.mrf.mxu0
    %v1229 = vadd.f32 %v1200, %v1228
    %1230 = vdwg.mxu0
    %1231 = vst [vmem:[#allocation4] sm:$0xff] %v1226
    %1232 = vst [vmem:[#allocation4 + $0x8] sm:$0xff] %v1229
    %s1233 = scalar_lea.vmem [#allocation12], 32
    %v1234 = vld [vmem:[%s1233] sm:$0xff]
    %v1235 = vld [vmem:[%s1233 + $0x8] sm:$0xff]
    %v1236 = vld [vmem:[%s1233 + $0x10] sm:$0xff]
    %v1237 = vld [vmem:[%s1233 + $0x18] sm:$0xff]
    %s1238 = scalar_lea.vmem [#allocation2], 2
    %v1239 = vld [vmem:[%s1238] sm:$0x3]
    %s1240 = scalar_lea.vmem [#allocation3], 2
    %v1241 = vld [vmem:[%s1240] sm:$0x3]
    %v1242 = vld [vmem:[#allocation4] sm:$0x1]
    %v1243 = vld [vmem:[#allocation4 + $0x8] sm:$0x1]
    %v1245 = vsel %vm188, %v1239, 0
    %1247 = vmatpush.msra.mxu0 0.0
    %1248 = vmatpush.msra.mxu0 0.0
    %1249 = vmatpush.msra.mxu0 0.0
    %1250 = vmatpush.msra.mxu0 0.0
    %1251 = vmatpush.msra.mxu0 0.0
    %1252 = vmatpush.msra.mxu0 0.0
    %1253 = vmatpush.msra.mxu0 0.0
    %1254 = vmatpush.msra.mxu0 0.0
    %1255 = vmatpush.msra.mxu0 0.0
    %1256 = vmatpush.msra.mxu0 0.0
    %1257 = vmatpush.msra.mxu0 0.0
    %1258 = vmatpush.msra.mxu0 0.0
    %1259 = vmatpush.msra.mxu0 %v1237
    %1260 = vmatpush.msra.mxu0 %v1236
    %1261 = vmatpush.msra.mxu0 %v1235
    %1262 = vmatpush.msra.mxu0 %v1234
    %1263 = vmatmul.f32.gmra.mxu0 %v1245
    %v1264 = vpop.f32.mrf.mxu0
    %v1265 = vadd.f32 0.0, %v1264
    %1266 = vdwg.mxu0
    %v1268 = vrot.slane %v1265, 1
    %v1271 = vadd.f32 %v1242, %v1265
    %v1272 = vadd.f32 %v1243, %v1268
    %v1273 = vxor.u32 %v1271, 2147483648
    %v1274 = vxor.u32 %v1272, 2147483648
    %v1275 = vmul.f32 %v1273, 1.442695
    %v1276 = vpow.pop %v1275
    %v1277 = vmul.f32 %v1274, 1.442695
    %v1278 = vpow.pop %v1277
    %v1279 = vadd.f32 %v1276, 1.0
    %v1280 = vadd.f32 %v1278, 1.0
    %v1281 = vrcp.pop %v1279
    %v1282 = vmul.f32 %v1279, %v1281
    %v1283 = vsub.f32 1.0, %v1282
    %v1284 = vmul.f32 %v1281, %v1283
    %v1285 = vadd.f32 %v1281, %v1284
    %vm1286 = vweird.f32 %v1279
    %vm1287 = vweird.f32 %v1281
    %vm1288 = vmor %vm1286, %vm1287
    %v1289 = vsel %vm1288, %v1281, %v1285
    %v1290 = vand.u32 2147483647, %v1279
    %vm1291 = vcmp.eq.f32.partialorder %v1290, 8.507059e+37
    %v1292 = vand.u32 %v1279, 2147483648
    %v1293 = vor.u32 1.1754944e-38, %v1292
    %v1294 = vsel %vm1291, %v1293, %v1289
    %v1295 = vmul.f32 1.0, %v1294
    %v1296 = vrcp.pop %v1280
    %v1297 = vmul.f32 %v1280, %v1296
    %v1298 = vsub.f32 1.0, %v1297
    %v1299 = vmul.f32 %v1296, %v1298
    %v1300 = vadd.f32 %v1296, %v1299
    %vm1301 = vweird.f32 %v1280
    %vm1302 = vweird.f32 %v1296
    %vm1303 = vmor %vm1301, %vm1302
    %v1304 = vsel %vm1303, %v1296, %v1300
    %v1305 = vand.u32 2147483647, %v1280
    %vm1306 = vcmp.eq.f32.partialorder %v1305, 8.507059e+37
    %v1307 = vand.u32 %v1280, 2147483648
    %v1308 = vor.u32 1.1754944e-38, %v1307
    %v1309 = vsel %vm1306, %v1308, %v1304
    %v1310 = vmul.f32 1.0, %v1309
    %v1311 = vtanh.pop %v1271
    %v1312 = vtanh.pop %v1272
    %v1314 = vrot.slane %v1241, 1
    %1315 = vrot.lane.b32.xlu0 %v1241, 32
    %v1316 = vpop.permute.xlu0 %1315
    %1317 = vrot.lane.b32.xlu0 %v1314, 32
    %v1318 = vpop.permute.xlu0 %1317
    %v1321 = vmul.f32 %v1295, %v1316
    %v1322 = vmul.f32 %v1310, %v1318
    %1325 = vrot.lane.b32.xlu0 %v1311, 64
    %v1326 = vpop.permute.xlu0 %1325
    %1327 = vrot.lane.b32.xlu0 %v1312, 64
    %v1328 = vpop.permute.xlu0 %1327
    %v1331 = vmul.f32 %v1295, %v1326
    %v1332 = vmul.f32 %v1310, %v1328
    %1335 = vrot.lane.b32.xlu0 %v1331, 32
    %v1336 = vpop.permute.xlu0 %1335
    %1337 = vrot.lane.b32.xlu0 %v1332, 32
    %v1338 = vpop.permute.xlu0 %1337
    %v1341 = vadd.f32 %v1321, %v1336
    %v1342 = vadd.f32 %v1322, %v1338
    %v1343 = vtanh.pop %v1341
    %v1344 = vtanh.pop %v1342
    %1347 = vrot.lane.b32.xlu0 %v1343, 64
    %v1348 = vpop.permute.xlu0 %1347
    %1349 = vrot.lane.b32.xlu0 %v1344, 64
    %v1350 = vpop.permute.xlu0 %1349
    %v1353 = vmul.f32 %v1295, %v1348
    %v1354 = vmul.f32 %v1310, %v1350
    %1357 = vrot.lane.b32.xlu0 %v1353, 32
    %v1358 = vpop.permute.xlu0 %1357
    %1359 = vrot.lane.b32.xlu0 %v1354, 32
    %v1360 = vpop.permute.xlu0 %1359
    %1363 = vst.msk [vmem:[#allocation5] sm:$0x1] %vm347, %v1358
    %1364 = vst.msk [vmem:[#allocation5 + $0x8] sm:$0x1] %vm347, %v1360
    %v1365 = vld [vmem:[#allocation4 + $0x1] sm:$0x1]
    %v1366 = vld [vmem:[#allocation4 + $0x9] sm:$0x1]
    %v1367 = vrot.slane %v1354, 7
    %v1368 = vsel %vm353, %v1367, %v1353
    %1369 = vrot.lane.b32.xlu0 %v1368, 32
    %v1370 = vpop.permute.xlu0 %1369
    %v1371 = vsel %vm188, %v1370, 0
    %1373 = vmatpush.msra.mxu0 0.0
    %1374 = vmatpush.msra.mxu0 0.0
    %1375 = vmatpush.msra.mxu0 0.0
    %1376 = vmatpush.msra.mxu0 0.0
    %1377 = vmatpush.msra.mxu0 0.0
    %1378 = vmatpush.msra.mxu0 0.0
    %1379 = vmatpush.msra.mxu0 0.0
    %1380 = vmatpush.msra.mxu0 0.0
    %1381 = vmatpush.msra.mxu0 0.0
    %1382 = vmatpush.msra.mxu0 0.0
    %1383 = vmatpush.msra.mxu0 0.0
    %1384 = vmatpush.msra.mxu0 0.0
    %1385 = vmatpush.msra.mxu0 %v1237
    %1386 = vmatpush.msra.mxu0 %v1236
    %1387 = vmatpush.msra.mxu0 %v1235
    %1388 = vmatpush.msra.mxu0 %v1234
    %1389 = vmatmul.f32.gmra.mxu0 %v1371
    %v1390 = vpop.f32.mrf.mxu0
    %v1391 = vadd.f32 0.0, %v1390
    %1392 = vdwg.mxu0
    %v1394 = vrot.slane %v1391, 1
    %v1397 = vadd.f32 %v1365, %v1391
    %v1398 = vadd.f32 %v1366, %v1394
    %v1399 = vxor.u32 %v1397, 2147483648
    %v1400 = vxor.u32 %v1398, 2147483648
    %v1401 = vmul.f32 %v1399, 1.442695
    %v1402 = vpow.pop %v1401
    %v1403 = vmul.f32 %v1400, 1.442695
    %v1404 = vpow.pop %v1403
    %v1405 = vadd.f32 %v1402, 1.0
    %v1406 = vadd.f32 %v1404, 1.0
    %v1407 = vrcp.pop %v1405
    %v1408 = vmul.f32 %v1405, %v1407
    %v1409 = vsub.f32 1.0, %v1408
    %v1410 = vmul.f32 %v1407, %v1409
    %v1411 = vadd.f32 %v1407, %v1410
    %vm1412 = vweird.f32 %v1405
    %vm1413 = vweird.f32 %v1407
    %vm1414 = vmor %vm1412, %vm1413
    %v1415 = vsel %vm1414, %v1407, %v1411
    %v1416 = vand.u32 2147483647, %v1405
    %vm1417 = vcmp.eq.f32.partialorder %v1416, 8.507059e+37
    %v1418 = vand.u32 %v1405, 2147483648
    %v1419 = vor.u32 1.1754944e-38, %v1418
    %v1420 = vsel %vm1417, %v1419, %v1415
    %v1421 = vmul.f32 1.0, %v1420
    %v1422 = vrcp.pop %v1406
    %v1423 = vmul.f32 %v1406, %v1422
    %v1424 = vsub.f32 1.0, %v1423
    %v1425 = vmul.f32 %v1422, %v1424
    %v1426 = vadd.f32 %v1422, %v1425
    %vm1427 = vweird.f32 %v1406
    %vm1428 = vweird.f32 %v1422
    %vm1429 = vmor %vm1427, %vm1428
    %v1430 = vsel %vm1429, %v1422, %v1426
    %v1431 = vand.u32 2147483647, %v1406
    %vm1432 = vcmp.eq.f32.partialorder %v1431, 8.507059e+37
    %v1433 = vand.u32 %v1406, 2147483648
    %v1434 = vor.u32 1.1754944e-38, %v1433
    %v1435 = vsel %vm1432, %v1434, %v1430
    %v1436 = vmul.f32 1.0, %v1435
    %v1437 = vtanh.pop %v1397
    %v1438 = vtanh.pop %v1398
    %v1439 = vmul.f32 %v1421, %v1341
    %v1440 = vmul.f32 %v1436, %v1342
    %1443 = vrot.lane.b32.xlu0 %v1437, 64
    %v1444 = vpop.permute.xlu0 %1443
    %1445 = vrot.lane.b32.xlu0 %v1438, 64
    %v1446 = vpop.permute.xlu0 %1445
    %v1449 = vmul.f32 %v1421, %v1444
    %v1450 = vmul.f32 %v1436, %v1446
    %1453 = vrot.lane.b32.xlu0 %v1449, 32
    %v1454 = vpop.permute.xlu0 %1453
    %1455 = vrot.lane.b32.xlu0 %v1450, 32
    %v1456 = vpop.permute.xlu0 %1455
    %v1459 = vadd.f32 %v1439, %v1454
    %v1460 = vadd.f32 %v1440, %v1456
    %v1461 = vtanh.pop %v1459
    %v1462 = vtanh.pop %v1460
    %1465 = vrot.lane.b32.xlu0 %v1461, 64
    %v1466 = vpop.permute.xlu0 %1465
    %1467 = vrot.lane.b32.xlu0 %v1462, 64
    %v1468 = vpop.permute.xlu0 %1467
    %v1471 = vmul.f32 %v1421, %v1466
    %v1472 = vmul.f32 %v1436, %v1468
    %1475 = vrot.lane.b32.xlu0 %v1471, 32
    %v1476 = vpop.permute.xlu0 %1475
    %1477 = vrot.lane.b32.xlu0 %v1472, 32
    %v1478 = vpop.permute.xlu0 %1477
    %1481 = vst.msk [vmem:[#allocation5 + $0x1] sm:$0x1] %vm347, %v1476
    %1482 = vst.msk [vmem:[#allocation5 + $0x9] sm:$0x1] %vm347, %v1478
    %v1483 = vld [vmem:[#allocation4 + $0x2] sm:$0x1]
    %v1484 = vld [vmem:[#allocation4 + $0xa] sm:$0x1]
    %v1485 = vrot.slane %v1472, 7
    %v1486 = vsel %vm353, %v1485, %v1471
    %1487 = vrot.lane.b32.xlu0 %v1486, 32
    %v1488 = vpop.permute.xlu0 %1487
    %v1489 = vsel %vm188, %v1488, 0
    %1491 = vmatpush.msra.mxu0 0.0
    %1492 = vmatpush.msra.mxu0 0.0
    %1493 = vmatpush.msra.mxu0 0.0
    %1494 = vmatpush.msra.mxu0 0.0
    %1495 = vmatpush.msra.mxu0 0.0
    %1496 = vmatpush.msra.mxu0 0.0
    %1497 = vmatpush.msra.mxu0 0.0
    %1498 = vmatpush.msra.mxu0 0.0
    %1499 = vmatpush.msra.mxu0 0.0
    %1500 = vmatpush.msra.mxu0 0.0
    %1501 = vmatpush.msra.mxu0 0.0
    %1502 = vmatpush.msra.mxu0 0.0
    %1503 = vmatpush.msra.mxu0 %v1237
    %1504 = vmatpush.msra.mxu0 %v1236
    %1505 = vmatpush.msra.mxu0 %v1235
    %1506 = vmatpush.msra.mxu0 %v1234
    %1507 = vmatmul.f32.gmra.mxu0 %v1489
    %v1508 = vpop.f32.mrf.mxu0
    %v1509 = vadd.f32 0.0, %v1508
    %1510 = vdwg.mxu0
    %v1512 = vrot.slane %v1509, 1
    %v1515 = vadd.f32 %v1483, %v1509
    %v1516 = vadd.f32 %v1484, %v1512
    %v1517 = vxor.u32 %v1515, 2147483648
    %v1518 = vxor.u32 %v1516, 2147483648
    %v1519 = vmul.f32 %v1517, 1.442695
    %v1520 = vpow.pop %v1519
    %v1521 = vmul.f32 %v1518, 1.442695
    %v1522 = vpow.pop %v1521
    %v1523 = vadd.f32 %v1520, 1.0
    %v1524 = vadd.f32 %v1522, 1.0
    %v1525 = vrcp.pop %v1523
    %v1526 = vmul.f32 %v1523, %v1525
    %v1527 = vsub.f32 1.0, %v1526
    %v1528 = vmul.f32 %v1525, %v1527
    %v1529 = vadd.f32 %v1525, %v1528
    %vm1530 = vweird.f32 %v1523
    %vm1531 = vweird.f32 %v1525
    %vm1532 = vmor %vm1530, %vm1531
    %v1533 = vsel %vm1532, %v1525, %v1529
    %v1534 = vand.u32 2147483647, %v1523
    %vm1535 = vcmp.eq.f32.partialorder %v1534, 8.507059e+37
    %v1536 = vand.u32 %v1523, 2147483648
    %v1537 = vor.u32 1.1754944e-38, %v1536
    %v1538 = vsel %vm1535, %v1537, %v1533
    %v1539 = vmul.f32 1.0, %v1538
    %v1540 = vrcp.pop %v1524
    %v1541 = vmul.f32 %v1524, %v1540
    %v1542 = vsub.f32 1.0, %v1541
    %v1543 = vmul.f32 %v1540, %v1542
    %v1544 = vadd.f32 %v1540, %v1543
    %vm1545 = vweird.f32 %v1524
    %vm1546 = vweird.f32 %v1540
    %vm1547 = vmor %vm1545, %vm1546
    %v1548 = vsel %vm1547, %v1540, %v1544
    %v1549 = vand.u32 2147483647, %v1524
    %vm1550 = vcmp.eq.f32.partialorder %v1549, 8.507059e+37
    %v1551 = vand.u32 %v1524, 2147483648
    %v1552 = vor.u32 1.1754944e-38, %v1551
    %v1553 = vsel %vm1550, %v1552, %v1548
    %v1554 = vmul.f32 1.0, %v1553
    %v1555 = vtanh.pop %v1515
    %v1556 = vtanh.pop %v1516
    %v1557 = vmul.f32 %v1539, %v1459
    %v1558 = vmul.f32 %v1554, %v1460
    %1561 = vrot.lane.b32.xlu0 %v1555, 64
    %v1562 = vpop.permute.xlu0 %1561
    %1563 = vrot.lane.b32.xlu0 %v1556, 64
    %v1564 = vpop.permute.xlu0 %1563
    %v1567 = vmul.f32 %v1539, %v1562
    %v1568 = vmul.f32 %v1554, %v1564
    %1571 = vrot.lane.b32.xlu0 %v1567, 32
    %v1572 = vpop.permute.xlu0 %1571
    %1573 = vrot.lane.b32.xlu0 %v1568, 32
    %v1574 = vpop.permute.xlu0 %1573
    %v1577 = vadd.f32 %v1557, %v1572
    %v1578 = vadd.f32 %v1558, %v1574
    %v1579 = vtanh.pop %v1577
    %v1580 = vtanh.pop %v1578
    %1583 = vrot.lane.b32.xlu0 %v1579, 64
    %v1584 = vpop.permute.xlu0 %1583
    %1585 = vrot.lane.b32.xlu0 %v1580, 64
    %v1586 = vpop.permute.xlu0 %1585
    %v1589 = vmul.f32 %v1539, %v1584
    %v1590 = vmul.f32 %v1554, %v1586
    %1593 = vrot.lane.b32.xlu0 %v1589, 32
    %v1594 = vpop.permute.xlu0 %1593
    %1595 = vrot.lane.b32.xlu0 %v1590, 32
    %v1596 = vpop.permute.xlu0 %1595
    %1599 = vst.msk [vmem:[#allocation5 + $0x2] sm:$0x1] %vm347, %v1594
    %1600 = vst.msk [vmem:[#allocation5 + $0xa] sm:$0x1] %vm347, %v1596
    %v1601 = vld [vmem:[#allocation4 + $0x3] sm:$0x1]
    %v1602 = vld [vmem:[#allocation4 + $0xb] sm:$0x1]
    %v1603 = vrot.slane %v1590, 7
    %v1604 = vsel %vm353, %v1603, %v1589
    %1605 = vrot.lane.b32.xlu0 %v1604, 32
    %v1606 = vpop.permute.xlu0 %1605
    %v1607 = vsel %vm188, %v1606, 0
    %1609 = vmatpush.msra.mxu0 0.0
    %1610 = vmatpush.msra.mxu0 0.0
    %1611 = vmatpush.msra.mxu0 0.0
    %1612 = vmatpush.msra.mxu0 0.0
    %1613 = vmatpush.msra.mxu0 0.0
    %1614 = vmatpush.msra.mxu0 0.0
    %1615 = vmatpush.msra.mxu0 0.0
    %1616 = vmatpush.msra.mxu0 0.0
    %1617 = vmatpush.msra.mxu0 0.0
    %1618 = vmatpush.msra.mxu0 0.0
    %1619 = vmatpush.msra.mxu0 0.0
    %1620 = vmatpush.msra.mxu0 0.0
    %1621 = vmatpush.msra.mxu0 %v1237
    %1622 = vmatpush.msra.mxu0 %v1236
    %1623 = vmatpush.msra.mxu0 %v1235
    %1624 = vmatpush.msra.mxu0 %v1234
    %1625 = vmatmul.f32.gmra.mxu0 %v1607
    %v1626 = vpop.f32.mrf.mxu0
    %v1627 = vadd.f32 0.0, %v1626
    %1628 = vdwg.mxu0
    %v1630 = vrot.slane %v1627, 1
    %v1633 = vadd.f32 %v1601, %v1627
    %v1634 = vadd.f32 %v1602, %v1630
    %v1635 = vxor.u32 %v1633, 2147483648
    %v1636 = vxor.u32 %v1634, 2147483648
    %v1637 = vmul.f32 %v1635, 1.442695
    %v1638 = vpow.pop %v1637
    %v1639 = vmul.f32 %v1636, 1.442695
    %v1640 = vpow.pop %v1639
    %v1641 = vadd.f32 %v1638, 1.0
    %v1642 = vadd.f32 %v1640, 1.0
    %v1643 = vrcp.pop %v1641
    %v1644 = vmul.f32 %v1641, %v1643
    %v1645 = vsub.f32 1.0, %v1644
    %v1646 = vmul.f32 %v1643, %v1645
    %v1647 = vadd.f32 %v1643, %v1646
    %vm1648 = vweird.f32 %v1641
    %vm1649 = vweird.f32 %v1643
    %vm1650 = vmor %vm1648, %vm1649
    %v1651 = vsel %vm1650, %v1643, %v1647
    %v1652 = vand.u32 2147483647, %v1641
    %vm1653 = vcmp.eq.f32.partialorder %v1652, 8.507059e+37
    %v1654 = vand.u32 %v1641, 2147483648
    %v1655 = vor.u32 1.1754944e-38, %v1654
    %v1656 = vsel %vm1653, %v1655, %v1651
    %v1657 = vmul.f32 1.0, %v1656
    %v1658 = vrcp.pop %v1642
    %v1659 = vmul.f32 %v1642, %v1658
    %v1660 = vsub.f32 1.0, %v1659
    %v1661 = vmul.f32 %v1658, %v1660
    %v1662 = vadd.f32 %v1658, %v1661
    %vm1663 = vweird.f32 %v1642
    %vm1664 = vweird.f32 %v1658
    %vm1665 = vmor %vm1663, %vm1664
    %v1666 = vsel %vm1665, %v1658, %v1662
    %v1667 = vand.u32 2147483647, %v1642
    %vm1668 = vcmp.eq.f32.partialorder %v1667, 8.507059e+37
    %v1669 = vand.u32 %v1642, 2147483648
    %v1670 = vor.u32 1.1754944e-38, %v1669
    %v1671 = vsel %vm1668, %v1670, %v1666
    %v1672 = vmul.f32 1.0, %v1671
    %v1673 = vtanh.pop %v1633
    %v1674 = vtanh.pop %v1634
    %v1675 = vmul.f32 %v1657, %v1577
    %v1676 = vmul.f32 %v1672, %v1578
    %1679 = vrot.lane.b32.xlu0 %v1673, 64
    %v1680 = vpop.permute.xlu0 %1679
    %1681 = vrot.lane.b32.xlu0 %v1674, 64
    %v1682 = vpop.permute.xlu0 %1681
    %v1685 = vmul.f32 %v1657, %v1680
    %v1686 = vmul.f32 %v1672, %v1682
    %1689 = vrot.lane.b32.xlu0 %v1685, 32
    %v1690 = vpop.permute.xlu0 %1689
    %1691 = vrot.lane.b32.xlu0 %v1686, 32
    %v1692 = vpop.permute.xlu0 %1691
    %v1695 = vadd.f32 %v1675, %v1690
    %v1696 = vadd.f32 %v1676, %v1692
    %v1697 = vtanh.pop %v1695
    %v1698 = vtanh.pop %v1696
    %1701 = vrot.lane.b32.xlu0 %v1697, 64
    %v1702 = vpop.permute.xlu0 %1701
    %1703 = vrot.lane.b32.xlu0 %v1698, 64
    %v1704 = vpop.permute.xlu0 %1703
    %v1707 = vmul.f32 %v1657, %v1702
    %v1708 = vmul.f32 %v1672, %v1704
    %1711 = vrot.lane.b32.xlu0 %v1707, 32
    %v1712 = vpop.permute.xlu0 %1711
    %1713 = vrot.lane.b32.xlu0 %v1708, 32
    %v1714 = vpop.permute.xlu0 %1713
    %1717 = vst.msk [vmem:[#allocation5 + $0x3] sm:$0x1] %vm347, %v1712
    %1718 = vst.msk [vmem:[#allocation5 + $0xb] sm:$0x1] %vm347, %v1714
    %v1719 = vld [vmem:[#allocation4 + $0x4] sm:$0x1]
    %v1720 = vld [vmem:[#allocation4 + $0xc] sm:$0x1]
    %v1721 = vrot.slane %v1708, 7
    %v1722 = vsel %vm353, %v1721, %v1707
    %1723 = vrot.lane.b32.xlu0 %v1722, 32
    %v1724 = vpop.permute.xlu0 %1723
    %v1725 = vsel %vm188, %v1724, 0
    %1727 = vmatpush.msra.mxu0 0.0
    %1728 = vmatpush.msra.mxu0 0.0
    %1729 = vmatpush.msra.mxu0 0.0
    %1730 = vmatpush.msra.mxu0 0.0
    %1731 = vmatpush.msra.mxu0 0.0
    %1732 = vmatpush.msra.mxu0 0.0
    %1733 = vmatpush.msra.mxu0 0.0
    %1734 = vmatpush.msra.mxu0 0.0
    %1735 = vmatpush.msra.mxu0 0.0
    %1736 = vmatpush.msra.mxu0 0.0
    %1737 = vmatpush.msra.mxu0 0.0
    %1738 = vmatpush.msra.mxu0 0.0
    %1739 = vmatpush.msra.mxu0 %v1237
    %1740 = vmatpush.msra.mxu0 %v1236
    %1741 = vmatpush.msra.mxu0 %v1235
    %1742 = vmatpush.msra.mxu0 %v1234
    %1743 = vmatmul.f32.gmra.mxu0 %v1725
    %v1744 = vpop.f32.mrf.mxu0
    %v1745 = vadd.f32 0.0, %v1744
    %1746 = vdwg.mxu0
    %v1748 = vrot.slane %v1745, 1
    %v1751 = vadd.f32 %v1719, %v1745
    %v1752 = vadd.f32 %v1720, %v1748
    %v1753 = vxor.u32 %v1751, 2147483648
    %v1754 = vxor.u32 %v1752, 2147483648
    %v1755 = vmul.f32 %v1753, 1.442695
    %v1756 = vpow.pop %v1755
    %v1757 = vmul.f32 %v1754, 1.442695
    %v1758 = vpow.pop %v1757
    %v1759 = vadd.f32 %v1756, 1.0
    %v1760 = vadd.f32 %v1758, 1.0
    %v1761 = vrcp.pop %v1759
    %v1762 = vmul.f32 %v1759, %v1761
    %v1763 = vsub.f32 1.0, %v1762
    %v1764 = vmul.f32 %v1761, %v1763
    %v1765 = vadd.f32 %v1761, %v1764
    %vm1766 = vweird.f32 %v1759
    %vm1767 = vweird.f32 %v1761
    %vm1768 = vmor %vm1766, %vm1767
    %v1769 = vsel %vm1768, %v1761, %v1765
    %v1770 = vand.u32 2147483647, %v1759
    %vm1771 = vcmp.eq.f32.partialorder %v1770, 8.507059e+37
    %v1772 = vand.u32 %v1759, 2147483648
    %v1773 = vor.u32 1.1754944e-38, %v1772
    %v1774 = vsel %vm1771, %v1773, %v1769
    %v1775 = vmul.f32 1.0, %v1774
    %v1776 = vrcp.pop %v1760
    %v1777 = vmul.f32 %v1760, %v1776
    %v1778 = vsub.f32 1.0, %v1777
    %v1779 = vmul.f32 %v1776, %v1778
    %v1780 = vadd.f32 %v1776, %v1779
    %vm1781 = vweird.f32 %v1760
    %vm1782 = vweird.f32 %v1776
    %vm1783 = vmor %vm1781, %vm1782
    %v1784 = vsel %vm1783, %v1776, %v1780
    %v1785 = vand.u32 2147483647, %v1760
    %vm1786 = vcmp.eq.f32.partialorder %v1785, 8.507059e+37
    %v1787 = vand.u32 %v1760, 2147483648
    %v1788 = vor.u32 1.1754944e-38, %v1787
    %v1789 = vsel %vm1786, %v1788, %v1784
    %v1790 = vmul.f32 1.0, %v1789
    %v1791 = vtanh.pop %v1751
    %v1792 = vtanh.pop %v1752
    %v1793 = vmul.f32 %v1775, %v1695
    %v1794 = vmul.f32 %v1790, %v1696
    %1797 = vrot.lane.b32.xlu0 %v1791, 64
    %v1798 = vpop.permute.xlu0 %1797
    %1799 = vrot.lane.b32.xlu0 %v1792, 64
    %v1800 = vpop.permute.xlu0 %1799
    %v1803 = vmul.f32 %v1775, %v1798
    %v1804 = vmul.f32 %v1790, %v1800
    %1807 = vrot.lane.b32.xlu0 %v1803, 32
    %v1808 = vpop.permute.xlu0 %1807
    %1809 = vrot.lane.b32.xlu0 %v1804, 32
    %v1810 = vpop.permute.xlu0 %1809
    %v1813 = vadd.f32 %v1793, %v1808
    %v1814 = vadd.f32 %v1794, %v1810
    %v1815 = vtanh.pop %v1813
    %v1816 = vtanh.pop %v1814
    %1819 = vrot.lane.b32.xlu0 %v1815, 64
    %v1820 = vpop.permute.xlu0 %1819
    %1821 = vrot.lane.b32.xlu0 %v1816, 64
    %v1822 = vpop.permute.xlu0 %1821
    %v1825 = vmul.f32 %v1775, %v1820
    %v1826 = vmul.f32 %v1790, %v1822
    %1829 = vrot.lane.b32.xlu0 %v1825, 32
    %v1830 = vpop.permute.xlu0 %1829
    %1831 = vrot.lane.b32.xlu0 %v1826, 32
    %v1832 = vpop.permute.xlu0 %1831
    %1835 = vst.msk [vmem:[#allocation5 + $0x4] sm:$0x1] %vm347, %v1830
    %1836 = vst.msk [vmem:[#allocation5 + $0xc] sm:$0x1] %vm347, %v1832
    %v1837 = vld [vmem:[#allocation4 + $0x5] sm:$0x1]
    %v1838 = vld [vmem:[#allocation4 + $0xd] sm:$0x1]
    %v1839 = vrot.slane %v1826, 7
    %v1840 = vsel %vm353, %v1839, %v1825
    %1841 = vrot.lane.b32.xlu0 %v1840, 32
    %v1842 = vpop.permute.xlu0 %1841
    %v1843 = vsel %vm188, %v1842, 0
    %1845 = vmatpush.msra.mxu0 0.0
    %1846 = vmatpush.msra.mxu0 0.0
    %1847 = vmatpush.msra.mxu0 0.0
    %1848 = vmatpush.msra.mxu0 0.0
    %1849 = vmatpush.msra.mxu0 0.0
    %1850 = vmatpush.msra.mxu0 0.0
    %1851 = vmatpush.msra.mxu0 0.0
    %1852 = vmatpush.msra.mxu0 0.0
    %1853 = vmatpush.msra.mxu0 0.0
    %1854 = vmatpush.msra.mxu0 0.0
    %1855 = vmatpush.msra.mxu0 0.0
    %1856 = vmatpush.msra.mxu0 0.0
    %1857 = vmatpush.msra.mxu0 %v1237
    %1858 = vmatpush.msra.mxu0 %v1236
    %1859 = vmatpush.msra.mxu0 %v1235
    %1860 = vmatpush.msra.mxu0 %v1234
    %1861 = vmatmul.f32.gmra.mxu0 %v1843
    %v1862 = vpop.f32.mrf.mxu0
    %v1863 = vadd.f32 0.0, %v1862
    %1864 = vdwg.mxu0
    %v1866 = vrot.slane %v1863, 1
    %v1869 = vadd.f32 %v1837, %v1863
    %v1870 = vadd.f32 %v1838, %v1866
    %v1871 = vxor.u32 %v1869, 2147483648
    %v1872 = vxor.u32 %v1870, 2147483648
    %v1873 = vmul.f32 %v1871, 1.442695
    %v1874 = vpow.pop %v1873
    %v1875 = vmul.f32 %v1872, 1.442695
    %v1876 = vpow.pop %v1875
    %v1877 = vadd.f32 %v1874, 1.0
    %v1878 = vadd.f32 %v1876, 1.0
    %v1879 = vrcp.pop %v1877
    %v1880 = vmul.f32 %v1877, %v1879
    %v1881 = vsub.f32 1.0, %v1880
    %v1882 = vmul.f32 %v1879, %v1881
    %v1883 = vadd.f32 %v1879, %v1882
    %vm1884 = vweird.f32 %v1877
    %vm1885 = vweird.f32 %v1879
    %vm1886 = vmor %vm1884, %vm1885
    %v1887 = vsel %vm1886, %v1879, %v1883
    %v1888 = vand.u32 2147483647, %v1877
    %vm1889 = vcmp.eq.f32.partialorder %v1888, 8.507059e+37
    %v1890 = vand.u32 %v1877, 2147483648
    %v1891 = vor.u32 1.1754944e-38, %v1890
    %v1892 = vsel %vm1889, %v1891, %v1887
    %v1893 = vmul.f32 1.0, %v1892
    %v1894 = vrcp.pop %v1878
    %v1895 = vmul.f32 %v1878, %v1894
    %v1896 = vsub.f32 1.0, %v1895
    %v1897 = vmul.f32 %v1894, %v1896
    %v1898 = vadd.f32 %v1894, %v1897
    %vm1899 = vweird.f32 %v1878
    %vm1900 = vweird.f32 %v1894
    %vm1901 = vmor %vm1899, %vm1900
    %v1902 = vsel %vm1901, %v1894, %v1898
    %v1903 = vand.u32 2147483647, %v1878
    %vm1904 = vcmp.eq.f32.partialorder %v1903, 8.507059e+37
    %v1905 = vand.u32 %v1878, 2147483648
    %v1906 = vor.u32 1.1754944e-38, %v1905
    %v1907 = vsel %vm1904, %v1906, %v1902
    %v1908 = vmul.f32 1.0, %v1907
    %v1909 = vtanh.pop %v1869
    %v1910 = vtanh.pop %v1870
    %v1911 = vmul.f32 %v1893, %v1813
    %v1912 = vmul.f32 %v1908, %v1814
    %1915 = vrot.lane.b32.xlu0 %v1909, 64
    %v1916 = vpop.permute.xlu0 %1915
    %1917 = vrot.lane.b32.xlu0 %v1910, 64
    %v1918 = vpop.permute.xlu0 %1917
    %v1921 = vmul.f32 %v1893, %v1916
    %v1922 = vmul.f32 %v1908, %v1918
    %1925 = vrot.lane.b32.xlu0 %v1921, 32
    %v1926 = vpop.permute.xlu0 %1925
    %1927 = vrot.lane.b32.xlu0 %v1922, 32
    %v1928 = vpop.permute.xlu0 %1927
    %v1931 = vadd.f32 %v1911, %v1926
    %v1932 = vadd.f32 %v1912, %v1928
    %v1933 = vtanh.pop %v1931
    %v1934 = vtanh.pop %v1932
    %1937 = vrot.lane.b32.xlu0 %v1933, 64
    %v1938 = vpop.permute.xlu0 %1937
    %1939 = vrot.lane.b32.xlu0 %v1934, 64
    %v1940 = vpop.permute.xlu0 %1939
    %v1943 = vmul.f32 %v1893, %v1938
    %v1944 = vmul.f32 %v1908, %v1940
    %1947 = vrot.lane.b32.xlu0 %v1943, 32
    %v1948 = vpop.permute.xlu0 %1947
    %1949 = vrot.lane.b32.xlu0 %v1944, 32
    %v1950 = vpop.permute.xlu0 %1949
    %1953 = vst.msk [vmem:[#allocation5 + $0x5] sm:$0x1] %vm347, %v1948
    %1954 = vst.msk [vmem:[#allocation5 + $0xd] sm:$0x1] %vm347, %v1950
    %v1955 = vld [vmem:[#allocation4 + $0x6] sm:$0x1]
    %v1956 = vld [vmem:[#allocation4 + $0xe] sm:$0x1]
    %v1957 = vrot.slane %v1944, 7
    %v1958 = vsel %vm353, %v1957, %v1943
    %1959 = vrot.lane.b32.xlu0 %v1958, 32
    %v1960 = vpop.permute.xlu0 %1959
    %v1961 = vsel %vm188, %v1960, 0
    %1963 = vmatpush.msra.mxu0 0.0
    %1964 = vmatpush.msra.mxu0 0.0
    %1965 = vmatpush.msra.mxu0 0.0
    %1966 = vmatpush.msra.mxu0 0.0
    %1967 = vmatpush.msra.mxu0 0.0
    %1968 = vmatpush.msra.mxu0 0.0
    %1969 = vmatpush.msra.mxu0 0.0
    %1970 = vmatpush.msra.mxu0 0.0
    %1971 = vmatpush.msra.mxu0 0.0
    %1972 = vmatpush.msra.mxu0 0.0
    %1973 = vmatpush.msra.mxu0 0.0
    %1974 = vmatpush.msra.mxu0 0.0
    %1975 = vmatpush.msra.mxu0 %v1237
    %1976 = vmatpush.msra.mxu0 %v1236
    %1977 = vmatpush.msra.mxu0 %v1235
    %1978 = vmatpush.msra.mxu0 %v1234
    %1979 = vmatmul.f32.gmra.mxu0 %v1961
    %v1980 = vpop.f32.mrf.mxu0
    %v1981 = vadd.f32 0.0, %v1980
    %1982 = vdwg.mxu0
    %v1984 = vrot.slane %v1981, 1
    %v1987 = vadd.f32 %v1955, %v1981
    %v1988 = vadd.f32 %v1956, %v1984
    %v1989 = vxor.u32 %v1987, 2147483648
    %v1990 = vxor.u32 %v1988, 2147483648
    %v1991 = vmul.f32 %v1989, 1.442695
    %v1992 = vpow.pop %v1991
    %v1993 = vmul.f32 %v1990, 1.442695
    %v1994 = vpow.pop %v1993
    %v1995 = vadd.f32 %v1992, 1.0
    %v1996 = vadd.f32 %v1994, 1.0
    %v1997 = vrcp.pop %v1995
    %v1998 = vmul.f32 %v1995, %v1997
    %v1999 = vsub.f32 1.0, %v1998
    %v2000 = vmul.f32 %v1997, %v1999
    %v2001 = vadd.f32 %v1997, %v2000
    %vm2002 = vweird.f32 %v1995
    %vm2003 = vweird.f32 %v1997
    %vm2004 = vmor %vm2002, %vm2003
    %v2005 = vsel %vm2004, %v1997, %v2001
    %v2006 = vand.u32 2147483647, %v1995
    %vm2007 = vcmp.eq.f32.partialorder %v2006, 8.507059e+37
    %v2008 = vand.u32 %v1995, 2147483648
    %v2009 = vor.u32 1.1754944e-38, %v2008
    %v2010 = vsel %vm2007, %v2009, %v2005
    %v2011 = vmul.f32 1.0, %v2010
    %v2012 = vrcp.pop %v1996
    %v2013 = vmul.f32 %v1996, %v2012
    %v2014 = vsub.f32 1.0, %v2013
    %v2015 = vmul.f32 %v2012, %v2014
    %v2016 = vadd.f32 %v2012, %v2015
    %vm2017 = vweird.f32 %v1996
    %vm2018 = vweird.f32 %v2012
    %vm2019 = vmor %vm2017, %vm2018
    %v2020 = vsel %vm2019, %v2012, %v2016
    %v2021 = vand.u32 2147483647, %v1996
    %vm2022 = vcmp.eq.f32.partialorder %v2021, 8.507059e+37
    %v2023 = vand.u32 %v1996, 2147483648
    %v2024 = vor.u32 1.1754944e-38, %v2023
    %v2025 = vsel %vm2022, %v2024, %v2020
    %v2026 = vmul.f32 1.0, %v2025
    %v2027 = vtanh.pop %v1987
    %v2028 = vtanh.pop %v1988
    %v2029 = vmul.f32 %v2011, %v1931
    %v2030 = vmul.f32 %v2026, %v1932
    %2033 = vrot.lane.b32.xlu0 %v2027, 64
    %v2034 = vpop.permute.xlu0 %2033
    %2035 = vrot.lane.b32.xlu0 %v2028, 64
    %v2036 = vpop.permute.xlu0 %2035
    %v2039 = vmul.f32 %v2011, %v2034
    %v2040 = vmul.f32 %v2026, %v2036
    %2043 = vrot.lane.b32.xlu0 %v2039, 32
    %v2044 = vpop.permute.xlu0 %2043
    %2045 = vrot.lane.b32.xlu0 %v2040, 32
    %v2046 = vpop.permute.xlu0 %2045
    %v2049 = vadd.f32 %v2029, %v2044
    %v2050 = vadd.f32 %v2030, %v2046
    %v2051 = vtanh.pop %v2049
    %v2052 = vtanh.pop %v2050
    %2055 = vrot.lane.b32.xlu0 %v2051, 64
    %v2056 = vpop.permute.xlu0 %2055
    %2057 = vrot.lane.b32.xlu0 %v2052, 64
    %v2058 = vpop.permute.xlu0 %2057
    %v2061 = vmul.f32 %v2011, %v2056
    %v2062 = vmul.f32 %v2026, %v2058
    %2065 = vrot.lane.b32.xlu0 %v2061, 32
    %v2066 = vpop.permute.xlu0 %2065
    %2067 = vrot.lane.b32.xlu0 %v2062, 32
    %v2068 = vpop.permute.xlu0 %2067
    %2071 = vst.msk [vmem:[#allocation5 + $0x6] sm:$0x1] %vm347, %v2066
    %2072 = vst.msk [vmem:[#allocation5 + $0xe] sm:$0x1] %vm347, %v2068
    %v2073 = vld [vmem:[#allocation4 + $0x7] sm:$0x1]
    %v2074 = vld [vmem:[#allocation4 + $0xf] sm:$0x1]
    %v2075 = vrot.slane %v2062, 7
    %v2076 = vsel %vm353, %v2075, %v2061
    %2077 = vrot.lane.b32.xlu0 %v2076, 32
    %v2078 = vpop.permute.xlu0 %2077
    %v2079 = vsel %vm188, %v2078, 0
    %2081 = vmatpush.msra.mxu0 0.0
    %2082 = vmatpush.msra.mxu0 0.0
    %2083 = vmatpush.msra.mxu0 0.0
    %2084 = vmatpush.msra.mxu0 0.0
    %2085 = vmatpush.msra.mxu0 0.0
    %2086 = vmatpush.msra.mxu0 0.0
    %2087 = vmatpush.msra.mxu0 0.0
    %2088 = vmatpush.msra.mxu0 0.0
    %2089 = vmatpush.msra.mxu0 0.0
    %2090 = vmatpush.msra.mxu0 0.0
    %2091 = vmatpush.msra.mxu0 0.0
    %2092 = vmatpush.msra.mxu0 0.0
    %2093 = vmatpush.msra.mxu0 %v1237
    %2094 = vmatpush.msra.mxu0 %v1236
    %2095 = vmatpush.msra.mxu0 %v1235
    %2096 = vmatpush.msra.mxu0 %v1234
    %2097 = vmatmul.f32.gmra.mxu0 %v2079
    %v2098 = vpop.f32.mrf.mxu0
    %v2099 = vadd.f32 0.0, %v2098
    %2100 = vdwg.mxu0
    %v2102 = vrot.slane %v2099, 1
    %v2105 = vadd.f32 %v2073, %v2099
    %v2106 = vadd.f32 %v2074, %v2102
    %v2107 = vxor.u32 %v2105, 2147483648
    %v2108 = vxor.u32 %v2106, 2147483648
    %v2109 = vmul.f32 %v2107, 1.442695
    %v2110 = vpow.pop %v2109
    %v2111 = vmul.f32 %v2108, 1.442695
    %v2112 = vpow.pop %v2111
    %v2113 = vadd.f32 %v2110, 1.0
    %v2114 = vadd.f32 %v2112, 1.0
    %v2115 = vrcp.pop %v2113
    %v2116 = vmul.f32 %v2113, %v2115
    %v2117 = vsub.f32 1.0, %v2116
    %v2118 = vmul.f32 %v2115, %v2117
    %v2119 = vadd.f32 %v2115, %v2118
    %vm2120 = vweird.f32 %v2113
    %vm2121 = vweird.f32 %v2115
    %vm2122 = vmor %vm2120, %vm2121
    %v2123 = vsel %vm2122, %v2115, %v2119
    %v2124 = vand.u32 2147483647, %v2113
    %vm2125 = vcmp.eq.f32.partialorder %v2124, 8.507059e+37
    %v2126 = vand.u32 %v2113, 2147483648
    %v2127 = vor.u32 1.1754944e-38, %v2126
    %v2128 = vsel %vm2125, %v2127, %v2123
    %v2129 = vmul.f32 1.0, %v2128
    %v2130 = vrcp.pop %v2114
    %v2131 = vmul.f32 %v2114, %v2130
    %v2132 = vsub.f32 1.0, %v2131
    %v2133 = vmul.f32 %v2130, %v2132
    %v2134 = vadd.f32 %v2130, %v2133
    %vm2135 = vweird.f32 %v2114
    %vm2136 = vweird.f32 %v2130
    %vm2137 = vmor %vm2135, %vm2136
    %v2138 = vsel %vm2137, %v2130, %v2134
    %v2139 = vand.u32 2147483647, %v2114
    %vm2140 = vcmp.eq.f32.partialorder %v2139, 8.507059e+37
    %v2141 = vand.u32 %v2114, 2147483648
    %v2142 = vor.u32 1.1754944e-38, %v2141
    %v2143 = vsel %vm2140, %v2142, %v2138
    %v2144 = vmul.f32 1.0, %v2143
    %v2145 = vtanh.pop %v2105
    %v2146 = vtanh.pop %v2106
    %v2147 = vmul.f32 %v2129, %v2049
    %v2148 = vmul.f32 %v2144, %v2050
    %2151 = vrot.lane.b32.xlu0 %v2145, 64
    %v2152 = vpop.permute.xlu0 %2151
    %2153 = vrot.lane.b32.xlu0 %v2146, 64
    %v2154 = vpop.permute.xlu0 %2153
    %v2157 = vmul.f32 %v2129, %v2152
    %v2158 = vmul.f32 %v2144, %v2154
    %2161 = vrot.lane.b32.xlu0 %v2157, 32
    %v2162 = vpop.permute.xlu0 %2161
    %2163 = vrot.lane.b32.xlu0 %v2158, 32
    %v2164 = vpop.permute.xlu0 %2163
    %v2167 = vadd.f32 %v2147, %v2162
    %v2168 = vadd.f32 %v2148, %v2164
    %v2169 = vtanh.pop %v2167
    %v2170 = vtanh.pop %v2168
    %2173 = vrot.lane.b32.xlu0 %v2169, 64
    %v2174 = vpop.permute.xlu0 %2173
    %2175 = vrot.lane.b32.xlu0 %v2170, 64
    %v2176 = vpop.permute.xlu0 %2175
    %v2179 = vmul.f32 %v2129, %v2174
    %v2180 = vmul.f32 %v2144, %v2176
    %2183 = vrot.lane.b32.xlu0 %v2179, 32
    %v2184 = vpop.permute.xlu0 %2183
    %2185 = vrot.lane.b32.xlu0 %v2180, 32
    %v2186 = vpop.permute.xlu0 %2185
    %2189 = vst.msk [vmem:[#allocation5 + $0x7] sm:$0x1] %vm347, %v2184
    %2190 = vst.msk [vmem:[#allocation5 + $0xf] sm:$0x1] %vm347, %v2186
    %v2191 = vrot.slane %v2180, 7
    %v2192 = vsel %vm353, %v2191, %v2179
    %2193 = vrot.lane.b32.xlu0 %v2192, 32
    %v2194 = vpop.permute.xlu0 %2193
    %2196 = vst.msk [vmem:[%s1238] sm:$0x3] %vm1182, %v2194
    %v2199 = vrot.slane %v2168, 7
    %v2200 = vsel %vm353, %v2199, %v2167
    %2201 = vrot.lane.b32.xlu0 %v2200, 96
    %v2202 = vpop.permute.xlu0 %2201
    %2204 = vst.msk [vmem:[%s1240] sm:$0x3] %vm1182, %v2202
    %v2205 = vld [vmem:[#allocation5] sm:$0xff]
    %v2206 = vld [vmem:[#allocation5 + $0x8] sm:$0xff]
    %s2207 = scalar_lea.vmem [#allocation11], 32
    %v2208 = vld [vmem:[%s2207] sm:$0xff]
    %v2209 = vld [vmem:[%s2207 + $0x8] sm:$0xff]
    %v2210 = vld [vmem:[%s2207 + $0x10] sm:$0xff]
    %v2211 = vld [vmem:[%s2207 + $0x18] sm:$0xff]
    %s2212 = scalar_lea.vmem [#allocation15], 1
    %v2213 = vld [vmem:[%s2212] sm:$0x1]
    %v2215 = vperm.slane %v2213, 0
    %v2218 = vsel %vm188, %v2205, 0
    %v2221 = vsel %vm188, %v2206, 0
    %2223 = vmatpush.msra.mxu0 0.0
    %2224 = vmatpush.msra.mxu0 0.0
    %2225 = vmatpush.msra.mxu0 0.0
    %2226 = vmatpush.msra.mxu0 0.0
    %2227 = vmatpush.msra.mxu0 0.0
    %2228 = vmatpush.msra.mxu0 0.0
    %2229 = vmatpush.msra.mxu0 0.0
    %2230 = vmatpush.msra.mxu0 0.0
    %2231 = vmatpush.msra.mxu0 0.0
    %2232 = vmatpush.msra.mxu0 0.0
    %2233 = vmatpush.msra.mxu0 0.0
    %2234 = vmatpush.msra.mxu0 0.0
    %2235 = vmatpush.msra.mxu0 %v2211
    %2236 = vmatpush.msra.mxu0 %v2210
    %2237 = vmatpush.msra.mxu0 %v2209
    %2238 = vmatpush.msra.mxu0 %v2208
    %2239 = vmatmul.f32.gmra.mxu0 %v2218
    %v2240 = vpop.f32.mrf.mxu0
    %v2241 = vadd.f32 %v2215, %v2240
    %2242 = vmatmul.f32.gmra.mxu0 %v2221
    %v2243 = vpop.f32.mrf.mxu0
    %v2244 = vadd.f32 %v2215, %v2243
    %2245 = vdwg.mxu0
    %2246 = vst [vmem:[#allocation4] sm:$0xff] %v2241
    %2247 = vst [vmem:[#allocation4 + $0x8] sm:$0xff] %v2244
    %s2248 = scalar_lea.vmem [#allocation12], 64
    %v2249 = vld [vmem:[%s2248] sm:$0xff]
    %v2250 = vld [vmem:[%s2248 + $0x8] sm:$0xff]
    %v2251 = vld [vmem:[%s2248 + $0x10] sm:$0xff]
    %v2252 = vld [vmem:[%s2248 + $0x18] sm:$0xff]
    %s2253 = scalar_lea.vmem [#allocation2], 4
    %v2254 = vld [vmem:[%s2253] sm:$0x3]
    %s2255 = scalar_lea.vmem [#allocation3], 4
    %v2256 = vld [vmem:[%s2255] sm:$0x3]
    %v2257 = vld [vmem:[#allocation4] sm:$0x1]
    %v2258 = vld [vmem:[#allocation4 + $0x8] sm:$0x1]
    %v2260 = vsel %vm188, %v2254, 0
    %2262 = vmatpush.msra.mxu0 0.0
    %2263 = vmatpush.msra.mxu0 0.0
    %2264 = vmatpush.msra.mxu0 0.0
    %2265 = vmatpush.msra.mxu0 0.0
    %2266 = vmatpush.msra.mxu0 0.0
    %2267 = vmatpush.msra.mxu0 0.0
    %2268 = vmatpush.msra.mxu0 0.0
    %2269 = vmatpush.msra.mxu0 0.0
    %2270 = vmatpush.msra.mxu0 0.0
    %2271 = vmatpush.msra.mxu0 0.0
    %2272 = vmatpush.msra.mxu0 0.0
    %2273 = vmatpush.msra.mxu0 0.0
    %2274 = vmatpush.msra.mxu0 %v2252
    %2275 = vmatpush.msra.mxu0 %v2251
    %2276 = vmatpush.msra.mxu0 %v2250
    %2277 = vmatpush.msra.mxu0 %v2249
    %2278 = vmatmul.f32.gmra.mxu0 %v2260
    %v2279 = vpop.f32.mrf.mxu0
    %v2280 = vadd.f32 0.0, %v2279
    %2281 = vdwg.mxu0
    %v2283 = vrot.slane %v2280, 1
    %v2286 = vadd.f32 %v2257, %v2280
    %v2287 = vadd.f32 %v2258, %v2283
    %v2288 = vxor.u32 %v2286, 2147483648
    %v2289 = vxor.u32 %v2287, 2147483648
    %v2290 = vmul.f32 %v2288, 1.442695
    %v2291 = vpow.pop %v2290
    %v2292 = vmul.f32 %v2289, 1.442695
    %v2293 = vpow.pop %v2292
    %v2294 = vadd.f32 %v2291, 1.0
    %v2295 = vadd.f32 %v2293, 1.0
    %v2296 = vrcp.pop %v2294
    %v2297 = vmul.f32 %v2294, %v2296
    %v2298 = vsub.f32 1.0, %v2297
    %v2299 = vmul.f32 %v2296, %v2298
    %v2300 = vadd.f32 %v2296, %v2299
    %vm2301 = vweird.f32 %v2294
    %vm2302 = vweird.f32 %v2296
    %vm2303 = vmor %vm2301, %vm2302
    %v2304 = vsel %vm2303, %v2296, %v2300
    %v2305 = vand.u32 2147483647, %v2294
    %vm2306 = vcmp.eq.f32.partialorder %v2305, 8.507059e+37
    %v2307 = vand.u32 %v2294, 2147483648
    %v2308 = vor.u32 1.1754944e-38, %v2307
    %v2309 = vsel %vm2306, %v2308, %v2304
    %v2310 = vmul.f32 1.0, %v2309
    %v2311 = vrcp.pop %v2295
    %v2312 = vmul.f32 %v2295, %v2311
    %v2313 = vsub.f32 1.0, %v2312
    %v2314 = vmul.f32 %v2311, %v2313
    %v2315 = vadd.f32 %v2311, %v2314
    %vm2316 = vweird.f32 %v2295
    %vm2317 = vweird.f32 %v2311
    %vm2318 = vmor %vm2316, %vm2317
    %v2319 = vsel %vm2318, %v2311, %v2315
    %v2320 = vand.u32 2147483647, %v2295
    %vm2321 = vcmp.eq.f32.partialorder %v2320, 8.507059e+37
    %v2322 = vand.u32 %v2295, 2147483648
    %v2323 = vor.u32 1.1754944e-38, %v2322
    %v2324 = vsel %vm2321, %v2323, %v2319
    %v2325 = vmul.f32 1.0, %v2324
    %v2326 = vtanh.pop %v2286
    %v2327 = vtanh.pop %v2287
    %v2329 = vrot.slane %v2256, 1
    %2330 = vrot.lane.b32.xlu0 %v2256, 32
    %v2331 = vpop.permute.xlu0 %2330
    %2332 = vrot.lane.b32.xlu0 %v2329, 32
    %v2333 = vpop.permute.xlu0 %2332
    %v2336 = vmul.f32 %v2310, %v2331
    %v2337 = vmul.f32 %v2325, %v2333
    %2340 = vrot.lane.b32.xlu0 %v2326, 64
    %v2341 = vpop.permute.xlu0 %2340
    %2342 = vrot.lane.b32.xlu0 %v2327, 64
    %v2343 = vpop.permute.xlu0 %2342
    %v2346 = vmul.f32 %v2310, %v2341
    %v2347 = vmul.f32 %v2325, %v2343
    %2350 = vrot.lane.b32.xlu0 %v2346, 32
    %v2351 = vpop.permute.xlu0 %2350
    %2352 = vrot.lane.b32.xlu0 %v2347, 32
    %v2353 = vpop.permute.xlu0 %2352
    %v2356 = vadd.f32 %v2336, %v2351
    %v2357 = vadd.f32 %v2337, %v2353
    %v2358 = vtanh.pop %v2356
    %v2359 = vtanh.pop %v2357
    %2362 = vrot.lane.b32.xlu0 %v2358, 64
    %v2363 = vpop.permute.xlu0 %2362
    %2364 = vrot.lane.b32.xlu0 %v2359, 64
    %v2365 = vpop.permute.xlu0 %2364
    %v2368 = vmul.f32 %v2310, %v2363
    %v2369 = vmul.f32 %v2325, %v2365
    %2372 = vrot.lane.b32.xlu0 %v2368, 32
    %v2373 = vpop.permute.xlu0 %2372
    %2374 = vrot.lane.b32.xlu0 %v2369, 32
    %v2375 = vpop.permute.xlu0 %2374
    %2378 = vst.msk [vmem:[#allocation5] sm:$0x1] %vm347, %v2373
    %2379 = vst.msk [vmem:[#allocation5 + $0x8] sm:$0x1] %vm347, %v2375
    %v2380 = vld [vmem:[#allocation4 + $0x1] sm:$0x1]
    %v2381 = vld [vmem:[#allocation4 + $0x9] sm:$0x1]
    %v2382 = vrot.slane %v2369, 7
    %v2383 = vsel %vm353, %v2382, %v2368
    %2384 = vrot.lane.b32.xlu0 %v2383, 32
    %v2385 = vpop.permute.xlu0 %2384
    %v2386 = vsel %vm188, %v2385, 0
    %2388 = vmatpush.msra.mxu0 0.0
    %2389 = vmatpush.msra.mxu0 0.0
    %2390 = vmatpush.msra.mxu0 0.0
    %2391 = vmatpush.msra.mxu0 0.0
    %2392 = vmatpush.msra.mxu0 0.0
    %2393 = vmatpush.msra.mxu0 0.0
    %2394 = vmatpush.msra.mxu0 0.0
    %2395 = vmatpush.msra.mxu0 0.0
    %2396 = vmatpush.msra.mxu0 0.0
    %2397 = vmatpush.msra.mxu0 0.0
    %2398 = vmatpush.msra.mxu0 0.0
    %2399 = vmatpush.msra.mxu0 0.0
    %2400 = vmatpush.msra.mxu0 %v2252
    %2401 = vmatpush.msra.mxu0 %v2251
    %2402 = vmatpush.msra.mxu0 %v2250
    %2403 = vmatpush.msra.mxu0 %v2249
    %2404 = vmatmul.f32.gmra.mxu0 %v2386
    %v2405 = vpop.f32.mrf.mxu0
    %v2406 = vadd.f32 0.0, %v2405
    %2407 = vdwg.mxu0
    %v2409 = vrot.slane %v2406, 1
    %v2412 = vadd.f32 %v2380, %v2406
    %v2413 = vadd.f32 %v2381, %v2409
    %v2414 = vxor.u32 %v2412, 2147483648
    %v2415 = vxor.u32 %v2413, 2147483648
    %v2416 = vmul.f32 %v2414, 1.442695
    %v2417 = vpow.pop %v2416
    %v2418 = vmul.f32 %v2415, 1.442695
    %v2419 = vpow.pop %v2418
    %v2420 = vadd.f32 %v2417, 1.0
    %v2421 = vadd.f32 %v2419, 1.0
    %v2422 = vrcp.pop %v2420
    %v2423 = vmul.f32 %v2420, %v2422
    %v2424 = vsub.f32 1.0, %v2423
    %v2425 = vmul.f32 %v2422, %v2424
    %v2426 = vadd.f32 %v2422, %v2425
    %vm2427 = vweird.f32 %v2420
    %vm2428 = vweird.f32 %v2422
    %vm2429 = vmor %vm2427, %vm2428
    %v2430 = vsel %vm2429, %v2422, %v2426
    %v2431 = vand.u32 2147483647, %v2420
    %vm2432 = vcmp.eq.f32.partialorder %v2431, 8.507059e+37
    %v2433 = vand.u32 %v2420, 2147483648
    %v2434 = vor.u32 1.1754944e-38, %v2433
    %v2435 = vsel %vm2432, %v2434, %v2430
    %v2436 = vmul.f32 1.0, %v2435
    %v2437 = vrcp.pop %v2421
    %v2438 = vmul.f32 %v2421, %v2437
    %v2439 = vsub.f32 1.0, %v2438
    %v2440 = vmul.f32 %v2437, %v2439
    %v2441 = vadd.f32 %v2437, %v2440
    %vm2442 = vweird.f32 %v2421
    %vm2443 = vweird.f32 %v2437
    %vm2444 = vmor %vm2442, %vm2443
    %v2445 = vsel %vm2444, %v2437, %v2441
    %v2446 = vand.u32 2147483647, %v2421
    %vm2447 = vcmp.eq.f32.partialorder %v2446, 8.507059e+37
    %v2448 = vand.u32 %v2421, 2147483648
    %v2449 = vor.u32 1.1754944e-38, %v2448
    %v2450 = vsel %vm2447, %v2449, %v2445
    %v2451 = vmul.f32 1.0, %v2450
    %v2452 = vtanh.pop %v2412
    %v2453 = vtanh.pop %v2413
    %v2454 = vmul.f32 %v2436, %v2356
    %v2455 = vmul.f32 %v2451, %v2357
    %2458 = vrot.lane.b32.xlu0 %v2452, 64
    %v2459 = vpop.permute.xlu0 %2458
    %2460 = vrot.lane.b32.xlu0 %v2453, 64
    %v2461 = vpop.permute.xlu0 %2460
    %v2464 = vmul.f32 %v2436, %v2459
    %v2465 = vmul.f32 %v2451, %v2461
    %2468 = vrot.lane.b32.xlu0 %v2464, 32
    %v2469 = vpop.permute.xlu0 %2468
    %2470 = vrot.lane.b32.xlu0 %v2465, 32
    %v2471 = vpop.permute.xlu0 %2470
    %v2474 = vadd.f32 %v2454, %v2469
    %v2475 = vadd.f32 %v2455, %v2471
    %v2476 = vtanh.pop %v2474
    %v2477 = vtanh.pop %v2475
    %2480 = vrot.lane.b32.xlu0 %v2476, 64
    %v2481 = vpop.permute.xlu0 %2480
    %2482 = vrot.lane.b32.xlu0 %v2477, 64
    %v2483 = vpop.permute.xlu0 %2482
    %v2486 = vmul.f32 %v2436, %v2481
    %v2487 = vmul.f32 %v2451, %v2483
    %2490 = vrot.lane.b32.xlu0 %v2486, 32
    %v2491 = vpop.permute.xlu0 %2490
    %2492 = vrot.lane.b32.xlu0 %v2487, 32
    %v2493 = vpop.permute.xlu0 %2492
    %2496 = vst.msk [vmem:[#allocation5 + $0x1] sm:$0x1] %vm347, %v2491
    %2497 = vst.msk [vmem:[#allocation5 + $0x9] sm:$0x1] %vm347, %v2493
    %v2498 = vld [vmem:[#allocation4 + $0x2] sm:$0x1]
    %v2499 = vld [vmem:[#allocation4 + $0xa] sm:$0x1]
    %v2500 = vrot.slane %v2487, 7
    %v2501 = vsel %vm353, %v2500, %v2486
    %2502 = vrot.lane.b32.xlu0 %v2501, 32
    %v2503 = vpop.permute.xlu0 %2502
    %v2504 = vsel %vm188, %v2503, 0
    %2506 = vmatpush.msra.mxu0 0.0
    %2507 = vmatpush.msra.mxu0 0.0
    %2508 = vmatpush.msra.mxu0 0.0
    %2509 = vmatpush.msra.mxu0 0.0
    %2510 = vmatpush.msra.mxu0 0.0
    %2511 = vmatpush.msra.mxu0 0.0
    %2512 = vmatpush.msra.mxu0 0.0
    %2513 = vmatpush.msra.mxu0 0.0
    %2514 = vmatpush.msra.mxu0 0.0
    %2515 = vmatpush.msra.mxu0 0.0
    %2516 = vmatpush.msra.mxu0 0.0
    %2517 = vmatpush.msra.mxu0 0.0
    %2518 = vmatpush.msra.mxu0 %v2252
    %2519 = vmatpush.msra.mxu0 %v2251
    %2520 = vmatpush.msra.mxu0 %v2250
    %2521 = vmatpush.msra.mxu0 %v2249
    %2522 = vmatmul.f32.gmra.mxu0 %v2504
    %v2523 = vpop.f32.mrf.mxu0
    %v2524 = vadd.f32 0.0, %v2523
    %2525 = vdwg.mxu0
    %v2527 = vrot.slane %v2524, 1
    %v2530 = vadd.f32 %v2498, %v2524
    %v2531 = vadd.f32 %v2499, %v2527
    %v2532 = vxor.u32 %v2530, 2147483648
    %v2533 = vxor.u32 %v2531, 2147483648
    %v2534 = vmul.f32 %v2532, 1.442695
    %v2535 = vpow.pop %v2534
    %v2536 = vmul.f32 %v2533, 1.442695
    %v2537 = vpow.pop %v2536
    %v2538 = vadd.f32 %v2535, 1.0
    %v2539 = vadd.f32 %v2537, 1.0
    %v2540 = vrcp.pop %v2538
    %v2541 = vmul.f32 %v2538, %v2540
    %v2542 = vsub.f32 1.0, %v2541
    %v2543 = vmul.f32 %v2540, %v2542
    %v2544 = vadd.f32 %v2540, %v2543
    %vm2545 = vweird.f32 %v2538
    %vm2546 = vweird.f32 %v2540
    %vm2547 = vmor %vm2545, %vm2546
    %v2548 = vsel %vm2547, %v2540, %v2544
    %v2549 = vand.u32 2147483647, %v2538
    %vm2550 = vcmp.eq.f32.partialorder %v2549, 8.507059e+37
    %v2551 = vand.u32 %v2538, 2147483648
    %v2552 = vor.u32 1.1754944e-38, %v2551
    %v2553 = vsel %vm2550, %v2552, %v2548
    %v2554 = vmul.f32 1.0, %v2553
    %v2555 = vrcp.pop %v2539
    %v2556 = vmul.f32 %v2539, %v2555
    %v2557 = vsub.f32 1.0, %v2556
    %v2558 = vmul.f32 %v2555, %v2557
    %v2559 = vadd.f32 %v2555, %v2558
    %vm2560 = vweird.f32 %v2539
    %vm2561 = vweird.f32 %v2555
    %vm2562 = vmor %vm2560, %vm2561
    %v2563 = vsel %vm2562, %v2555, %v2559
    %v2564 = vand.u32 2147483647, %v2539
    %vm2565 = vcmp.eq.f32.partialorder %v2564, 8.507059e+37
    %v2566 = vand.u32 %v2539, 2147483648
    %v2567 = vor.u32 1.1754944e-38, %v2566
    %v2568 = vsel %vm2565, %v2567, %v2563
    %v2569 = vmul.f32 1.0, %v2568
    %v2570 = vtanh.pop %v2530
    %v2571 = vtanh.pop %v2531
    %v2572 = vmul.f32 %v2554, %v2474
    %v2573 = vmul.f32 %v2569, %v2475
    %2576 = vrot.lane.b32.xlu0 %v2570, 64
    %v2577 = vpop.permute.xlu0 %2576
    %2578 = vrot.lane.b32.xlu0 %v2571, 64
    %v2579 = vpop.permute.xlu0 %2578
    %v2582 = vmul.f32 %v2554, %v2577
    %v2583 = vmul.f32 %v2569, %v2579
    %2586 = vrot.lane.b32.xlu0 %v2582, 32
    %v2587 = vpop.permute.xlu0 %2586
    %2588 = vrot.lane.b32.xlu0 %v2583, 32
    %v2589 = vpop.permute.xlu0 %2588
    %v2592 = vadd.f32 %v2572, %v2587
    %v2593 = vadd.f32 %v2573, %v2589
    %v2594 = vtanh.pop %v2592
    %v2595 = vtanh.pop %v2593
    %2598 = vrot.lane.b32.xlu0 %v2594, 64
    %v2599 = vpop.permute.xlu0 %2598
    %2600 = vrot.lane.b32.xlu0 %v2595, 64
    %v2601 = vpop.permute.xlu0 %2600
    %v2604 = vmul.f32 %v2554, %v2599
    %v2605 = vmul.f32 %v2569, %v2601
    %2608 = vrot.lane.b32.xlu0 %v2604, 32
    %v2609 = vpop.permute.xlu0 %2608
    %2610 = vrot.lane.b32.xlu0 %v2605, 32
    %v2611 = vpop.permute.xlu0 %2610
    %2614 = vst.msk [vmem:[#allocation5 + $0x2] sm:$0x1] %vm347, %v2609
    %2615 = vst.msk [vmem:[#allocation5 + $0xa] sm:$0x1] %vm347, %v2611
    %v2616 = vld [vmem:[#allocation4 + $0x3] sm:$0x1]
    %v2617 = vld [vmem:[#allocation4 + $0xb] sm:$0x1]
    %v2618 = vrot.slane %v2605, 7
    %v2619 = vsel %vm353, %v2618, %v2604
    %2620 = vrot.lane.b32.xlu0 %v2619, 32
    %v2621 = vpop.permute.xlu0 %2620
    %v2622 = vsel %vm188, %v2621, 0
    %2624 = vmatpush.msra.mxu0 0.0
    %2625 = vmatpush.msra.mxu0 0.0
    %2626 = vmatpush.msra.mxu0 0.0
    %2627 = vmatpush.msra.mxu0 0.0
    %2628 = vmatpush.msra.mxu0 0.0
    %2629 = vmatpush.msra.mxu0 0.0
    %2630 = vmatpush.msra.mxu0 0.0
    %2631 = vmatpush.msra.mxu0 0.0
    %2632 = vmatpush.msra.mxu0 0.0
    %2633 = vmatpush.msra.mxu0 0.0
    %2634 = vmatpush.msra.mxu0 0.0
    %2635 = vmatpush.msra.mxu0 0.0
    %2636 = vmatpush.msra.mxu0 %v2252
    %2637 = vmatpush.msra.mxu0 %v2251
    %2638 = vmatpush.msra.mxu0 %v2250
    %2639 = vmatpush.msra.mxu0 %v2249
    %2640 = vmatmul.f32.gmra.mxu0 %v2622
    %v2641 = vpop.f32.mrf.mxu0
    %v2642 = vadd.f32 0.0, %v2641
    %2643 = vdwg.mxu0
    %v2645 = vrot.slane %v2642, 1
    %v2648 = vadd.f32 %v2616, %v2642
    %v2649 = vadd.f32 %v2617, %v2645
    %v2650 = vxor.u32 %v2648, 2147483648
    %v2651 = vxor.u32 %v2649, 2147483648
    %v2652 = vmul.f32 %v2650, 1.442695
    %v2653 = vpow.pop %v2652
    %v2654 = vmul.f32 %v2651, 1.442695
    %v2655 = vpow.pop %v2654
    %v2656 = vadd.f32 %v2653, 1.0
    %v2657 = vadd.f32 %v2655, 1.0
    %v2658 = vrcp.pop %v2656
    %v2659 = vmul.f32 %v2656, %v2658
    %v2660 = vsub.f32 1.0, %v2659
    %v2661 = vmul.f32 %v2658, %v2660
    %v2662 = vadd.f32 %v2658, %v2661
    %vm2663 = vweird.f32 %v2656
    %vm2664 = vweird.f32 %v2658
    %vm2665 = vmor %vm2663, %vm2664
    %v2666 = vsel %vm2665, %v2658, %v2662
    %v2667 = vand.u32 2147483647, %v2656
    %vm2668 = vcmp.eq.f32.partialorder %v2667, 8.507059e+37
    %v2669 = vand.u32 %v2656, 2147483648
    %v2670 = vor.u32 1.1754944e-38, %v2669
    %v2671 = vsel %vm2668, %v2670, %v2666
    %v2672 = vmul.f32 1.0, %v2671
    %v2673 = vrcp.pop %v2657
    %v2674 = vmul.f32 %v2657, %v2673
    %v2675 = vsub.f32 1.0, %v2674
    %v2676 = vmul.f32 %v2673, %v2675
    %v2677 = vadd.f32 %v2673, %v2676
    %vm2678 = vweird.f32 %v2657
    %vm2679 = vweird.f32 %v2673
    %vm2680 = vmor %vm2678, %vm2679
    %v2681 = vsel %vm2680, %v2673, %v2677
    %v2682 = vand.u32 2147483647, %v2657
    %vm2683 = vcmp.eq.f32.partialorder %v2682, 8.507059e+37
    %v2684 = vand.u32 %v2657, 2147483648
    %v2685 = vor.u32 1.1754944e-38, %v2684
    %v2686 = vsel %vm2683, %v2685, %v2681
    %v2687 = vmul.f32 1.0, %v2686
    %v2688 = vtanh.pop %v2648
    %v2689 = vtanh.pop %v2649
    %v2690 = vmul.f32 %v2672, %v2592
    %v2691 = vmul.f32 %v2687, %v2593
    %2694 = vrot.lane.b32.xlu0 %v2688, 64
    %v2695 = vpop.permute.xlu0 %2694
    %2696 = vrot.lane.b32.xlu0 %v2689, 64
    %v2697 = vpop.permute.xlu0 %2696
    %v2700 = vmul.f32 %v2672, %v2695
    %v2701 = vmul.f32 %v2687, %v2697
    %2704 = vrot.lane.b32.xlu0 %v2700, 32
    %v2705 = vpop.permute.xlu0 %2704
    %2706 = vrot.lane.b32.xlu0 %v2701, 32
    %v2707 = vpop.permute.xlu0 %2706
    %v2710 = vadd.f32 %v2690, %v2705
    %v2711 = vadd.f32 %v2691, %v2707
    %v2712 = vtanh.pop %v2710
    %v2713 = vtanh.pop %v2711
    %2716 = vrot.lane.b32.xlu0 %v2712, 64
    %v2717 = vpop.permute.xlu0 %2716
    %2718 = vrot.lane.b32.xlu0 %v2713, 64
    %v2719 = vpop.permute.xlu0 %2718
    %v2722 = vmul.f32 %v2672, %v2717
    %v2723 = vmul.f32 %v2687, %v2719
    %2726 = vrot.lane.b32.xlu0 %v2722, 32
    %v2727 = vpop.permute.xlu0 %2726
    %2728 = vrot.lane.b32.xlu0 %v2723, 32
    %v2729 = vpop.permute.xlu0 %2728
    %2732 = vst.msk [vmem:[#allocation5 + $0x3] sm:$0x1] %vm347, %v2727
    %2733 = vst.msk [vmem:[#allocation5 + $0xb] sm:$0x1] %vm347, %v2729
    %v2734 = vld [vmem:[#allocation4 + $0x4] sm:$0x1]
    %v2735 = vld [vmem:[#allocation4 + $0xc] sm:$0x1]
    %v2736 = vrot.slane %v2723, 7
    %v2737 = vsel %vm353, %v2736, %v2722
    %2738 = vrot.lane.b32.xlu0 %v2737, 32
    %v2739 = vpop.permute.xlu0 %2738
    %v2740 = vsel %vm188, %v2739, 0
    %2742 = vmatpush.msra.mxu0 0.0
    %2743 = vmatpush.msra.mxu0 0.0
    %2744 = vmatpush.msra.mxu0 0.0
    %2745 = vmatpush.msra.mxu0 0.0
    %2746 = vmatpush.msra.mxu0 0.0
    %2747 = vmatpush.msra.mxu0 0.0
    %2748 = vmatpush.msra.mxu0 0.0
    %2749 = vmatpush.msra.mxu0 0.0
    %2750 = vmatpush.msra.mxu0 0.0
    %2751 = vmatpush.msra.mxu0 0.0
    %2752 = vmatpush.msra.mxu0 0.0
    %2753 = vmatpush.msra.mxu0 0.0
    %2754 = vmatpush.msra.mxu0 %v2252
    %2755 = vmatpush.msra.mxu0 %v2251
    %2756 = vmatpush.msra.mxu0 %v2250
    %2757 = vmatpush.msra.mxu0 %v2249
    %2758 = vmatmul.f32.gmra.mxu0 %v2740
    %v2759 = vpop.f32.mrf.mxu0
    %v2760 = vadd.f32 0.0, %v2759
    %2761 = vdwg.mxu0
    %v2763 = vrot.slane %v2760, 1
    %v2766 = vadd.f32 %v2734, %v2760
    %v2767 = vadd.f32 %v2735, %v2763
    %v2768 = vxor.u32 %v2766, 2147483648
    %v2769 = vxor.u32 %v2767, 2147483648
    %v2770 = vmul.f32 %v2768, 1.442695
    %v2771 = vpow.pop %v2770
    %v2772 = vmul.f32 %v2769, 1.442695
    %v2773 = vpow.pop %v2772
    %v2774 = vadd.f32 %v2771, 1.0
    %v2775 = vadd.f32 %v2773, 1.0
    %v2776 = vrcp.pop %v2774
    %v2777 = vmul.f32 %v2774, %v2776
    %v2778 = vsub.f32 1.0, %v2777
    %v2779 = vmul.f32 %v2776, %v2778
    %v2780 = vadd.f32 %v2776, %v2779
    %vm2781 = vweird.f32 %v2774
    %vm2782 = vweird.f32 %v2776
    %vm2783 = vmor %vm2781, %vm2782
    %v2784 = vsel %vm2783, %v2776, %v2780
    %v2785 = vand.u32 2147483647, %v2774
    %vm2786 = vcmp.eq.f32.partialorder %v2785, 8.507059e+37
    %v2787 = vand.u32 %v2774, 2147483648
    %v2788 = vor.u32 1.1754944e-38, %v2787
    %v2789 = vsel %vm2786, %v2788, %v2784
    %v2790 = vmul.f32 1.0, %v2789
    %v2791 = vrcp.pop %v2775
    %v2792 = vmul.f32 %v2775, %v2791
    %v2793 = vsub.f32 1.0, %v2792
    %v2794 = vmul.f32 %v2791, %v2793
    %v2795 = vadd.f32 %v2791, %v2794
    %vm2796 = vweird.f32 %v2775
    %vm2797 = vweird.f32 %v2791
    %vm2798 = vmor %vm2796, %vm2797
    %v2799 = vsel %vm2798, %v2791, %v2795
    %v2800 = vand.u32 2147483647, %v2775
    %vm2801 = vcmp.eq.f32.partialorder %v2800, 8.507059e+37
    %v2802 = vand.u32 %v2775, 2147483648
    %v2803 = vor.u32 1.1754944e-38, %v2802
    %v2804 = vsel %vm2801, %v2803, %v2799
    %v2805 = vmul.f32 1.0, %v2804
    %v2806 = vtanh.pop %v2766
    %v2807 = vtanh.pop %v2767
    %v2808 = vmul.f32 %v2790, %v2710
    %v2809 = vmul.f32 %v2805, %v2711
    %2812 = vrot.lane.b32.xlu0 %v2806, 64
    %v2813 = vpop.permute.xlu0 %2812
    %2814 = vrot.lane.b32.xlu0 %v2807, 64
    %v2815 = vpop.permute.xlu0 %2814
    %v2818 = vmul.f32 %v2790, %v2813
    %v2819 = vmul.f32 %v2805, %v2815
    %2822 = vrot.lane.b32.xlu0 %v2818, 32
    %v2823 = vpop.permute.xlu0 %2822
    %2824 = vrot.lane.b32.xlu0 %v2819, 32
    %v2825 = vpop.permute.xlu0 %2824
    %v2828 = vadd.f32 %v2808, %v2823
    %v2829 = vadd.f32 %v2809, %v2825
    %v2830 = vtanh.pop %v2828
    %v2831 = vtanh.pop %v2829
    %2834 = vrot.lane.b32.xlu0 %v2830, 64
    %v2835 = vpop.permute.xlu0 %2834
    %2836 = vrot.lane.b32.xlu0 %v2831, 64
    %v2837 = vpop.permute.xlu0 %2836
    %v2840 = vmul.f32 %v2790, %v2835
    %v2841 = vmul.f32 %v2805, %v2837
    %2844 = vrot.lane.b32.xlu0 %v2840, 32
    %v2845 = vpop.permute.xlu0 %2844
    %2846 = vrot.lane.b32.xlu0 %v2841, 32
    %v2847 = vpop.permute.xlu0 %2846
    %2850 = vst.msk [vmem:[#allocation5 + $0x4] sm:$0x1] %vm347, %v2845
    %2851 = vst.msk [vmem:[#allocation5 + $0xc] sm:$0x1] %vm347, %v2847
    %v2852 = vld [vmem:[#allocation4 + $0x5] sm:$0x1]
    %v2853 = vld [vmem:[#allocation4 + $0xd] sm:$0x1]
    %v2854 = vrot.slane %v2841, 7
    %v2855 = vsel %vm353, %v2854, %v2840
    %2856 = vrot.lane.b32.xlu0 %v2855, 32
    %v2857 = vpop.permute.xlu0 %2856
    %v2858 = vsel %vm188, %v2857, 0
    %2860 = vmatpush.msra.mxu0 0.0
    %2861 = vmatpush.msra.mxu0 0.0
    %2862 = vmatpush.msra.mxu0 0.0
    %2863 = vmatpush.msra.mxu0 0.0
    %2864 = vmatpush.msra.mxu0 0.0
    %2865 = vmatpush.msra.mxu0 0.0
    %2866 = vmatpush.msra.mxu0 0.0
    %2867 = vmatpush.msra.mxu0 0.0
    %2868 = vmatpush.msra.mxu0 0.0
    %2869 = vmatpush.msra.mxu0 0.0
    %2870 = vmatpush.msra.mxu0 0.0
    %2871 = vmatpush.msra.mxu0 0.0
    %2872 = vmatpush.msra.mxu0 %v2252
    %2873 = vmatpush.msra.mxu0 %v2251
    %2874 = vmatpush.msra.mxu0 %v2250
    %2875 = vmatpush.msra.mxu0 %v2249
    %2876 = vmatmul.f32.gmra.mxu0 %v2858
    %v2877 = vpop.f32.mrf.mxu0
    %v2878 = vadd.f32 0.0, %v2877
    %2879 = vdwg.mxu0
    %v2881 = vrot.slane %v2878, 1
    %v2884 = vadd.f32 %v2852, %v2878
    %v2885 = vadd.f32 %v2853, %v2881
    %v2886 = vxor.u32 %v2884, 2147483648
    %v2887 = vxor.u32 %v2885, 2147483648
    %v2888 = vmul.f32 %v2886, 1.442695
    %v2889 = vpow.pop %v2888
    %v2890 = vmul.f32 %v2887, 1.442695
    %v2891 = vpow.pop %v2890
    %v2892 = vadd.f32 %v2889, 1.0
    %v2893 = vadd.f32 %v2891, 1.0
    %v2894 = vrcp.pop %v2892
    %v2895 = vmul.f32 %v2892, %v2894
    %v2896 = vsub.f32 1.0, %v2895
    %v2897 = vmul.f32 %v2894, %v2896
    %v2898 = vadd.f32 %v2894, %v2897
    %vm2899 = vweird.f32 %v2892
    %vm2900 = vweird.f32 %v2894
    %vm2901 = vmor %vm2899, %vm2900
    %v2902 = vsel %vm2901, %v2894, %v2898
    %v2903 = vand.u32 2147483647, %v2892
    %vm2904 = vcmp.eq.f32.partialorder %v2903, 8.507059e+37
    %v2905 = vand.u32 %v2892, 2147483648
    %v2906 = vor.u32 1.1754944e-38, %v2905
    %v2907 = vsel %vm2904, %v2906, %v2902
    %v2908 = vmul.f32 1.0, %v2907
    %v2909 = vrcp.pop %v2893
    %v2910 = vmul.f32 %v2893, %v2909
    %v2911 = vsub.f32 1.0, %v2910
    %v2912 = vmul.f32 %v2909, %v2911
    %v2913 = vadd.f32 %v2909, %v2912
    %vm2914 = vweird.f32 %v2893
    %vm2915 = vweird.f32 %v2909
    %vm2916 = vmor %vm2914, %vm2915
    %v2917 = vsel %vm2916, %v2909, %v2913
    %v2918 = vand.u32 2147483647, %v2893
    %vm2919 = vcmp.eq.f32.partialorder %v2918, 8.507059e+37
    %v2920 = vand.u32 %v2893, 2147483648
    %v2921 = vor.u32 1.1754944e-38, %v2920
    %v2922 = vsel %vm2919, %v2921, %v2917
    %v2923 = vmul.f32 1.0, %v2922
    %v2924 = vtanh.pop %v2884
    %v2925 = vtanh.pop %v2885
    %v2926 = vmul.f32 %v2908, %v2828
    %v2927 = vmul.f32 %v2923, %v2829
    %2930 = vrot.lane.b32.xlu0 %v2924, 64
    %v2931 = vpop.permute.xlu0 %2930
    %2932 = vrot.lane.b32.xlu0 %v2925, 64
    %v2933 = vpop.permute.xlu0 %2932
    %v2936 = vmul.f32 %v2908, %v2931
    %v2937 = vmul.f32 %v2923, %v2933
    %2940 = vrot.lane.b32.xlu0 %v2936, 32
    %v2941 = vpop.permute.xlu0 %2940
    %2942 = vrot.lane.b32.xlu0 %v2937, 32
    %v2943 = vpop.permute.xlu0 %2942
    %v2946 = vadd.f32 %v2926, %v2941
    %v2947 = vadd.f32 %v2927, %v2943
    %v2948 = vtanh.pop %v2946
    %v2949 = vtanh.pop %v2947
    %2952 = vrot.lane.b32.xlu0 %v2948, 64
    %v2953 = vpop.permute.xlu0 %2952
    %2954 = vrot.lane.b32.xlu0 %v2949, 64
    %v2955 = vpop.permute.xlu0 %2954
    %v2958 = vmul.f32 %v2908, %v2953
    %v2959 = vmul.f32 %v2923, %v2955
    %2962 = vrot.lane.b32.xlu0 %v2958, 32
    %v2963 = vpop.permute.xlu0 %2962
    %2964 = vrot.lane.b32.xlu0 %v2959, 32
    %v2965 = vpop.permute.xlu0 %2964
    %2968 = vst.msk [vmem:[#allocation5 + $0x5] sm:$0x1] %vm347, %v2963
    %2969 = vst.msk [vmem:[#allocation5 + $0xd] sm:$0x1] %vm347, %v2965
    %v2970 = vld [vmem:[#allocation4 + $0x6] sm:$0x1]
    %v2971 = vld [vmem:[#allocation4 + $0xe] sm:$0x1]
    %v2972 = vrot.slane %v2959, 7
    %v2973 = vsel %vm353, %v2972, %v2958
    %2974 = vrot.lane.b32.xlu0 %v2973, 32
    %v2975 = vpop.permute.xlu0 %2974
    %v2976 = vsel %vm188, %v2975, 0
    %2978 = vmatpush.msra.mxu0 0.0
    %2979 = vmatpush.msra.mxu0 0.0
    %2980 = vmatpush.msra.mxu0 0.0
    %2981 = vmatpush.msra.mxu0 0.0
    %2982 = vmatpush.msra.mxu0 0.0
    %2983 = vmatpush.msra.mxu0 0.0
    %2984 = vmatpush.msra.mxu0 0.0
    %2985 = vmatpush.msra.mxu0 0.0
    %2986 = vmatpush.msra.mxu0 0.0
    %2987 = vmatpush.msra.mxu0 0.0
    %2988 = vmatpush.msra.mxu0 0.0
    %2989 = vmatpush.msra.mxu0 0.0
    %2990 = vmatpush.msra.mxu0 %v2252
    %2991 = vmatpush.msra.mxu0 %v2251
    %2992 = vmatpush.msra.mxu0 %v2250
    %2993 = vmatpush.msra.mxu0 %v2249
    %2994 = vmatmul.f32.gmra.mxu0 %v2976
    %v2995 = vpop.f32.mrf.mxu0
    %v2996 = vadd.f32 0.0, %v2995
    %2997 = vdwg.mxu0
    %v2999 = vrot.slane %v2996, 1
    %v3002 = vadd.f32 %v2970, %v2996
    %v3003 = vadd.f32 %v2971, %v2999
    %v3004 = vxor.u32 %v3002, 2147483648
    %v3005 = vxor.u32 %v3003, 2147483648
    %v3006 = vmul.f32 %v3004, 1.442695
    %v3007 = vpow.pop %v3006
    %v3008 = vmul.f32 %v3005, 1.442695
    %v3009 = vpow.pop %v3008
    %v3010 = vadd.f32 %v3007, 1.0
    %v3011 = vadd.f32 %v3009, 1.0
    %v3012 = vrcp.pop %v3010
    %v3013 = vmul.f32 %v3010, %v3012
    %v3014 = vsub.f32 1.0, %v3013
    %v3015 = vmul.f32 %v3012, %v3014
    %v3016 = vadd.f32 %v3012, %v3015
    %vm3017 = vweird.f32 %v3010
    %vm3018 = vweird.f32 %v3012
    %vm3019 = vmor %vm3017, %vm3018
    %v3020 = vsel %vm3019, %v3012, %v3016
    %v3021 = vand.u32 2147483647, %v3010
    %vm3022 = vcmp.eq.f32.partialorder %v3021, 8.507059e+37
    %v3023 = vand.u32 %v3010, 2147483648
    %v3024 = vor.u32 1.1754944e-38, %v3023
    %v3025 = vsel %vm3022, %v3024, %v3020
    %v3026 = vmul.f32 1.0, %v3025
    %v3027 = vrcp.pop %v3011
    %v3028 = vmul.f32 %v3011, %v3027
    %v3029 = vsub.f32 1.0, %v3028
    %v3030 = vmul.f32 %v3027, %v3029
    %v3031 = vadd.f32 %v3027, %v3030
    %vm3032 = vweird.f32 %v3011
    %vm3033 = vweird.f32 %v3027
    %vm3034 = vmor %vm3032, %vm3033
    %v3035 = vsel %vm3034, %v3027, %v3031
    %v3036 = vand.u32 2147483647, %v3011
    %vm3037 = vcmp.eq.f32.partialorder %v3036, 8.507059e+37
    %v3038 = vand.u32 %v3011, 2147483648
    %v3039 = vor.u32 1.1754944e-38, %v3038
    %v3040 = vsel %vm3037, %v3039, %v3035
    %v3041 = vmul.f32 1.0, %v3040
    %v3042 = vtanh.pop %v3002
    %v3043 = vtanh.pop %v3003
    %v3044 = vmul.f32 %v3026, %v2946
    %v3045 = vmul.f32 %v3041, %v2947
    %3048 = vrot.lane.b32.xlu0 %v3042, 64
    %v3049 = vpop.permute.xlu0 %3048
    %3050 = vrot.lane.b32.xlu0 %v3043, 64
    %v3051 = vpop.permute.xlu0 %3050
    %v3054 = vmul.f32 %v3026, %v3049
    %v3055 = vmul.f32 %v3041, %v3051
    %3058 = vrot.lane.b32.xlu0 %v3054, 32
    %v3059 = vpop.permute.xlu0 %3058
    %3060 = vrot.lane.b32.xlu0 %v3055, 32
    %v3061 = vpop.permute.xlu0 %3060
    %v3064 = vadd.f32 %v3044, %v3059
    %v3065 = vadd.f32 %v3045, %v3061
    %v3066 = vtanh.pop %v3064
    %v3067 = vtanh.pop %v3065
    %3070 = vrot.lane.b32.xlu0 %v3066, 64
    %v3071 = vpop.permute.xlu0 %3070
    %3072 = vrot.lane.b32.xlu0 %v3067, 64
    %v3073 = vpop.permute.xlu0 %3072
    %v3076 = vmul.f32 %v3026, %v3071
    %v3077 = vmul.f32 %v3041, %v3073
    %3080 = vrot.lane.b32.xlu0 %v3076, 32
    %v3081 = vpop.permute.xlu0 %3080
    %3082 = vrot.lane.b32.xlu0 %v3077, 32
    %v3083 = vpop.permute.xlu0 %3082
    %3086 = vst.msk [vmem:[#allocation5 + $0x6] sm:$0x1] %vm347, %v3081
    %3087 = vst.msk [vmem:[#allocation5 + $0xe] sm:$0x1] %vm347, %v3083
    %v3088 = vld [vmem:[#allocation4 + $0x7] sm:$0x1]
    %v3089 = vld [vmem:[#allocation4 + $0xf] sm:$0x1]
    %v3090 = vrot.slane %v3077, 7
    %v3091 = vsel %vm353, %v3090, %v3076
    %3092 = vrot.lane.b32.xlu0 %v3091, 32
    %v3093 = vpop.permute.xlu0 %3092
    %v3094 = vsel %vm188, %v3093, 0
    %3096 = vmatpush.msra.mxu0 0.0
    %3097 = vmatpush.msra.mxu0 0.0
    %3098 = vmatpush.msra.mxu0 0.0
    %3099 = vmatpush.msra.mxu0 0.0
    %3100 = vmatpush.msra.mxu0 0.0
    %3101 = vmatpush.msra.mxu0 0.0
    %3102 = vmatpush.msra.mxu0 0.0
    %3103 = vmatpush.msra.mxu0 0.0
    %3104 = vmatpush.msra.mxu0 0.0
    %3105 = vmatpush.msra.mxu0 0.0
    %3106 = vmatpush.msra.mxu0 0.0
    %3107 = vmatpush.msra.mxu0 0.0
    %3108 = vmatpush.msra.mxu0 %v2252
    %3109 = vmatpush.msra.mxu0 %v2251
    %3110 = vmatpush.msra.mxu0 %v2250
    %3111 = vmatpush.msra.mxu0 %v2249
    %3112 = vmatmul.f32.gmra.mxu0 %v3094
    %v3113 = vpop.f32.mrf.mxu0
    %v3114 = vadd.f32 0.0, %v3113
    %3115 = vdwg.mxu0
    %v3117 = vrot.slane %v3114, 1
    %v3120 = vadd.f32 %v3088, %v3114
    %v3121 = vadd.f32 %v3089, %v3117
    %v3122 = vxor.u32 %v3120, 2147483648
    %v3123 = vxor.u32 %v3121, 2147483648
    %v3124 = vmul.f32 %v3122, 1.442695
    %v3125 = vpow.pop %v3124
    %v3126 = vmul.f32 %v3123, 1.442695
    %v3127 = vpow.pop %v3126
    %v3128 = vadd.f32 %v3125, 1.0
    %v3129 = vadd.f32 %v3127, 1.0
    %v3130 = vrcp.pop %v3128
    %v3131 = vmul.f32 %v3128, %v3130
    %v3132 = vsub.f32 1.0, %v3131
    %v3133 = vmul.f32 %v3130, %v3132
    %v3134 = vadd.f32 %v3130, %v3133
    %vm3135 = vweird.f32 %v3128
    %vm3136 = vweird.f32 %v3130
    %vm3137 = vmor %vm3135, %vm3136
    %v3138 = vsel %vm3137, %v3130, %v3134
    %v3139 = vand.u32 2147483647, %v3128
    %vm3140 = vcmp.eq.f32.partialorder %v3139, 8.507059e+37
    %v3141 = vand.u32 %v3128, 2147483648
    %v3142 = vor.u32 1.1754944e-38, %v3141
    %v3143 = vsel %vm3140, %v3142, %v3138
    %v3144 = vmul.f32 1.0, %v3143
    %v3145 = vrcp.pop %v3129
    %v3146 = vmul.f32 %v3129, %v3145
    %v3147 = vsub.f32 1.0, %v3146
    %v3148 = vmul.f32 %v3145, %v3147
    %v3149 = vadd.f32 %v3145, %v3148
    %vm3150 = vweird.f32 %v3129
    %vm3151 = vweird.f32 %v3145
    %vm3152 = vmor %vm3150, %vm3151
    %v3153 = vsel %vm3152, %v3145, %v3149
    %v3154 = vand.u32 2147483647, %v3129
    %vm3155 = vcmp.eq.f32.partialorder %v3154, 8.507059e+37
    %v3156 = vand.u32 %v3129, 2147483648
    %v3157 = vor.u32 1.1754944e-38, %v3156
    %v3158 = vsel %vm3155, %v3157, %v3153
    %v3159 = vmul.f32 1.0, %v3158
    %v3160 = vtanh.pop %v3120
    %v3161 = vtanh.pop %v3121
    %v3162 = vmul.f32 %v3144, %v3064
    %v3163 = vmul.f32 %v3159, %v3065
    %3166 = vrot.lane.b32.xlu0 %v3160, 64
    %v3167 = vpop.permute.xlu0 %3166
    %3168 = vrot.lane.b32.xlu0 %v3161, 64
    %v3169 = vpop.permute.xlu0 %3168
    %v3172 = vmul.f32 %v3144, %v3167
    %v3173 = vmul.f32 %v3159, %v3169
    %3176 = vrot.lane.b32.xlu0 %v3172, 32
    %v3177 = vpop.permute.xlu0 %3176
    %3178 = vrot.lane.b32.xlu0 %v3173, 32
    %v3179 = vpop.permute.xlu0 %3178
    %v3182 = vadd.f32 %v3162, %v3177
    %v3183 = vadd.f32 %v3163, %v3179
    %v3184 = vtanh.pop %v3182
    %v3185 = vtanh.pop %v3183
    %3188 = vrot.lane.b32.xlu0 %v3184, 64
    %v3189 = vpop.permute.xlu0 %3188
    %3190 = vrot.lane.b32.xlu0 %v3185, 64
    %v3191 = vpop.permute.xlu0 %3190
    %v3194 = vmul.f32 %v3144, %v3189
    %v3195 = vmul.f32 %v3159, %v3191
    %3198 = vrot.lane.b32.xlu0 %v3194, 32
    %v3199 = vpop.permute.xlu0 %3198
    %3200 = vrot.lane.b32.xlu0 %v3195, 32
    %v3201 = vpop.permute.xlu0 %3200
    %3204 = vst.msk [vmem:[#allocation5 + $0x7] sm:$0x1] %vm347, %v3199
    %3205 = vst.msk [vmem:[#allocation5 + $0xf] sm:$0x1] %vm347, %v3201
    %v3206 = vrot.slane %v3195, 7
    %v3207 = vsel %vm353, %v3206, %v3194
    %3208 = vrot.lane.b32.xlu0 %v3207, 32
    %v3209 = vpop.permute.xlu0 %3208
    %3211 = vst.msk [vmem:[%s2253] sm:$0x3] %vm1182, %v3209
    %v3214 = vrot.slane %v3183, 7
    %v3215 = vsel %vm353, %v3214, %v3182
    %3216 = vrot.lane.b32.xlu0 %v3215, 96
    %v3217 = vpop.permute.xlu0 %3216
    %3219 = vst.msk [vmem:[%s2255] sm:$0x3] %vm1182, %v3217
    %v3220 = vld [vmem:[#allocation5] sm:$0xff]
    %v3221 = vld [vmem:[#allocation5 + $0x8] sm:$0xff]
    %v3222 = vsel %vm188, %v3220, 0.0
    %3223 = vadd.xlane.f32.xlu0 %v3222
    %v3224 = vpop.xlane.xlu0 %3223
    %v3225 = vsel %vm188, %v3221, 0.0
    %3226 = vadd.xlane.f32.xlu0 %v3225
    %v3227 = vpop.xlane.xlu0 %3226
    %v3228 = vrcp.pop 32.0
    %v3229 = vmul.f32 32.0, %v3228
    %v3230 = vsub.f32 1.0, %v3229
    %v3231 = vmul.f32 %v3228, %v3230
    %v3232 = vadd.f32 %v3228, %v3231
    %vm3233 = vweird.f32 %v3228
    %v3234 = vsel %vm3233, %v3228, %v3232
    %v3235 = vmul.f32 %v3224, %v3234
    %v3236 = vmul.f32 %v3227, %v3234
    %v3237 = vmul.f32 %v3220, %v3220
    %v3238 = vmul.f32 %v3221, %v3221
    %v3239 = vsel %vm188, %v3237, 0.0
    %3240 = vadd.xlane.f32.xlu0 %v3239
    %v3241 = vpop.xlane.xlu0 %3240
    %v3242 = vsel %vm188, %v3238, 0.0
    %3243 = vadd.xlane.f32.xlu0 %v3242
    %v3244 = vpop.xlane.xlu0 %3243
    %v3245 = vmul.f32 %v3241, %v3234
    %v3246 = vmul.f32 %v3244, %v3234
    %v3247 = vmul.f32 %v3235, %v3235
    %v3248 = vmul.f32 %v3236, %v3236
    %v3249 = vsub.f32 %v3245, %v3247
    %v3250 = vsub.f32 %v3246, %v3248
    %v3251 = vsub.f32 %v3220, %v3235
    %v3252 = vsub.f32 %v3221, %v3236
    %v3253 = vadd.f32 %v3249, 1e-05
    %v3254 = vadd.f32 %v3250, 1e-05
    %v3255 = vrsqrt.pop %v3253
    %v3256 = vmul.f32 %v3255, %v3253
    %v3257 = vmul.f32 %v3256, %v3255
    %v3258 = vmul.f32 0.5, %v3257
    %v3259 = vsub.f32 1.5, %v3258
    %v3260 = vmul.f32 %v3255, %v3259
    %vm3261 = vweird.f32 %v3253
    %vm3262 = vweird.f32 %v3255
    %vm3263 = vmor %vm3261, %vm3262
    %v3264 = vsel %vm3263, %v3255, %v3260
    %v3265 = vrsqrt.pop %v3254
    %v3266 = vmul.f32 %v3265, %v3254
    %v3267 = vmul.f32 %v3266, %v3265
    %v3268 = vmul.f32 0.5, %v3267
    %v3269 = vsub.f32 1.5, %v3268
    %v3270 = vmul.f32 %v3265, %v3269
    %vm3271 = vweird.f32 %v3254
    %vm3272 = vweird.f32 %v3265
    %vm3273 = vmor %vm3271, %vm3272
    %v3274 = vsel %vm3273, %v3265, %v3270
    %v3275 = vmul.f32 %v3251, %v3264
    %v3276 = vmul.f32 %v3252, %v3274
    %v3278 = vperm.slane %v176, 0
    %v3280 = vmul.f32 %v3275, %v3278
    %v3281 = vmul.f32 %v3276, %v3278
    %v3283 = vperm.slane %v177, 0
    %v3285 = vadd.f32 %v3280, %v3283
    %v3286 = vadd.f32 %v3281, %v3283
    %3287 = vst.msk [vmem:[#allocation18] sm:$0xff] %vm188, %v3285
    %3288 = vst.msk [vmem:[#allocation18 + $0x8] sm:$0xff] %vm188, %v3286
    // Predicated region
    $region74: #{tpu_custom_call.1} parent=1 // pred_check
      %p3289 = pneg %p147
    $region75: #{tpu_custom_call.1} parent=1 // pred_check_branch
      %3291 = sbr.rel (%p3289) target = $region77
    $region76: #{tpu_custom_call.1} parent=1 // pred_region
      %v3292 = vld [vmem:[#allocation2] sm:$0x3]
      %v3293 = vld [vmem:[#allocation2 + $0x2] sm:$0x3]
      %v3294 = vld [vmem:[#allocation2 + $0x4] sm:$0x3]
      %3295 = vst.msk [vmem:[#allocation19] sm:$0x3] %vm1182, %v3292
      %3296 = vst.msk [vmem:[#allocation19 + $0x2] sm:$0x3] %vm1182, %v3293
      %3297 = vst.msk [vmem:[#allocation19 + $0x4] sm:$0x3] %vm1182, %v3294
      %v3298 = vld [vmem:[#allocation3] sm:$0x3]
      %v3299 = vld [vmem:[#allocation3 + $0x2] sm:$0x3]
      %v3300 = vld [vmem:[#allocation3 + $0x4] sm:$0x3]
      %3301 = vst.msk [vmem:[#allocation21] sm:$0x3] %vm1182, %v3298
      %3302 = vst.msk [vmem:[#allocation21 + $0x2] sm:$0x3] %vm1182, %v3299
      %3303 = vst.msk [vmem:[#allocation21 + $0x4] sm:$0x3] %vm1182, %v3300
    $region77: #{tpu_custom_call.1} parent=1 // pred_fallthru
      _
    // Predicated region
    $region78: #{tpu_custom_call.1} parent=1 // pred_check
      _
    $region79: #{tpu_custom_call.1} parent=1 // pred_check_branch
      %3305 = sbr.rel (0) target = $region81
    $region80: #{tpu_custom_call.1} parent=1 // pred_region
      %3307 = vsyncadd [#allocation8], 0
      %s3308 = sshll.u32 [#allocation18], 4
      %s3309 = int_to_ptr.vmem [resolvable:$true] %s3308
      %s3310 = sshll.u32 %s10, 4
      %s3311 = int_to_ptr.hbm [resolvable:$true] %s3310
      %3316 = dma.vmem_to_hbm [thread:$0]  %s3309, 256, %s3311, [#allocation8], 128, 128, 8
    $region81: #{tpu_custom_call.1} parent=1 // pred_fallthru
      _
    // Predicated region
    $region82: #{tpu_custom_call.1} parent=1 // pred_check
      _
    $region83: #{tpu_custom_call.1} parent=1 // pred_check_branch
      %3318 = sbr.rel (0) target = $region85
    $region84: #{tpu_custom_call.1} parent=1 // pred_region
      %3320 = vsyncadd [#allocation20], 0
      %s3321 = sshll.u32 [#allocation19], 4
      %s3322 = int_to_ptr.vmem [resolvable:$true] %s3321
      %s3323 = sshll.u32 %s11, 4
      %s3324 = int_to_ptr.hbm [resolvable:$true] %s3323
      %3329 = dma.vmem_to_hbm [thread:$0]  %s3322, 96, %s3324, [#allocation20], 32, 32, 2
    $region85: #{tpu_custom_call.1} parent=1 // pred_fallthru
      _
    // Predicated region
    $region86: #{tpu_custom_call.1} parent=1 // pred_check
      _
    $region87: #{tpu_custom_call.1} parent=1 // pred_check_branch
      %3331 = sbr.rel (0) target = $region89
    $region88: #{tpu_custom_call.1} parent=1 // pred_region
      %3333 = vsyncadd [#allocation20], 0
      %s3334 = sshll.u32 [#allocation21], 4
      %s3335 = int_to_ptr.vmem [resolvable:$true] %s3334
      %s3336 = sshll.u32 %s12, 4
      %s3337 = int_to_ptr.hbm [resolvable:$true] %s3336
      %3342 = dma.vmem_to_hbm [thread:$0]  %s3335, 96, %s3337, [#allocation20], 32, 32, 2
    $region89: #{tpu_custom_call.1} parent=1 // pred_fallthru
      _
    // Predicated region
    $region90: #{tpu_custom_call.1} parent=1 // pred_check
      _
    $region91: #{tpu_custom_call.1} parent=1 // pred_check_branch
      %3344 = sbr.rel (0) target = $region93
    $region92: #{tpu_custom_call.1} parent=1 // pred_region
      %3346 = dma.done [#allocation8], 256
    $region93: #{tpu_custom_call.1} parent=1 // pred_fallthru
      _
    // Predicated region
    $region94: #{tpu_custom_call.1} parent=1 // pred_check
      _
    $region95: #{tpu_custom_call.1} parent=1 // pred_check_branch
      %3348 = sbr.rel (0) target = $region97
    $region96: #{tpu_custom_call.1} parent=1 // pred_region
      %3350 = dma.done [#allocation20], 96
    $region97: #{tpu_custom_call.1} parent=1 // pred_fallthru
      _
    // Predicated region
    $region98: #{tpu_custom_call.1} parent=1 // pred_check
      _
    $region99: #{tpu_custom_call.1} parent=1 // pred_check_branch
      %3352 = sbr.rel (0) target = $region101
    $region100: #{tpu_custom_call.1} parent=1 // pred_region
      %3354 = dma.done [#allocation20], 96
    $region101: #{tpu_custom_call.1} parent=1 // pred_fallthru
      _
    %3355 = vsyncpa [#allocation7], 1
    %3356 = vsyncpa [#allocation10], 1
    %3357 = vsyncpa [#allocation13], 1
    %3358 = vsyncpa [#allocation16], 1
    %3359 = vsyncpa [#allocation8], 1
    %3360 = vsyncpa [#allocation20], 1

// kernel: tpu_custom_call.1
$region0: #{tpu_custom_call.1}
  #allocation0 [shape = 'u32[]', space=smem, size = 0x4, offset = 0x4, fixed_abs, tag = 'smem constant byte address 0x4 - core index']
  #allocation1 [shape = 'u32[72,128]{1,0:T(1,128)}', space=vmem, size = 0x9000, scoped, tag = 'internal scratch']
  #allocation2 [shape = 'f32[3,2,32]{2,1,0:T(2,128)}', space=vmem, size = 0xc00, scoped, tag = 'scratch operand']
  #allocation3 [shape = 'f32[3,2,32]{2,1,0:T(2,128)}', space=vmem, size = 0xc00, scoped, tag = 'scratch operand']
  #allocation4 [shape = 'f32[2,8,128]{2,1,0:T(8,128)}', space=vmem, size = 0x2000, scoped, tag = 'scratch operand']
  #allocation5 [shape = 'f32[2,8,32]{2,1,0:T(8,128)}', space=vmem, size = 0x2000, scoped, tag = 'scratch operand']
  %s0 = inlined_call_operand.hbm [shape: f32[2,8,32], index: 0, kind: input, shape index: {}]
  %s1 = inlined_call_operand.hbm [shape: f32[32,128], index: 1, kind: input, shape index: {}]
  %s2 = inlined_call_operand.hbm [shape: f32[2,32,128], index: 2, kind: input, shape index: {}]
  %s3 = inlined_call_operand.hbm [shape: f32[3,32,128], index: 3, kind: input, shape index: {}]
  %s4 = inlined_call_operand.hbm [shape: f32[1,128], index: 4, kind: input, shape index: {}]
  %s5 = inlined_call_operand.hbm [shape: f32[2,1,128], index: 5, kind: input, shape index: {}]
  %s6 = inlined_call_operand.hbm [shape: f32[3,2,32], index: 6, kind: input, shape index: {}]
  %s7 = inlined_call_operand.vmem [shape: f32[3,2,32], index: 7, kind: input, shape index: {}]
  %s8 = inlined_call_operand.vmem [shape: f32[1,32], index: 8, kind: input, shape index: {}]
  %s9 = inlined_call_operand.vmem [shape: f32[1,32], index: 9, kind: input, shape index: {}]
  %s10 = inlined_call_operand.hbm [shape: f32[2,8,32], index: 10, kind: output, shape index: {0}]
  %s11 = inlined_call_operand.hbm [shape: f32[3,2,32], index: 11, kind: output, shape index: {1}]
  %s12 = inlined_call_operand.hbm [shape: f32[3,2,32], index: 12, kind: output, shape index: {2}]
  %13 = xla_tuple %s10, %s11, %s12
  %s14 = sld [smem:[#allocation0]]
  $region102: #{tpu_custom_call.1} parent=0
    _
  %s16 = ssub.s32 1, %s14
  %s17 = scalar_select 0, %s16, %s14
  $region1: #{tpu_custom_call.1} parent=0
    #allocation6 [shape = 'u8[8192]{0}', space=vmem, size = 0x2000, scoped, tag = 'input window, operand 0, single buffered']
    #allocation7 [shape = 's32[1]{0}', space=sflag, size = 0x4, scoped, tag = 'scoped memory for tpu_custom_call.1']
    #allocation8 [shape = 's32[1]{0}', space=sflag, size = 0x4, scoped, tag = 'scoped memory for tpu_custom_call.1']
    #allocation9 [shape = 'u8[16384]{0}', space=vmem, size = 0x4000, scoped, tag = 'input window, operand 1, single buffered']
    #allocation10 [shape = 's32[1]{0}', space=sflag, size = 0x4, scoped, tag = 'scoped memory for tpu_custom_call.1']
    #allocation11 [shape = 'u8[32768]{0}', space=vmem, size = 0x8000, scoped, tag = 'input window, operand 2, single buffered']
    #allocation12 [shape = 'u8[49152]{0}', space=vmem, size = 0xc000, scoped, tag = 'input window, operand 3, single buffered']
    #allocation13 [shape = 's32[1]{0}', space=sflag, size = 0x4, scoped, tag = 'scoped memory for tpu_custom_call.1']
    #allocation14 [shape = 'u8[512]{0}', space=vmem, size = 0x400, scoped, tag = 'input window, operand 4, single buffered']
    #allocation15 [shape = 'u8[1024]{0}', space=vmem, size = 0x400, scoped, tag = 'input window, operand 5, single buffered']
    #allocation16 [shape = 's32[1]{0}', space=sflag, size = 0x4, scoped, tag = 'scoped memory for tpu_custom_call.1']
    #allocation17 [shape = 'u8[3072]{0}', space=vmem, size = 0xc00, scoped, tag = 'input window, operand 6, single buffered']
    #allocation18 [shape = 'u8[8192]{0}', space=vmem, size = 0x2000, scoped, tag = 'output window, operand 0, single buffered']
    #allocation19 [shape = 'u8[3072]{0}', space=vmem, size = 0xc00, scoped, tag = 'output window, operand 1, single buffered']
    #allocation20 [shape = 's32[1]{0}', space=sflag, size = 0x4, scoped, tag = 'scoped memory for tpu_custom_call.1']
    #allocation21 [shape = 'u8[3072]{0}', space=vmem, size = 0xc00, scoped, tag = 'output window, operand 2, single buffered']
    %18 = vsyncpa [#allocation7], 0
    %19 = vsyncpa [#allocation10], 0
    %20 = vsyncpa [#allocation13], 0
    %21 = vsyncpa [#allocation16], 0
    %22 = vsyncpa [#allocation8], 0
    %23 = vsyncpa [#allocation20], 0
    // Predicated region
    $region2: #{tpu_custom_call.1} parent=1 // pred_check
      _
    $region3: #{tpu_custom_call.1} parent=1 // pred_check_branch
      %25 = sbr.rel (0) target = $region5
    $region4: #{tpu_custom_call.1} parent=1 // pred_region
      %27 = vsyncadd [#allocation7], 0
      %s28 = sshll.u32 %s0, 4
      %s29 = int_to_ptr.hbm [resolvable:$true] %s28
      %s30 = sshll.u32 [#allocation6], 4
      %s31 = int_to_ptr.vmem [resolvable:$true] %s30
      %36 = dma.hbm_to_vmem [thread:$0]  %s29, 256, %s31, [#allocation7], 128, 128, 8
    $region5: #{tpu_custom_call.1} parent=1 // pred_fallthru
      _
    // Predicated region
    $region6: #{tpu_custom_call.1} parent=1 // pred_check
      _
    $region7: #{tpu_custom_call.1} parent=1 // pred_check_branch
      %38 = sbr.rel (0) target = $region9
    $region8: #{tpu_custom_call.1} parent=1 // pred_region
      %40 = vsyncadd [#allocation10], 0
      %s41 = sshll.u32 %s1, 4
      %s42 = int_to_ptr.hbm [resolvable:$true] %s41
      %s43 = sshll.u32 [#allocation9], 4
      %s44 = int_to_ptr.vmem [resolvable:$true] %s43
      %49 = dma.hbm_to_vmem [thread:$0]  %s42, 512, %s44, [#allocation10], 128, 128, 8
    $region9: #{tpu_custom_call.1} parent=1 // pred_fallthru
      _
    // Predicated region
    $region10: #{tpu_custom_call.1} parent=1 // pred_check
      _
    $region11: #{tpu_custom_call.1} parent=1 // pred_check_branch
      %51 = sbr.rel (0) target = $region13
    $region12: #{tpu_custom_call.1} parent=1 // pred_region
      %53 = vsyncadd [#allocation10], 0
      %s54 = sshll.u32 %s2, 4
      %s55 = int_to_ptr.hbm [resolvable:$true] %s54
      %s56 = sshll.u32 [#allocation11], 4
      %s57 = int_to_ptr.vmem [resolvable:$true] %s56
      %62 = dma.hbm_to_vmem [thread:$0]  %s55, 1024, %s57, [#allocation10], 128, 128, 8
    $region13: #{tpu_custom_call.1} parent=1 // pred_fallthru
      _
    // Predicated region
    $region14: #{tpu_custom_call.1} parent=1 // pred_check
      _
    $region15: #{tpu_custom_call.1} parent=1 // pred_check_branch
      %64 = sbr.rel (0) target = $region17
    $region16: #{tpu_custom_call.1} parent=1 // pred_region
      %66 = vsyncadd [#allocation13], 0
      %s67 = sshll.u32 %s3, 4
      %s68 = int_to_ptr.hbm [resolvable:$true] %s67
      %s69 = sshll.u32 [#allocation12], 4
      %s70 = int_to_ptr.vmem [resolvable:$true] %s69
      %75 = dma.hbm_to_vmem [thread:$0]  %s68, 1536, %s70, [#allocation13], 128, 128, 8
    $region17: #{tpu_custom_call.1} parent=1 // pred_fallthru
      _
    // Predicated region
    $region18: #{tpu_custom_call.1} parent=1 // pred_check
      _
    $region19: #{tpu_custom_call.1} parent=1 // pred_check_branch
      %77 = sbr.rel (0) target = $region21
    $region20: #{tpu_custom_call.1} parent=1 // pred_region
      %79 = vsyncadd [#allocation13], 0
      %s81 = sshll.u32 %s4, 4
      %s82 = int_to_ptr.hbm [resolvable:$true] %s81
      %s83 = sshll.u32 [#allocation14], 4
      %s84 = int_to_ptr.vmem [resolvable:$true] %s83
      %86 = dma.hbm_to_vmem [thread:$0]  %s82, 16, %s84, [#allocation13]
    $region21: #{tpu_custom_call.1} parent=1 // pred_fallthru
      _
    // Predicated region
    $region22: #{tpu_custom_call.1} parent=1 // pred_check
      _
    $region23: #{tpu_custom_call.1} parent=1 // pred_check_branch
      %88 = sbr.rel (0) target = $region25
    $region24: #{tpu_custom_call.1} parent=1 // pred_region
      %90 = vsyncadd [#allocation16], 0
      %s91 = sshll.u32 %s5, 4
      %s92 = int_to_ptr.hbm [resolvable:$true] %s91
      %s93 = sshll.u32 [#allocation15], 4
      %s94 = int_to_ptr.vmem [resolvable:$true] %s93
      %99 = dma.hbm_to_vmem [thread:$0]  %s92, 32, %s94, [#allocation16], 16, 16, 1
    $region25: #{tpu_custom_call.1} parent=1 // pred_fallthru
      _
    // Predicated region
    $region26: #{tpu_custom_call.1} parent=1 // pred_check
      _
    $region27: #{tpu_custom_call.1} parent=1 // pred_check_branch
      %101 = sbr.rel (0) target = $region29
    $region28: #{tpu_custom_call.1} parent=1 // pred_region
      %103 = vsyncadd [#allocation16], 0
      %s104 = sshll.u32 %s6, 4
      %s105 = int_to_ptr.hbm [resolvable:$true] %s104
      %s106 = sshll.u32 [#allocation17], 4
      %s107 = int_to_ptr.vmem [resolvable:$true] %s106
      %112 = dma.hbm_to_vmem [thread:$0]  %s105, 96, %s107, [#allocation16], 32, 32, 2
    $region29: #{tpu_custom_call.1} parent=1 // pred_fallthru
      _
    // Predicated region
    $region30: #{tpu_custom_call.1} parent=1 // pred_check
      _
    $region31: #{tpu_custom_call.1} parent=1 // pred_check_branch
      %114 = sbr.rel (0) target = $region33
    $region32: #{tpu_custom_call.1} parent=1 // pred_region
      _
    $region33: #{tpu_custom_call.1} parent=1 // pred_fallthru
      _
    // Predicated region
    $region34: #{tpu_custom_call.1} parent=1 // pred_check
      _
    $region35: #{tpu_custom_call.1} parent=1 // pred_check_branch
      %116 = sbr.rel (0) target = $region37
    $region36: #{tpu_custom_call.1} parent=1 // pred_region
      _
    $region37: #{tpu_custom_call.1} parent=1 // pred_fallthru
      _
    // Predicated region
    $region38: #{tpu_custom_call.1} parent=1 // pred_check
      _
    $region39: #{tpu_custom_call.1} parent=1 // pred_check_branch
      %118 = sbr.rel (0) target = $region41
    $region40: #{tpu_custom_call.1} parent=1 // pred_region
      _
    $region41: #{tpu_custom_call.1} parent=1 // pred_fallthru
      _
    // Predicated region
    $region42: #{tpu_custom_call.1} parent=1 // pred_check
      _
    $region43: #{tpu_custom_call.1} parent=1 // pred_check_branch
      %120 = sbr.rel (0) target = $region45
    $region44: #{tpu_custom_call.1} parent=1 // pred_region
      %122 = dma.done [#allocation7], 256
    $region45: #{tpu_custom_call.1} parent=1 // pred_fallthru
      _
    // Predicated region
    $region46: #{tpu_custom_call.1} parent=1 // pred_check
      _
    $region47: #{tpu_custom_call.1} parent=1 // pred_check_branch
      %124 = sbr.rel (0) target = $region49
    $region48: #{tpu_custom_call.1} parent=1 // pred_region
      %126 = dma.done [#allocation10], 512
    $region49: #{tpu_custom_call.1} parent=1 // pred_fallthru
      _
    // Predicated region
    $region50: #{tpu_custom_call.1} parent=1 // pred_check
      _
    $region51: #{tpu_custom_call.1} parent=1 // pred_check_branch
      %128 = sbr.rel (0) target = $region53
    $region52: #{tpu_custom_call.1} parent=1 // pred_region
      %130 = dma.done [#allocation10], 1024
    $region53: #{tpu_custom_call.1} parent=1 // pred_fallthru
      _
    // Predicated region
    $region54: #{tpu_custom_call.1} parent=1 // pred_check
      _
    $region55: #{tpu_custom_call.1} parent=1 // pred_check_branch
      %132 = sbr.rel (0) target = $region57
    $region56: #{tpu_custom_call.1} parent=1 // pred_region
      %134 = dma.done [#allocation13], 1536
    $region57: #{tpu_custom_call.1} parent=1 // pred_fallthru
      _
    // Predicated region
    $region58: #{tpu_custom_call.1} parent=1 // pred_check
      _
    $region59: #{tpu_custom_call.1} parent=1 // pred_check_branch
      %136 = sbr.rel (0) target = $region61
    $region60: #{tpu_custom_call.1} parent=1 // pred_region
      %138 = dma.done [#allocation13], 16
    $region61: #{tpu_custom_call.1} parent=1 // pred_fallthru
      _
    // Predicated region
    $region62: #{tpu_custom_call.1} parent=1 // pred_check
      _
    $region63: #{tpu_custom_call.1} parent=1 // pred_check_branch
      %140 = sbr.rel (0) target = $region65
    $region64: #{tpu_custom_call.1} parent=1 // pred_region
      %142 = dma.done [#allocation16], 32
    $region65: #{tpu_custom_call.1} parent=1 // pred_fallthru
      _
    // Predicated region
    $region66: #{tpu_custom_call.1} parent=1 // pred_check
      _
    $region67: #{tpu_custom_call.1} parent=1 // pred_check_branch
      %144 = sbr.rel (0) target = $region69
    $region68: #{tpu_custom_call.1} parent=1 // pred_region
      %146 = dma.done [#allocation16], 96
    $region69: #{tpu_custom_call.1} parent=1 // pred_fallthru
      _
    %p147 = scmp.eq.s32.totalorder 0, 0
    // Predicated region
    $region70: #{tpu_custom_call.1} parent=1 // pred_check
      %p148 = pneg %p147
    $region71: #{tpu_custom_call.1} parent=1 // pred_check_branch
      %150 = sbr.rel (%p148) target = $region73
    $region72: #{tpu_custom_call.1} parent=1 // pred_region
      %v151 = vld [vmem:[#allocation17] sm:$0x3]
      %v152 = vld [vmem:[#allocation17 + $0x2] sm:$0x3]
      %v153 = vld [vmem:[#allocation17 + $0x4] sm:$0x3]
      %vm154 = vcmask 254976
      %155 = vst.msk [vmem:[#allocation2] sm:$0x3] %vm154, %v151
      %156 = vst.msk [vmem:[#allocation2 + $0x2] sm:$0x3] %vm154, %v152
      %157 = vst.msk [vmem:[#allocation2 + $0x4] sm:$0x3] %vm154, %v153
      %v158 = vld [vmem:[%s7] sm:$0x3]
      %v159 = vld [vmem:[%s7 + $0x2] sm:$0x3]
      %v160 = vld [vmem:[%s7 + $0x4] sm:$0x3]
      %161 = vst.msk [vmem:[#allocation3] sm:$0x3] %vm154, %v158
      %162 = vst.msk [vmem:[#allocation3 + $0x2] sm:$0x3] %vm154, %v159
      %163 = vst.msk [vmem:[#allocation3 + $0x4] sm:$0x3] %vm154, %v160
      %v164 = vld [vmem:[#allocation17] sm:$0x3]
      %v165 = vld [vmem:[#allocation17 + $0x2] sm:$0x3]
      %v166 = vld [vmem:[#allocation17 + $0x4] sm:$0x3]
      %167 = vst.msk [vmem:[#allocation19] sm:$0x3] %vm154, %v164
      %168 = vst.msk [vmem:[#allocation19 + $0x2] sm:$0x3] %vm154, %v165
      %169 = vst.msk [vmem:[#allocation19 + $0x4] sm:$0x3] %vm154, %v166
      %v170 = vld [vmem:[%s7] sm:$0x3]
      %v171 = vld [vmem:[%s7 + $0x2] sm:$0x3]
      %v172 = vld [vmem:[%s7 + $0x4] sm:$0x3]
      %173 = vst.msk [vmem:[#allocation21] sm:$0x3] %vm154, %v170
      %174 = vst.msk [vmem:[#allocation21 + $0x2] sm:$0x3] %vm154, %v171
      %175 = vst.msk [vmem:[#allocation21 + $0x4] sm:$0x3] %vm154, %v172
    $region73: #{tpu_custom_call.1} parent=1 // pred_fallthru
      _
    %v176 = vld [vmem:[%s8] sm:$0x1]
    %v177 = vld [vmem:[%s9] sm:$0x1]
    %v178 = vld [vmem:[#allocation6] sm:$0xff]
    %v179 = vld [vmem:[#allocation6 + $0x8] sm:$0xff]
    %v180 = vld [vmem:[#allocation9] sm:$0xff]
    %v181 = vld [vmem:[#allocation9 + $0x8] sm:$0xff]
    %v182 = vld [vmem:[#allocation9 + $0x10] sm:$0xff]
    %v183 = vld [vmem:[#allocation9 + $0x18] sm:$0xff]
    %v184 = vld [vmem:[#allocation14] sm:$0x1]
    %v186 = vperm.slane %v184, 0
    %vm188 = vcmask 261120
    %v190 = vsel %vm188, %v178, 0
    %v193 = vsel %vm188, %v179, 0
    %195 = vmatpush.msra.mxu0 0.0
    %196 = vmatpush.msra.mxu0 0.0
    %197 = vmatpush.msra.mxu0 0.0
    %198 = vmatpush.msra.mxu0 0.0
    %199 = vmatpush.msra.mxu0 0.0
    %200 = vmatpush.msra.mxu0 0.0
    %201 = vmatpush.msra.mxu0 0.0
    %202 = vmatpush.msra.mxu0 0.0
    %203 = vmatpush.msra.mxu0 0.0
    %204 = vmatpush.msra.mxu0 0.0
    %205 = vmatpush.msra.mxu0 0.0
    %206 = vmatpush.msra.mxu0 0.0
    %207 = vmatpush.msra.mxu0 %v183
    %208 = vmatpush.msra.mxu0 %v182
    %209 = vmatpush.msra.mxu0 %v181
    %210 = vmatpush.msra.mxu0 %v180
    %211 = vmatmul.f32.gmra.mxu0 %v190
    %v212 = vpop.f32.mrf.mxu0
    %v213 = vadd.f32 %v186, %v212
    %214 = vmatmul.f32.gmra.mxu0 %v193
    %v215 = vpop.f32.mrf.mxu0
    %v216 = vadd.f32 %v186, %v215
    %217 = vdwg.mxu0
    %218 = vst [vmem:[#allocation4] sm:$0xff] %v213
    %219 = vst [vmem:[#allocation4 + $0x8] sm:$0xff] %v216
    %v220 = vld [vmem:[#allocation12] sm:$0xff]
    %v221 = vld [vmem:[#allocation12 + $0x8] sm:$0xff]
    %v222 = vld [vmem:[#allocation12 + $0x10] sm:$0xff]
    %v223 = vld [vmem:[#allocation12 + $0x18] sm:$0xff]
    %v224 = vld [vmem:[#allocation2] sm:$0x3]
    %v225 = vld [vmem:[#allocation3] sm:$0x3]
    %v226 = vld [vmem:[#allocation4] sm:$0x1]
    %v227 = vld [vmem:[#allocation4 + $0x8] sm:$0x1]
    %v229 = vsel %vm188, %v224, 0
    %231 = vmatpush.msra.mxu0 0.0
    %232 = vmatpush.msra.mxu0 0.0
    %233 = vmatpush.msra.mxu0 0.0
    %234 = vmatpush.msra.mxu0 0.0
    %235 = vmatpush.msra.mxu0 0.0
    %236 = vmatpush.msra.mxu0 0.0
    %237 = vmatpush.msra.mxu0 0.0
    %238 = vmatpush.msra.mxu0 0.0
    %239 = vmatpush.msra.mxu0 0.0
    %240 = vmatpush.msra.mxu0 0.0
    %241 = vmatpush.msra.mxu0 0.0
    %242 = vmatpush.msra.mxu0 0.0
    %243 = vmatpush.msra.mxu0 %v223
    %244 = vmatpush.msra.mxu0 %v222
    %245 = vmatpush.msra.mxu0 %v221
    %246 = vmatpush.msra.mxu0 %v220
    %247 = vmatmul.f32.gmra.mxu0 %v229
    %v248 = vpop.f32.mrf.mxu0
    %v249 = vadd.f32 0.0, %v248
    %250 = vdwg.mxu0
    %v252 = vrot.slane %v249, 1
    %v255 = vadd.f32 %v226, %v249
    %v256 = vadd.f32 %v227, %v252
    %v257 = vxor.u32 %v255, 2147483648
    %v258 = vxor.u32 %v256, 2147483648
    %v259 = vmul.f32 %v257, 1.442695
    %v260 = vpow.pop %v259
    %v261 = vmul.f32 %v258, 1.442695
    %v262 = vpow.pop %v261
    %v263 = vadd.f32 %v260, 1.0
    %v264 = vadd.f32 %v262, 1.0
    %v265 = vrcp.pop %v263
    %v266 = vmul.f32 %v263, %v265
    %v267 = vsub.f32 1.0, %v266
    %v268 = vmul.f32 %v265, %v267
    %v269 = vadd.f32 %v265, %v268
    %vm270 = vweird.f32 %v263
    %vm271 = vweird.f32 %v265
    %vm272 = vmor %vm270, %vm271
    %v273 = vsel %vm272, %v265, %v269
    %v274 = vand.u32 2147483647, %v263
    %vm275 = vcmp.eq.f32.partialorder %v274, 8.507059e+37
    %v276 = vand.u32 %v263, 2147483648
    %v277 = vor.u32 1.1754944e-38, %v276
    %v278 = vsel %vm275, %v277, %v273
    %v279 = vmul.f32 1.0, %v278
    %v280 = vrcp.pop %v264
    %v281 = vmul.f32 %v264, %v280
    %v282 = vsub.f32 1.0, %v281
    %v283 = vmul.f32 %v280, %v282
    %v284 = vadd.f32 %v280, %v283
    %vm285 = vweird.f32 %v264
    %vm286 = vweird.f32 %v280
    %vm287 = vmor %vm285, %vm286
    %v288 = vsel %vm287, %v280, %v284
    %v289 = vand.u32 2147483647, %v264
    %vm290 = vcmp.eq.f32.partialorder %v289, 8.507059e+37
    %v291 = vand.u32 %v264, 2147483648
    %v292 = vor.u32 1.1754944e-38, %v291
    %v293 = vsel %vm290, %v292, %v288
    %v294 = vmul.f32 1.0, %v293
    %v295 = vtanh.pop %v255
    %v296 = vtanh.pop %v256
    %v298 = vrot.slane %v225, 1
    %299 = vrot.lane.b32.xlu0 %v225, 32
    %v300 = vpop.permute.xlu0 %299
    %301 = vrot.lane.b32.xlu0 %v298, 32
    %v302 = vpop.permute.xlu0 %301
    %v305 = vmul.f32 %v279, %v300
    %v306 = vmul.f32 %v294, %v302
    %309 = vrot.lane.b32.xlu0 %v295, 64
    %v310 = vpop.permute.xlu0 %309
    %311 = vrot.lane.b32.xlu0 %v296, 64
    %v312 = vpop.permute.xlu0 %311
    %v315 = vmul.f32 %v279, %v310
    %v316 = vmul.f32 %v294, %v312
    %319 = vrot.lane.b32.xlu0 %v315, 32
    %v320 = vpop.permute.xlu0 %319
    %321 = vrot.lane.b32.xlu0 %v316, 32
    %v322 = vpop.permute.xlu0 %321
    %v325 = vadd.f32 %v305, %v320
    %v326 = vadd.f32 %v306, %v322
    %v327 = vtanh.pop %v325
    %v328 = vtanh.pop %v326
    %331 = vrot.lane.b32.xlu0 %v327, 64
    %v332 = vpop.permute.xlu0 %331
    %333 = vrot.lane.b32.xlu0 %v328, 64
    %v334 = vpop.permute.xlu0 %333
    %v337 = vmul.f32 %v279, %v332
    %v338 = vmul.f32 %v294, %v334
    %341 = vrot.lane.b32.xlu0 %v337, 32
    %v342 = vpop.permute.xlu0 %341
    %343 = vrot.lane.b32.xlu0 %v338, 32
    %v344 = vpop.permute.xlu0 %343
    %vm347 = vcmask 253952
    %348 = vst.msk [vmem:[#allocation5] sm:$0x1] %vm347, %v342
    %349 = vst.msk [vmem:[#allocation5 + $0x8] sm:$0x1] %vm347, %v344
    %v350 = vld [vmem:[#allocation4 + $0x1] sm:$0x1]
    %v351 = vld [vmem:[#allocation4 + $0x9] sm:$0x1]
    %v352 = vrot.slane %v338, 7
    %vm353 = vcmask 1041409
    %v354 = vsel %vm353, %v352, %v337
    %355 = vrot.lane.b32.xlu0 %v354, 32
    %v356 = vpop.permute.xlu0 %355
    %v357 = vsel %vm188, %v356, 0
    %359 = vmatpush.msra.mxu0 0.0
    %360 = vmatpush.msra.mxu0 0.0
    %361 = vmatpush.msra.mxu0 0.0
    %362 = vmatpush.msra.mxu0 0.0
    %363 = vmatpush.msra.mxu0 0.0
    %364 = vmatpush.msra.mxu0 0.0
    %365 = vmatpush.msra.mxu0 0.0
    %366 = vmatpush.msra.mxu0 0.0
    %367 = vmatpush.msra.mxu0 0.0
    %368 = vmatpush.msra.mxu0 0.0
    %369 = vmatpush.msra.mxu0 0.0
    %370 = vmatpush.msra.mxu0 0.0
    %371 = vmatpush.msra.mxu0 %v223
    %372 = vmatpush.msra.mxu0 %v222
    %373 = vmatpush.msra.mxu0 %v221
    %374 = vmatpush.msra.mxu0 %v220
    %375 = vmatmul.f32.gmra.mxu0 %v357
    %v376 = vpop.f32.mrf.mxu0
    %v377 = vadd.f32 0.0, %v376
    %378 = vdwg.mxu0
    %v380 = vrot.slane %v377, 1
    %v383 = vadd.f32 %v350, %v377
    %v384 = vadd.f32 %v351, %v380
    %v385 = vxor.u32 %v383, 2147483648
    %v386 = vxor.u32 %v384, 2147483648
    %v387 = vmul.f32 %v385, 1.442695
    %v388 = vpow.pop %v387
    %v389 = vmul.f32 %v386, 1.442695
    %v390 = vpow.pop %v389
    %v391 = vadd.f32 %v388, 1.0
    %v392 = vadd.f32 %v390, 1.0
    %v393 = vrcp.pop %v391
    %v394 = vmul.f32 %v391, %v393
    %v395 = vsub.f32 1.0, %v394
    %v396 = vmul.f32 %v393, %v395
    %v397 = vadd.f32 %v393, %v396
    %vm398 = vweird.f32 %v391
    %vm399 = vweird.f32 %v393
    %vm400 = vmor %vm398, %vm399
    %v401 = vsel %vm400, %v393, %v397
    %v402 = vand.u32 2147483647, %v391
    %vm403 = vcmp.eq.f32.partialorder %v402, 8.507059e+37
    %v404 = vand.u32 %v391, 2147483648
    %v405 = vor.u32 1.1754944e-38, %v404
    %v406 = vsel %vm403, %v405, %v401
    %v407 = vmul.f32 1.0, %v406
    %v408 = vrcp.pop %v392
    %v409 = vmul.f32 %v392, %v408
    %v410 = vsub.f32 1.0, %v409
    %v411 = vmul.f32 %v408, %v410
    %v412 = vadd.f32 %v408, %v411
    %vm413 = vweird.f32 %v392
    %vm414 = vweird.f32 %v408
    %vm415 = vmor %vm413, %vm414
    %v416 = vsel %vm415, %v408, %v412
    %v417 = vand.u32 2147483647, %v392
    %vm418 = vcmp.eq.f32.partialorder %v417, 8.507059e+37
    %v419 = vand.u32 %v392, 2147483648
    %v420 = vor.u32 1.1754944e-38, %v419
    %v421 = vsel %vm418, %v420, %v416
    %v422 = vmul.f32 1.0, %v421
    %v423 = vtanh.pop %v383
    %v424 = vtanh.pop %v384
    %v425 = vmul.f32 %v407, %v325
    %v426 = vmul.f32 %v422, %v326
    %429 = vrot.lane.b32.xlu0 %v423, 64
    %v430 = vpop.permute.xlu0 %429
    %431 = vrot.lane.b32.xlu0 %v424, 64
    %v432 = vpop.permute.xlu0 %431
    %v435 = vmul.f32 %v407, %v430
    %v436 = vmul.f32 %v422, %v432
    %439 = vrot.lane.b32.xlu0 %v435, 32
    %v440 = vpop.permute.xlu0 %439
    %441 = vrot.lane.b32.xlu0 %v436, 32
    %v442 = vpop.permute.xlu0 %441
    %v445 = vadd.f32 %v425, %v440
    %v446 = vadd.f32 %v426, %v442
    %v447 = vtanh.pop %v445
    %v448 = vtanh.pop %v446
    %451 = vrot.lane.b32.xlu0 %v447, 64
    %v452 = vpop.permute.xlu0 %451
    %453 = vrot.lane.b32.xlu0 %v448, 64
    %v454 = vpop.permute.xlu0 %453
    %v457 = vmul.f32 %v407, %v452
    %v458 = vmul.f32 %v422, %v454
    %461 = vrot.lane.b32.xlu0 %v457, 32
    %v462 = vpop.permute.xlu0 %461
    %463 = vrot.lane.b32.xlu0 %v458, 32
    %v464 = vpop.permute.xlu0 %463
    %467 = vst.msk [vmem:[#allocation5 + $0x1] sm:$0x1] %vm347, %v462
    %468 = vst.msk [vmem:[#allocation5 + $0x9] sm:$0x1] %vm347, %v464
    %v469 = vld [vmem:[#allocation4 + $0x2] sm:$0x1]
    %v470 = vld [vmem:[#allocation4 + $0xa] sm:$0x1]
    %v471 = vrot.slane %v458, 7
    %v472 = vsel %vm353, %v471, %v457
    %473 = vrot.lane.b32.xlu0 %v472, 32
    %v474 = vpop.permute.xlu0 %473
    %v475 = vsel %vm188, %v474, 0
    %477 = vmatpush.msra.mxu0 0.0
    %478 = vmatpush.msra.mxu0 0.0
    %479 = vmatpush.msra.mxu0 0.0
    %480 = vmatpush.msra.mxu0 0.0
    %481 = vmatpush.msra.mxu0 0.0
    %482 = vmatpush.msra.mxu0 0.0
    %483 = vmatpush.msra.mxu0 0.0
    %484 = vmatpush.msra.mxu0 0.0
    %485 = vmatpush.msra.mxu0 0.0
    %486 = vmatpush.msra.mxu0 0.0
    %487 = vmatpush.msra.mxu0 0.0
    %488 = vmatpush.msra.mxu0 0.0
    %489 = vmatpush.msra.mxu0 %v223
    %490 = vmatpush.msra.mxu0 %v222
    %491 = vmatpush.msra.mxu0 %v221
    %492 = vmatpush.msra.mxu0 %v220
    %493 = vmatmul.f32.gmra.mxu0 %v475
    %v494 = vpop.f32.mrf.mxu0
    %v495 = vadd.f32 0.0, %v494
    %496 = vdwg.mxu0
    %v498 = vrot.slane %v495, 1
    %v501 = vadd.f32 %v469, %v495
    %v502 = vadd.f32 %v470, %v498
    %v503 = vxor.u32 %v501, 2147483648
    %v504 = vxor.u32 %v502, 2147483648
    %v505 = vmul.f32 %v503, 1.442695
    %v506 = vpow.pop %v505
    %v507 = vmul.f32 %v504, 1.442695
    %v508 = vpow.pop %v507
    %v509 = vadd.f32 %v506, 1.0
    %v510 = vadd.f32 %v508, 1.0
    %v511 = vrcp.pop %v509
    %v512 = vmul.f32 %v509, %v511
    %v513 = vsub.f32 1.0, %v512
    %v514 = vmul.f32 %v511, %v513
    %v515 = vadd.f32 %v511, %v514
    %vm516 = vweird.f32 %v509
    %vm517 = vweird.f32 %v511
    %vm518 = vmor %vm516, %vm517
    %v519 = vsel %vm518, %v511, %v515
    %v520 = vand.u32 2147483647, %v509
    %vm521 = vcmp.eq.f32.partialorder %v520, 8.507059e+37
    %v522 = vand.u32 %v509, 2147483648
    %v523 = vor.u32 1.1754944e-38, %v522
    %v524 = vsel %vm521, %v523, %v519
    %v525 = vmul.f32 1.0, %v524
    %v526 = vrcp.pop %v510
    %v527 = vmul.f32 %v510, %v526
    %v528 = vsub.f32 1.0, %v527
    %v529 = vmul.f32 %v526, %v528
    %v530 = vadd.f32 %v526, %v529
    %vm531 = vweird.f32 %v510
    %vm532 = vweird.f32 %v526
    %vm533 = vmor %vm531, %vm532
    %v534 = vsel %vm533, %v526, %v530
    %v535 = vand.u32 2147483647, %v510
    %vm536 = vcmp.eq.f32.partialorder %v535, 8.507059e+37
    %v537 = vand.u32 %v510, 2147483648
    %v538 = vor.u32 1.1754944e-38, %v537
    %v539 = vsel %vm536, %v538, %v534
    %v540 = vmul.f32 1.0, %v539
    %v541 = vtanh.pop %v501
    %v542 = vtanh.pop %v502
    %v543 = vmul.f32 %v525, %v445
    %v544 = vmul.f32 %v540, %v446
    %547 = vrot.lane.b32.xlu0 %v541, 64
    %v548 = vpop.permute.xlu0 %547
    %549 = vrot.lane.b32.xlu0 %v542, 64
    %v550 = vpop.permute.xlu0 %549
    %v553 = vmul.f32 %v525, %v548
    %v554 = vmul.f32 %v540, %v550
    %557 = vrot.lane.b32.xlu0 %v553, 32
    %v558 = vpop.permute.xlu0 %557
    %559 = vrot.lane.b32.xlu0 %v554, 32
    %v560 = vpop.permute.xlu0 %559
    %v563 = vadd.f32 %v543, %v558
    %v564 = vadd.f32 %v544, %v560
    %v565 = vtanh.pop %v563
    %v566 = vtanh.pop %v564
    %569 = vrot.lane.b32.xlu0 %v565, 64
    %v570 = vpop.permute.xlu0 %569
    %571 = vrot.lane.b32.xlu0 %v566, 64
    %v572 = vpop.permute.xlu0 %571
    %v575 = vmul.f32 %v525, %v570
    %v576 = vmul.f32 %v540, %v572
    %579 = vrot.lane.b32.xlu0 %v575, 32
    %v580 = vpop.permute.xlu0 %579
    %581 = vrot.lane.b32.xlu0 %v576, 32
    %v582 = vpop.permute.xlu0 %581
    %585 = vst.msk [vmem:[#allocation5 + $0x2] sm:$0x1] %vm347, %v580
    %586 = vst.msk [vmem:[#allocation5 + $0xa] sm:$0x1] %vm347, %v582
    %v587 = vld [vmem:[#allocation4 + $0x3] sm:$0x1]
    %v588 = vld [vmem:[#allocation4 + $0xb] sm:$0x1]
    %v589 = vrot.slane %v576, 7
    %v590 = vsel %vm353, %v589, %v575
    %591 = vrot.lane.b32.xlu0 %v590, 32
    %v592 = vpop.permute.xlu0 %591
    %v593 = vsel %vm188, %v592, 0
    %595 = vmatpush.msra.mxu0 0.0
    %596 = vmatpush.msra.mxu0 0.0
    %597 = vmatpush.msra.mxu0 0.0
    %598 = vmatpush.msra.mxu0 0.0
    %599 = vmatpush.msra.mxu0 0.0
    %600 = vmatpush.msra.mxu0 0.0
    %601 = vmatpush.msra.mxu0 0.0
    %602 = vmatpush.msra.mxu0 0.0
    %603 = vmatpush.msra.mxu0 0.0
    %604 = vmatpush.msra.mxu0 0.0
    %605 = vmatpush.msra.mxu0 0.0
    %606 = vmatpush.msra.mxu0 0.0
    %607 = vmatpush.msra.mxu0 %v223
    %608 = vmatpush.msra.mxu0 %v222
    %609 = vmatpush.msra.mxu0 %v221
    %610 = vmatpush.msra.mxu0 %v220
    %611 = vmatmul.f32.gmra.mxu0 %v593
    %v612 = vpop.f32.mrf.mxu0
    %v613 = vadd.f32 0.0, %v612
    %614 = vdwg.mxu0
    %v616 = vrot.slane %v613, 1
    %v619 = vadd.f32 %v587, %v613
    %v620 = vadd.f32 %v588, %v616
    %v621 = vxor.u32 %v619, 2147483648
    %v622 = vxor.u32 %v620, 2147483648
    %v623 = vmul.f32 %v621, 1.442695
    %v624 = vpow.pop %v623
    %v625 = vmul.f32 %v622, 1.442695
    %v626 = vpow.pop %v625
    %v627 = vadd.f32 %v624, 1.0
    %v628 = vadd.f32 %v626, 1.0
    %v629 = vrcp.pop %v627
    %v630 = vmul.f32 %v627, %v629
    %v631 = vsub.f32 1.0, %v630
    %v632 = vmul.f32 %v629, %v631
    %v633 = vadd.f32 %v629, %v632
    %vm634 = vweird.f32 %v627
    %vm635 = vweird.f32 %v629
    %vm636 = vmor %vm634, %vm635
    %v637 = vsel %vm636, %v629, %v633
    %v638 = vand.u32 2147483647, %v627
    %vm639 = vcmp.eq.f32.partialorder %v638, 8.507059e+37
    %v640 = vand.u32 %v627, 2147483648
    %v641 = vor.u32 1.1754944e-38, %v640
    %v642 = vsel %vm639, %v641, %v637
    %v643 = vmul.f32 1.0, %v642
    %v644 = vrcp.pop %v628
    %v645 = vmul.f32 %v628, %v644
    %v646 = vsub.f32 1.0, %v645
    %v647 = vmul.f32 %v644, %v646
    %v648 = vadd.f32 %v644, %v647
    %vm649 = vweird.f32 %v628
    %vm650 = vweird.f32 %v644
    %vm651 = vmor %vm649, %vm650
    %v652 = vsel %vm651, %v644, %v648
    %v653 = vand.u32 2147483647, %v628
    %vm654 = vcmp.eq.f32.partialorder %v653, 8.507059e+37
    %v655 = vand.u32 %v628, 2147483648
    %v656 = vor.u32 1.1754944e-38, %v655
    %v657 = vsel %vm654, %v656, %v652
    %v658 = vmul.f32 1.0, %v657
    %v659 = vtanh.pop %v619
    %v660 = vtanh.pop %v620
    %v661 = vmul.f32 %v643, %v563
    %v662 = vmul.f32 %v658, %v564
    %665 = vrot.lane.b32.xlu0 %v659, 64
    %v666 = vpop.permute.xlu0 %665
    %667 = vrot.lane.b32.xlu0 %v660, 64
    %v668 = vpop.permute.xlu0 %667
    %v671 = vmul.f32 %v643, %v666
    %v672 = vmul.f32 %v658, %v668
    %675 = vrot.lane.b32.xlu0 %v671, 32
    %v676 = vpop.permute.xlu0 %675
    %677 = vrot.lane.b32.xlu0 %v672, 32
    %v678 = vpop.permute.xlu0 %677
    %v681 = vadd.f32 %v661, %v676
    %v682 = vadd.f32 %v662, %v678
    %v683 = vtanh.pop %v681
    %v684 = vtanh.pop %v682
    %687 = vrot.lane.b32.xlu0 %v683, 64
    %v688 = vpop.permute.xlu0 %687
    %689 = vrot.lane.b32.xlu0 %v684, 64
    %v690 = vpop.permute.xlu0 %689
    %v693 = vmul.f32 %v643, %v688
    %v694 = vmul.f32 %v658, %v690
    %697 = vrot.lane.b32.xlu0 %v693, 32
    %v698 = vpop.permute.xlu0 %697
    %699 = vrot.lane.b32.xlu0 %v694, 32
    %v700 = vpop.permute.xlu0 %699
    %703 = vst.msk [vmem:[#allocation5 + $0x3] sm:$0x1] %vm347, %v698
    %704 = vst.msk [vmem:[#allocation5 + $0xb] sm:$0x1] %vm347, %v700
    %v705 = vld [vmem:[#allocation4 + $0x4] sm:$0x1]
    %v706 = vld [vmem:[#allocation4 + $0xc] sm:$0x1]
    %v707 = vrot.slane %v694, 7
    %v708 = vsel %vm353, %v707, %v693
    %709 = vrot.lane.b32.xlu0 %v708, 32
    %v710 = vpop.permute.xlu0 %709
    %v711 = vsel %vm188, %v710, 0
    %713 = vmatpush.msra.mxu0 0.0
    %714 = vmatpush.msra.mxu0 0.0
    %715 = vmatpush.msra.mxu0 0.0
    %716 = vmatpush.msra.mxu0 0.0
    %717 = vmatpush.msra.mxu0 0.0
    %718 = vmatpush.msra.mxu0 0.0
    %719 = vmatpush.msra.mxu0 0.0
    %720 = vmatpush.msra.mxu0 0.0
    %721 = vmatpush.msra.mxu0 0.0
    %722 = vmatpush.msra.mxu0 0.0
    %723 = vmatpush.msra.mxu0 0.0
    %724 = vmatpush.msra.mxu0 0.0
    %725 = vmatpush.msra.mxu0 %v223
    %726 = vmatpush.msra.mxu0 %v222
    %727 = vmatpush.msra.mxu0 %v221
    %728 = vmatpush.msra.mxu0 %v220
    %729 = vmatmul.f32.gmra.mxu0 %v711
    %v730 = vpop.f32.mrf.mxu0
    %v731 = vadd.f32 0.0, %v730
    %732 = vdwg.mxu0
    %v734 = vrot.slane %v731, 1
    %v737 = vadd.f32 %v705, %v731
    %v738 = vadd.f32 %v706, %v734
    %v739 = vxor.u32 %v737, 2147483648
    %v740 = vxor.u32 %v738, 2147483648
    %v741 = vmul.f32 %v739, 1.442695
    %v742 = vpow.pop %v741
    %v743 = vmul.f32 %v740, 1.442695
    %v744 = vpow.pop %v743
    %v745 = vadd.f32 %v742, 1.0
    %v746 = vadd.f32 %v744, 1.0
    %v747 = vrcp.pop %v745
    %v748 = vmul.f32 %v745, %v747
    %v749 = vsub.f32 1.0, %v748
    %v750 = vmul.f32 %v747, %v749
    %v751 = vadd.f32 %v747, %v750
    %vm752 = vweird.f32 %v745
    %vm753 = vweird.f32 %v747
    %vm754 = vmor %vm752, %vm753
    %v755 = vsel %vm754, %v747, %v751
    %v756 = vand.u32 2147483647, %v745
    %vm757 = vcmp.eq.f32.partialorder %v756, 8.507059e+37
    %v758 = vand.u32 %v745, 2147483648
    %v759 = vor.u32 1.1754944e-38, %v758
    %v760 = vsel %vm757, %v759, %v755
    %v761 = vmul.f32 1.0, %v760
    %v762 = vrcp.pop %v746
    %v763 = vmul.f32 %v746, %v762
    %v764 = vsub.f32 1.0, %v763
    %v765 = vmul.f32 %v762, %v764
    %v766 = vadd.f32 %v762, %v765
    %vm767 = vweird.f32 %v746
    %vm768 = vweird.f32 %v762
    %vm769 = vmor %vm767, %vm768
    %v770 = vsel %vm769, %v762, %v766
    %v771 = vand.u32 2147483647, %v746
    %vm772 = vcmp.eq.f32.partialorder %v771, 8.507059e+37
    %v773 = vand.u32 %v746, 2147483648
    %v774 = vor.u32 1.1754944e-38, %v773
    %v775 = vsel %vm772, %v774, %v770
    %v776 = vmul.f32 1.0, %v775
    %v777 = vtanh.pop %v737
    %v778 = vtanh.pop %v738
    %v779 = vmul.f32 %v761, %v681
    %v780 = vmul.f32 %v776, %v682
    %783 = vrot.lane.b32.xlu0 %v777, 64
    %v784 = vpop.permute.xlu0 %783
    %785 = vrot.lane.b32.xlu0 %v778, 64
    %v786 = vpop.permute.xlu0 %785
    %v789 = vmul.f32 %v761, %v784
    %v790 = vmul.f32 %v776, %v786
    %793 = vrot.lane.b32.xlu0 %v789, 32
    %v794 = vpop.permute.xlu0 %793
    %795 = vrot.lane.b32.xlu0 %v790, 32
    %v796 = vpop.permute.xlu0 %795
    %v799 = vadd.f32 %v779, %v794
    %v800 = vadd.f32 %v780, %v796
    %v801 = vtanh.pop %v799
    %v802 = vtanh.pop %v800
    %805 = vrot.lane.b32.xlu0 %v801, 64
    %v806 = vpop.permute.xlu0 %805
    %807 = vrot.lane.b32.xlu0 %v802, 64
    %v808 = vpop.permute.xlu0 %807
    %v811 = vmul.f32 %v761, %v806
    %v812 = vmul.f32 %v776, %v808
    %815 = vrot.lane.b32.xlu0 %v811, 32
    %v816 = vpop.permute.xlu0 %815
    %817 = vrot.lane.b32.xlu0 %v812, 32
    %v818 = vpop.permute.xlu0 %817
    %821 = vst.msk [vmem:[#allocation5 + $0x4] sm:$0x1] %vm347, %v816
    %822 = vst.msk [vmem:[#allocation5 + $0xc] sm:$0x1] %vm347, %v818
    %v823 = vld [vmem:[#allocation4 + $0x5] sm:$0x1]
    %v824 = vld [vmem:[#allocation4 + $0xd] sm:$0x1]
    %v825 = vrot.slane %v812, 7
    %v826 = vsel %vm353, %v825, %v811
    %827 = vrot.lane.b32.xlu0 %v826, 32
    %v828 = vpop.permute.xlu0 %827
    %v829 = vsel %vm188, %v828, 0
    %831 = vmatpush.msra.mxu0 0.0
    %832 = vmatpush.msra.mxu0 0.0
    %833 = vmatpush.msra.mxu0 0.0
    %834 = vmatpush.msra.mxu0 0.0
    %835 = vmatpush.msra.mxu0 0.0
    %836 = vmatpush.msra.mxu0 0.0
    %837 = vmatpush.msra.mxu0 0.0
    %838 = vmatpush.msra.mxu0 0.0
    %839 = vmatpush.msra.mxu0 0.0
    %840 = vmatpush.msra.mxu0 0.0
    %841 = vmatpush.msra.mxu0 0.0
    %842 = vmatpush.msra.mxu0 0.0
    %843 = vmatpush.msra.mxu0 %v223
    %844 = vmatpush.msra.mxu0 %v222
    %845 = vmatpush.msra.mxu0 %v221
    %846 = vmatpush.msra.mxu0 %v220
    %847 = vmatmul.f32.gmra.mxu0 %v829
    %v848 = vpop.f32.mrf.mxu0
    %v849 = vadd.f32 0.0, %v848
    %850 = vdwg.mxu0
    %v852 = vrot.slane %v849, 1
    %v855 = vadd.f32 %v823, %v849
    %v856 = vadd.f32 %v824, %v852
    %v857 = vxor.u32 %v855, 2147483648
    %v858 = vxor.u32 %v856, 2147483648
    %v859 = vmul.f32 %v857, 1.442695
    %v860 = vpow.pop %v859
    %v861 = vmul.f32 %v858, 1.442695
    %v862 = vpow.pop %v861
    %v863 = vadd.f32 %v860, 1.0
    %v864 = vadd.f32 %v862, 1.0
    %v865 = vrcp.pop %v863
    %v866 = vmul.f32 %v863, %v865
    %v867 = vsub.f32 1.0, %v866
    %v868 = vmul.f32 %v865, %v867
    %v869 = vadd.f32 %v865, %v868
    %vm870 = vweird.f32 %v863
    %vm871 = vweird.f32 %v865
    %vm872 = vmor %vm870, %vm871
    %v873 = vsel %vm872, %v865, %v869
    %v874 = vand.u32 2147483647, %v863
    %vm875 = vcmp.eq.f32.partialorder %v874, 8.507059e+37
    %v876 = vand.u32 %v863, 2147483648
    %v877 = vor.u32 1.1754944e-38, %v876
    %v878 = vsel %vm875, %v877, %v873
    %v879 = vmul.f32 1.0, %v878
    %v880 = vrcp.pop %v864
    %v881 = vmul.f32 %v864, %v880
    %v882 = vsub.f32 1.0, %v881
    %v883 = vmul.f32 %v880, %v882
    %v884 = vadd.f32 %v880, %v883
    %vm885 = vweird.f32 %v864
    %vm886 = vweird.f32 %v880
    %vm887 = vmor %vm885, %vm886
    %v888 = vsel %vm887, %v880, %v884
    %v889 = vand.u32 2147483647, %v864
    %vm890 = vcmp.eq.f32.partialorder %v889, 8.507059e+37
    %v891 = vand.u32 %v864, 2147483648
    %v892 = vor.u32 1.1754944e-38, %v891
    %v893 = vsel %vm890, %v892, %v888
    %v894 = vmul.f32 1.0, %v893
    %v895 = vtanh.pop %v855
    %v896 = vtanh.pop %v856
    %v897 = vmul.f32 %v879, %v799
    %v898 = vmul.f32 %v894, %v800
    %901 = vrot.lane.b32.xlu0 %v895, 64
    %v902 = vpop.permute.xlu0 %901
    %903 = vrot.lane.b32.xlu0 %v896, 64
    %v904 = vpop.permute.xlu0 %903
    %v907 = vmul.f32 %v879, %v902
    %v908 = vmul.f32 %v894, %v904
    %911 = vrot.lane.b32.xlu0 %v907, 32
    %v912 = vpop.permute.xlu0 %911
    %913 = vrot.lane.b32.xlu0 %v908, 32
    %v914 = vpop.permute.xlu0 %913
    %v917 = vadd.f32 %v897, %v912
    %v918 = vadd.f32 %v898, %v914
    %v919 = vtanh.pop %v917
    %v920 = vtanh.pop %v918
    %923 = vrot.lane.b32.xlu0 %v919, 64
    %v924 = vpop.permute.xlu0 %923
    %925 = vrot.lane.b32.xlu0 %v920, 64
    %v926 = vpop.permute.xlu0 %925
    %v929 = vmul.f32 %v879, %v924
    %v930 = vmul.f32 %v894, %v926
    %933 = vrot.lane.b32.xlu0 %v929, 32
    %v934 = vpop.permute.xlu0 %933
    %935 = vrot.lane.b32.xlu0 %v930, 32
    %v936 = vpop.permute.xlu0 %935
    %939 = vst.msk [vmem:[#allocation5 + $0x5] sm:$0x1] %vm347, %v934
    %940 = vst.msk [vmem:[#allocation5 + $0xd] sm:$0x1] %vm347, %v936
    %v941 = vld [vmem:[#allocation4 + $0x6] sm:$0x1]
    %v942 = vld [vmem:[#allocation4 + $0xe] sm:$0x1]
    %v943 = vrot.slane %v930, 7
    %v944 = vsel %vm353, %v943, %v929
    %945 = vrot.lane.b32.xlu0 %v944, 32
    %v946 = vpop.permute.xlu0 %945
    %v947 = vsel %vm188, %v946, 0
    %949 = vmatpush.msra.mxu0 0.0
    %950 = vmatpush.msra.mxu0 0.0
    %951 = vmatpush.msra.mxu0 0.0
    %952 = vmatpush.msra.mxu0 0.0
    %953 = vmatpush.msra.mxu0 0.0
    %954 = vmatpush.msra.mxu0 0.0
    %955 = vmatpush.msra.mxu0 0.0
    %956 = vmatpush.msra.mxu0 0.0
    %957 = vmatpush.msra.mxu0 0.0
    %958 = vmatpush.msra.mxu0 0.0
    %959 = vmatpush.msra.mxu0 0.0
    %960 = vmatpush.msra.mxu0 0.0
    %961 = vmatpush.msra.mxu0 %v223
    %962 = vmatpush.msra.mxu0 %v222
    %963 = vmatpush.msra.mxu0 %v221
    %964 = vmatpush.msra.mxu0 %v220
    %965 = vmatmul.f32.gmra.mxu0 %v947
    %v966 = vpop.f32.mrf.mxu0
    %v967 = vadd.f32 0.0, %v966
    %968 = vdwg.mxu0
    %v970 = vrot.slane %v967, 1
    %v973 = vadd.f32 %v941, %v967
    %v974 = vadd.f32 %v942, %v970
    %v975 = vxor.u32 %v973, 2147483648
    %v976 = vxor.u32 %v974, 2147483648
    %v977 = vmul.f32 %v975, 1.442695
    %v978 = vpow.pop %v977
    %v979 = vmul.f32 %v976, 1.442695
    %v980 = vpow.pop %v979
    %v981 = vadd.f32 %v978, 1.0
    %v982 = vadd.f32 %v980, 1.0
    %v983 = vrcp.pop %v981
    %v984 = vmul.f32 %v981, %v983
    %v985 = vsub.f32 1.0, %v984
    %v986 = vmul.f32 %v983, %v985
    %v987 = vadd.f32 %v983, %v986
    %vm988 = vweird.f32 %v981
    %vm989 = vweird.f32 %v983
    %vm990 = vmor %vm988, %vm989
    %v991 = vsel %vm990, %v983, %v987
    %v992 = vand.u32 2147483647, %v981
    %vm993 = vcmp.eq.f32.partialorder %v992, 8.507059e+37
    %v994 = vand.u32 %v981, 2147483648
    %v995 = vor.u32 1.1754944e-38, %v994
    %v996 = vsel %vm993, %v995, %v991
    %v997 = vmul.f32 1.0, %v996
    %v998 = vrcp.pop %v982
    %v999 = vmul.f32 %v982, %v998
    %v1000 = vsub.f32 1.0, %v999
    %v1001 = vmul.f32 %v998, %v1000
    %v1002 = vadd.f32 %v998, %v1001
    %vm1003 = vweird.f32 %v982
    %vm1004 = vweird.f32 %v998
    %vm1005 = vmor %vm1003, %vm1004
    %v1006 = vsel %vm1005, %v998, %v1002
    %v1007 = vand.u32 2147483647, %v982
    %vm1008 = vcmp.eq.f32.partialorder %v1007, 8.507059e+37
    %v1009 = vand.u32 %v982, 2147483648
    %v1010 = vor.u32 1.1754944e-38, %v1009
    %v1011 = vsel %vm1008, %v1010, %v1006
    %v1012 = vmul.f32 1.0, %v1011
    %v1013 = vtanh.pop %v973
    %v1014 = vtanh.pop %v974
    %v1015 = vmul.f32 %v997, %v917
    %v1016 = vmul.f32 %v1012, %v918
    %1019 = vrot.lane.b32.xlu0 %v1013, 64
    %v1020 = vpop.permute.xlu0 %1019
    %1021 = vrot.lane.b32.xlu0 %v1014, 64
    %v1022 = vpop.permute.xlu0 %1021
    %v1025 = vmul.f32 %v997, %v1020
    %v1026 = vmul.f32 %v1012, %v1022
    %1029 = vrot.lane.b32.xlu0 %v1025, 32
    %v1030 = vpop.permute.xlu0 %1029
    %1031 = vrot.lane.b32.xlu0 %v1026, 32
    %v1032 = vpop.permute.xlu0 %1031
    %v1035 = vadd.f32 %v1015, %v1030
    %v1036 = vadd.f32 %v1016, %v1032
    %v1037 = vtanh.pop %v1035
    %v1038 = vtanh.pop %v1036
    %1041 = vrot.lane.b32.xlu0 %v1037, 64
    %v1042 = vpop.permute.xlu0 %1041
    %1043 = vrot.lane.b32.xlu0 %v1038, 64
    %v1044 = vpop.permute.xlu0 %1043
    %v1047 = vmul.f32 %v997, %v1042
    %v1048 = vmul.f32 %v1012, %v1044
    %1051 = vrot.lane.b32.xlu0 %v1047, 32
    %v1052 = vpop.permute.xlu0 %1051
    %1053 = vrot.lane.b32.xlu0 %v1048, 32
    %v1054 = vpop.permute.xlu0 %1053
    %1057 = vst.msk [vmem:[#allocation5 + $0x6] sm:$0x1] %vm347, %v1052
    %1058 = vst.msk [vmem:[#allocation5 + $0xe] sm:$0x1] %vm347, %v1054
    %v1059 = vld [vmem:[#allocation4 + $0x7] sm:$0x1]
    %v1060 = vld [vmem:[#allocation4 + $0xf] sm:$0x1]
    %v1061 = vrot.slane %v1048, 7
    %v1062 = vsel %vm353, %v1061, %v1047
    %1063 = vrot.lane.b32.xlu0 %v1062, 32
    %v1064 = vpop.permute.xlu0 %1063
    %v1065 = vsel %vm188, %v1064, 0
    %1067 = vmatpush.msra.mxu0 0.0
    %1068 = vmatpush.msra.mxu0 0.0
    %1069 = vmatpush.msra.mxu0 0.0
    %1070 = vmatpush.msra.mxu0 0.0
    %1071 = vmatpush.msra.mxu0 0.0
    %1072 = vmatpush.msra.mxu0 0.0
    %1073 = vmatpush.msra.mxu0 0.0
    %1074 = vmatpush.msra.mxu0 0.0
    %1075 = vmatpush.msra.mxu0 0.0
    %1076 = vmatpush.msra.mxu0 0.0
    %1077 = vmatpush.msra.mxu0 0.0
    %1078 = vmatpush.msra.mxu0 0.0
    %1079 = vmatpush.msra.mxu0 %v223
    %1080 = vmatpush.msra.mxu0 %v222
    %1081 = vmatpush.msra.mxu0 %v221
    %1082 = vmatpush.msra.mxu0 %v220
    %1083 = vmatmul.f32.gmra.mxu0 %v1065
    %v1084 = vpop.f32.mrf.mxu0
    %v1085 = vadd.f32 0.0, %v1084
    %1086 = vdwg.mxu0
    %v1088 = vrot.slane %v1085, 1
    %v1091 = vadd.f32 %v1059, %v1085
    %v1092 = vadd.f32 %v1060, %v1088
    %v1093 = vxor.u32 %v1091, 2147483648
    %v1094 = vxor.u32 %v1092, 2147483648
    %v1095 = vmul.f32 %v1093, 1.442695
    %v1096 = vpow.pop %v1095
    %v1097 = vmul.f32 %v1094, 1.442695
    %v1098 = vpow.pop %v1097
    %v1099 = vadd.f32 %v1096, 1.0
    %v1100 = vadd.f32 %v1098, 1.0
    %v1101 = vrcp.pop %v1099
    %v1102 = vmul.f32 %v1099, %v1101
    %v1103 = vsub.f32 1.0, %v1102
    %v1104 = vmul.f32 %v1101, %v1103
    %v1105 = vadd.f32 %v1101, %v1104
    %vm1106 = vweird.f32 %v1099
    %vm1107 = vweird.f32 %v1101
    %vm1108 = vmor %vm1106, %vm1107
    %v1109 = vsel %vm1108, %v1101, %v1105
    %v1110 = vand.u32 2147483647, %v1099
    %vm1111 = vcmp.eq.f32.partialorder %v1110, 8.507059e+37
    %v1112 = vand.u32 %v1099, 2147483648
    %v1113 = vor.u32 1.1754944e-38, %v1112
    %v1114 = vsel %vm1111, %v1113, %v1109
    %v1115 = vmul.f32 1.0, %v1114
    %v1116 = vrcp.pop %v1100
    %v1117 = vmul.f32 %v1100, %v1116
    %v1118 = vsub.f32 1.0, %v1117
    %v1119 = vmul.f32 %v1116, %v1118
    %v1120 = vadd.f32 %v1116, %v1119
    %vm1121 = vweird.f32 %v1100
    %vm1122 = vweird.f32 %v1116
    %vm1123 = vmor %vm1121, %vm1122
    %v1124 = vsel %vm1123, %v1116, %v1120
    %v1125 = vand.u32 2147483647, %v1100
    %vm1126 = vcmp.eq.f32.partialorder %v1125, 8.507059e+37
    %v1127 = vand.u32 %v1100, 2147483648
    %v1128 = vor.u32 1.1754944e-38, %v1127
    %v1129 = vsel %vm1126, %v1128, %v1124
    %v1130 = vmul.f32 1.0, %v1129
    %v1131 = vtanh.pop %v1091
    %v1132 = vtanh.pop %v1092
    %v1133 = vmul.f32 %v1115, %v1035
    %v1134 = vmul.f32 %v1130, %v1036
    %1137 = vrot.lane.b32.xlu0 %v1131, 64
    %v1138 = vpop.permute.xlu0 %1137
    %1139 = vrot.lane.b32.xlu0 %v1132, 64
    %v1140 = vpop.permute.xlu0 %1139
    %v1143 = vmul.f32 %v1115, %v1138
    %v1144 = vmul.f32 %v1130, %v1140
    %1147 = vrot.lane.b32.xlu0 %v1143, 32
    %v1148 = vpop.permute.xlu0 %1147
    %1149 = vrot.lane.b32.xlu0 %v1144, 32
    %v1150 = vpop.permute.xlu0 %1149
    %v1153 = vadd.f32 %v1133, %v1148
    %v1154 = vadd.f32 %v1134, %v1150
    %v1155 = vtanh.pop %v1153
    %v1156 = vtanh.pop %v1154
    %1159 = vrot.lane.b32.xlu0 %v1155, 64
    %v1160 = vpop.permute.xlu0 %1159
    %1161 = vrot.lane.b32.xlu0 %v1156, 64
    %v1162 = vpop.permute.xlu0 %1161
    %v1165 = vmul.f32 %v1115, %v1160
    %v1166 = vmul.f32 %v1130, %v1162
    %1169 = vrot.lane.b32.xlu0 %v1165, 32
    %v1170 = vpop.permute.xlu0 %1169
    %1171 = vrot.lane.b32.xlu0 %v1166, 32
    %v1172 = vpop.permute.xlu0 %1171
    %1175 = vst.msk [vmem:[#allocation5 + $0x7] sm:$0x1] %vm347, %v1170
    %1176 = vst.msk [vmem:[#allocation5 + $0xf] sm:$0x1] %vm347, %v1172
    %v1177 = vrot.slane %v1166, 7
    %v1178 = vsel %vm353, %v1177, %v1165
    %1179 = vrot.lane.b32.xlu0 %v1178, 32
    %v1180 = vpop.permute.xlu0 %1179
    %vm1182 = vcmask 254976
    %1183 = vst.msk [vmem:[#allocation2] sm:$0x3] %vm1182, %v1180
    %v1186 = vrot.slane %v1154, 7
    %v1187 = vsel %vm353, %v1186, %v1153
    %1188 = vrot.lane.b32.xlu0 %v1187, 96
    %v1189 = vpop.permute.xlu0 %1188
    %1191 = vst.msk [vmem:[#allocation3] sm:$0x3] %vm1182, %v1189
    %v1192 = vld [vmem:[#allocation5] sm:$0xff]
    %v1193 = vld [vmem:[#allocation5 + $0x8] sm:$0xff]
    %v1194 = vld [vmem:[#allocation11] sm:$0xff]
    %v1195 = vld [vmem:[#allocation11 + $0x8] sm:$0xff]
    %v1196 = vld [vmem:[#allocation11 + $0x10] sm:$0xff]
    %v1197 = vld [vmem:[#allocation11 + $0x18] sm:$0xff]
    %v1198 = vld [vmem:[#allocation15] sm:$0x1]
    %v1200 = vperm.slane %v1198, 0
    %v1203 = vsel %vm188, %v1192, 0
    %v1206 = vsel %vm188, %v1193, 0
    %1208 = vmatpush.msra.mxu0 0.0
    %1209 = vmatpush.msra.mxu0 0.0
    %1210 = vmatpush.msra.mxu0 0.0
    %1211 = vmatpush.msra.mxu0 0.0
    %1212 = vmatpush.msra.mxu0 0.0
    %1213 = vmatpush.msra.mxu0 0.0
    %1214 = vmatpush.msra.mxu0 0.0
    %1215 = vmatpush.msra.mxu0 0.0
    %1216 = vmatpush.msra.mxu0 0.0
    %1217 = vmatpush.msra.mxu0 0.0
    %1218 = vmatpush.msra.mxu0 0.0
    %1219 = vmatpush.msra.mxu0 0.0
    %1220 = vmatpush.msra.mxu0 %v1197
    %1221 = vmatpush.msra.mxu0 %v1196
    %1222 = vmatpush.msra.mxu0 %v1195
    %1223 = vmatpush.msra.mxu0 %v1194
    %1224 = vmatmul.f32.gmra.mxu0 %v1203
    %v1225 = vpop.f32.mrf.mxu0
    %v1226 = vadd.f32 %v1200, %v1225
    %1227 = vmatmul.f32.gmra.mxu0 %v1206
    %v1228 = vpop.f32.mrf.mxu0
    %v1229 = vadd.f32 %v1200, %v1228
    %1230 = vdwg.mxu0
    %1231 = vst [vmem:[#allocation4] sm:$0xff] %v1226
    %1232 = vst [vmem:[#allocation4 + $0x8] sm:$0xff] %v1229
    %s1233 = scalar_lea.vmem [#allocation12], 32
    %v1234 = vld [vmem:[%s1233] sm:$0xff]
    %v1235 = vld [vmem:[%s1233 + $0x8] sm:$0xff]
    %v1236 = vld [vmem:[%s1233 + $0x10] sm:$0xff]
    %v1237 = vld [vmem:[%s1233 + $0x18] sm:$0xff]
    %s1238 = scalar_lea.vmem [#allocation2], 2
    %v1239 = vld [vmem:[%s1238] sm:$0x3]
    %s1240 = scalar_lea.vmem [#allocation3], 2
    %v1241 = vld [vmem:[%s1240] sm:$0x3]
    %v1242 = vld [vmem:[#allocation4] sm:$0x1]
    %v1243 = vld [vmem:[#allocation4 + $0x8] sm:$0x1]
    %v1245 = vsel %vm188, %v1239, 0
    %1247 = vmatpush.msra.mxu0 0.0
    %1248 = vmatpush.msra.mxu0 0.0
    %1249 = vmatpush.msra.mxu0 0.0
    %1250 = vmatpush.msra.mxu0 0.0
    %1251 = vmatpush.msra.mxu0 0.0
    %1252 = vmatpush.msra.mxu0 0.0
    %1253 = vmatpush.msra.mxu0 0.0
    %1254 = vmatpush.msra.mxu0 0.0
    %1255 = vmatpush.msra.mxu0 0.0
    %1256 = vmatpush.msra.mxu0 0.0
    %1257 = vmatpush.msra.mxu0 0.0
    %1258 = vmatpush.msra.mxu0 0.0
    %1259 = vmatpush.msra.mxu0 %v1237
    %1260 = vmatpush.msra.mxu0 %v1236
    %1261 = vmatpush.msra.mxu0 %v1235
    %1262 = vmatpush.msra.mxu0 %v1234
    %1263 = vmatmul.f32.gmra.mxu0 %v1245
    %v1264 = vpop.f32.mrf.mxu0
    %v1265 = vadd.f32 0.0, %v1264
    %1266 = vdwg.mxu0
    %v1268 = vrot.slane %v1265, 1
    %v1271 = vadd.f32 %v1242, %v1265
    %v1272 = vadd.f32 %v1243, %v1268
    %v1273 = vxor.u32 %v1271, 2147483648
    %v1274 = vxor.u32 %v1272, 2147483648
    %v1275 = vmul.f32 %v1273, 1.442695
    %v1276 = vpow.pop %v1275
    %v1277 = vmul.f32 %v1274, 1.442695
    %v1278 = vpow.pop %v1277
    %v1279 = vadd.f32 %v1276, 1.0
    %v1280 = vadd.f32 %v1278, 1.0
    %v1281 = vrcp.pop %v1279
    %v1282 = vmul.f32 %v1279, %v1281
    %v1283 = vsub.f32 1.0, %v1282
    %v1284 = vmul.f32 %v1281, %v1283
    %v1285 = vadd.f32 %v1281, %v1284
    %vm1286 = vweird.f32 %v1279
    %vm1287 = vweird.f32 %v1281
    %vm1288 = vmor %vm1286, %vm1287
    %v1289 = vsel %vm1288, %v1281, %v1285
    %v1290 = vand.u32 2147483647, %v1279
    %vm1291 = vcmp.eq.f32.partialorder %v1290, 8.507059e+37
    %v1292 = vand.u32 %v1279, 2147483648
    %v1293 = vor.u32 1.1754944e-38, %v1292
    %v1294 = vsel %vm1291, %v1293, %v1289
    %v1295 = vmul.f32 1.0, %v1294
    %v1296 = vrcp.pop %v1280
    %v1297 = vmul.f32 %v1280, %v1296
    %v1298 = vsub.f32 1.0, %v1297
    %v1299 = vmul.f32 %v1296, %v1298
    %v1300 = vadd.f32 %v1296, %v1299
    %vm1301 = vweird.f32 %v1280
    %vm1302 = vweird.f32 %v1296
    %vm1303 = vmor %vm1301, %vm1302
    %v1304 = vsel %vm1303, %v1296, %v1300
    %v1305 = vand.u32 2147483647, %v1280
    %vm1306 = vcmp.eq.f32.partialorder %v1305, 8.507059e+37
    %v1307 = vand.u32 %v1280, 2147483648
    %v1308 = vor.u32 1.1754944e-38, %v1307
    %v1309 = vsel %vm1306, %v1308, %v1304
    %v1310 = vmul.f32 1.0, %v1309
    %v1311 = vtanh.pop %v1271
    %v1312 = vtanh.pop %v1272
    %v1314 = vrot.slane %v1241, 1
    %1315 = vrot.lane.b32.xlu0 %v1241, 32
    %v1316 = vpop.permute.xlu0 %1315
    %1317 = vrot.lane.b32.xlu0 %v1314, 32
    %v1318 = vpop.permute.xlu0 %1317
    %v1321 = vmul.f32 %v1295, %v1316
    %v1322 = vmul.f32 %v1310, %v1318
    %1325 = vrot.lane.b32.xlu0 %v1311, 64
    %v1326 = vpop.permute.xlu0 %1325
    %1327 = vrot.lane.b32.xlu0 %v1312, 64
    %v1328 = vpop.permute.xlu0 %1327
    %v1331 = vmul.f32 %v1295, %v1326
    %v1332 = vmul.f32 %v1310, %v1328
    %1335 = vrot.lane.b32.xlu0 %v1331, 32
    %v1336 = vpop.permute.xlu0 %1335
    %1337 = vrot.lane.b32.xlu0 %v1332, 32
    %v1338 = vpop.permute.xlu0 %1337
    %v1341 = vadd.f32 %v1321, %v1336
    %v1342 = vadd.f32 %v1322, %v1338
    %v1343 = vtanh.pop %v1341
    %v1344 = vtanh.pop %v1342
    %1347 = vrot.lane.b32.xlu0 %v1343, 64
    %v1348 = vpop.permute.xlu0 %1347
    %1349 = vrot.lane.b32.xlu0 %v1344, 64
    %v1350 = vpop.permute.xlu0 %1349
    %v1353 = vmul.f32 %v1295, %v1348
    %v1354 = vmul.f32 %v1310, %v1350
    %1357 = vrot.lane.b32.xlu0 %v1353, 32
    %v1358 = vpop.permute.xlu0 %1357
    %1359 = vrot.lane.b32.xlu0 %v1354, 32
    %v1360 = vpop.permute.xlu0 %1359
    %1363 = vst.msk [vmem:[#allocation5] sm:$0x1] %vm347, %v1358
    %1364 = vst.msk [vmem:[#allocation5 + $0x8] sm:$0x1] %vm347, %v1360
    %v1365 = vld [vmem:[#allocation4 + $0x1] sm:$0x1]
    %v1366 = vld [vmem:[#allocation4 + $0x9] sm:$0x1]
    %v1367 = vrot.slane %v1354, 7
    %v1368 = vsel %vm353, %v1367, %v1353
    %1369 = vrot.lane.b32.xlu0 %v1368, 32
    %v1370 = vpop.permute.xlu0 %1369
    %v1371 = vsel %vm188, %v1370, 0
    %1373 = vmatpush.msra.mxu0 0.0
    %1374 = vmatpush.msra.mxu0 0.0
    %1375 = vmatpush.msra.mxu0 0.0
    %1376 = vmatpush.msra.mxu0 0.0
    %1377 = vmatpush.msra.mxu0 0.0
    %1378 = vmatpush.msra.mxu0 0.0
    %1379 = vmatpush.msra.mxu0 0.0
    %1380 = vmatpush.msra.mxu0 0.0
    %1381 = vmatpush.msra.mxu0 0.0
    %1382 = vmatpush.msra.mxu0 0.0
    %1383 = vmatpush.msra.mxu0 0.0
    %1384 = vmatpush.msra.mxu0 0.0
    %1385 = vmatpush.msra.mxu0 %v1237
    %1386 = vmatpush.msra.mxu0 %v1236
    %1387 = vmatpush.msra.mxu0 %v1235
    %1388 = vmatpush.msra.mxu0 %v1234
    %1389 = vmatmul.f32.gmra.mxu0 %v1371
    %v1390 = vpop.f32.mrf.mxu0
    %v1391 = vadd.f32 0.0, %v1390
    %1392 = vdwg.mxu0
    %v1394 = vrot.slane %v1391, 1
    %v1397 = vadd.f32 %v1365, %v1391
    %v1398 = vadd.f32 %v1366, %v1394
    %v1399 = vxor.u32 %v1397, 2147483648
    %v1400 = vxor.u32 %v1398, 2147483648
    %v1401 = vmul.f32 %v1399, 1.442695
    %v1402 = vpow.pop %v1401
    %v1403 = vmul.f32 %v1400, 1.442695
    %v1404 = vpow.pop %v1403
    %v1405 = vadd.f32 %v1402, 1.0
    %v1406 = vadd.f32 %v1404, 1.0
    %v1407 = vrcp.pop %v1405
    %v1408 = vmul.f32 %v1405, %v1407
    %v1409 = vsub.f32 1.0, %v1408
    %v1410 = vmul.f32 %v1407, %v1409
    %v1411 = vadd.f32 %v1407, %v1410
    %vm1412 = vweird.f32 %v1405
    %vm1413 = vweird.f32 %v1407
    %vm1414 = vmor %vm1412, %vm1413
    %v1415 = vsel %vm1414, %v1407, %v1411
    %v1416 = vand.u32 2147483647, %v1405
    %vm1417 = vcmp.eq.f32.partialorder %v1416, 8.507059e+37
    %v1418 = vand.u32 %v1405, 2147483648
    %v1419 = vor.u32 1.1754944e-38, %v1418
    %v1420 = vsel %vm1417, %v1419, %v1415
    %v1421 = vmul.f32 1.0, %v1420
    %v1422 = vrcp.pop %v1406
    %v1423 = vmul.f32 %v1406, %v1422
    %v1424 = vsub.f32 1.0, %v1423
    %v1425 = vmul.f32 %v1422, %v1424
    %v1426 = vadd.f32 %v1422, %v1425
    %vm1427 = vweird.f32 %v1406
    %vm1428 = vweird.f32 %v1422
    %vm1429 = vmor %vm1427, %vm1428
    %v1430 = vsel %vm1429, %v1422, %v1426
    %v1431 = vand.u32 2147483647, %v1406
    %vm1432 = vcmp.eq.f32.partialorder %v1431, 8.507059e+37
    %v1433 = vand.u32 %v1406, 2147483648
    %v1434 = vor.u32 1.1754944e-38, %v1433
    %v1435 = vsel %vm1432, %v1434, %v1430
    %v1436 = vmul.f32 1.0, %v1435
    %v1437 = vtanh.pop %v1397
    %v1438 = vtanh.pop %v1398
    %v1439 = vmul.f32 %v1421, %v1341
    %v1440 = vmul.f32 %v1436, %v1342
    %1443 = vrot.lane.b32.xlu0 %v1437, 64
    %v1444 = vpop.permute.xlu0 %1443
    %1445 = vrot.lane.b32.xlu0 %v1438, 64
    %v1446 = vpop.permute.xlu0 %1445
    %v1449 = vmul.f32 %v1421, %v1444
    %v1450 = vmul.f32 %v1436, %v1446
    %1453 = vrot.lane.b32.xlu0 %v1449, 32
    %v1454 = vpop.permute.xlu0 %1453
    %1455 = vrot.lane.b32.xlu0 %v1450, 32
    %v1456 = vpop.permute.xlu0 %1455
    %v1459 = vadd.f32 %v1439, %v1454
    %v1460 = vadd.f32 %v1440, %v1456
    %v1461 = vtanh.pop %v1459
    %v1462 = vtanh.pop %v1460
    %1465 = vrot.lane.b32.xlu0 %v1461, 64
    %v1466 = vpop.permute.xlu0 %1465
    %1467 = vrot.lane.b32.xlu0 %v1462, 64
    %v1468 = vpop.permute.xlu0 %1467
    %v1471 = vmul.f32 %v1421, %v1466
    %v1472 = vmul.f32 %v1436, %v1468
    %1475 = vrot.lane.b32.xlu0 %v1471, 32
    %v1476 = vpop.permute.xlu0 %1475
    %1477 = vrot.lane.b32.xlu0 %v1472, 32
    %v1478 = vpop.permute.xlu0 %1477
    %1481 = vst.msk [vmem:[#allocation5 + $0x1] sm:$0x1] %vm347, %v1476
    %1482 = vst.msk [vmem:[#allocation5 + $0x9] sm:$0x1] %vm347, %v1478
    %v1483 = vld [vmem:[#allocation4 + $0x2] sm:$0x1]
    %v1484 = vld [vmem:[#allocation4 + $0xa] sm:$0x1]
    %v1485 = vrot.slane %v1472, 7
    %v1486 = vsel %vm353, %v1485, %v1471
    %1487 = vrot.lane.b32.xlu0 %v1486, 32
    %v1488 = vpop.permute.xlu0 %1487
    %v1489 = vsel %vm188, %v1488, 0
    %1491 = vmatpush.msra.mxu0 0.0
    %1492 = vmatpush.msra.mxu0 0.0
    %1493 = vmatpush.msra.mxu0 0.0
    %1494 = vmatpush.msra.mxu0 0.0
    %1495 = vmatpush.msra.mxu0 0.0
    %1496 = vmatpush.msra.mxu0 0.0
    %1497 = vmatpush.msra.mxu0 0.0
    %1498 = vmatpush.msra.mxu0 0.0
    %1499 = vmatpush.msra.mxu0 0.0
    %1500 = vmatpush.msra.mxu0 0.0
    %1501 = vmatpush.msra.mxu0 0.0
    %1502 = vmatpush.msra.mxu0 0.0
    %1503 = vmatpush.msra.mxu0 %v1237
    %1504 = vmatpush.msra.mxu0 %v1236
    %1505 = vmatpush.msra.mxu0 %v1235
    %1506 = vmatpush.msra.mxu0 %v1234
    %1507 = vmatmul.f32.gmra.mxu0 %v1489
    %v1508 = vpop.f32.mrf.mxu0
    %v1509 = vadd.f32 0.0, %v1508
    %1510 = vdwg.mxu0
    %v1512 = vrot.slane %v1509, 1
    %v1515 = vadd.f32 %v1483, %v1509
    %v1516 = vadd.f32 %v1484, %v1512
    %v1517 = vxor.u32 %v1515, 2147483648
    %v1518 = vxor.u32 %v1516, 2147483648
    %v1519 = vmul.f32 %v1517, 1.442695
    %v1520 = vpow.pop %v1519
    %v1521 = vmul.f32 %v1518, 1.442695
    %v1522 = vpow.pop %v1521
    %v1523 = vadd.f32 %v1520, 1.0
    %v1524 = vadd.f32 %v1522, 1.0
    %v1525 = vrcp.pop %v1523
    %v1526 = vmul.f32 %v1523, %v1525
    %v1527 = vsub.f32 1.0, %v1526
    %v1528 = vmul.f32 %v1525, %v1527
    %v1529 = vadd.f32 %v1525, %v1528
    %vm1530 = vweird.f32 %v1523
    %vm1531 = vweird.f32 %v1525
    %vm1532 = vmor %vm1530, %vm1531
    %v1533 = vsel %vm1532, %v1525, %v1529
    %v1534 = vand.u32 2147483647, %v1523
    %vm1535 = vcmp.eq.f32.partialorder %v1534, 8.507059e+37
    %v1536 = vand.u32 %v1523, 2147483648
    %v1537 = vor.u32 1.1754944e-38, %v1536
    %v1538 = vsel %vm1535, %v1537, %v1533
    %v1539 = vmul.f32 1.0, %v1538
    %v1540 = vrcp.pop %v1524
    %v1541 = vmul.f32 %v1524, %v1540
    %v1542 = vsub.f32 1.0, %v1541
    %v1543 = vmul.f32 %v1540, %v1542
    %v1544 = vadd.f32 %v1540, %v1543
    %vm1545 = vweird.f32 %v1524
    %vm1546 = vweird.f32 %v1540
    %vm1547 = vmor %vm1545, %vm1546
    %v1548 = vsel %vm1547, %v1540, %v1544
    %v1549 = vand.u32 2147483647, %v1524
    %vm1550 = vcmp.eq.f32.partialorder %v1549, 8.507059e+37
    %v1551 = vand.u32 %v1524, 2147483648
    %v1552 = vor.u32 1.1754944e-38, %v1551
    %v1553 = vsel %vm1550, %v1552, %v1548
    %v1554 = vmul.f32 1.0, %v1553
    %v1555 = vtanh.pop %v1515
    %v1556 = vtanh.pop %v1516
    %v1557 = vmul.f32 %v1539, %v1459
    %v1558 = vmul.f32 %v1554, %v1460
    %1561 = vrot.lane.b32.xlu0 %v1555, 64
    %v1562 = vpop.permute.xlu0 %1561
    %1563 = vrot.lane.b32.xlu0 %v1556, 64
    %v1564 = vpop.permute.xlu0 %1563
    %v1567 = vmul.f32 %v1539, %v1562
    %v1568 = vmul.f32 %v1554, %v1564
    %1571 = vrot.lane.b32.xlu0 %v1567, 32
    %v1572 = vpop.permute.xlu0 %1571
    %1573 = vrot.lane.b32.xlu0 %v1568, 32
    %v1574 = vpop.permute.xlu0 %1573
    %v1577 = vadd.f32 %v1557, %v1572
    %v1578 = vadd.f32 %v1558, %v1574
    %v1579 = vtanh.pop %v1577
    %v1580 = vtanh.pop %v1578
    %1583 = vrot.lane.b32.xlu0 %v1579, 64
    %v1584 = vpop.permute.xlu0 %1583
    %1585 = vrot.lane.b32.xlu0 %v1580, 64
    %v1586 = vpop.permute.xlu0 %1585
    %v1589 = vmul.f32 %v1539, %v1584
    %v1590 = vmul.f32 %v1554, %v1586
    %1593 = vrot.lane.b32.xlu0 %v1589, 32
    %v1594 = vpop.permute.xlu0 %1593
    %1595 = vrot.lane.b32.xlu0 %v1590, 32
    %v1596 = vpop.permute.xlu0 %1595
    %1599 = vst.msk [vmem:[#allocation5 + $0x2] sm:$0x1] %vm347, %v1594
    %1600 = vst.msk [vmem:[#allocation5 + $0xa] sm:$0x1] %vm347, %v1596
    %v1601 = vld [vmem:[#allocation4 + $0x3] sm:$0x1]
    %v1602 = vld [vmem:[#allocation4 + $0xb] sm:$0x1]
    %v1603 = vrot.slane %v1590, 7
    %v1604 = vsel %vm353, %v1603, %v1589
    %1605 = vrot.lane.b32.xlu0 %v1604, 32
    %v1606 = vpop.permute.xlu0 %1605
    %v1607 = vsel %vm188, %v1606, 0
    %1609 = vmatpush.msra.mxu0 0.0
    %1610 = vmatpush.msra.mxu0 0.0
    %1611 = vmatpush.msra.mxu0 0.0
    %1612 = vmatpush.msra.mxu0 0.0
    %1613 = vmatpush.msra.mxu0 0.0
    %1614 = vmatpush.msra.mxu0 0.0
    %1615 = vmatpush.msra.mxu0 0.0
    %1616 = vmatpush.msra.mxu0 0.0
    %1617 = vmatpush.msra.mxu0 0.0
    %1618 = vmatpush.msra.mxu0 0.0
    %1619 = vmatpush.msra.mxu0 0.0
    %1620 = vmatpush.msra.mxu0 0.0
    %1621 = vmatpush.msra.mxu0 %v1237
    %1622 = vmatpush.msra.mxu0 %v1236
    %1623 = vmatpush.msra.mxu0 %v1235
    %1624 = vmatpush.msra.mxu0 %v1234
    %1625 = vmatmul.f32.gmra.mxu0 %v1607
    %v1626 = vpop.f32.mrf.mxu0
    %v1627 = vadd.f32 0.0, %v1626
    %1628 = vdwg.mxu0
    %v1630 = vrot.slane %v1627, 1
    %v1633 = vadd.f32 %v1601, %v1627
    %v1634 = vadd.f32 %v1602, %v1630
    %v1635 = vxor.u32 %v1633, 2147483648
    %v1636 = vxor.u32 %v1634, 2147483648
    %v1637 = vmul.f32 %v1635, 1.442695
    %v1638 = vpow.pop %v1637
    %v1639 = vmul.f32 %v1636, 1.442695
    %v1640 = vpow.pop %v1639
    %v1641 = vadd.f32 %v1638, 1.0
    %v1642 = vadd.f32 %v1640, 1.0
    %v1643 = vrcp.pop %v1641
    %v1644 = vmul.f32 %v1641, %v1643
    %v1645 = vsub.f32 1.0, %v1644
    %v1646 = vmul.f32 %v1643, %v1645
    %v1647 = vadd.f32 %v1643, %v1646
    %vm1648 = vweird.f32 %v1641
    %vm1649 = vweird.f32 %v1643
    %vm1650 = vmor %vm1648, %vm1649
    %v1651 = vsel %vm1650, %v1643, %v1647
    %v1652 = vand.u32 2147483647, %v1641
    %vm1653 = vcmp.eq.f32.partialorder %v1652, 8.507059e+37
    %v1654 = vand.u32 %v1641, 2147483648
    %v1655 = vor.u32 1.1754944e-38, %v1654
    %v1656 = vsel %vm1653, %v1655, %v1651
    %v1657 = vmul.f32 1.0, %v1656
    %v1658 = vrcp.pop %v1642
    %v1659 = vmul.f32 %v1642, %v1658
    %v1660 = vsub.f32 1.0, %v1659
    %v1661 = vmul.f32 %v1658, %v1660
    %v1662 = vadd.f32 %v1658, %v1661
    %vm1663 = vweird.f32 %v1642
    %vm1664 = vweird.f32 %v1658
    %vm1665 = vmor %vm1663, %vm1664
    %v1666 = vsel %vm1665, %v1658, %v1662
    %v1667 = vand.u32 2147483647, %v1642
    %vm1668 = vcmp.eq.f32.partialorder %v1667, 8.507059e+37
    %v1669 = vand.u32 %v1642, 2147483648
    %v1670 = vor.u32 1.1754944e-38, %v1669
    %v1671 = vsel %vm1668, %v1670, %v1666
    %v1672 = vmul.f32 1.0, %v1671
    %v1673 = vtanh.pop %v1633
    %v1674 = vtanh.pop %v1634
    %v1675 = vmul.f32 %v1657, %v1577
    %v1676 = vmul.f32 %v1672, %v1578
    %1679 = vrot.lane.b32.xlu0 %v1673, 64
    %v1680 = vpop.permute.xlu0 %1679
    %1681 = vrot.lane.b32.xlu0 %v1674, 64
    %v1682 = vpop.permute.xlu0 %1681
    %v1685 = vmul.f32 %v1657, %v1680
    %v1686 = vmul.f32 %v1672, %v1682
    %1689 = vrot.lane.b32.xlu0 %v1685, 32
    %v1690 = vpop.permute.xlu0 %1689
    %1691 = vrot.lane.b32.xlu0 %v1686, 32
    %v1692 = vpop.permute.xlu0 %1691
    %v1695 = vadd.f32 %v1675, %v1690
    %v1696 = vadd.f32 %v1676, %v1692
    %v1697 = vtanh.pop %v1695
    %v1698 = vtanh.pop %v1696
    %1701 = vrot.lane.b32.xlu0 %v1697, 64
    %v1702 = vpop.permute.xlu0 %1701
    %1703 = vrot.lane.b32.xlu0 %v1698, 64
    %v1704 = vpop.permute.xlu0 %1703
    %v1707 = vmul.f32 %v1657, %v1702
    %v1708 = vmul.f32 %v1672, %v1704
    %1711 = vrot.lane.b32.xlu0 %v1707, 32
    %v1712 = vpop.permute.xlu0 %1711
    %1713 = vrot.lane.b32.xlu0 %v1708, 32
    %v1714 = vpop.permute.xlu0 %1713
    %1717 = vst.msk [vmem:[#allocation5 + $0x3] sm:$0x1] %vm347, %v1712
    %1718 = vst.msk [vmem:[#allocation5 + $0xb] sm:$0x1] %vm347, %v1714
    %v1719 = vld [vmem:[#allocation4 + $0x4] sm:$0x1]
    %v1720 = vld [vmem:[#allocation4 + $0xc] sm:$0x1]
    %v1721 = vrot.slane %v1708, 7
    %v1722 = vsel %vm353, %v1721, %v1707
    %1723 = vrot.lane.b32.xlu0 %v1722, 32
    %v1724 = vpop.permute.xlu0 %1723
    %v1725 = vsel %vm188, %v1724, 0
    %1727 = vmatpush.msra.mxu0 0.0
    %1728 = vmatpush.msra.mxu0 0.0
    %1729 = vmatpush.msra.mxu0 0.0
    %1730 = vmatpush.msra.mxu0 0.0
    %1731 = vmatpush.msra.mxu0 0.0
    %1732 = vmatpush.msra.mxu0 0.0
    %1733 = vmatpush.msra.mxu0 0.0
    %1734 = vmatpush.msra.mxu0 0.0
    %1735 = vmatpush.msra.mxu0 0.0
    %1736 = vmatpush.msra.mxu0 0.0
    %1737 = vmatpush.msra.mxu0 0.0
    %1738 = vmatpush.msra.mxu0 0.0
    %1739 = vmatpush.msra.mxu0 %v1237
    %1740 = vmatpush.msra.mxu0 %v1236
    %1741 = vmatpush.msra.mxu0 %v1235
    %1742 = vmatpush.msra.mxu0 %v1234
    %1743 = vmatmul.f32.gmra.mxu0 %v1725
    %v1744 = vpop.f32.mrf.mxu0
    %v1745 = vadd.f32 0.0, %v1744
    %1746 = vdwg.mxu0
    %v1748 = vrot.slane %v1745, 1
    %v1751 = vadd.f32 %v1719, %v1745
    %v1752 = vadd.f32 %v1720, %v1748
    %v1753 = vxor.u32 %v1751, 2147483648
    %v1754 = vxor.u32 %v1752, 2147483648
    %v1755 = vmul.f32 %v1753, 1.442695
    %v1756 = vpow.pop %v1755
    %v1757 = vmul.f32 %v1754, 1.442695
    %v1758 = vpow.pop %v1757
    %v1759 = vadd.f32 %v1756, 1.0
    %v1760 = vadd.f32 %v1758, 1.0
    %v1761 = vrcp.pop %v1759
    %v1762 = vmul.f32 %v1759, %v1761
    %v1763 = vsub.f32 1.0, %v1762
    %v1764 = vmul.f32 %v1761, %v1763
    %v1765 = vadd.f32 %v1761, %v1764
    %vm1766 = vweird.f32 %v1759
    %vm1767 = vweird.f32 %v1761
    %vm1768 = vmor %vm1766, %vm1767
    %v1769 = vsel %vm1768, %v1761, %v1765
    %v1770 = vand.u32 2147483647, %v1759
    %vm1771 = vcmp.eq.f32.partialorder %v1770, 8.507059e+37
    %v1772 = vand.u32 %v1759, 2147483648
    %v1773 = vor.u32 1.1754944e-38, %v1772
    %v1774 = vsel %vm1771, %v1773, %v1769
    %v1775 = vmul.f32 1.0, %v1774
    %v1776 = vrcp.pop %v1760
    %v1777 = vmul.f32 %v1760, %v1776
    %v1778 = vsub.f32 1.0, %v1777
    %v1779 = vmul.f32 %v1776, %v1778
    %v1780 = vadd.f32 %v1776, %v1779
    %vm1781 = vweird.f32 %v1760
    %vm1782 = vweird.f32 %v1776
    %vm1783 = vmor %vm1781, %vm1782
    %v1784 = vsel %vm1783, %v1776, %v1780
    %v1785 = vand.u32 2147483647, %v1760
    %vm1786 = vcmp.eq.f32.partialorder %v1785, 8.507059e+37
    %v1787 = vand.u32 %v1760, 2147483648
    %v1788 = vor.u32 1.1754944e-38, %v1787
    %v1789 = vsel %vm1786, %v1788, %v1784
    %v1790 = vmul.f32 1.0, %v1789
    %v1791 = vtanh.pop %v1751
    %v1792 = vtanh.pop %v1752
    %v1793 = vmul.f32 %v1775, %v1695
    %v1794 = vmul.f32 %v1790, %v1696
    %1797 = vrot.lane.b32.xlu0 %v1791, 64
    %v1798 = vpop.permute.xlu0 %1797
    %1799 = vrot.lane.b32.xlu0 %v1792, 64
    %v1800 = vpop.permute.xlu0 %1799
    %v1803 = vmul.f32 %v1775, %v1798
    %v1804 = vmul.f32 %v1790, %v1800
    %1807 = vrot.lane.b32.xlu0 %v1803, 32
    %v1808 = vpop.permute.xlu0 %1807
    %1809 = vrot.lane.b32.xlu0 %v1804, 32
    %v1810 = vpop.permute.xlu0 %1809
    %v1813 = vadd.f32 %v1793, %v1808
    %v1814 = vadd.f32 %v1794, %v1810
    %v1815 = vtanh.pop %v1813
    %v1816 = vtanh.pop %v1814
    %1819 = vrot.lane.b32.xlu0 %v1815, 64
    %v1820 = vpop.permute.xlu0 %1819
    %1821 = vrot.lane.b32.xlu0 %v1816, 64
    %v1822 = vpop.permute.xlu0 %1821
    %v1825 = vmul.f32 %v1775, %v1820
    %v1826 = vmul.f32 %v1790, %v1822
    %1829 = vrot.lane.b32.xlu0 %v1825, 32
    %v1830 = vpop.permute.xlu0 %1829
    %1831 = vrot.lane.b32.xlu0 %v1826, 32
    %v1832 = vpop.permute.xlu0 %1831
    %1835 = vst.msk [vmem:[#allocation5 + $0x4] sm:$0x1] %vm347, %v1830
    %1836 = vst.msk [vmem:[#allocation5 + $0xc] sm:$0x1] %vm347, %v1832
    %v1837 = vld [vmem:[#allocation4 + $0x5] sm:$0x1]
    %v1838 = vld [vmem:[#allocation4 + $0xd] sm:$0x1]
    %v1839 = vrot.slane %v1826, 7
    %v1840 = vsel %vm353, %v1839, %v1825
    %1841 = vrot.lane.b32.xlu0 %v1840, 32
    %v1842 = vpop.permute.xlu0 %1841
    %v1843 = vsel %vm188, %v1842, 0
    %1845 = vmatpush.msra.mxu0 0.0
    %1846 = vmatpush.msra.mxu0 0.0
    %1847 = vmatpush.msra.mxu0 0.0
    %1848 = vmatpush.msra.mxu0 0.0
    %1849 = vmatpush.msra.mxu0 0.0
    %1850 = vmatpush.msra.mxu0 0.0
    %1851 = vmatpush.msra.mxu0 0.0
    %1852 = vmatpush.msra.mxu0 0.0
    %1853 = vmatpush.msra.mxu0 0.0
    %1854 = vmatpush.msra.mxu0 0.0
    %1855 = vmatpush.msra.mxu0 0.0
    %1856 = vmatpush.msra.mxu0 0.0
    %1857 = vmatpush.msra.mxu0 %v1237
    %1858 = vmatpush.msra.mxu0 %v1236
    %1859 = vmatpush.msra.mxu0 %v1235
    %1860 = vmatpush.msra.mxu0 %v1234
    %1861 = vmatmul.f32.gmra.mxu0 %v1843
    %v1862 = vpop.f32.mrf.mxu0
    %v1863 = vadd.f32 0.0, %v1862
    %1864 = vdwg.mxu0
    %v1866 = vrot.slane %v1863, 1
    %v1869 = vadd.f32 %v1837, %v1863
    %v1870 = vadd.f32 %v1838, %v1866
    %v1871 = vxor.u32 %v1869, 2147483648
    %v1872 = vxor.u32 %v1870, 2147483648
    %v1873 = vmul.f32 %v1871, 1.442695
    %v1874 = vpow.pop %v1873
    %v1875 = vmul.f32 %v1872, 1.442695
    %v1876 = vpow.pop %v1875
    %v1877 = vadd.f32 %v1874, 1.0
    %v1878 = vadd.f32 %v1876, 1.0
    %v1879 = vrcp.pop %v1877
    %v1880 = vmul.f32 %v1877, %v1879
    %v1881 = vsub.f32 1.0, %v1880
    %v1882 = vmul.f32 %v1879, %v1881
    %v1883 = vadd.f32 %v1879, %v1882
    %vm1884 = vweird.f32 %v1877
    %vm1885 = vweird.f32 %v1879
    %vm1886 = vmor %vm1884, %vm1885
    %v1887 = vsel %vm1886, %v1879, %v1883
    %v1888 = vand.u32 2147483647, %v1877
    %vm1889 = vcmp.eq.f32.partialorder %v1888, 8.507059e+37
    %v1890 = vand.u32 %v1877, 2147483648
    %v1891 = vor.u32 1.1754944e-38, %v1890
    %v1892 = vsel %vm1889, %v1891, %v1887
    %v1893 = vmul.f32 1.0, %v1892
    %v1894 = vrcp.pop %v1878
    %v1895 = vmul.f32 %v1878, %v1894
    %v1896 = vsub.f32 1.0, %v1895
    %v1897 = vmul.f32 %v1894, %v1896
    %v1898 = vadd.f32 %v1894, %v1897
    %vm1899 = vweird.f32 %v1878
    %vm1900 = vweird.f32 %v1894
    %vm1901 = vmor %vm1899, %vm1900
    %v1902 = vsel %vm1901, %v1894, %v1898
    %v1903 = vand.u32 2147483647, %v1878
    %vm1904 = vcmp.eq.f32.partialorder %v1903, 8.507059e+37
    %v1905 = vand.u32 %v1878, 2147483648
    %v1906 = vor.u32 1.1754944e-38, %v1905
    %v1907 = vsel %vm1904, %v1906, %v1902
    %v1908 = vmul.f32 1.0, %v1907
    %v1909 = vtanh.pop %v1869
    %v1910 = vtanh.pop %v1870
    %v1911 = vmul.f32 %v1893, %v1813
    %v1912 = vmul.f32 %v1908, %v1814
    %1915 = vrot.lane.b32.xlu0 %v1909, 64
    %v1916 = vpop.permute.xlu0 %1915
    %1917 = vrot.lane.b32.xlu0 %v1910, 64
    %v1918 = vpop.permute.xlu0 %1917
    %v1921 = vmul.f32 %v1893, %v1916
    %v1922 = vmul.f32 %v1908, %v1918
    %1925 = vrot.lane.b32.xlu0 %v1921, 32
    %v1926 = vpop.permute.xlu0 %1925
    %1927 = vrot.lane.b32.xlu0 %v1922, 32
    %v1928 = vpop.permute.xlu0 %1927
    %v1931 = vadd.f32 %v1911, %v1926
    %v1932 = vadd.f32 %v1912, %v1928
    %v1933 = vtanh.pop %v1931
    %v1934 = vtanh.pop %v1932
    %1937 = vrot.lane.b32.xlu0 %v1933, 64
    %v1938 = vpop.permute.xlu0 %1937
    %1939 = vrot.lane.b32.xlu0 %v1934, 64
    %v1940 = vpop.permute.xlu0 %1939
    %v1943 = vmul.f32 %v1893, %v1938
    %v1944 = vmul.f32 %v1908, %v1940
    %1947 = vrot.lane.b32.xlu0 %v1943, 32
    %v1948 = vpop.permute.xlu0 %1947
    %1949 = vrot.lane.b32.xlu0 %v1944, 32
    %v1950 = vpop.permute.xlu0 %1949
    %1953 = vst.msk [vmem:[#allocation5 + $0x5] sm:$0x1] %vm347, %v1948
    %1954 = vst.msk [vmem:[#allocation5 + $0xd] sm:$0x1] %vm347, %v1950
    %v1955 = vld [vmem:[#allocation4 + $0x6] sm:$0x1]
    %v1956 = vld [vmem:[#allocation4 + $0xe] sm:$0x1]
    %v1957 = vrot.slane %v1944, 7
    %v1958 = vsel %vm353, %v1957, %v1943
    %1959 = vrot.lane.b32.xlu0 %v1958, 32
    %v1960 = vpop.permute.xlu0 %1959
    %v1961 = vsel %vm188, %v1960, 0
    %1963 = vmatpush.msra.mxu0 0.0
    %1964 = vmatpush.msra.mxu0 0.0
    %1965 = vmatpush.msra.mxu0 0.0
    %1966 = vmatpush.msra.mxu0 0.0
    %1967 = vmatpush.msra.mxu0 0.0
    %1968 = vmatpush.msra.mxu0 0.0
    %1969 = vmatpush.msra.mxu0 0.0
    %1970 = vmatpush.msra.mxu0 0.0
    %1971 = vmatpush.msra.mxu0 0.0
    %1972 = vmatpush.msra.mxu0 0.0
    %1973 = vmatpush.msra.mxu0 0.0
    %1974 = vmatpush.msra.mxu0 0.0
    %1975 = vmatpush.msra.mxu0 %v1237
    %1976 = vmatpush.msra.mxu0 %v1236
    %1977 = vmatpush.msra.mxu0 %v1235
    %1978 = vmatpush.msra.mxu0 %v1234
    %1979 = vmatmul.f32.gmra.mxu0 %v1961
    %v1980 = vpop.f32.mrf.mxu0
    %v1981 = vadd.f32 0.0, %v1980
    %1982 = vdwg.mxu0
    %v1984 = vrot.slane %v1981, 1
    %v1987 = vadd.f32 %v1955, %v1981
    %v1988 = vadd.f32 %v1956, %v1984
    %v1989 = vxor.u32 %v1987, 2147483648
    %v1990 = vxor.u32 %v1988, 2147483648
    %v1991 = vmul.f32 %v1989, 1.442695
    %v1992 = vpow.pop %v1991
    %v1993 = vmul.f32 %v1990, 1.442695
    %v1994 = vpow.pop %v1993
    %v1995 = vadd.f32 %v1992, 1.0
    %v1996 = vadd.f32 %v1994, 1.0
    %v1997 = vrcp.pop %v1995
    %v1998 = vmul.f32 %v1995, %v1997
    %v1999 = vsub.f32 1.0, %v1998
    %v2000 = vmul.f32 %v1997, %v1999
    %v2001 = vadd.f32 %v1997, %v2000
    %vm2002 = vweird.f32 %v1995
    %vm2003 = vweird.f32 %v1997
    %vm2004 = vmor %vm2002, %vm2003
    %v2005 = vsel %vm2004, %v1997, %v2001
    %v2006 = vand.u32 2147483647, %v1995
    %vm2007 = vcmp.eq.f32.partialorder %v2006, 8.507059e+37
    %v2008 = vand.u32 %v1995, 2147483648
    %v2009 = vor.u32 1.1754944e-38, %v2008
    %v2010 = vsel %vm2007, %v2009, %v2005
    %v2011 = vmul.f32 1.0, %v2010
    %v2012 = vrcp.pop %v1996
    %v2013 = vmul.f32 %v1996, %v2012
    %v2014 = vsub.f32 1.0, %v2013
    %v2015 = vmul.f32 %v2012, %v2014
    %v2016 = vadd.f32 %v2012, %v2015
    %vm2017 = vweird.f32 %v1996
    %vm2018 = vweird.f32 %v2012
    %vm2019 = vmor %vm2017, %vm2018
    %v2020 = vsel %vm2019, %v2012, %v2016
    %v2021 = vand.u32 2147483647, %v1996
    %vm2022 = vcmp.eq.f32.partialorder %v2021, 8.507059e+37
    %v2023 = vand.u32 %v1996, 2147483648
    %v2024 = vor.u32 1.1754944e-38, %v2023
    %v2025 = vsel %vm2022, %v2024, %v2020
    %v2026 = vmul.f32 1.0, %v2025
    %v2027 = vtanh.pop %v1987
    %v2028 = vtanh.pop %v1988
    %v2029 = vmul.f32 %v2011, %v1931
    %v2030 = vmul.f32 %v2026, %v1932
    %2033 = vrot.lane.b32.xlu0 %v2027, 64
    %v2034 = vpop.permute.xlu0 %2033
    %2035 = vrot.lane.b32.xlu0 %v2028, 64
    %v2036 = vpop.permute.xlu0 %2035
    %v2039 = vmul.f32 %v2011, %v2034
    %v2040 = vmul.f32 %v2026, %v2036
    %2043 = vrot.lane.b32.xlu0 %v2039, 32
    %v2044 = vpop.permute.xlu0 %2043
    %2045 = vrot.lane.b32.xlu0 %v2040, 32
    %v2046 = vpop.permute.xlu0 %2045
    %v2049 = vadd.f32 %v2029, %v2044
    %v2050 = vadd.f32 %v2030, %v2046
    %v2051 = vtanh.pop %v2049
    %v2052 = vtanh.pop %v2050
    %2055 = vrot.lane.b32.xlu0 %v2051, 64
    %v2056 = vpop.permute.xlu0 %2055
    %2057 = vrot.lane.b32.xlu0 %v2052, 64
    %v2058 = vpop.permute.xlu0 %2057
    %v2061 = vmul.f32 %v2011, %v2056
    %v2062 = vmul.f32 %v2026, %v2058
    %2065 = vrot.lane.b32.xlu0 %v2061, 32
    %v2066 = vpop.permute.xlu0 %2065
    %2067 = vrot.lane.b32.xlu0 %v2062, 32
    %v2068 = vpop.permute.xlu0 %2067
    %2071 = vst.msk [vmem:[#allocation5 + $0x6] sm:$0x1] %vm347, %v2066
    %2072 = vst.msk [vmem:[#allocation5 + $0xe] sm:$0x1] %vm347, %v2068
    %v2073 = vld [vmem:[#allocation4 + $0x7] sm:$0x1]
    %v2074 = vld [vmem:[#allocation4 + $0xf] sm:$0x1]
    %v2075 = vrot.slane %v2062, 7
    %v2076 = vsel %vm353, %v2075, %v2061
    %2077 = vrot.lane.b32.xlu0 %v2076, 32
    %v2078 = vpop.permute.xlu0 %2077
    %v2079 = vsel %vm188, %v2078, 0
    %2081 = vmatpush.msra.mxu0 0.0
    %2082 = vmatpush.msra.mxu0 0.0
    %2083 = vmatpush.msra.mxu0 0.0
    %2084 = vmatpush.msra.mxu0 0.0
    %2085 = vmatpush.msra.mxu0 0.0
    %2086 = vmatpush.msra.mxu0 0.0
    %2087 = vmatpush.msra.mxu0 0.0
    %2088 = vmatpush.msra.mxu0 0.0
    %2089 = vmatpush.msra.mxu0 0.0
    %2090 = vmatpush.msra.mxu0 0.0
    %2091 = vmatpush.msra.mxu0 0.0
    %2092 = vmatpush.msra.mxu0 0.0
    %2093 = vmatpush.msra.mxu0 %v1237
    %2094 = vmatpush.msra.mxu0 %v1236
    %2095 = vmatpush.msra.mxu0 %v1235
    %2096 = vmatpush.msra.mxu0 %v1234
    %2097 = vmatmul.f32.gmra.mxu0 %v2079
    %v2098 = vpop.f32.mrf.mxu0
    %v2099 = vadd.f32 0.0, %v2098
    %2100 = vdwg.mxu0
    %v2102 = vrot.slane %v2099, 1
    %v2105 = vadd.f32 %v2073, %v2099
    %v2106 = vadd.f32 %v2074, %v2102
    %v2107 = vxor.u32 %v2105, 2147483648
    %v2108 = vxor.u32 %v2106, 2147483648
    %v2109 = vmul.f32 %v2107, 1.442695
    %v2110 = vpow.pop %v2109
    %v2111 = vmul.f32 %v2108, 1.442695
    %v2112 = vpow.pop %v2111
    %v2113 = vadd.f32 %v2110, 1.0
    %v2114 = vadd.f32 %v2112, 1.0
    %v2115 = vrcp.pop %v2113
    %v2116 = vmul.f32 %v2113, %v2115
    %v2117 = vsub.f32 1.0, %v2116
    %v2118 = vmul.f32 %v2115, %v2117
    %v2119 = vadd.f32 %v2115, %v2118
    %vm2120 = vweird.f32 %v2113
    %vm2121 = vweird.f32 %v2115
    %vm2122 = vmor %vm2120, %vm2121
    %v2123 = vsel %vm2122, %v2115, %v2119
    %v2124 = vand.u32 2147483647, %v2113
    %vm2125 = vcmp.eq.f32.partialorder %v2124, 8.507059e+37
    %v2126 = vand.u32 %v2113, 2147483648
    %v2127 = vor.u32 1.1754944e-38, %v2126
    %v2128 = vsel %vm2125, %v2127, %v2123
    %v2129 = vmul.f32 1.0, %v2128
    %v2130 = vrcp.pop %v2114
    %v2131 = vmul.f32 %v2114, %v2130
    %v2132 = vsub.f32 1.0, %v2131
    %v2133 = vmul.f32 %v2130, %v2132
    %v2134 = vadd.f32 %v2130, %v2133
    %vm2135 = vweird.f32 %v2114
    %vm2136 = vweird.f32 %v2130
    %vm2137 = vmor %vm2135, %vm2136
    %v2138 = vsel %vm2137, %v2130, %v2134
    %v2139 = vand.u32 2147483647, %v2114
    %vm2140 = vcmp.eq.f32.partialorder %v2139, 8.507059e+37
    %v2141 = vand.u32 %v2114, 2147483648
    %v2142 = vor.u32 1.1754944e-38, %v2141
    %v2143 = vsel %vm2140, %v2142, %v2138
    %v2144 = vmul.f32 1.0, %v2143
    %v2145 = vtanh.pop %v2105
    %v2146 = vtanh.pop %v2106
    %v2147 = vmul.f32 %v2129, %v2049
    %v2148 = vmul.f32 %v2144, %v2050
    %2151 = vrot.lane.b32.xlu0 %v2145, 64
    %v2152 = vpop.permute.xlu0 %2151
    %2153 = vrot.lane.b32.xlu0 %v2146, 64
    %v2154 = vpop.permute.xlu0 %2153
    %v2157 = vmul.f32 %v2129, %v2152
    %v2158 = vmul.f32 %v2144, %v2154
    %2161 = vrot.lane.b32.xlu0 %v2157, 32
    %v2162 = vpop.permute.xlu0 %2161
    %2163 = vrot.lane.b32.xlu0 %v2158, 32
    %v2164 = vpop.permute.xlu0 %2163
    %v2167 = vadd.f32 %v2147, %v2162
    %v2168 = vadd.f32 %v2148, %v2164
    %v2169 = vtanh.pop %v2167
    %v2170 = vtanh.pop %v2168
    %2173 = vrot.lane.b32.xlu0 %v2169, 64
    %v2174 = vpop.permute.xlu0 %2173
    %2175 = vrot.lane.b32.xlu0 %v2170, 64
    %v2176 = vpop.permute.xlu0 %2175
    %v2179 = vmul.f32 %v2129, %v2174
    %v2180 = vmul.f32 %v2144, %v2176
    %2183 = vrot.lane.b32.xlu0 %v2179, 32
    %v2184 = vpop.permute.xlu0 %2183
    %2185 = vrot.lane.b32.xlu0 %v2180, 32
    %v2186 = vpop.permute.xlu0 %2185
    %2189 = vst.msk [vmem:[#allocation5 + $0x7] sm:$0x1] %vm347, %v2184
    %2190 = vst.msk [vmem:[#allocation5 + $0xf] sm:$0x1] %vm347, %v2186
    %v2191 = vrot.slane %v2180, 7
    %v2192 = vsel %vm353, %v2191, %v2179
    %2193 = vrot.lane.b32.xlu0 %v2192, 32
    %v2194 = vpop.permute.xlu0 %2193
    %2196 = vst.msk [vmem:[%s1238] sm:$0x3] %vm1182, %v2194
    %v2199 = vrot.slane %v2168, 7
    %v2200 = vsel %vm353, %v2199, %v2167
    %2201 = vrot.lane.b32.xlu0 %v2200, 96
    %v2202 = vpop.permute.xlu0 %2201
    %2204 = vst.msk [vmem:[%s1240] sm:$0x3] %vm1182, %v2202
    %v2205 = vld [vmem:[#allocation5] sm:$0xff]
    %v2206 = vld [vmem:[#allocation5 + $0x8] sm:$0xff]
    %s2207 = scalar_lea.vmem [#allocation11], 32
    %v2208 = vld [vmem:[%s2207] sm:$0xff]
    %v2209 = vld [vmem:[%s2207 + $0x8] sm:$0xff]
    %v2210 = vld [vmem:[%s2207 + $0x10] sm:$0xff]
    %v2211 = vld [vmem:[%s2207 + $0x18] sm:$0xff]
    %s2212 = scalar_lea.vmem [#allocation15], 1
    %v2213 = vld [vmem:[%s2212] sm:$0x1]
    %v2215 = vperm.slane %v2213, 0
    %v2218 = vsel %vm188, %v2205, 0
    %v2221 = vsel %vm188, %v2206, 0
    %2223 = vmatpush.msra.mxu0 0.0
    %2224 = vmatpush.msra.mxu0 0.0
    %2225 = vmatpush.msra.mxu0 0.0
    %2226 = vmatpush.msra.mxu0 0.0
    %2227 = vmatpush.msra.mxu0 0.0
    %2228 = vmatpush.msra.mxu0 0.0
    %2229 = vmatpush.msra.mxu0 0.0
    %2230 = vmatpush.msra.mxu0 0.0
    %2231 = vmatpush.msra.mxu0 0.0
    %2232 = vmatpush.msra.mxu0 0.0
    %2233 = vmatpush.msra.mxu0 0.0
    %2234 = vmatpush.msra.mxu0 0.0
    %2235 = vmatpush.msra.mxu0 %v2211
    %2236 = vmatpush.msra.mxu0 %v2210
    %2237 = vmatpush.msra.mxu0 %v2209
    %2238 = vmatpush.msra.mxu0 %v2208
    %2239 = vmatmul.f32.gmra.mxu0 %v2218
    %v2240 = vpop.f32.mrf.mxu0
    %v2241 = vadd.f32 %v2215, %v2240
    %2242 = vmatmul.f32.gmra.mxu0 %v2221
    %v2243 = vpop.f32.mrf.mxu0
    %v2244 = vadd.f32 %v2215, %v2243
    %2245 = vdwg.mxu0
    %2246 = vst [vmem:[#allocation4] sm:$0xff] %v2241
    %2247 = vst [vmem:[#allocation4 + $0x8] sm:$0xff] %v2244
    %s2248 = scalar_lea.vmem [#allocation12], 64
    %v2249 = vld [vmem:[%s2248] sm:$0xff]
    %v2250 = vld [vmem:[%s2248 + $0x8] sm:$0xff]
    %v2251 = vld [vmem:[%s2248 + $0x10] sm:$0xff]
    %v2252 = vld [vmem:[%s2248 + $0x18] sm:$0xff]
    %s2253 = scalar_lea.vmem [#allocation2], 4
    %v2254 = vld [vmem:[%s2253] sm:$0x3]
    %s2255 = scalar_lea.vmem [#allocation3], 4
    %v2256 = vld [vmem:[%s2255] sm:$0x3]
    %v2257 = vld [vmem:[#allocation4] sm:$0x1]
    %v2258 = vld [vmem:[#allocation4 + $0x8] sm:$0x1]
    %v2260 = vsel %vm188, %v2254, 0
    %2262 = vmatpush.msra.mxu0 0.0
    %2263 = vmatpush.msra.mxu0 0.0
    %2264 = vmatpush.msra.mxu0 0.0
    %2265 = vmatpush.msra.mxu0 0.0
    %2266 = vmatpush.msra.mxu0 0.0
    %2267 = vmatpush.msra.mxu0 0.0
    %2268 = vmatpush.msra.mxu0 0.0
    %2269 = vmatpush.msra.mxu0 0.0
    %2270 = vmatpush.msra.mxu0 0.0
    %2271 = vmatpush.msra.mxu0 0.0
    %2272 = vmatpush.msra.mxu0 0.0
    %2273 = vmatpush.msra.mxu0 0.0
    %2274 = vmatpush.msra.mxu0 %v2252
    %2275 = vmatpush.msra.mxu0 %v2251
    %2276 = vmatpush.msra.mxu0 %v2250
    %2277 = vmatpush.msra.mxu0 %v2249
    %2278 = vmatmul.f32.gmra.mxu0 %v2260
    %v2279 = vpop.f32.mrf.mxu0
    %v2280 = vadd.f32 0.0, %v2279
    %2281 = vdwg.mxu0
    %v2283 = vrot.slane %v2280, 1
    %v2286 = vadd.f32 %v2257, %v2280
    %v2287 = vadd.f32 %v2258, %v2283
    %v2288 = vxor.u32 %v2286, 2147483648
    %v2289 = vxor.u32 %v2287, 2147483648
    %v2290 = vmul.f32 %v2288, 1.442695
    %v2291 = vpow.pop %v2290
    %v2292 = vmul.f32 %v2289, 1.442695
    %v2293 = vpow.pop %v2292
    %v2294 = vadd.f32 %v2291, 1.0
    %v2295 = vadd.f32 %v2293, 1.0
    %v2296 = vrcp.pop %v2294
    %v2297 = vmul.f32 %v2294, %v2296
    %v2298 = vsub.f32 1.0, %v2297
    %v2299 = vmul.f32 %v2296, %v2298
    %v2300 = vadd.f32 %v2296, %v2299
    %vm2301 = vweird.f32 %v2294
    %vm2302 = vweird.f32 %v2296
    %vm2303 = vmor %vm2301, %vm2302
    %v2304 = vsel %vm2303, %v2296, %v2300
    %v2305 = vand.u32 2147483647, %v2294
    %vm2306 = vcmp.eq.f32.partialorder %v2305, 8.507059e+37
    %v2307 = vand.u32 %v2294, 2147483648
    %v2308 = vor.u32 1.1754944e-38, %v2307
    %v2309 = vsel %vm2306, %v2308, %v2304
    %v2310 = vmul.f32 1.0, %v2309
    %v2311 = vrcp.pop %v2295
    %v2312 = vmul.f32 %v2295, %v2311
    %v2313 = vsub.f32 1.0, %v2312
    %v2314 = vmul.f32 %v2311, %v2313
    %v2315 = vadd.f32 %v2311, %v2314
    %vm2316 = vweird.f32 %v2295
    %vm2317 = vweird.f32 %v2311
    %vm2318 = vmor %vm2316, %vm2317
    %v2319 = vsel %vm2318, %v2311, %v2315
    %v2320 = vand.u32 2147483647, %v2295
    %vm2321 = vcmp.eq.f32.partialorder %v2320, 8.507059e+37
    %v2322 = vand.u32 %v2295, 2147483648
    %v2323 = vor.u32 1.1754944e-38, %v2322
    %v2324 = vsel %vm2321, %v2323, %v2319
    %v2325 = vmul.f32 1.0, %v2324
    %v2326 = vtanh.pop %v2286
    %v2327 = vtanh.pop %v2287
    %v2329 = vrot.slane %v2256, 1
    %2330 = vrot.lane.b32.xlu0 %v2256, 32
    %v2331 = vpop.permute.xlu0 %2330
    %2332 = vrot.lane.b32.xlu0 %v2329, 32
    %v2333 = vpop.permute.xlu0 %2332
    %v2336 = vmul.f32 %v2310, %v2331
    %v2337 = vmul.f32 %v2325, %v2333
    %2340 = vrot.lane.b32.xlu0 %v2326, 64
    %v2341 = vpop.permute.xlu0 %2340
    %2342 = vrot.lane.b32.xlu0 %v2327, 64
    %v2343 = vpop.permute.xlu0 %2342
    %v2346 = vmul.f32 %v2310, %v2341
    %v2347 = vmul.f32 %v2325, %v2343
    %2350 = vrot.lane.b32.xlu0 %v2346, 32
    %v2351 = vpop.permute.xlu0 %2350
    %2352 = vrot.lane.b32.xlu0 %v2347, 32
    %v2353 = vpop.permute.xlu0 %2352
    %v2356 = vadd.f32 %v2336, %v2351
    %v2357 = vadd.f32 %v2337, %v2353
    %v2358 = vtanh.pop %v2356
    %v2359 = vtanh.pop %v2357
    %2362 = vrot.lane.b32.xlu0 %v2358, 64
    %v2363 = vpop.permute.xlu0 %2362
    %2364 = vrot.lane.b32.xlu0 %v2359, 64
    %v2365 = vpop.permute.xlu0 %2364
    %v2368 = vmul.f32 %v2310, %v2363
    %v2369 = vmul.f32 %v2325, %v2365
    %2372 = vrot.lane.b32.xlu0 %v2368, 32
    %v2373 = vpop.permute.xlu0 %2372
    %2374 = vrot.lane.b32.xlu0 %v2369, 32
    %v2375 = vpop.permute.xlu0 %2374
    %2378 = vst.msk [vmem:[#allocation5] sm:$0x1] %vm347, %v2373
    %2379 = vst.msk [vmem:[#allocation5 + $0x8] sm:$0x1] %vm347, %v2375
    %v2380 = vld [vmem:[#allocation4 + $0x1] sm:$0x1]
    %v2381 = vld [vmem:[#allocation4 + $0x9] sm:$0x1]
    %v2382 = vrot.slane %v2369, 7
    %v2383 = vsel %vm353, %v2382, %v2368
    %2384 = vrot.lane.b32.xlu0 %v2383, 32
    %v2385 = vpop.permute.xlu0 %2384
    %v2386 = vsel %vm188, %v2385, 0
    %2388 = vmatpush.msra.mxu0 0.0
    %2389 = vmatpush.msra.mxu0 0.0
    %2390 = vmatpush.msra.mxu0 0.0
    %2391 = vmatpush.msra.mxu0 0.0
    %2392 = vmatpush.msra.mxu0 0.0
    %2393 = vmatpush.msra.mxu0 0.0
    %2394 = vmatpush.msra.mxu0 0.0
    %2395 = vmatpush.msra.mxu0 0.0
    %2396 = vmatpush.msra.mxu0 0.0
    %2397 = vmatpush.msra.mxu0 0.0
    %2398 = vmatpush.msra.mxu0 0.0
    %2399 = vmatpush.msra.mxu0 0.0
    %2400 = vmatpush.msra.mxu0 %v2252
    %2401 = vmatpush.msra.mxu0 %v2251
    %2402 = vmatpush.msra.mxu0 %v2250
    %2403 = vmatpush.msra.mxu0 %v2249
    %2404 = vmatmul.f32.gmra.mxu0 %v2386
    %v2405 = vpop.f32.mrf.mxu0
    %v2406 = vadd.f32 0.0, %v2405
    %2407 = vdwg.mxu0
    %v2409 = vrot.slane %v2406, 1
    %v2412 = vadd.f32 %v2380, %v2406
    %v2413 = vadd.f32 %v2381, %v2409
    %v2414 = vxor.u32 %v2412, 2147483648
    %v2415 = vxor.u32 %v2413, 2147483648
    %v2416 = vmul.f32 %v2414, 1.442695
    %v2417 = vpow.pop %v2416
    %v2418 = vmul.f32 %v2415, 1.442695
    %v2419 = vpow.pop %v2418
    %v2420 = vadd.f32 %v2417, 1.0
    %v2421 = vadd.f32 %v2419, 1.0
    %v2422 = vrcp.pop %v2420
    %v2423 = vmul.f32 %v2420, %v2422
    %v2424 = vsub.f32 1.0, %v2423
    %v2425 = vmul.f32 %v2422, %v2424
    %v2426 = vadd.f32 %v2422, %v2425
    %vm2427 = vweird.f32 %v2420
    %vm2428 = vweird.f32 %v2422
    %vm2429 = vmor %vm2427, %vm2428
    %v2430 = vsel %vm2429, %v2422, %v2426
    %v2431 = vand.u32 2147483647, %v2420
    %vm2432 = vcmp.eq.f32.partialorder %v2431, 8.507059e+37
    %v2433 = vand.u32 %v2420, 2147483648
    %v2434 = vor.u32 1.1754944e-38, %v2433
    %v2435 = vsel %vm2432, %v2434, %v2430
    %v2436 = vmul.f32 1.0, %v2435
    %v2437 = vrcp.pop %v2421
    %v2438 = vmul.f32 %v2421, %v2437
    %v2439 = vsub.f32 1.0, %v2438
    %v2440 = vmul.f32 %v2437, %v2439
    %v2441 = vadd.f32 %v2437, %v2440
    %vm2442 = vweird.f32 %v2421
    %vm2443 = vweird.f32 %v2437
    %vm2444 = vmor %vm2442, %vm2443
    %v2445 = vsel %vm2444, %v2437, %v2441
    %v2446 = vand.u32 2147483647, %v2421
    %vm2447 = vcmp.eq.f32.partialorder %v2446, 8.507059e+37
    %v2448 = vand.u32 %v2421, 2147483648
    %v2449 = vor.u32 1.1754944e-38, %v2448
    %v2450 = vsel %vm2447, %v2449, %v2445
    %v2451 = vmul.f32 1.0, %v2450
    %v2452 = vtanh.pop %v2412
    %v2453 = vtanh.pop %v2413
    %v2454 = vmul.f32 %v2436, %v2356
    %v2455 = vmul.f32 %v2451, %v2357
    %2458 = vrot.lane.b32.xlu0 %v2452, 64
    %v2459 = vpop.permute.xlu0 %2458
    %2460 = vrot.lane.b32.xlu0 %v2453, 64
    %v2461 = vpop.permute.xlu0 %2460
    %v2464 = vmul.f32 %v2436, %v2459
    %v2465 = vmul.f32 %v2451, %v2461
    %2468 = vrot.lane.b32.xlu0 %v2464, 32
    %v2469 = vpop.permute.xlu0 %2468
    %2470 = vrot.lane.b32.xlu0 %v2465, 32
    %v2471 = vpop.permute.xlu0 %2470
    %v2474 = vadd.f32 %v2454, %v2469
    %v2475 = vadd.f32 %v2455, %v2471
    %v2476 = vtanh.pop %v2474
    %v2477 = vtanh.pop %v2475
    %2480 = vrot.lane.b32.xlu0 %v2476, 64
    %v2481 = vpop.permute.xlu0 %2480
    %2482 = vrot.lane.b32.xlu0 %v2477, 64
    %v2483 = vpop.permute.xlu0 %2482
    %v2486 = vmul.f32 %v2436, %v2481
    %v2487 = vmul.f32 %v2451, %v2483
    %2490 = vrot.lane.b32.xlu0 %v2486, 32
    %v2491 = vpop.permute.xlu0 %2490
    %2492 = vrot.lane.b32.xlu0 %v2487, 32
    %v2493 = vpop.permute.xlu0 %2492
    %2496 = vst.msk [vmem:[#allocation5 + $0x1] sm:$0x1] %vm347, %v2491
    %2497 = vst.msk [vmem:[#allocation5 + $0x9] sm:$0x1] %vm347, %v2493
    %v2498 = vld [vmem:[#allocation4 + $0x2] sm:$0x1]
    %v2499 = vld [vmem:[#allocation4 + $0xa] sm:$0x1]
    %v2500 = vrot.slane %v2487, 7
    %v2501 = vsel %vm353, %v2500, %v2486
    %2502 = vrot.lane.b32.xlu0 %v2501, 32
    %v2503 = vpop.permute.xlu0 %2502
    %v2504 = vsel %vm188, %v2503, 0
    %2506 = vmatpush.msra.mxu0 0.0
    %2507 = vmatpush.msra.mxu0 0.0
    %2508 = vmatpush.msra.mxu0 0.0
    %2509 = vmatpush.msra.mxu0 0.0
    %2510 = vmatpush.msra.mxu0 0.0
    %2511 = vmatpush.msra.mxu0 0.0
    %2512 = vmatpush.msra.mxu0 0.0
    %2513 = vmatpush.msra.mxu0 0.0
    %2514 = vmatpush.msra.mxu0 0.0
    %2515 = vmatpush.msra.mxu0 0.0
    %2516 = vmatpush.msra.mxu0 0.0
    %2517 = vmatpush.msra.mxu0 0.0
    %2518 = vmatpush.msra.mxu0 %v2252
    %2519 = vmatpush.msra.mxu0 %v2251
    %2520 = vmatpush.msra.mxu0 %v2250
    %2521 = vmatpush.msra.mxu0 %v2249
    %2522 = vmatmul.f32.gmra.mxu0 %v2504
    %v2523 = vpop.f32.mrf.mxu0
    %v2524 = vadd.f32 0.0, %v2523
    %2525 = vdwg.mxu0
    %v2527 = vrot.slane %v2524, 1
    %v2530 = vadd.f32 %v2498, %v2524
    %v2531 = vadd.f32 %v2499, %v2527
    %v2532 = vxor.u32 %v2530, 2147483648
    %v2533 = vxor.u32 %v2531, 2147483648
    %v2534 = vmul.f32 %v2532, 1.442695
    %v2535 = vpow.pop %v2534
    %v2536 = vmul.f32 %v2533, 1.442695
    %v2537 = vpow.pop %v2536
    %v2538 = vadd.f32 %v2535, 1.0
    %v2539 = vadd.f32 %v2537, 1.0
    %v2540 = vrcp.pop %v2538
    %v2541 = vmul.f32 %v2538, %v2540
    %v2542 = vsub.f32 1.0, %v2541
    %v2543 = vmul.f32 %v2540, %v2542
    %v2544 = vadd.f32 %v2540, %v2543
    %vm2545 = vweird.f32 %v2538
    %vm2546 = vweird.f32 %v2540
    %vm2547 = vmor %vm2545, %vm2546
    %v2548 = vsel %vm2547, %v2540, %v2544
    %v2549 = vand.u32 2147483647, %v2538
    %vm2550 = vcmp.eq.f32.partialorder %v2549, 8.507059e+37
    %v2551 = vand.u32 %v2538, 2147483648
    %v2552 = vor.u32 1.1754944e-38, %v2551
    %v2553 = vsel %vm2550, %v2552, %v2548
    %v2554 = vmul.f32 1.0, %v2553
    %v2555 = vrcp.pop %v2539
    %v2556 = vmul.f32 %v2539, %v2555
    %v2557 = vsub.f32 1.0, %v2556
    %v2558 = vmul.f32 %v2555, %v2557
    %v2559 = vadd.f32 %v2555, %v2558
    %vm2560 = vweird.f32 %v2539
    %vm2561 = vweird.f32 %v2555
    %vm2562 = vmor %vm2560, %vm2561
    %v2563 = vsel %vm2562, %v2555, %v2559
    %v2564 = vand.u32 2147483647, %v2539
    %vm2565 = vcmp.eq.f32.partialorder %v2564, 8.507059e+37
    %v2566 = vand.u32 %v2539, 2147483648
    %v2567 = vor.u32 1.1754944e-38, %v2566
    %v2568 = vsel %vm2565, %v2567, %v2563
    %v2569 = vmul.f32 1.0, %v2568
    %v2570 = vtanh.pop %v2530
    %v2571 = vtanh.pop %v2531
    %v2572 = vmul.f32 %v2554, %v2474
    %v2573 = vmul.f32 %v2569, %v2475
    %2576 = vrot.lane.b32.xlu0 %v2570, 64
    %v2577 = vpop.permute.xlu0 %2576
    %2578 = vrot.lane.b32.xlu0 %v2571, 64
    %v2579 = vpop.permute.xlu0 %2578
    %v2582 = vmul.f32 %v2554, %v2577
    %v2583 = vmul.f32 %v2569, %v2579
    %2586 = vrot.lane.b32.xlu0 %v2582, 32
    %v2587 = vpop.permute.xlu0 %2586
    %2588 = vrot.lane.b32.xlu0 %v2583, 32
    %v2589 = vpop.permute.xlu0 %2588
    %v2592 = vadd.f32 %v2572, %v2587
    %v2593 = vadd.f32 %v2573, %v2589
    %v2594 = vtanh.pop %v2592
    %v2595 = vtanh.pop %v2593
    %2598 = vrot.lane.b32.xlu0 %v2594, 64
    %v2599 = vpop.permute.xlu0 %2598
    %2600 = vrot.lane.b32.xlu0 %v2595, 64
    %v2601 = vpop.permute.xlu0 %2600
    %v2604 = vmul.f32 %v2554, %v2599
    %v2605 = vmul.f32 %v2569, %v2601
    %2608 = vrot.lane.b32.xlu0 %v2604, 32
    %v2609 = vpop.permute.xlu0 %2608
    %2610 = vrot.lane.b32.xlu0 %v2605, 32
    %v2611 = vpop.permute.xlu0 %2610
    %2614 = vst.msk [vmem:[#allocation5 + $0x2] sm:$0x1] %vm347, %v2609
    %2615 = vst.msk [vmem:[#allocation5 + $0xa] sm:$0x1] %vm347, %v2611
    %v2616 = vld [vmem:[#allocation4 + $0x3] sm:$0x1]
    %v2617 = vld [vmem:[#allocation4 + $0xb] sm:$0x1]
    %v2618 = vrot.slane %v2605, 7
    %v2619 = vsel %vm353, %v2618, %v2604
    %2620 = vrot.lane.b32.xlu0 %v2619, 32
    %v2621 = vpop.permute.xlu0 %2620
    %v2622 = vsel %vm188, %v2621, 0
    %2624 = vmatpush.msra.mxu0 0.0
    %2625 = vmatpush.msra.mxu0 0.0
    %2626 = vmatpush.msra.mxu0 0.0
    %2627 = vmatpush.msra.mxu0 0.0
    %2628 = vmatpush.msra.mxu0 0.0
    %2629 = vmatpush.msra.mxu0 0.0
    %2630 = vmatpush.msra.mxu0 0.0
    %2631 = vmatpush.msra.mxu0 0.0
    %2632 = vmatpush.msra.mxu0 0.0
    %2633 = vmatpush.msra.mxu0 0.0
    %2634 = vmatpush.msra.mxu0 0.0
    %2635 = vmatpush.msra.mxu0 0.0
    %2636 = vmatpush.msra.mxu0 %v2252
    %2637 = vmatpush.msra.mxu0 %v2251
    %2638 = vmatpush.msra.mxu0 %v2250
    %2639 = vmatpush.msra.mxu0 %v2249
    %2640 = vmatmul.f32.gmra.mxu0 %v2622
    %v2641 = vpop.f32.mrf.mxu0
    %v2642 = vadd.f32 0.0, %v2641
    %2643 = vdwg.mxu0
    %v2645 = vrot.slane %v2642, 1
    %v2648 = vadd.f32 %v2616, %v2642
    %v2649 = vadd.f32 %v2617, %v2645
    %v2650 = vxor.u32 %v2648, 2147483648
    %v2651 = vxor.u32 %v2649, 2147483648
    %v2652 = vmul.f32 %v2650, 1.442695
    %v2653 = vpow.pop %v2652
    %v2654 = vmul.f32 %v2651, 1.442695
    %v2655 = vpow.pop %v2654
    %v2656 = vadd.f32 %v2653, 1.0
    %v2657 = vadd.f32 %v2655, 1.0
    %v2658 = vrcp.pop %v2656
    %v2659 = vmul.f32 %v2656, %v2658
    %v2660 = vsub.f32 1.0, %v2659
    %v2661 = vmul.f32 %v2658, %v2660
    %v2662 = vadd.f32 %v2658, %v2661
    %vm2663 = vweird.f32 %v2656
    %vm2664 = vweird.f32 %v2658
    %vm2665 = vmor %vm2663, %vm2664
    %v2666 = vsel %vm2665, %v2658, %v2662
    %v2667 = vand.u32 2147483647, %v2656
    %vm2668 = vcmp.eq.f32.partialorder %v2667, 8.507059e+37
    %v2669 = vand.u32 %v2656, 2147483648
    %v2670 = vor.u32 1.1754944e-38, %v2669
    %v2671 = vsel %vm2668, %v2670, %v2666
    %v2672 = vmul.f32 1.0, %v2671
    %v2673 = vrcp.pop %v2657
    %v2674 = vmul.f32 %v2657, %v2673
    %v2675 = vsub.f32 1.0, %v2674
    %v2676 = vmul.f32 %v2673, %v2675
    %v2677 = vadd.f32 %v2673, %v2676
    %vm2678 = vweird.f32 %v2657
    %vm2679 = vweird.f32 %v2673
    %vm2680 = vmor %vm2678, %vm2679
    %v2681 = vsel %vm2680, %v2673, %v2677
    %v2682 = vand.u32 2147483647, %v2657
    %vm2683 = vcmp.eq.f32.partialorder %v2682, 8.507059e+37
    %v2684 = vand.u32 %v2657, 2147483648
    %v2685 = vor.u32 1.1754944e-38, %v2684
    %v2686 = vsel %vm2683, %v2685, %v2681
    %v2687 = vmul.f32 1.0, %v2686
    %v2688 = vtanh.pop %v2648
    %v2689 = vtanh.pop %v2649
    %v2690 = vmul.f32 %v2672, %v2592
    %v2691 = vmul.f32 %v2687, %v2593
    %2694 = vrot.lane.b32.xlu0 %v2688, 64
    %v2695 = vpop.permute.xlu0 %2694
    %2696 = vrot.lane.b32.xlu0 %v2689, 64
    %v2697 = vpop.permute.xlu0 %2696
    %v2700 = vmul.f32 %v2672, %v2695
    %v2701 = vmul.f32 %v2687, %v2697
    %2704 = vrot.lane.b32.xlu0 %v2700, 32
    %v2705 = vpop.permute.xlu0 %2704
    %2706 = vrot.lane.b32.xlu0 %v2701, 32
    %v2707 = vpop.permute.xlu0 %2706
    %v2710 = vadd.f32 %v2690, %v2705
    %v2711 = vadd.f32 %v2691, %v2707
    %v2712 = vtanh.pop %v2710
    %v2713 = vtanh.pop %v2711
    %2716 = vrot.lane.b32.xlu0 %v2712, 64
    %v2717 = vpop.permute.xlu0 %2716
    %2718 = vrot.lane.b32.xlu0 %v2713, 64
    %v2719 = vpop.permute.xlu0 %2718
    %v2722 = vmul.f32 %v2672, %v2717
    %v2723 = vmul.f32 %v2687, %v2719
    %2726 = vrot.lane.b32.xlu0 %v2722, 32
    %v2727 = vpop.permute.xlu0 %2726
    %2728 = vrot.lane.b32.xlu0 %v2723, 32
    %v2729 = vpop.permute.xlu0 %2728
    %2732 = vst.msk [vmem:[#allocation5 + $0x3] sm:$0x1] %vm347, %v2727
    %2733 = vst.msk [vmem:[#allocation5 + $0xb] sm:$0x1] %vm347, %v2729
    %v2734 = vld [vmem:[#allocation4 + $0x4] sm:$0x1]
    %v2735 = vld [vmem:[#allocation4 + $0xc] sm:$0x1]
    %v2736 = vrot.slane %v2723, 7
    %v2737 = vsel %vm353, %v2736, %v2722
    %2738 = vrot.lane.b32.xlu0 %v2737, 32
    %v2739 = vpop.permute.xlu0 %2738
    %v2740 = vsel %vm188, %v2739, 0
    %2742 = vmatpush.msra.mxu0 0.0
    %2743 = vmatpush.msra.mxu0 0.0
    %2744 = vmatpush.msra.mxu0 0.0
    %2745 = vmatpush.msra.mxu0 0.0
    %2746 = vmatpush.msra.mxu0 0.0
    %2747 = vmatpush.msra.mxu0 0.0
    %2748 = vmatpush.msra.mxu0 0.0
    %2749 = vmatpush.msra.mxu0 0.0
    %2750 = vmatpush.msra.mxu0 0.0
    %2751 = vmatpush.msra.mxu0 0.0
    %2752 = vmatpush.msra.mxu0 0.0
    %2753 = vmatpush.msra.mxu0 0.0
    %2754 = vmatpush.msra.mxu0 %v2252
    %2755 = vmatpush.msra.mxu0 %v2251
    %2756 = vmatpush.msra.mxu0 %v2250
    %2757 = vmatpush.msra.mxu0 %v2249
    %2758 = vmatmul.f32.gmra.mxu0 %v2740
    %v2759 = vpop.f32.mrf.mxu0
    %v2760 = vadd.f32 0.0, %v2759
    %2761 = vdwg.mxu0
    %v2763 = vrot.slane %v2760, 1
    %v2766 = vadd.f32 %v2734, %v2760
    %v2767 = vadd.f32 %v2735, %v2763
    %v2768 = vxor.u32 %v2766, 2147483648
    %v2769 = vxor.u32 %v2767, 2147483648
    %v2770 = vmul.f32 %v2768, 1.442695
    %v2771 = vpow.pop %v2770
    %v2772 = vmul.f32 %v2769, 1.442695
    %v2773 = vpow.pop %v2772
    %v2774 = vadd.f32 %v2771, 1.0
    %v2775 = vadd.f32 %v2773, 1.0
    %v2776 = vrcp.pop %v2774
    %v2777 = vmul.f32 %v2774, %v2776
    %v2778 = vsub.f32 1.0, %v2777
    %v2779 = vmul.f32 %v2776, %v2778
    %v2780 = vadd.f32 %v2776, %v2779
    %vm2781 = vweird.f32 %v2774
    %vm2782 = vweird.f32 %v2776
    %vm2783 = vmor %vm2781, %vm2782
    %v2784 = vsel %vm2783, %v2776, %v2780
    %v2785 = vand.u32 2147483647, %v2774
    %vm2786 = vcmp.eq.f32.partialorder %v2785, 8.507059e+37
    %v2787 = vand.u32 %v2774, 2147483648
    %v2788 = vor.u32 1.1754944e-38, %v2787
    %v2789 = vsel %vm2786, %v2788, %v2784
    %v2790 = vmul.f32 1.0, %v2789
    %v2791 = vrcp.pop %v2775
    %v2792 = vmul.f32 %v2775, %v2791
    %v2793 = vsub.f32 1.0, %v2792
    %v2794 = vmul.f32 %v2791, %v2793
    %v2795 = vadd.f32 %v2791, %v2794
    %vm2796 = vweird.f32 %v2775
    %vm2797 = vweird.f32 %v2791
    %vm2798 = vmor %vm2796, %vm2797
    %v2799 = vsel %vm2798, %v2791, %v2795
    %v2800 = vand.u32 2147483647, %v2775
    %vm2801 = vcmp.eq.f32.partialorder %v2800, 8.507059e+37
    %v2802 = vand.u32 %v2775, 2147483648
    %v2803 = vor.u32 1.1754944e-38, %v2802
    %v2804 = vsel %vm2801, %v2803, %v2799
    %v2805 = vmul.f32 1.0, %v2804
    %v2806 = vtanh.pop %v2766
    %v2807 = vtanh.pop %v2767
    %v2808 = vmul.f32 %v2790, %v2710
    %v2809 = vmul.f32 %v2805, %v2711
    %2812 = vrot.lane.b32.xlu0 %v2806, 64
    %v2813 = vpop.permute.xlu0 %2812
    %2814 = vrot.lane.b32.xlu0 %v2807, 64
    %v2815 = vpop.permute.xlu0 %2814
    %v2818 = vmul.f32 %v2790, %v2813
    %v2819 = vmul.f32 %v2805, %v2815
    %2822 = vrot.lane.b32.xlu0 %v2818, 32
    %v2823 = vpop.permute.xlu0 %2822
    %2824 = vrot.lane.b32.xlu0 %v2819, 32
    %v2825 = vpop.permute.xlu0 %2824
    %v2828 = vadd.f32 %v2808, %v2823
    %v2829 = vadd.f32 %v2809, %v2825
    %v2830 = vtanh.pop %v2828
    %v2831 = vtanh.pop %v2829
    %2834 = vrot.lane.b32.xlu0 %v2830, 64
    %v2835 = vpop.permute.xlu0 %2834
    %2836 = vrot.lane.b32.xlu0 %v2831, 64
    %v2837 = vpop.permute.xlu0 %2836
    %v2840 = vmul.f32 %v2790, %v2835
    %v2841 = vmul.f32 %v2805, %v2837
    %2844 = vrot.lane.b32.xlu0 %v2840, 32
    %v2845 = vpop.permute.xlu0 %2844
    %2846 = vrot.lane.b32.xlu0 %v2841, 32
    %v2847 = vpop.permute.xlu0 %2846
    %2850 = vst.msk [vmem:[#allocation5 + $0x4] sm:$0x1] %vm347, %v2845
    %2851 = vst.msk [vmem:[#allocation5 + $0xc] sm:$0x1] %vm347, %v2847
    %v2852 = vld [vmem:[#allocation4 + $0x5] sm:$0x1]
    %v2853 = vld [vmem:[#allocation4 + $0xd] sm:$0x1]
    %v2854 = vrot.slane %v2841, 7
    %v2855 = vsel %vm353, %v2854, %v2840
    %2856 = vrot.lane.b32.xlu0 %v2855, 32
    %v2857 = vpop.permute.xlu0 %2856
    %v2858 = vsel %vm188, %v2857, 0
    %2860 = vmatpush.msra.mxu0 0.0
    %2861 = vmatpush.msra.mxu0 0.0
    %2862 = vmatpush.msra.mxu0 0.0
    %2863 = vmatpush.msra.mxu0 0.0
    %2864 = vmatpush.msra.mxu0 0.0
    %2865 = vmatpush.msra.mxu0 0.0
    %2866 = vmatpush.msra.mxu0 0.0
    %2867 = vmatpush.msra.mxu0 0.0
    %2868 = vmatpush.msra.mxu0 0.0
    %2869 = vmatpush.msra.mxu0 0.0
    %2870 = vmatpush.msra.mxu0 0.0
    %2871 = vmatpush.msra.mxu0 0.0
    %2872 = vmatpush.msra.mxu0 %v2252
    %2873 = vmatpush.msra.mxu0 %v2251
    %2874 = vmatpush.msra.mxu0 %v2250
    %2875 = vmatpush.msra.mxu0 %v2249
    %2876 = vmatmul.f32.gmra.mxu0 %v2858
    %v2877 = vpop.f32.mrf.mxu0
    %v2878 = vadd.f32 0.0, %v2877
    %2879 = vdwg.mxu0
    %v2881 = vrot.slane %v2878, 1
    %v2884 = vadd.f32 %v2852, %v2878
    %v2885 = vadd.f32 %v2853, %v2881
    %v2886 = vxor.u32 %v2884, 2147483648
    %v2887 = vxor.u32 %v2885, 2147483648
    %v2888 = vmul.f32 %v2886, 1.442695
    %v2889 = vpow.pop %v2888
    %v2890 = vmul.f32 %v2887, 1.442695
    %v2891 = vpow.pop %v2890
    %v2892 = vadd.f32 %v2889, 1.0
    %v2893 = vadd.f32 %v2891, 1.0
    %v2894 = vrcp.pop %v2892
    %v2895 = vmul.f32 %v2892, %v2894
    %v2896 = vsub.f32 1.0, %v2895
    %v2897 = vmul.f32 %v2894, %v2896
    %v2898 = vadd.f32 %v2894, %v2897
    %vm2899 = vweird.f32 %v2892
    %vm2900 = vweird.f32 %v2894
    %vm2901 = vmor %vm2899, %vm2900
    %v2902 = vsel %vm2901, %v2894, %v2898
    %v2903 = vand.u32 2147483647, %v2892
    %vm2904 = vcmp.eq.f32.partialorder %v2903, 8.507059e+37
    %v2905 = vand.u32 %v2892, 2147483648
    %v2906 = vor.u32 1.1754944e-38, %v2905
    %v2907 = vsel %vm2904, %v2906, %v2902
    %v2908 = vmul.f32 1.0, %v2907
    %v2909 = vrcp.pop %v2893
    %v2910 = vmul.f32 %v2893, %v2909
    %v2911 = vsub.f32 1.0, %v2910
    %v2912 = vmul.f32 %v2909, %v2911
    %v2913 = vadd.f32 %v2909, %v2912
    %vm2914 = vweird.f32 %v2893
    %vm2915 = vweird.f32 %v2909
    %vm2916 = vmor %vm2914, %vm2915
    %v2917 = vsel %vm2916, %v2909, %v2913
    %v2918 = vand.u32 2147483647, %v2893
    %vm2919 = vcmp.eq.f32.partialorder %v2918, 8.507059e+37
    %v2920 = vand.u32 %v2893, 2147483648
    %v2921 = vor.u32 1.1754944e-38, %v2920
    %v2922 = vsel %vm2919, %v2921, %v2917
    %v2923 = vmul.f32 1.0, %v2922
    %v2924 = vtanh.pop %v2884
    %v2925 = vtanh.pop %v2885
    %v2926 = vmul.f32 %v2908, %v2828
    %v2927 = vmul.f32 %v2923, %v2829
    %2930 = vrot.lane.b32.xlu0 %v2924, 64
    %v2931 = vpop.permute.xlu0 %2930
    %2932 = vrot.lane.b32.xlu0 %v2925, 64
    %v2933 = vpop.permute.xlu0 %2932
    %v2936 = vmul.f32 %v2908, %v2931
    %v2937 = vmul.f32 %v2923, %v2933
    %2940 = vrot.lane.b32.xlu0 %v2936, 32
    %v2941 = vpop.permute.xlu0 %2940
    %2942 = vrot.lane.b32.xlu0 %v2937, 32
    %v2943 = vpop.permute.xlu0 %2942
    %v2946 = vadd.f32 %v2926, %v2941
    %v2947 = vadd.f32 %v2927, %v2943
    %v2948 = vtanh.pop %v2946
    %v2949 = vtanh.pop %v2947
    %2952 = vrot.lane.b32.xlu0 %v2948, 64
    %v2953 = vpop.permute.xlu0 %2952
    %2954 = vrot.lane.b32.xlu0 %v2949, 64
    %v2955 = vpop.permute.xlu0 %2954
    %v2958 = vmul.f32 %v2908, %v2953
    %v2959 = vmul.f32 %v2923, %v2955
    %2962 = vrot.lane.b32.xlu0 %v2958, 32
    %v2963 = vpop.permute.xlu0 %2962
    %2964 = vrot.lane.b32.xlu0 %v2959, 32
    %v2965 = vpop.permute.xlu0 %2964
    %2968 = vst.msk [vmem:[#allocation5 + $0x5] sm:$0x1] %vm347, %v2963
    %2969 = vst.msk [vmem:[#allocation5 + $0xd] sm:$0x1] %vm347, %v2965
    %v2970 = vld [vmem:[#allocation4 + $0x6] sm:$0x1]
    %v2971 = vld [vmem:[#allocation4 + $0xe] sm:$0x1]
    %v2972 = vrot.slane %v2959, 7
    %v2973 = vsel %vm353, %v2972, %v2958
    %2974 = vrot.lane.b32.xlu0 %v2973, 32
    %v2975 = vpop.permute.xlu0 %2974
    %v2976 = vsel %vm188, %v2975, 0
    %2978 = vmatpush.msra.mxu0 0.0
    %2979 = vmatpush.msra.mxu0 0.0
    %2980 = vmatpush.msra.mxu0 0.0
    %2981 = vmatpush.msra.mxu0 0.0
    %2982 = vmatpush.msra.mxu0 0.0
    %2983 = vmatpush.msra.mxu0 0.0
    %2984 = vmatpush.msra.mxu0 0.0
    %2985 = vmatpush.msra.mxu0 0.0
    %2986 = vmatpush.msra.mxu0 0.0
    %2987 = vmatpush.msra.mxu0 0.0
    %2988 = vmatpush.msra.mxu0 0.0
    %2989 = vmatpush.msra.mxu0 0.0
    %2990 = vmatpush.msra.mxu0 %v2252
    %2991 = vmatpush.msra.mxu0 %v2251
    %2992 = vmatpush.msra.mxu0 %v2250
    %2993 = vmatpush.msra.mxu0 %v2249
    %2994 = vmatmul.f32.gmra.mxu0 %v2976
    %v2995 = vpop.f32.mrf.mxu0
    %v2996 = vadd.f32 0.0, %v2995
    %2997 = vdwg.mxu0
    %v2999 = vrot.slane %v2996, 1
    %v3002 = vadd.f32 %v2970, %v2996
    %v3003 = vadd.f32 %v2971, %v2999
    %v3004 = vxor.u32 %v3002, 2147483648
    %v3005 = vxor.u32 %v3003, 2147483648
    %v3006 = vmul.f32 %v3004, 1.442695
    %v3007 = vpow.pop %v3006
    %v3008 = vmul.f32 %v3005, 1.442695
    %v3009 = vpow.pop %v3008
    %v3010 = vadd.f32 %v3007, 1.0
    %v3011 = vadd.f32 %v3009, 1.0
    %v3012 = vrcp.pop %v3010
    %v3013 = vmul.f32 %v3010, %v3012
    %v3014 = vsub.f32 1.0, %v3013
    %v3015 = vmul.f32 %v3012, %v3014
    %v3016 = vadd.f32 %v3012, %v3015
    %vm3017 = vweird.f32 %v3010
    %vm3018 = vweird.f32 %v3012
    %vm3019 = vmor %vm3017, %vm3018
    %v3020 = vsel %vm3019, %v3012, %v3016
    %v3021 = vand.u32 2147483647, %v3010
    %vm3022 = vcmp.eq.f32.partialorder %v3021, 8.507059e+37
    %v3023 = vand.u32 %v3010, 2147483648
    %v3024 = vor.u32 1.1754944e-38, %v3023
    %v3025 = vsel %vm3022, %v3024, %v3020
    %v3026 = vmul.f32 1.0, %v3025
    %v3027 = vrcp.pop %v3011
    %v3028 = vmul.f32 %v3011, %v3027
    %v3029 = vsub.f32 1.0, %v3028
    %v3030 = vmul.f32 %v3027, %v3029
    %v3031 = vadd.f32 %v3027, %v3030
    %vm3032 = vweird.f32 %v3011
    %vm3033 = vweird.f32 %v3027
    %vm3034 = vmor %vm3032, %vm3033
    %v3035 = vsel %vm3034, %v3027, %v3031
    %v3036 = vand.u32 2147483647, %v3011
    %vm3037 = vcmp.eq.f32.partialorder %v3036, 8.507059e+37
    %v3038 = vand.u32 %v3011, 2147483648
    %v3039 = vor.u32 1.1754944e-38, %v3038
    %v3040 = vsel %vm3037, %v3039, %v3035
    %v3041 = vmul.f32 1.0, %v3040
    %v3042 = vtanh.pop %v3002
    %v3043 = vtanh.pop %v3003
    %v3044 = vmul.f32 %v3026, %v2946
    %v3045 = vmul.f32 %v3041, %v2947
    %3048 = vrot.lane.b32.xlu0 %v3042, 64
    %v3049 = vpop.permute.xlu0 %3048
    %3050 = vrot.lane.b32.xlu0 %v3043, 64
    %v3051 = vpop.permute.xlu0 %3050
    %v3054 = vmul.f32 %v3026, %v3049
    %v3055 = vmul.f32 %v3041, %v3051
    %3058 = vrot.lane.b32.xlu0 %v3054, 32
    %v3059 = vpop.permute.xlu0 %3058
    %3060 = vrot.lane.b32.xlu0 %v3055, 32
    %v3061 = vpop.permute.xlu0 %3060
    %v3064 = vadd.f32 %v3044, %v3059
    %v3065 = vadd.f32 %v3045, %v3061
    %v3066 = vtanh.pop %v3064
    %v3067 = vtanh.pop %v3065
    %3070 = vrot.lane.b32.xlu0 %v3066, 64
    %v3071 = vpop.permute.xlu0 %3070
    %3072 = vrot.lane.b32.xlu0 %v3067, 64
    %v3073 = vpop.permute.xlu0 %3072
    %v3076 = vmul.f32 %v3026, %v3071
    %v3077 = vmul.f32 %v3041, %v3073
    %3080 = vrot.lane.b32.xlu0 %v3076, 32
    %v3081 = vpop.permute.xlu0 %3080
    %3082 = vrot.lane.b32.xlu0 %v3077, 32
    %v3083 = vpop.permute.xlu0 %3082
    %3086 = vst.msk [vmem:[#allocation5 + $0x6] sm:$0x1] %vm347, %v3081
    %3087 = vst.msk [vmem:[#allocation5 + $0xe] sm:$0x1] %vm347, %v3083
    %v3088 = vld [vmem:[#allocation4 + $0x7] sm:$0x1]
    %v3089 = vld [vmem:[#allocation4 + $0xf] sm:$0x1]
    %v3090 = vrot.slane %v3077, 7
    %v3091 = vsel %vm353, %v3090, %v3076
    %3092 = vrot.lane.b32.xlu0 %v3091, 32
    %v3093 = vpop.permute.xlu0 %3092
    %v3094 = vsel %vm188, %v3093, 0
    %3096 = vmatpush.msra.mxu0 0.0
    %3097 = vmatpush.msra.mxu0 0.0
    %3098 = vmatpush.msra.mxu0 0.0
    %3099 = vmatpush.msra.mxu0 0.0
    %3100 = vmatpush.msra.mxu0 0.0
    %3101 = vmatpush.msra.mxu0 0.0
    %3102 = vmatpush.msra.mxu0 0.0
    %3103 = vmatpush.msra.mxu0 0.0
    %3104 = vmatpush.msra.mxu0 0.0
    %3105 = vmatpush.msra.mxu0 0.0
    %3106 = vmatpush.msra.mxu0 0.0
    %3107 = vmatpush.msra.mxu0 0.0
    %3108 = vmatpush.msra.mxu0 %v2252
    %3109 = vmatpush.msra.mxu0 %v2251
    %3110 = vmatpush.msra.mxu0 %v2250
    %3111 = vmatpush.msra.mxu0 %v2249
    %3112 = vmatmul.f32.gmra.mxu0 %v3094
    %v3113 = vpop.f32.mrf.mxu0
    %v3114 = vadd.f32 0.0, %v3113
    %3115 = vdwg.mxu0
    %v3117 = vrot.slane %v3114, 1
    %v3120 = vadd.f32 %v3088, %v3114
    %v3121 = vadd.f32 %v3089, %v3117
    %v3122 = vxor.u32 %v3120, 2147483648
    %v3123 = vxor.u32 %v3121, 2147483648
    %v3124 = vmul.f32 %v3122, 1.442695
    %v3125 = vpow.pop %v3124
    %v3126 = vmul.f32 %v3123, 1.442695
    %v3127 = vpow.pop %v3126
    %v3128 = vadd.f32 %v3125, 1.0
    %v3129 = vadd.f32 %v3127, 1.0
    %v3130 = vrcp.pop %v3128
    %v3131 = vmul.f32 %v3128, %v3130
    %v3132 = vsub.f32 1.0, %v3131
    %v3133 = vmul.f32 %v3130, %v3132
    %v3134 = vadd.f32 %v3130, %v3133
    %vm3135 = vweird.f32 %v3128
    %vm3136 = vweird.f32 %v3130
    %vm3137 = vmor %vm3135, %vm3136
    %v3138 = vsel %vm3137, %v3130, %v3134
    %v3139 = vand.u32 2147483647, %v3128
    %vm3140 = vcmp.eq.f32.partialorder %v3139, 8.507059e+37
    %v3141 = vand.u32 %v3128, 2147483648
    %v3142 = vor.u32 1.1754944e-38, %v3141
    %v3143 = vsel %vm3140, %v3142, %v3138
    %v3144 = vmul.f32 1.0, %v3143
    %v3145 = vrcp.pop %v3129
    %v3146 = vmul.f32 %v3129, %v3145
    %v3147 = vsub.f32 1.0, %v3146
    %v3148 = vmul.f32 %v3145, %v3147
    %v3149 = vadd.f32 %v3145, %v3148
    %vm3150 = vweird.f32 %v3129
    %vm3151 = vweird.f32 %v3145
    %vm3152 = vmor %vm3150, %vm3151
    %v3153 = vsel %vm3152, %v3145, %v3149
    %v3154 = vand.u32 2147483647, %v3129
    %vm3155 = vcmp.eq.f32.partialorder %v3154, 8.507059e+37
    %v3156 = vand.u32 %v3129, 2147483648
    %v3157 = vor.u32 1.1754944e-38, %v3156
    %v3158 = vsel %vm3155, %v3157, %v3153
    %v3159 = vmul.f32 1.0, %v3158
    %v3160 = vtanh.pop %v3120
    %v3161 = vtanh.pop %v3121
    %v3162 = vmul.f32 %v3144, %v3064
    %v3163 = vmul.f32 %v3159, %v3065
    %3166 = vrot.lane.b32.xlu0 %v3160, 64
    %v3167 = vpop.permute.xlu0 %3166
    %3168 = vrot.lane.b32.xlu0 %v3161, 64
    %v3169 = vpop.permute.xlu0 %3168
    %v3172 = vmul.f32 %v3144, %v3167
    %v3173 = vmul.f32 %v3159, %v3169
    %3176 = vrot.lane.b32.xlu0 %v3172, 32
    %v3177 = vpop.permute.xlu0 %3176
    %3178 = vrot.lane.b32.xlu0 %v3173, 32
    %v3179 = vpop.permute.xlu0 %3178
    %v3182 = vadd.f32 %v3162, %v3177
    %v3183 = vadd.f32 %v3163, %v3179
    %v3184 = vtanh.pop %v3182
    %v3185 = vtanh.pop %v3183
    %3188 = vrot.lane.b32.xlu0 %v3184, 64
    %v3189 = vpop.permute.xlu0 %3188
    %3190 = vrot.lane.b32.xlu0 %v3185, 64
    %v3191 = vpop.permute.xlu0 %3190
    %v3194 = vmul.f32 %v3144, %v3189
    %v3195 = vmul.f32 %v3159, %v3191
    %3198 = vrot.lane.b32.xlu0 %v3194, 32
    %v3199 = vpop.permute.xlu0 %3198
    %3200 = vrot.lane.b32.xlu0 %v3195, 32
    %v3201 = vpop.permute.xlu0 %3200
    %3204 = vst.msk [vmem:[#allocation5 + $0x7] sm:$0x1] %vm347, %v3199
    %3205 = vst.msk [vmem:[#allocation5 + $0xf] sm:$0x1] %vm347, %v3201
    %v3206 = vrot.slane %v3195, 7
    %v3207 = vsel %vm353, %v3206, %v3194
    %3208 = vrot.lane.b32.xlu0 %v3207, 32
    %v3209 = vpop.permute.xlu0 %3208
    %3211 = vst.msk [vmem:[%s2253] sm:$0x3] %vm1182, %v3209
    %v3214 = vrot.slane %v3183, 7
    %v3215 = vsel %vm353, %v3214, %v3182
    %3216 = vrot.lane.b32.xlu0 %v3215, 96
    %v3217 = vpop.permute.xlu0 %3216
    %3219 = vst.msk [vmem:[%s2255] sm:$0x3] %vm1182, %v3217
    %v3220 = vld [vmem:[#allocation5] sm:$0xff]
    %v3221 = vld [vmem:[#allocation5 + $0x8] sm:$0xff]
    %v3222 = vsel %vm188, %v3220, 0.0
    %3223 = vadd.xlane.f32.xlu0 %v3222
    %v3224 = vpop.xlane.xlu0 %3223
    %v3225 = vsel %vm188, %v3221, 0.0
    %3226 = vadd.xlane.f32.xlu0 %v3225
    %v3227 = vpop.xlane.xlu0 %3226
    %v3228 = vrcp.pop 32.0
    %v3229 = vmul.f32 32.0, %v3228
    %v3230 = vsub.f32 1.0, %v3229
    %v3231 = vmul.f32 %v3228, %v3230
    %v3232 = vadd.f32 %v3228, %v3231
    %vm3233 = vweird.f32 %v3228
    %v3234 = vsel %vm3233, %v3228, %v3232
    %v3235 = vmul.f32 %v3224, %v3234
    %v3236 = vmul.f32 %v3227, %v3234
    %v3237 = vmul.f32 %v3220, %v3220
    %v3238 = vmul.f32 %v3221, %v3221
    %v3239 = vsel %vm188, %v3237, 0.0
    %3240 = vadd.xlane.f32.xlu0 %v3239
    %v3241 = vpop.xlane.xlu0 %3240
    %v3242 = vsel %vm188, %v3238, 0.0
    %3243 = vadd.xlane.f32.xlu0 %v3242
    %v3244 = vpop.xlane.xlu0 %3243
    %v3245 = vmul.f32 %v3241, %v3234
    %v3246 = vmul.f32 %v3244, %v3234
    %v3247 = vmul.f32 %v3235, %v3235
    %v3248 = vmul.f32 %v3236, %v3236
    %v3249 = vsub.f32 %v3245, %v3247
    %v3250 = vsub.f32 %v3246, %v3248
    %v3251 = vsub.f32 %v3220, %v3235
    %v3252 = vsub.f32 %v3221, %v3236
    %v3253 = vadd.f32 %v3249, 1e-05
    %v3254 = vadd.f32 %v3250, 1e-05
    %v3255 = vrsqrt.pop %v3253
    %v3256 = vmul.f32 %v3255, %v3253
    %v3257 = vmul.f32 %v3256, %v3255
    %v3258 = vmul.f32 0.5, %v3257
    %v3259 = vsub.f32 1.5, %v3258
    %v3260 = vmul.f32 %v3255, %v3259
    %vm3261 = vweird.f32 %v3253
    %vm3262 = vweird.f32 %v3255
    %vm3263 = vmor %vm3261, %vm3262
    %v3264 = vsel %vm3263, %v3255, %v3260
    %v3265 = vrsqrt.pop %v3254
    %v3266 = vmul.f32 %v3265, %v3254
    %v3267 = vmul.f32 %v3266, %v3265
    %v3268 = vmul.f32 0.5, %v3267
    %v3269 = vsub.f32 1.5, %v3268
    %v3270 = vmul.f32 %v3265, %v3269
    %vm3271 = vweird.f32 %v3254
    %vm3272 = vweird.f32 %v3265
    %vm3273 = vmor %vm3271, %vm3272
    %v3274 = vsel %vm3273, %v3265, %v3270
    %v3275 = vmul.f32 %v3251, %v3264
    %v3276 = vmul.f32 %v3252, %v3274
    %v3278 = vperm.slane %v176, 0
    %v3280 = vmul.f32 %v3275, %v3278
    %v3281 = vmul.f32 %v3276, %v3278
    %v3283 = vperm.slane %v177, 0
    %v3285 = vadd.f32 %v3280, %v3283
    %v3286 = vadd.f32 %v3281, %v3283
    %3287 = vst.msk [vmem:[#allocation18] sm:$0xff] %vm188, %v3285
    %3288 = vst.msk [vmem:[#allocation18 + $0x8] sm:$0xff] %vm188, %v3286
    // Predicated region
    $region74: #{tpu_custom_call.1} parent=1 // pred_check
      %p3289 = pneg %p147
    $region75: #{tpu_custom_call.1} parent=1 // pred_check_branch
      %3291 = sbr.rel (%p3289) target = $region77
    $region76: #{tpu_custom_call.1} parent=1 // pred_region
      %v3292 = vld [vmem:[#allocation2] sm:$0x3]
      %v3293 = vld [vmem:[#allocation2 + $0x2] sm:$0x3]
      %v3294 = vld [vmem:[#allocation2 + $0x4] sm:$0x3]
      %3295 = vst.msk [vmem:[#allocation19] sm:$0x3] %vm1182, %v3292
      %3296 = vst.msk [vmem:[#allocation19 + $0x2] sm:$0x3] %vm1182, %v3293
      %3297 = vst.msk [vmem:[#allocation19 + $0x4] sm:$0x3] %vm1182, %v3294
      %v3298 = vld [vmem:[#allocation3] sm:$0x3]
      %v3299 = vld [vmem:[#allocation3 + $0x2] sm:$0x3]
      %v3300 = vld [vmem:[#allocation3 + $0x4] sm:$0x3]
      %3301 = vst.msk [vmem:[#allocation21] sm:$0x3] %vm1182, %v3298
      %3302 = vst.msk [vmem:[#allocation21 + $0x2] sm:$0x3] %vm1182, %v3299
      %3303 = vst.msk [vmem:[#allocation21 + $0x4] sm:$0x3] %vm1182, %v3300
    $region77: #{tpu_custom_call.1} parent=1 // pred_fallthru
      _
    // Predicated region
    $region78: #{tpu_custom_call.1} parent=1 // pred_check
      _
    $region79: #{tpu_custom_call.1} parent=1 // pred_check_branch
      %3305 = sbr.rel (0) target = $region81
    $region80: #{tpu_custom_call.1} parent=1 // pred_region
      %3307 = vsyncadd [#allocation8], 0
      %s3308 = sshll.u32 [#allocation18], 4
      %s3309 = int_to_ptr.vmem [resolvable:$true] %s3308
      %s3310 = sshll.u32 %s10, 4
      %s3311 = int_to_ptr.hbm [resolvable:$true] %s3310
      %3316 = dma.vmem_to_hbm [thread:$0]  %s3309, 256, %s3311, [#allocation8], 128, 128, 8
    $region81: #{tpu_custom_call.1} parent=1 // pred_fallthru
      _
    // Predicated region
    $region82: #{tpu_custom_call.1} parent=1 // pred_check
      _
    $region83: #{tpu_custom_call.1} parent=1 // pred_check_branch
      %3318 = sbr.rel (0) target = $region85
    $region84: #{tpu_custom_call.1} parent=1 // pred_region
      %3320 = vsyncadd [#allocation20], 0
      %s3321 = sshll.u32 [#allocation19], 4
      %s3322 = int_to_ptr.vmem [resolvable:$true] %s3321
      %s3323 = sshll.u32 %s11, 4
      %s3324 = int_to_ptr.hbm [resolvable:$true] %s3323
      %3329 = dma.vmem_to_hbm [thread:$0]  %s3322, 96, %s3324, [#allocation20], 32, 32, 2
    $region85: #{tpu_custom_call.1} parent=1 // pred_fallthru
      _
    // Predicated region
    $region86: #{tpu_custom_call.1} parent=1 // pred_check
      _
    $region87: #{tpu_custom_call.1} parent=1 // pred_check_branch
      %3331 = sbr.rel (0) target = $region89
    $region88: #{tpu_custom_call.1} parent=1 // pred_region
      %3333 = vsyncadd [#allocation20], 0
      %s3334 = sshll.u32 [#allocation21], 4
      %s3335 = int_to_ptr.vmem [resolvable:$true] %s3334
      %s3336 = sshll.u32 %s12, 4
      %s3337 = int_to_ptr.hbm [resolvable:$true] %s3336
      %3342 = dma.vmem_to_hbm [thread:$0]  %s3335, 96, %s3337, [#allocation20], 32, 32, 2
    $region89: #{tpu_custom_call.1} parent=1 // pred_fallthru
      _
    // Predicated region
    $region90: #{tpu_custom_call.1} parent=1 // pred_check
      _
    $region91: #{tpu_custom_call.1} parent=1 // pred_check_branch
      %3344 = sbr.rel (0) target = $region93
    $region92: #{tpu_custom_call.1} parent=1 // pred_region
      %3346 = dma.done [#allocation8], 256
    $region93: #{tpu_custom_call.1} parent=1 // pred_fallthru
      _
    // Predicated region
    $region94: #{tpu_custom_call.1} parent=1 // pred_check
      _
    $region95: #{tpu_custom_call.1} parent=1 // pred_check_branch
      %3348 = sbr.rel (0) target = $region97
    $region96: #{tpu_custom_call.1} parent=1 // pred_region
      %3350 = dma.done [#allocation20], 96
    $region97: #{tpu_custom_call.1} parent=1 // pred_fallthru
      _
    // Predicated region
    $region98: #{tpu_custom_call.1} parent=1 // pred_check
      _
    $region99: #{tpu_custom_call.1} parent=1 // pred_check_branch
      %3352 = sbr.rel (0) target = $region101
    $region100: #{tpu_custom_call.1} parent=1 // pred_region
      %3354 = dma.done [#allocation20], 96
    $region101: #{tpu_custom_call.1} parent=1 // pred_fallthru
      _
    %3355 = vsyncpa [#allocation7], 1
    %3356 = vsyncpa [#allocation10], 1
    %3357 = vsyncpa [#allocation13], 1
    %3358 = vsyncpa [#allocation16], 1
    %3359 = vsyncpa [#allocation8], 1
    %3360 = vsyncpa [#allocation20], 1

</llo_original>
